<compile_context>
chip_gen: v7x
topology: tpu7x:2x2x1
jax: 0.10.0
libtpu: 0.0.40
codegen_flags: <defaults>
</compile_context>

<pallas_src>
import functools

import jax
import jax.numpy as jnp
from jax import lax
from jax.experimental import pallas as pl
from jax.experimental.pallas import tpu as pltpu


def _halo_dtype_for_backend():
    """bf16 halo temporaries on chips with a bf16 VPU (v6e/v7x); f32 on v5e/older."""
    try:
        kind = jax.devices()[0].device_kind.lower()
    except Exception:
        return jnp.float32
    return jnp.bfloat16 if ("v6" in kind or "v7" in kind) else jnp.float32


# ----------------------------------------------------------------------------
# Pallas kernel: one grid step = B NHWC images, fully fused bottleneck
# ----------------------------------------------------------------------------
def _bottleneck_kernel(x_ref, w1_ref, b1_ref, w2_ref, b2_ref, w3_ref, b3_ref,
                       o_ref, *, halo_dtype):
    B, H, W, Cin = x_ref.shape
    Cmid = w1_ref.shape[1]
    Cout = w3_ref.shape[1]
    K3 = 3 * Cmid

    # ---- conv1 (1x1, BN scale pre-folded) + bias + relu ----------------------
    # bf16 operands (no-op cast when x is already bf16 in HBM), f32 accumulation.
    x_bf = x_ref[...].reshape(B * H * W, Cin).astype(jnp.bfloat16)
    h1 = jnp.dot(x_bf, w1_ref[...], preferred_element_type=jnp.float32)
    h1 = jnp.maximum(h1 + b1_ref[...], 0.0).reshape(B, H, W, Cmid)

    # ---- conv2 (3x3, pad=1, stride=1): dy-accumulating matmuls ----------------
    # H halo: one zero row per image concatenated along the (untiled) H axis, so
    # adjacent images in the block never bleed into each other's halo.
    zrow = jnp.zeros((B, 1, W, Cmid), jnp.float32)
    hp = jnp.concatenate([zrow, h1, zrow], axis=1)             # (B, H+2, W, Cmid)
    hp = hp.reshape(B * (H + 2), W, Cmid)

    # W (+/-1) taps: XLU sublane rolls + edge masks — no unaligned sublane
    # slices, no scratch buffer, no full-tile zero fill.
    lt = pltpu.roll(hp, shift=1, axis=1)                       # x-1 tap (dx=0)
    rt = pltpu.roll(hp, shift=W - 1, axis=1)                   # x+1 tap (dx=2)
    # TODO(synk): move this cast above the rolls once bf16 sublane pltpu.roll
    #             lowering is confirmed (review fallback: cast right after rolls).
    hp = hp.astype(halo_dtype)
    lt = lt.astype(halo_dtype)
    rt = rt.astype(halo_dtype)
    colw = lax.broadcasted_iota(jnp.int32, (1, W, Cmid), 1)
    lt = jnp.where(colw == 0, 0.0, lt)
    rt = jnp.where(colw == W - 1, 0.0, rt)

    bf = lambda a: a.astype(jnp.bfloat16)
    # channel order: dx = 0, 1, 2 (lane-aligned: Cmid is a multiple of 128)
    taps = jnp.concatenate([bf(lt), bf(hp), bf(rt)], axis=-1)  # (B*(H+2), W, 3*Cmid)
    taps = taps.reshape(B, H + 2, W, K3)

    # Accumulate over kernel rows dy = 0, 1, 2 instead of materializing a fat
    # (B*H*W, 9*Cmid) im2col buffer; K stays 3*Cmid thanks to the dx concat.
    h2 = None
    for dy in range(3):
        lhs = taps[:, dy:H + dy].reshape(B * H * W, K3)
        part = jnp.dot(lhs, w2_ref[dy], preferred_element_type=jnp.float32)
        h2 = part if h2 is None else h2 + part
    h2 = jnp.maximum(h2 + b2_ref[...], 0.0).astype(jnp.bfloat16)

    # ---- conv3 (1x1, BN scale pre-folded) + bias -----------------------------
    h3 = jnp.dot(h2, w3_ref[...], preferred_element_type=jnp.float32)
    h3 = h3 + b3_ref[...]

    # ---- residual add (fresh read of x) + relu -------------------------------
    res = x_ref[...].astype(jnp.float32).reshape(B * H * W, Cout)
    out = jnp.maximum(h3 + res, 0.0)
    o_ref[...] = out.reshape(B, H, W, Cout).astype(o_ref.dtype)


# ----------------------------------------------------------------------------
# Wrapper-side weight prep: fold BN scale into conv weights, cast to bf16
# ----------------------------------------------------------------------------
def _fold_bn_into_weights(params):
    w1, s1, b1, w2, s2, b2, w3, s3, b3 = params
    Cin, Cmid = w1.shape
    w1f = (w1 * s1).astype(jnp.bfloat16)                               # (Cin, Cmid)
    # HWIO -> (3, 3*Cmid, Cmid): leading dim = dy, rows = dx*Cmid + cin
    w2f = (w2 * s2.reshape(1, 1, 1, Cmid)).reshape(3, 3 * Cmid, Cmid)
    w2f = w2f.astype(jnp.bfloat16)
    w3f = (w3 * s3).astype(jnp.bfloat16)                               # (Cmid, Cout)
    return w1f, b1, w2f, b2, w3f, b3


def _pick_images_per_block(n):
    # Amortize per-grid-step overhead while keeping >= 2 grid steps so both
    # v7x TensorCores get work on the "parallel" batch axis.
    for b in (4, 2, 1):
        if n % b == 0 and n // b >= 2:
            return b
    return 1


@jax.jit
def bottleneck_pallas_nhwc(x_nhwc, params):
    """NHWC-native entry point (no layout transposes; preferred in a NHWC net).
    Works for f32 or bf16 x; bf16 I/O is the fast path (HBM-bound kernel)."""
    w1f, b1, w2f, b2, w3f, b3 = _fold_bn_into_weights(params)
    N, H, W, Cin = x_nhwc.shape
    Cmid = w1f.shape[1]
    Cout = w3f.shape[1]
    assert Cin == Cout, "identity add requires in_channel == 4*out_channel"

    B = _pick_images_per_block(N)
    halo_dt = _halo_dtype_for_backend()

    def rep(shape):  # grid-invariant operand (weights / biases)
        return pl.BlockSpec(shape, lambda n: (0,) * len(shape))

    # VMEM budget: ~2x the actual per-step footprint (double-buffered I/O blocks
    # + weights, f32 matmul outputs, halo temporaries). No 32 MiB floor (v7x has
    # only 64 MiB physical VMEM); clamp kept for a future large-H*W path.
    bpe_io = jnp.dtype(x_nhwc.dtype).itemsize
    bpe_h = jnp.dtype(halo_dt).itemsize
    img = B * H * W
    halo_rows = B * (H + 2) * W
    est_bytes = (
        2 * img * (Cin + Cout) * bpe_io                             # dbl-buffered in/out blocks
        + 2 * 2 * (Cin * Cmid + 9 * Cmid * Cmid + Cmid * Cout)      # dbl-buffered bf16 weights
        + 4 * img * (2 * Cmid + 2 * Cout)                           # h1/h2 + h3/residual f32
        + halo_rows * Cmid * (4 + 2 * bpe_h + 3 * 2)                # hp/lt/rt + taps
    )
    vmem_limit = int(min(48 * 2**20, max(8 * 2**20, 2 * est_bytes)))

    return pl.pallas_call(
        functools.partial(_bottleneck_kernel, halo_dtype=halo_dt),
        out_shape=jax.ShapeDtypeStruct((N, H, W, Cout), x_nhwc.dtype),
        grid_spec=pltpu.PrefetchScalarGridSpec(
            num_scalar_prefetch=0,
            grid=(N // B,),
            in_specs=[
                pl.BlockSpec((B, H, W, Cin), lambda n: (n, 0, 0, 0)),
                rep((Cin, Cmid)), rep((1, Cmid)),
                rep((3, 3 * Cmid, Cmid)), rep((1, Cmid)),
                rep((Cmid, Cout)), rep((1, Cout)),
            ],
            out_specs=pl.BlockSpec((B, H, W, Cout), lambda n: (n, 0, 0, 0)),
        ),
        compiler_params=pltpu.CompilerParams(
            dimension_semantics=("parallel",),
            vmem_limit_bytes=vmem_limit),
    )(x_nhwc, w1f, b1, w2f, b2, w3f, b3)


@jax.jit
def bottleneck_pallas(x_nchw, params):
    """PyTorch-layout (NCHW) adapter. Casts to bf16 at the pallas_call boundary
    (halves HBM in/out traffic; the kernel is HBM-bound on v5e/v6e)."""
    x = jnp.transpose(x_nchw, (0, 2, 3, 1)).astype(jnp.bfloat16)   # NCHW -> NHWC, bf16 I/O
    out = bottleneck_pallas_nhwc(x, params)
    return jnp.transpose(out, (0, 3, 1, 2)).astype(x_nchw.dtype)   # NHWC -> NCHW


# ----------------------------------------------------------------------------
# Pure-JAX references
# ----------------------------------------------------------------------------
def bottleneck_ref(x_nchw, params):
    """Exact f32 module semantics (eval-mode BN as per-channel scale/shift)."""
    w1, s1, b1, w2, s2, b2, w3, s3, b3 = params
    x = jnp.transpose(x_nchw, (0, 2, 3, 1))
    Cin, Cmid = w1.shape
    Cout = w3.shape[1]
    dn = ("NHWC", "HWIO", "NHWC")
    hi = lax.Precision.HIGHEST
    h = lax.conv_general_dilated(x, w1.reshape(1, 1, Cin, Cmid), (1, 1), "VALID",
                                 dimension_numbers=dn, precision=hi)
    h = jnp.maximum(h * s1 + b1, 0.0)
    h = lax.conv_general_dilated(h, w2, (1, 1), "SAME", dimension_numbers=dn,
                                 precision=hi)
    h = jnp.maximum(h * s2 + b2, 0.0)
    h = lax.conv_general_dilated(h, w3.reshape(1, 1, Cmid, Cout), (1, 1), "VALID",
                                 dimension_numbers=dn, precision=hi)
    h = h * s3 + b3
    return jnp.transpose(jnp.maximum(h + x, 0.0), (0, 3, 1, 2))


def bottleneck_ref_matched(x_nchw, folded):
    """Reference at the kernel's precision (bf16 HBM I/O, bf16 matmul operands,
    f32 accumulation / bias / ReLU)."""
    w1f, b1, w2f, b2, w3f, b3 = folded
    q = lambda a: a.astype(jnp.bfloat16).astype(jnp.float32)
    x = q(jnp.transpose(x_nchw, (0, 2, 3, 1)).astype(jnp.float32))   # bf16 boundary
    Cin, Cmid = w1f.shape
    Cout = w3f.shape[1]
    dn = ("NHWC", "HWIO", "NHWC")
    hi = lax.Precision.HIGHEST
    h = lax.conv_general_dilated(x, w1f.astype(jnp.float32).reshape(1, 1, Cin, Cmid),
                                 (1, 1), "VALID", dimension_numbers=dn, precision=hi)
    h = q(jnp.maximum(h + b1, 0.0))
    h = lax.conv_general_dilated(h, w2f.astype(jnp.float32).reshape(3, 3, Cmid, Cmid),
                                 (1, 1), "SAME", dimension_numbers=dn, precision=hi)
    h = q(jnp.maximum(h + b2, 0.0))
    h = lax.conv_general_dilated(h, w3f.astype(jnp.float32).reshape(1, 1, Cmid, Cout),
                                 (1, 1), "VALID", dimension_numbers=dn, precision=hi)
    h = h + b3
    out = q(jnp.maximum(h + x, 0.0))                                  # bf16 output
    return jnp.transpose(out, (0, 3, 1, 2))


# ----------------------------------------------------------------------------
# Deterministic parameter construction (BN folded into scale/shift, eval mode)
# ----------------------------------------------------------------------------
def make_params(key, in_channel, out_channel, eps=1e-5):
    exp = 4
    cmid, cout = out_channel, out_channel * exp
    ks = jax.random.split(key, 12)

    def bn_fold(kg, kb, km, kv, c):
        gamma = 1.0 + 0.1 * jax.random.normal(kg, (c,), jnp.float32)
        beta = 0.1 * jax.random.normal(kb, (c,), jnp.float32)
        mean = 0.1 * jax.random.normal(km, (c,), jnp.float32)
        var = 1.0 + 0.1 * jax.random.uniform(kv, (c,), jnp.float32)
        scale = gamma / jnp.sqrt(var + eps)
        shift = beta - mean * scale
        return scale.reshape(1, c), shift.reshape(1, c)

    w1 = 0.05 * jax.random.normal(ks[0], (in_channel, cmid), jnp.float32)   # 1x1
    w2 = 0.05 * jax.random.normal(ks[1], (3, 3, cmid, cmid), jnp.float32)   # 3x3 HWIO
    w3 = 0.05 * jax.random.normal(ks[2], (cmid, cout), jnp.float32)         # 1x1
    s1, b1 = bn_fold(ks[3], ks[4], ks[5], ks[6], cmid)
    s2, b2 = bn_fold(ks[7], ks[8], ks[9], ks[10], cmid)
    s3, b3 = bn_fold(ks[11], ks[0], ks[1], ks[2], cout)
    return (w1, s1, b1, w2, s2, b2, w3, s3, b3)


if __name__ == "__main__":
    key = jax.random.PRNGKey(0)
    k_x, k_p = jax.random.split(key)

    # Channel counts are multiples of 128 (lane width); identity add requires
    # in_channel == 4 * out_channel (stride=1, no downsample). N=4 exercises the
    # multi-image-per-step path (B=2 images/block, 2 parallel grid steps).
    N, IN_C, OUT_C, H, W = 4, 512, 128, 16, 16
    x = jax.random.normal(k_x, (N, IN_C, H, W), jnp.float32)   # PyTorch-style NCHW
    params = make_params(k_p, IN_C, OUT_C)

    out = jax.block_until_ready(bottleneck_pallas(x, params))
    assert out.shape == (N, IN_C, H, W)

    # Tight structural check vs a precision-matched (bf16-I/O, bf16-operand) ref.
    ref_m = bottleneck_ref_matched(x, _fold_bn_into_weights(params))
    err_m = float(jnp.max(jnp.abs(out - ref_m)))
    assert jnp.allclose(out, ref_m, atol=2e-2, rtol=1e-2), err_m

    # Looser semantic check vs the exact f32 module math.
    ref_f = bottleneck_ref(x, params)
    err_f = float(jnp.max(jnp.abs(out - ref_f)))
    assert jnp.allclose(out, ref_f, atol=1.5e-1, rtol=5e-2), err_f

    print("KERNEL_OK")
</pallas_src>

<mosaic_0001>
module attributes {stable_mosaic.version = 11 : i64} {
  func.func @_bottleneck_kernel(%arg0: i32, %arg1: memref<2x16x16x512xbf16, #tpu.memory_space<vmem>>, %arg2: memref<512x128xbf16, #tpu.memory_space<vmem>>, %arg3: memref<1x128xf32, #tpu.memory_space<vmem>>, %arg4: memref<3x384x128xbf16, #tpu.memory_space<vmem>>, %arg5: memref<1x128xf32, #tpu.memory_space<vmem>>, %arg6: memref<128x512xbf16, #tpu.memory_space<vmem>>, %arg7: memref<1x512xf32, #tpu.memory_space<vmem>>, %arg8: memref<2x16x16x512xbf16, #tpu.memory_space<vmem>>) attributes {dimension_semantics = [#tpu.dimension_semantics<parallel>], iteration_bounds = array<i64: 2>, scalar_prefetch = 0 : i64, scratch_operands = 0 : i64, tpu.core_type = #tpu.core_type<tc>, window_params = [{transform_indices = @transform_0, window_bounds = array<i64: 2, 16, 16, 512>}, {pipeline_mode = #tpu.pipeline_mode<synchronous>, transform_indices = @transform_1, window_bounds = array<i64: 512, 128>}, {pipeline_mode = #tpu.pipeline_mode<synchronous>, transform_indices = @transform_2, window_bounds = array<i64: 1, 128>}, {pipeline_mode = #tpu.pipeline_mode<synchronous>, transform_indices = @transform_3, window_bounds = array<i64: 3, 384, 128>}, {pipeline_mode = #tpu.pipeline_mode<synchronous>, transform_indices = @transform_4, window_bounds = array<i64: 1, 128>}, {pipeline_mode = #tpu.pipeline_mode<synchronous>, transform_indices = @transform_5, window_bounds = array<i64: 128, 512>}, {pipeline_mode = #tpu.pipeline_mode<synchronous>, transform_indices = @transform_6, window_bounds = array<i64: 1, 512>}, {transform_indices = @transform_7, window_bounds = array<i64: 2, 16, 16, 512>}]} {
    %c0 = arith.constant 0 : index
    %c0_0 = arith.constant 0 : index
    %c0_1 = arith.constant 0 : index
    %c0_2 = arith.constant 0 : index
    %0 = vector.load %arg1[%c0, %c0_0, %c0_1, %c0_2] : memref<2x16x16x512xbf16, #tpu.memory_space<vmem>>, vector<2x16x16x512xbf16>
    %1 = vector.shape_cast %0 : vector<2x16x16x512xbf16> to vector<512x512xbf16>
    %c0_3 = arith.constant 0 : index
    %c0_4 = arith.constant 0 : index
    %2 = vector.load %arg2[%c0_3, %c0_4] : memref<512x128xbf16, #tpu.memory_space<vmem>>, vector<512x128xbf16>
    %cst = arith.constant dense<0.000000e+00> : vector<512x128xf32>
    %3 = tpu.matmul %1, %2, %cst {dimension_numbers = #tpu.dot_dimension_numbers<[1], [0], [0], [1], [0, 0, 1, 1], [], []>} : vector<512x512xbf16>, vector<512x128xbf16>, vector<512x128xf32> -> vector<512x128xf32>
    %c0_5 = arith.constant 0 : index
    %c0_6 = arith.constant 0 : index
    %4 = vector.load %arg3[%c0_5, %c0_6] : memref<1x128xf32, #tpu.memory_space<vmem>>, vector<1x128xf32>
    %5 = vector.broadcast %4 : vector<1x128xf32> to vector<512x128xf32>
    %6 = arith.addf %3, %5 : vector<512x128xf32>
    %cst_7 = arith.constant 0.000000e+00 : f32
    %7 = vector.broadcast %cst_7 : f32 to vector<512x128xf32>
    %8 = arith.maximumf %6, %7 : vector<512x128xf32>
    %9 = vector.shape_cast %8 : vector<512x128xf32> to vector<2x16x16x128xf32>
    %cst_8 = arith.constant 0.000000e+00 : f32
    %10 = vector.broadcast %cst_8 : f32 to vector<2x1x16x128xf32>
    %11 = tpu.concatenate %10, %9, %10 in 1 : vector<2x1x16x128xf32>, vector<2x16x16x128xf32>, vector<2x1x16x128xf32> -> vector<2x18x16x128xf32>
    %12 = vector.shape_cast %11 : vector<2x18x16x128xf32> to vector<36x16x128xf32>
    %c1_i32 = arith.constant 1 : i32
    %13 = tpu.dynamic_rotate %12 by %c1_i32 dim 1 : vector<36x16x128xf32>, i32 -> vector<36x16x128xf32>
    %c15_i32 = arith.constant 15 : i32
    %14 = tpu.dynamic_rotate %12 by %c15_i32 dim 1 : vector<36x16x128xf32>, i32 -> vector<36x16x128xf32>
    %15 = tpu.iota {dimensions = array<i32: 1>} : vector<1x16x128xi32>
    %c0_i32 = arith.constant 0 : i32
    %16 = vector.broadcast %c0_i32 : i32 to vector<1x16x128xi32>
    %17 = arith.cmpi eq, %15, %16 : vector<1x16x128xi32>
    %cst_9 = arith.constant 0.000000e+00 : f32
    %18 = vector.shape_cast %17 : vector<1x16x128xi1> to vector<1x16x128xi1>
    %19 = vector.broadcast %18 : vector<1x16x128xi1> to vector<36x16x128xi1>
    %20 = vector.broadcast %cst_9 : f32 to vector<36x16x128xf32>
    %21 = arith.select %19, %20, %13 : vector<36x16x128xi1>, vector<36x16x128xf32>
    %c15_i32_10 = arith.constant 15 : i32
    %22 = vector.broadcast %c15_i32_10 : i32 to vector<1x16x128xi32>
    %23 = arith.cmpi eq, %15, %22 : vector<1x16x128xi32>
    %cst_11 = arith.constant 0.000000e+00 : f32
    %24 = vector.shape_cast %23 : vector<1x16x128xi1> to vector<1x16x128xi1>
    %25 = vector.broadcast %24 : vector<1x16x128xi1> to vector<36x16x128xi1>
    %26 = vector.broadcast %cst_11 : f32 to vector<36x16x128xf32>
    %27 = arith.select %25, %26, %14 : vector<36x16x128xi1>, vector<36x16x128xf32>
    %28 = arith.truncf %21 : vector<36x16x128xf32> to vector<36x16x128xbf16>
    %29 = arith.truncf %12 : vector<36x16x128xf32> to vector<36x16x128xbf16>
    %30 = arith.truncf %27 : vector<36x16x128xf32> to vector<36x16x128xbf16>
    %31 = tpu.concatenate %28, %29, %30 in 2 : vector<36x16x128xbf16>, vector<36x16x128xbf16>, vector<36x16x128xbf16> -> vector<36x16x384xbf16>
    %32 = vector.shape_cast %31 : vector<36x16x384xbf16> to vector<2x18x16x384xbf16>
    %33 = vector.extract_strided_slice %32 {offsets = [0, 0, 0, 0], sizes = [2, 16, 16, 384], strides = [1, 1, 1, 1]} : vector<2x18x16x384xbf16> to vector<2x16x16x384xbf16>
    %34 = vector.shape_cast %33 : vector<2x16x16x384xbf16> to vector<512x384xbf16>
    %c0_12 = arith.constant 0 : index
    %c0_13 = arith.constant 0 : index
    %c0_14 = arith.constant 0 : index
    %35 = vector.load %arg4[%c0_12, %c0_13, %c0_14] : memref<3x384x128xbf16, #tpu.memory_space<vmem>>, vector<1x384x128xbf16>
    %36 = vector.shape_cast %35 : vector<1x384x128xbf16> to vector<384x128xbf16>
    %cst_15 = arith.constant dense<0.000000e+00> : vector<512x128xf32>
    %37 = tpu.matmul %34, %36, %cst_15 {dimension_numbers = #tpu.dot_dimension_numbers<[1], [0], [0], [1], [0, 0, 1, 1], [], []>} : vector<512x384xbf16>, vector<384x128xbf16>, vector<512x128xf32> -> vector<512x128xf32>
    %38 = vector.extract_strided_slice %32 {offsets = [0, 1, 0, 0], sizes = [2, 16, 16, 384], strides = [1, 1, 1, 1]} : vector<2x18x16x384xbf16> to vector<2x16x16x384xbf16>
    %39 = vector.shape_cast %38 : vector<2x16x16x384xbf16> to vector<512x384xbf16>
    %c1 = arith.constant 1 : index
    %c0_16 = arith.constant 0 : index
    %c0_17 = arith.constant 0 : index
    %40 = vector.load %arg4[%c1, %c0_16, %c0_17] : memref<3x384x128xbf16, #tpu.memory_space<vmem>>, vector<1x384x128xbf16>
    %41 = vector.shape_cast %40 : vector<1x384x128xbf16> to vector<384x128xbf16>
    %cst_18 = arith.constant dense<0.000000e+00> : vector<512x128xf32>
    %42 = tpu.matmul %39, %41, %cst_18 {dimension_numbers = #tpu.dot_dimension_numbers<[1], [0], [0], [1], [0, 0, 1, 1], [], []>} : vector<512x384xbf16>, vector<384x128xbf16>, vector<512x128xf32> -> vector<512x128xf32>
    %43 = arith.addf %37, %42 : vector<512x128xf32>
    %44 = vector.extract_strided_slice %32 {offsets = [0, 2, 0, 0], sizes = [2, 16, 16, 384], strides = [1, 1, 1, 1]} : vector<2x18x16x384xbf16> to vector<2x16x16x384xbf16>
    %45 = vector.shape_cast %44 : vector<2x16x16x384xbf16> to vector<512x384xbf16>
    %c2 = arith.constant 2 : index
    %c0_19 = arith.constant 0 : index
    %c0_20 = arith.constant 0 : index
    %46 = vector.load %arg4[%c2, %c0_19, %c0_20] : memref<3x384x128xbf16, #tpu.memory_space<vmem>>, vector<1x384x128xbf16>
    %47 = vector.shape_cast %46 : vector<1x384x128xbf16> to vector<384x128xbf16>
    %cst_21 = arith.constant dense<0.000000e+00> : vector<512x128xf32>
    %48 = tpu.matmul %45, %47, %cst_21 {dimension_numbers = #tpu.dot_dimension_numbers<[1], [0], [0], [1], [0, 0, 1, 1], [], []>} : vector<512x384xbf16>, vector<384x128xbf16>, vector<512x128xf32> -> vector<512x128xf32>
    %49 = arith.addf %43, %48 : vector<512x128xf32>
    %c0_22 = arith.constant 0 : index
    %c0_23 = arith.constant 0 : index
    %50 = vector.load %arg5[%c0_22, %c0_23] : memref<1x128xf32, #tpu.memory_space<vmem>>, vector<1x128xf32>
    %51 = vector.broadcast %50 : vector<1x128xf32> to vector<512x128xf32>
    %52 = arith.addf %49, %51 : vector<512x128xf32>
    %cst_24 = arith.constant 0.000000e+00 : f32
    %53 = vector.broadcast %cst_24 : f32 to vector<512x128xf32>
    %54 = arith.maximumf %52, %53 : vector<512x128xf32>
    %55 = arith.truncf %54 : vector<512x128xf32> to vector<512x128xbf16>
    %c0_25 = arith.constant 0 : index
    %c0_26 = arith.constant 0 : index
    %56 = vector.load %arg6[%c0_25, %c0_26] : memref<128x512xbf16, #tpu.memory_space<vmem>>, vector<128x512xbf16>
    %cst_27 = arith.constant dense<0.000000e+00> : vector<512x512xf32>
    %57 = tpu.matmul %55, %56, %cst_27 {dimension_numbers = #tpu.dot_dimension_numbers<[1], [0], [0], [1], [0, 0, 1, 1], [], []>} : vector<512x128xbf16>, vector<128x512xbf16>, vector<512x512xf32> -> vector<512x512xf32>
    %c0_28 = arith.constant 0 : index
    %c0_29 = arith.constant 0 : index
    %58 = vector.load %arg7[%c0_28, %c0_29] : memref<1x512xf32, #tpu.memory_space<vmem>>, vector<1x512xf32>
    %59 = vector.broadcast %58 : vector<1x512xf32> to vector<512x512xf32>
    %60 = arith.addf %57, %59 : vector<512x512xf32>
    %c0_30 = arith.constant 0 : index
    %c0_31 = arith.constant 0 : index
    %c0_32 = arith.constant 0 : index
    %c0_33 = arith.constant 0 : index
    %61 = vector.load %arg1[%c0_30, %c0_31, %c0_32, %c0_33] : memref<2x16x16x512xbf16, #tpu.memory_space<vmem>>, vector<2x16x16x512xbf16>
    %62 = arith.extf %61 : vector<2x16x16x512xbf16> to vector<2x16x16x512xf32>
    %63 = vector.shape_cast %62 : vector<2x16x16x512xf32> to vector<512x512xf32>
    %64 = arith.addf %60, %63 : vector<512x512xf32>
    %cst_34 = arith.constant 0.000000e+00 : f32
    %65 = vector.broadcast %cst_34 : f32 to vector<512x512xf32>
    %66 = arith.maximumf %64, %65 : vector<512x512xf32>
    %67 = vector.shape_cast %66 : vector<512x512xf32> to vector<2x16x16x512xf32>
    %68 = arith.truncf %67 : vector<2x16x16x512xf32> to vector<2x16x16x512xbf16>
    %c0_35 = arith.constant 0 : index
    %c0_36 = arith.constant 0 : index
    %c0_37 = arith.constant 0 : index
    %c0_38 = arith.constant 0 : index
    %69 = vector.load %arg8[%c0_35, %c0_36, %c0_37, %c0_38] : memref<2x16x16x512xbf16, #tpu.memory_space<vmem>>, vector<2x16x16x512xbf16>
    tpu.vector_store %arg8[%c0_35, %c0_36, %c0_37, %c0_38], %68 {strides = array<i32>} : memref<2x16x16x512xbf16, #tpu.memory_space<vmem>>, vector<2x16x16x512xbf16>,
    return
  }
  func.func @transform_0(%arg0: i32) -> (i32, i32, i32, i32) {
    %c0_i32 = arith.constant 0 : i32
    %c0_i32_0 = arith.constant 0 : i32
    %c0_i32_1 = arith.constant 0 : i32
    %c0_i32_2 = arith.constant 0 : i32
    return %arg0, %c0_i32, %c0_i32_0, %c0_i32_1 : i32, i32, i32, i32
  }
  func.func @transform_1(%arg0: i32) -> (i32, i32) {
    %c0_i32 = arith.constant 0 : i32
    %c0_i32_0 = arith.constant 0 : i32
    %c0_i32_1 = arith.constant 0 : i32
    return %c0_i32, %c0_i32_0 : i32, i32
  }
  func.func @transform_2(%arg0: i32) -> (i32, i32) {
    %c0_i32 = arith.constant 0 : i32
    %c0_i32_0 = arith.constant 0 : i32
    %c0_i32_1 = arith.constant 0 : i32
    return %c0_i32, %c0_i32_0 : i32, i32
  }
  func.func @transform_3(%arg0: i32) -> (i32, i32, i32) {
    %c0_i32 = arith.constant 0 : i32
    %c0_i32_0 = arith.constant 0 : i32
    %c0_i32_1 = arith.constant 0 : i32
    %c0_i32_2 = arith.constant 0 : i32
    return %c0_i32, %c0_i32_0, %c0_i32_1 : i32, i32, i32
  }
  func.func @transform_4(%arg0: i32) -> (i32, i32) {
    %c0_i32 = arith.constant 0 : i32
    %c0_i32_0 = arith.constant 0 : i32
    %c0_i32_1 = arith.constant 0 : i32
    return %c0_i32, %c0_i32_0 : i32, i32
  }
  func.func @transform_5(%arg0: i32) -> (i32, i32) {
    %c0_i32 = arith.constant 0 : i32
    %c0_i32_0 = arith.constant 0 : i32
    %c0_i32_1 = arith.constant 0 : i32
    return %c0_i32, %c0_i32_0 : i32, i32
  }
  func.func @transform_6(%arg0: i32) -> (i32, i32) {
    %c0_i32 = arith.constant 0 : i32
    %c0_i32_0 = arith.constant 0 : i32
    %c0_i32_1 = arith.constant 0 : i32
    return %c0_i32, %c0_i32_0 : i32, i32
  }
  func.func @transform_7(%arg0: i32) -> (i32, i32, i32, i32) {
    %c0_i32 = arith.constant 0 : i32
    %c0_i32_0 = arith.constant 0 : i32
    %c0_i32_1 = arith.constant 0 : i32
    %c0_i32_2 = arith.constant 0 : i32
    return %arg0, %c0_i32, %c0_i32_0, %c0_i32_1 : i32, i32, i32, i32
  }
}

</mosaic_0001>

<llo_original>
// kernel: bottleneck_pallas_nhwc.1
$region0: #{bottleneck_pallas_nhwc.1}
  #allocation0 [shape = 'u32[]', space=smem, size = 0x4, offset = 0x4, fixed_abs, tag = 'smem constant byte address 0x4 - core index']
  #allocation1 [shape = 'u32[144,128]{1,0:T(1,128)}', space=vmem, size = 0x12000, scoped, tag = 'internal scratch']
  %s0 = inlined_call_operand.vmem [shape: bf16[4,16,16,512], index: 0, kind: input, shape index: {}]
  %s1 = inlined_call_operand.vmem [shape: bf16[512,128], index: 1, kind: input, shape index: {}]
  %s2 = inlined_call_operand.vmem [shape: f32[1,128], index: 2, kind: input, shape index: {}]
  %s3 = inlined_call_operand.vmem [shape: bf16[3,384,128], index: 3, kind: input, shape index: {}]
  %s4 = inlined_call_operand.vmem [shape: f32[1,128], index: 4, kind: input, shape index: {}]
  %s5 = inlined_call_operand.vmem [shape: bf16[128,512], index: 5, kind: input, shape index: {}]
  %s6 = inlined_call_operand.vmem [shape: f32[1,512], index: 6, kind: input, shape index: {}]
  %s7 = inlined_call_operand.hbm [shape: bf16[4,16,16,512], index: 7, kind: output, shape index: {}]
  %s8 = sld [smem:[#allocation0]]
  $region61: #{bottleneck_pallas_nhwc.1} parent=0
    _
  %s10 = ssub.s32 1, %s8
  %s11 = scalar_select 0, %s10, %s8
  $region1: #{bottleneck_pallas_nhwc.1} parent=0
    #allocation2 [shape = 'u8[1048576]{0}', space=vmem, size = 0x100000, scoped, tag = 'output window, operand 0']
    #allocation3 [shape = 's32[2]{0}', space=sflag, size = 0x8, scoped, tag = 'scoped memory for bottleneck_pallas_nhwc.1']
    %12 = vsyncpa [#allocation3], 0
    %s13 = scalar_lea.sflag [#allocation3], 1
    %14 = vsyncpa %s13, 0
    loop: start=0, step=1, limit=4
    $region2: #{bottleneck_pallas_nhwc.1} parent=1 // loop_pre_header
      _
    $region3: #{bottleneck_pallas_nhwc.1} parent=1 // loop_header
      %s16 = sphi 0, %s20
      %p17 = scmp.ge.s32.totalorder %s16, 4
      %s26 = sphi 0, %s28
      %s29 = sphi 0, %s26
      %s30 = sphi 0, %s29
      %s46 = sphi 0, %s30
      %s50 = sphi 0, %s50
      %s52 = sphi 0, %s50
      %s53 = sphi 0, %s52
      %s67 = sphi 0, %s53
      %s71 = sphi 0, %s71
      %s73 = sphi 0, %s71
      %s74 = sphi 0, %s73
      %s88 = sphi 0, %s74
      %s92 = sphi 0, %s92
      %s94 = sphi 0, %s92
      %s95 = sphi 0, %s94
      %s109 = sphi 0, %s95
      %s113 = sphi 0, %s113
      %s115 = sphi 0, %s113
      %s116 = sphi 0, %s115
      %s130 = sphi 0, %s116
      %s134 = sphi 0, %s134
      %s136 = sphi 0, %s134
      %s137 = sphi 0, %s136
      %s151 = sphi 0, %s137
      %s155 = sphi 0, %s155
      %s157 = sphi 0, %s155
      %s158 = sphi 0, %s157
      %s172 = sphi 0, %s158
      %s178 = sphi 0, %s180
      %s181 = sphi 0, %s178
      %s182 = sphi 0, %s181
      %s198 = sphi 0, %s182
    $region4: #{bottleneck_pallas_nhwc.1} parent=1 // loop_header_branch
      %19 = sbr.rel (%p17) target = $region8
    $region5: #{bottleneck_pallas_nhwc.1} parent=1 // loop_body
      %s21 = ssub.s32 %s16, 1
      %s22 = ssub.s32 %s16, 2
      %s23 = sadd.s32 %s16, 1
      %s24 = ssub.s32 %s16, %s23
      %p25 = scmp.eq.s32.totalorder %s24, 0
      %s27 = sadd.s32 %s26, 1
      %s28 = scalar_select %p25, %s26, %s27
      %p31 = pneg %p25
      %p32 = scmp.eq.s32.totalorder %s16, 1
      %p33 = por %p31, %p32
      %p34 = scmp.ne.s32.totalorder %s26, %s29
      %p35 = scmp.eq.s32.totalorder %s16, 0
      %p36 = por %p34, %p35
      %p37 = scmp.ne.s32.totalorder %s26, %s29
      %p38 = scmp.eq.s32.totalorder %s21, 1
      %p39 = por %p37, %p38
      %p40 = scmp.ne.s32.totalorder %s29, %s30
      %p41 = scmp.eq.s32.totalorder %s21, 0
      %p42 = por %p40, %p41
      %p43 = scmp.ne.s32.totalorder %s29, %s30
      %p44 = scmp.eq.s32.totalorder %s22, 1
      %p45 = por %p43, %p44
      %p47 = scmp.ne.s32.totalorder %s30, %s46
      %p48 = scmp.eq.s32.totalorder %s22, 0
      %p49 = por %p47, %p48
      %s51 = sadd.s32 %s50, 1
      %p54 = scmp.eq.s32.totalorder %s16, 1
      %p55 = scmp.ne.s32.totalorder %s50, %s52
      %p56 = scmp.eq.s32.totalorder %s16, 0
      %p57 = por %p55, %p56
      %p58 = scmp.ne.s32.totalorder %s50, %s52
      %p59 = scmp.eq.s32.totalorder %s21, 1
      %p60 = por %p58, %p59
      %p61 = scmp.ne.s32.totalorder %s52, %s53
      %p62 = scmp.eq.s32.totalorder %s21, 0
      %p63 = por %p61, %p62
      %p64 = scmp.ne.s32.totalorder %s52, %s53
      %p65 = scmp.eq.s32.totalorder %s22, 1
      %p66 = por %p64, %p65
      %p68 = scmp.ne.s32.totalorder %s53, %s67
      %p69 = scmp.eq.s32.totalorder %s22, 0
      %p70 = por %p68, %p69
      %s72 = sadd.s32 %s71, 1
      %p75 = scmp.eq.s32.totalorder %s16, 1
      %p76 = scmp.ne.s32.totalorder %s71, %s73
      %p77 = scmp.eq.s32.totalorder %s16, 0
      %p78 = por %p76, %p77
      %p79 = scmp.ne.s32.totalorder %s71, %s73
      %p80 = scmp.eq.s32.totalorder %s21, 1
      %p81 = por %p79, %p80
      %p82 = scmp.ne.s32.totalorder %s73, %s74
      %p83 = scmp.eq.s32.totalorder %s21, 0
      %p84 = por %p82, %p83
      %p85 = scmp.ne.s32.totalorder %s73, %s74
      %p86 = scmp.eq.s32.totalorder %s22, 1
      %p87 = por %p85, %p86
      %p89 = scmp.ne.s32.totalorder %s74, %s88
      %p90 = scmp.eq.s32.totalorder %s22, 0
      %p91 = por %p89, %p90
      %s93 = sadd.s32 %s92, 1
      %p96 = scmp.eq.s32.totalorder %s16, 1
      %p97 = scmp.ne.s32.totalorder %s92, %s94
      %p98 = scmp.eq.s32.totalorder %s16, 0
      %p99 = por %p97, %p98
      %p100 = scmp.ne.s32.totalorder %s92, %s94
      %p101 = scmp.eq.s32.totalorder %s21, 1
      %p102 = por %p100, %p101
      %p103 = scmp.ne.s32.totalorder %s94, %s95
      %p104 = scmp.eq.s32.totalorder %s21, 0
      %p105 = por %p103, %p104
      %p106 = scmp.ne.s32.totalorder %s94, %s95
      %p107 = scmp.eq.s32.totalorder %s22, 1
      %p108 = por %p106, %p107
      %p110 = scmp.ne.s32.totalorder %s95, %s109
      %p111 = scmp.eq.s32.totalorder %s22, 0
      %p112 = por %p110, %p111
      %s114 = sadd.s32 %s113, 1
      %p117 = scmp.eq.s32.totalorder %s16, 1
      %p118 = scmp.ne.s32.totalorder %s113, %s115
      %p119 = scmp.eq.s32.totalorder %s16, 0
      %p120 = por %p118, %p119
      %p121 = scmp.ne.s32.totalorder %s113, %s115
      %p122 = scmp.eq.s32.totalorder %s21, 1
      %p123 = por %p121, %p122
      %p124 = scmp.ne.s32.totalorder %s115, %s116
      %p125 = scmp.eq.s32.totalorder %s21, 0
      %p126 = por %p124, %p125
      %p127 = scmp.ne.s32.totalorder %s115, %s116
      %p128 = scmp.eq.s32.totalorder %s22, 1
      %p129 = por %p127, %p128
      %p131 = scmp.ne.s32.totalorder %s116, %s130
      %p132 = scmp.eq.s32.totalorder %s22, 0
      %p133 = por %p131, %p132
      %s135 = sadd.s32 %s134, 1
      %p138 = scmp.eq.s32.totalorder %s16, 1
      %p139 = scmp.ne.s32.totalorder %s134, %s136
      %p140 = scmp.eq.s32.totalorder %s16, 0
      %p141 = por %p139, %p140
      %p142 = scmp.ne.s32.totalorder %s134, %s136
      %p143 = scmp.eq.s32.totalorder %s21, 1
      %p144 = por %p142, %p143
      %p145 = scmp.ne.s32.totalorder %s136, %s137
      %p146 = scmp.eq.s32.totalorder %s21, 0
      %p147 = por %p145, %p146
      %p148 = scmp.ne.s32.totalorder %s136, %s137
      %p149 = scmp.eq.s32.totalorder %s22, 1
      %p150 = por %p148, %p149
      %p152 = scmp.ne.s32.totalorder %s137, %s151
      %p153 = scmp.eq.s32.totalorder %s22, 0
      %p154 = por %p152, %p153
      %s156 = sadd.s32 %s155, 1
      %p159 = scmp.eq.s32.totalorder %s16, 1
      %p160 = scmp.ne.s32.totalorder %s155, %s157
      %p161 = scmp.eq.s32.totalorder %s16, 0
      %p162 = por %p160, %p161
      %p163 = scmp.ne.s32.totalorder %s155, %s157
      %p164 = scmp.eq.s32.totalorder %s21, 1
      %p165 = por %p163, %p164
      %p166 = scmp.ne.s32.totalorder %s157, %s158
      %p167 = scmp.eq.s32.totalorder %s21, 0
      %p168 = por %p166, %p167
      %p169 = scmp.ne.s32.totalorder %s157, %s158
      %p170 = scmp.eq.s32.totalorder %s22, 1
      %p171 = por %p169, %p170
      %p173 = scmp.ne.s32.totalorder %s158, %s172
      %p174 = scmp.eq.s32.totalorder %s22, 0
      %p175 = por %p173, %p174
      %s176 = ssub.s32 %s16, %s23
      %p177 = scmp.eq.s32.totalorder %s176, 0
      %s179 = sadd.s32 %s178, 1
      %s180 = scalar_select %p177, %s178, %s179
      %p183 = pneg %p177
      %p184 = scmp.eq.s32.totalorder %s16, 1
      %p185 = por %p183, %p184
      %p186 = scmp.ne.s32.totalorder %s178, %s181
      %p187 = scmp.eq.s32.totalorder %s16, 0
      %p188 = por %p186, %p187
      %p189 = scmp.ne.s32.totalorder %s178, %s181
      %p190 = scmp.eq.s32.totalorder %s21, 1
      %p191 = por %p189, %p190
      %p192 = scmp.ne.s32.totalorder %s181, %s182
      %p193 = scmp.eq.s32.totalorder %s21, 0
      %p194 = por %p192, %p193
      %p195 = scmp.ne.s32.totalorder %s181, %s182
      %p196 = scmp.eq.s32.totalorder %s22, 1
      %p197 = por %p195, %p196
      %p199 = scmp.ne.s32.totalorder %s182, %s198
      %p200 = scmp.eq.s32.totalorder %s22, 0
      %p201 = por %p199, %p200
      %p202 = scmp.le.s32.totalorder 1, %s16
      %p203 = scmp.lt.s32.totalorder %s16, 3
      %p204 = pnand %p202, %p203
      %p205 = pneg %p204
      // Predicated region
      $region9: #{bottleneck_pallas_nhwc.1} parent=5 // pred_check
        _
      $region10: #{bottleneck_pallas_nhwc.1} parent=5 // pred_check_branch
        %207 = sbr.rel (%p204) target = $region12
      $region11: #{bottleneck_pallas_nhwc.1} parent=5 // pred_region
        %s208 = ssub.s32 %s16, 1
        // Predicated region
        $region13: #{bottleneck_pallas_nhwc.1} parent=11 // pred_check
          %p209 = pneg %p63
        $region14: #{bottleneck_pallas_nhwc.1} parent=11 // pred_check_branch
          %211 = sbr.rel (%p209) target = $region16
        $region15: #{bottleneck_pallas_nhwc.1} parent=11 // pred_region
          _
        $region16: #{bottleneck_pallas_nhwc.1} parent=11 // pred_fallthru
          _
        // Predicated region
        $region17: #{bottleneck_pallas_nhwc.1} parent=11 // pred_check
          %p212 = pneg %p84
        $region18: #{bottleneck_pallas_nhwc.1} parent=11 // pred_check_branch
          %214 = sbr.rel (%p212) target = $region20
        $region19: #{bottleneck_pallas_nhwc.1} parent=11 // pred_region
          _
        $region20: #{bottleneck_pallas_nhwc.1} parent=11 // pred_fallthru
          _
        // Predicated region
        $region21: #{bottleneck_pallas_nhwc.1} parent=11 // pred_check
          %p215 = pneg %p105
        $region22: #{bottleneck_pallas_nhwc.1} parent=11 // pred_check_branch
          %217 = sbr.rel (%p215) target = $region24
        $region23: #{bottleneck_pallas_nhwc.1} parent=11 // pred_region
          _
        $region24: #{bottleneck_pallas_nhwc.1} parent=11 // pred_fallthru
          _
        // Predicated region
        $region25: #{bottleneck_pallas_nhwc.1} parent=11 // pred_check
          %p218 = pneg %p126
        $region26: #{bottleneck_pallas_nhwc.1} parent=11 // pred_check_branch
          %220 = sbr.rel (%p218) target = $region28
        $region27: #{bottleneck_pallas_nhwc.1} parent=11 // pred_region
          _
        $region28: #{bottleneck_pallas_nhwc.1} parent=11 // pred_fallthru
          _
        // Predicated region
        $region29: #{bottleneck_pallas_nhwc.1} parent=11 // pred_check
          %p221 = pneg %p147
        $region30: #{bottleneck_pallas_nhwc.1} parent=11 // pred_check_branch
          %223 = sbr.rel (%p221) target = $region32
        $region31: #{bottleneck_pallas_nhwc.1} parent=11 // pred_region
          _
        $region32: #{bottleneck_pallas_nhwc.1} parent=11 // pred_fallthru
          _
        // Predicated region
        $region33: #{bottleneck_pallas_nhwc.1} parent=11 // pred_check
          %p224 = pneg %p168
        $region34: #{bottleneck_pallas_nhwc.1} parent=11 // pred_check_branch
          %226 = sbr.rel (%p224) target = $region36
        $region35: #{bottleneck_pallas_nhwc.1} parent=11 // pred_region
          _
        $region36: #{bottleneck_pallas_nhwc.1} parent=11 // pred_fallthru
          _
      $region12: #{bottleneck_pallas_nhwc.1} parent=5 // pred_fallthru
        _
      %p227 = scmp.lt.s32.totalorder %s16, 2
      // Predicated region
      $region37: #{bottleneck_pallas_nhwc.1} parent=5 // pred_check
        %p228 = pneg %p227
      $region38: #{bottleneck_pallas_nhwc.1} parent=5 // pred_check_branch
        %230 = sbr.rel (%p228) target = $region40
      $region39: #{bottleneck_pallas_nhwc.1} parent=5 // pred_region
        // Predicated region
        $region41: #{bottleneck_pallas_nhwc.1} parent=39 // pred_check
          %p231 = pneg %p36
        $region42: #{bottleneck_pallas_nhwc.1} parent=39 // pred_check_branch
          %233 = sbr.rel (%p231) target = $region44
        $region43: #{bottleneck_pallas_nhwc.1} parent=39 // pred_region
          %s234 = smul.u32 2, %s16
          %p235 = scmp.lt.s32.totalorder %s234, 3
          %s236 = scalar_select %p235, %s234, 3
          %s237 = smul.addr %s236, 128
          %s238 = smul.addr %s237, 4
          %s239 = scalar_lea.vmem %s0, %s238
          %s240 = smul.u32 2, %s16
        $region44: #{bottleneck_pallas_nhwc.1} parent=39 // pred_fallthru
          _
      $region40: #{bottleneck_pallas_nhwc.1} parent=5 // pred_fallthru
        _
      %p241 = scmp.le.s32.totalorder 1, %s16
      %p242 = scmp.lt.s32.totalorder %s16, 3
      %p243 = pnand %p241, %p242
      %p244 = pneg %p243
      // Predicated region
      $region45: #{bottleneck_pallas_nhwc.1} parent=5 // pred_check
        _
      $region46: #{bottleneck_pallas_nhwc.1} parent=5 // pred_check_branch
        %246 = sbr.rel (%p243) target = $region48
      $region47: #{bottleneck_pallas_nhwc.1} parent=5 // pred_region
        %s247 = ssub.s32 %s16, 1
        %s248 = smul.u32 2, %s21
        %p249 = scmp.lt.s32.totalorder %s248, 3
        %s250 = scalar_select %p249, %s248, 3
        %s251 = smul.addr %s250, 128
        %s252 = smul.addr %s251, 4
        %s253 = scalar_lea.vmem %s0, %s252
        %p254 = pneg %p42
        %p255 = pneg %p39
        %p256 = pneg %p63
        %p257 = pneg %p60
        %p258 = pneg %p84
        %p259 = pneg %p81
        %p260 = pneg %p105
        %p261 = pneg %p102
        %p262 = pneg %p126
        %p263 = pneg %p123
        %p264 = pneg %p147
        %p265 = pneg %p144
        %p266 = pneg %p168
        %p267 = pneg %p165
        %p268 = pneg %p194
        %p269 = pneg %p191
        %s270 = sand.u32 %s181, 1
        %s271 = scalar_lea.sflag [#allocation3], %s270
        %s272 = sand.u32 %s181, 1
        %s273 = smul.addr %s272, 1024
        %s274 = scalar_lea.vmem [#allocation2], %s273
        %s275 = smul.u32 2, %s21
        %p276 = scmp.lt.s32.totalorder %s275, 3
        %s277 = scalar_select %p276, %s275, 3
        %s278 = smul.addr %s277, 128
        %s279 = smul.addr %s278, 4
        %s280 = scalar_lea.vmem %s0, %s279
        %s281 = smul.u32 2, %s21
        %s282 = smul.u32 2, %s21
        %v284 = vld [vmem:[%s280] sm:$0xff]
        %v285 = vld [vmem:[%s280 + $0x8] sm:$0xff]
        %v286 = vld [vmem:[%s280 + $0x10] sm:$0xff]
        %v287 = vld [vmem:[%s280 + $0x18] sm:$0xff]
        %v288 = vld [vmem:[%s280 + $0x20] sm:$0xff]
        %v289 = vld [vmem:[%s280 + $0x28] sm:$0xff]
        %v290 = vld [vmem:[%s280 + $0x30] sm:$0xff]
        %v291 = vld [vmem:[%s280 + $0x38] sm:$0xff]
        %v292 = vld [vmem:[%s280 + $0x40] sm:$0xff]
        %v293 = vld [vmem:[%s280 + $0x48] sm:$0xff]
        %v294 = vld [vmem:[%s280 + $0x50] sm:$0xff]
        %v295 = vld [vmem:[%s280 + $0x58] sm:$0xff]
        %v296 = vld [vmem:[%s280 + $0x60] sm:$0xff]
        %v297 = vld [vmem:[%s280 + $0x68] sm:$0xff]
        %v298 = vld [vmem:[%s280 + $0x70] sm:$0xff]
        %v299 = vld [vmem:[%s280 + $0x78] sm:$0xff]
        %v300 = vld [vmem:[%s280 + $0x80] sm:$0xff]
        %v301 = vld [vmem:[%s280 + $0x88] sm:$0xff]
        %v302 = vld [vmem:[%s280 + $0x90] sm:$0xff]
        %v303 = vld [vmem:[%s280 + $0x98] sm:$0xff]
        %v304 = vld [vmem:[%s280 + $0xa0] sm:$0xff]
        %v305 = vld [vmem:[%s280 + $0xa8] sm:$0xff]
        %v306 = vld [vmem:[%s280 + $0xb0] sm:$0xff]
        %v307 = vld [vmem:[%s280 + $0xb8] sm:$0xff]
        %v308 = vld [vmem:[%s280 + $0xc0] sm:$0xff]
        %v309 = vld [vmem:[%s280 + $0xc8] sm:$0xff]
        %v310 = vld [vmem:[%s280 + $0xd0] sm:$0xff]
        %v311 = vld [vmem:[%s280 + $0xd8] sm:$0xff]
        %v312 = vld [vmem:[%s280 + $0xe0] sm:$0xff]
        %v313 = vld [vmem:[%s280 + $0xe8] sm:$0xff]
        %v314 = vld [vmem:[%s280 + $0xf0] sm:$0xff]
        %v315 = vld [vmem:[%s280 + $0xf8] sm:$0xff]
        %v316 = vld [vmem:[%s280 + $0x100] sm:$0xff]
        %v317 = vld [vmem:[%s280 + $0x108] sm:$0xff]
        %v318 = vld [vmem:[%s280 + $0x110] sm:$0xff]
        %v319 = vld [vmem:[%s280 + $0x118] sm:$0xff]
        %v320 = vld [vmem:[%s280 + $0x120] sm:$0xff]
        %v321 = vld [vmem:[%s280 + $0x128] sm:$0xff]
        %v322 = vld [vmem:[%s280 + $0x130] sm:$0xff]
        %v323 = vld [vmem:[%s280 + $0x138] sm:$0xff]
        %v324 = vld [vmem:[%s280 + $0x140] sm:$0xff]
        %v325 = vld [vmem:[%s280 + $0x148] sm:$0xff]
        %v326 = vld [vmem:[%s280 + $0x150] sm:$0xff]
        %v327 = vld [vmem:[%s280 + $0x158] sm:$0xff]
        %v328 = vld [vmem:[%s280 + $0x160] sm:$0xff]
        %v329 = vld [vmem:[%s280 + $0x168] sm:$0xff]
        %v330 = vld [vmem:[%s280 + $0x170] sm:$0xff]
        %v331 = vld [vmem:[%s280 + $0x178] sm:$0xff]
        %v332 = vld [vmem:[%s280 + $0x180] sm:$0xff]
        %v333 = vld [vmem:[%s280 + $0x188] sm:$0xff]
        %v334 = vld [vmem:[%s280 + $0x190] sm:$0xff]
        %v335 = vld [vmem:[%s280 + $0x198] sm:$0xff]
        %v336 = vld [vmem:[%s280 + $0x1a0] sm:$0xff]
        %v337 = vld [vmem:[%s280 + $0x1a8] sm:$0xff]
        %v338 = vld [vmem:[%s280 + $0x1b0] sm:$0xff]
        %v339 = vld [vmem:[%s280 + $0x1b8] sm:$0xff]
        %v340 = vld [vmem:[%s280 + $0x1c0] sm:$0xff]
        %v341 = vld [vmem:[%s280 + $0x1c8] sm:$0xff]
        %v342 = vld [vmem:[%s280 + $0x1d0] sm:$0xff]
        %v343 = vld [vmem:[%s280 + $0x1d8] sm:$0xff]
        %v344 = vld [vmem:[%s280 + $0x1e0] sm:$0xff]
        %v345 = vld [vmem:[%s280 + $0x1e8] sm:$0xff]
        %v346 = vld [vmem:[%s280 + $0x1f0] sm:$0xff]
        %v347 = vld [vmem:[%s280 + $0x1f8] sm:$0xff]
        %v348 = vld [vmem:[%s280 + $0x200] sm:$0xff]
        %v349 = vld [vmem:[%s280 + $0x208] sm:$0xff]
        %v350 = vld [vmem:[%s280 + $0x210] sm:$0xff]
        %v351 = vld [vmem:[%s280 + $0x218] sm:$0xff]
        %v352 = vld [vmem:[%s280 + $0x220] sm:$0xff]
        %v353 = vld [vmem:[%s280 + $0x228] sm:$0xff]
        %v354 = vld [vmem:[%s280 + $0x230] sm:$0xff]
        %v355 = vld [vmem:[%s280 + $0x238] sm:$0xff]
        %v356 = vld [vmem:[%s280 + $0x240] sm:$0xff]
        %v357 = vld [vmem:[%s280 + $0x248] sm:$0xff]
        %v358 = vld [vmem:[%s280 + $0x250] sm:$0xff]
        %v359 = vld [vmem:[%s280 + $0x258] sm:$0xff]
        %v360 = vld [vmem:[%s280 + $0x260] sm:$0xff]
        %v361 = vld [vmem:[%s280 + $0x268] sm:$0xff]
        %v362 = vld [vmem:[%s280 + $0x270] sm:$0xff]
        %v363 = vld [vmem:[%s280 + $0x278] sm:$0xff]
        %v364 = vld [vmem:[%s280 + $0x280] sm:$0xff]
        %v365 = vld [vmem:[%s280 + $0x288] sm:$0xff]
        %v366 = vld [vmem:[%s280 + $0x290] sm:$0xff]
        %v367 = vld [vmem:[%s280 + $0x298] sm:$0xff]
        %v368 = vld [vmem:[%s280 + $0x2a0] sm:$0xff]
        %v369 = vld [vmem:[%s280 + $0x2a8] sm:$0xff]
        %v370 = vld [vmem:[%s280 + $0x2b0] sm:$0xff]
        %v371 = vld [vmem:[%s280 + $0x2b8] sm:$0xff]
        %v372 = vld [vmem:[%s280 + $0x2c0] sm:$0xff]
        %v373 = vld [vmem:[%s280 + $0x2c8] sm:$0xff]
        %v374 = vld [vmem:[%s280 + $0x2d0] sm:$0xff]
        %v375 = vld [vmem:[%s280 + $0x2d8] sm:$0xff]
        %v376 = vld [vmem:[%s280 + $0x2e0] sm:$0xff]
        %v377 = vld [vmem:[%s280 + $0x2e8] sm:$0xff]
        %v378 = vld [vmem:[%s280 + $0x2f0] sm:$0xff]
        %v379 = vld [vmem:[%s280 + $0x2f8] sm:$0xff]
        %v380 = vld [vmem:[%s280 + $0x300] sm:$0xff]
        %v381 = vld [vmem:[%s280 + $0x308] sm:$0xff]
        %v382 = vld [vmem:[%s280 + $0x310] sm:$0xff]
        %v383 = vld [vmem:[%s280 + $0x318] sm:$0xff]
        %v384 = vld [vmem:[%s280 + $0x320] sm:$0xff]
        %v385 = vld [vmem:[%s280 + $0x328] sm:$0xff]
        %v386 = vld [vmem:[%s280 + $0x330] sm:$0xff]
        %v387 = vld [vmem:[%s280 + $0x338] sm:$0xff]
        %v388 = vld [vmem:[%s280 + $0x340] sm:$0xff]
        %v389 = vld [vmem:[%s280 + $0x348] sm:$0xff]
        %v390 = vld [vmem:[%s280 + $0x350] sm:$0xff]
        %v391 = vld [vmem:[%s280 + $0x358] sm:$0xff]
        %v392 = vld [vmem:[%s280 + $0x360] sm:$0xff]
        %v393 = vld [vmem:[%s280 + $0x368] sm:$0xff]
        %v394 = vld [vmem:[%s280 + $0x370] sm:$0xff]
        %v395 = vld [vmem:[%s280 + $0x378] sm:$0xff]
        %v396 = vld [vmem:[%s280 + $0x380] sm:$0xff]
        %v397 = vld [vmem:[%s280 + $0x388] sm:$0xff]
        %v398 = vld [vmem:[%s280 + $0x390] sm:$0xff]
        %v399 = vld [vmem:[%s280 + $0x398] sm:$0xff]
        %v400 = vld [vmem:[%s280 + $0x3a0] sm:$0xff]
        %v401 = vld [vmem:[%s280 + $0x3a8] sm:$0xff]
        %v402 = vld [vmem:[%s280 + $0x3b0] sm:$0xff]
        %v403 = vld [vmem:[%s280 + $0x3b8] sm:$0xff]
        %v404 = vld [vmem:[%s280 + $0x3c0] sm:$0xff]
        %v405 = vld [vmem:[%s280 + $0x3c8] sm:$0xff]
        %v406 = vld [vmem:[%s280 + $0x3d0] sm:$0xff]
        %v407 = vld [vmem:[%s280 + $0x3d8] sm:$0xff]
        %v408 = vld [vmem:[%s280 + $0x3e0] sm:$0xff]
        %v409 = vld [vmem:[%s280 + $0x3e8] sm:$0xff]
        %v410 = vld [vmem:[%s280 + $0x3f0] sm:$0xff]
        %v411 = vld [vmem:[%s280 + $0x3f8] sm:$0xff]
        %v412 = vld [vmem:[%s1] sm:$0xf]
        %v413 = vld [vmem:[%s1 + $0x4] sm:$0xf]
        %v414 = vld [vmem:[%s1 + $0x8] sm:$0xf]
        %v415 = vld [vmem:[%s1 + $0xc] sm:$0xf]
        %v416 = vld [vmem:[%s1 + $0x10] sm:$0xf]
        %v417 = vld [vmem:[%s1 + $0x14] sm:$0xf]
        %v418 = vld [vmem:[%s1 + $0x18] sm:$0xf]
        %v419 = vld [vmem:[%s1 + $0x1c] sm:$0xf]
        %v420 = vld [vmem:[%s1 + $0x20] sm:$0xf]
        %v421 = vld [vmem:[%s1 + $0x24] sm:$0xf]
        %v422 = vld [vmem:[%s1 + $0x28] sm:$0xf]
        %v423 = vld [vmem:[%s1 + $0x2c] sm:$0xf]
        %v424 = vld [vmem:[%s1 + $0x30] sm:$0xf]
        %v425 = vld [vmem:[%s1 + $0x34] sm:$0xf]
        %v426 = vld [vmem:[%s1 + $0x38] sm:$0xf]
        %v427 = vld [vmem:[%s1 + $0x3c] sm:$0xf]
        %v428 = vld [vmem:[%s1 + $0x40] sm:$0xf]
        %v429 = vld [vmem:[%s1 + $0x44] sm:$0xf]
        %v430 = vld [vmem:[%s1 + $0x48] sm:$0xf]
        %v431 = vld [vmem:[%s1 + $0x4c] sm:$0xf]
        %v432 = vld [vmem:[%s1 + $0x50] sm:$0xf]
        %v433 = vld [vmem:[%s1 + $0x54] sm:$0xf]
        %v434 = vld [vmem:[%s1 + $0x58] sm:$0xf]
        %v435 = vld [vmem:[%s1 + $0x5c] sm:$0xf]
        %v436 = vld [vmem:[%s1 + $0x60] sm:$0xf]
        %v437 = vld [vmem:[%s1 + $0x64] sm:$0xf]
        %v438 = vld [vmem:[%s1 + $0x68] sm:$0xf]
        %v439 = vld [vmem:[%s1 + $0x6c] sm:$0xf]
        %v440 = vld [vmem:[%s1 + $0x70] sm:$0xf]
        %v441 = vld [vmem:[%s1 + $0x74] sm:$0xf]
        %v442 = vld [vmem:[%s1 + $0x78] sm:$0xf]
        %v443 = vld [vmem:[%s1 + $0x7c] sm:$0xf]
        %v444 = vld [vmem:[%s1 + $0x80] sm:$0xf]
        %v445 = vld [vmem:[%s1 + $0x84] sm:$0xf]
        %v446 = vld [vmem:[%s1 + $0x88] sm:$0xf]
        %v447 = vld [vmem:[%s1 + $0x8c] sm:$0xf]
        %v448 = vld [vmem:[%s1 + $0x90] sm:$0xf]
        %v449 = vld [vmem:[%s1 + $0x94] sm:$0xf]
        %v450 = vld [vmem:[%s1 + $0x98] sm:$0xf]
        %v451 = vld [vmem:[%s1 + $0x9c] sm:$0xf]
        %v452 = vld [vmem:[%s1 + $0xa0] sm:$0xf]
        %v453 = vld [vmem:[%s1 + $0xa4] sm:$0xf]
        %v454 = vld [vmem:[%s1 + $0xa8] sm:$0xf]
        %v455 = vld [vmem:[%s1 + $0xac] sm:$0xf]
        %v456 = vld [vmem:[%s1 + $0xb0] sm:$0xf]
        %v457 = vld [vmem:[%s1 + $0xb4] sm:$0xf]
        %v458 = vld [vmem:[%s1 + $0xb8] sm:$0xf]
        %v459 = vld [vmem:[%s1 + $0xbc] sm:$0xf]
        %v460 = vld [vmem:[%s1 + $0xc0] sm:$0xf]
        %v461 = vld [vmem:[%s1 + $0xc4] sm:$0xf]
        %v462 = vld [vmem:[%s1 + $0xc8] sm:$0xf]
        %v463 = vld [vmem:[%s1 + $0xcc] sm:$0xf]
        %v464 = vld [vmem:[%s1 + $0xd0] sm:$0xf]
        %v465 = vld [vmem:[%s1 + $0xd4] sm:$0xf]
        %v466 = vld [vmem:[%s1 + $0xd8] sm:$0xf]
        %v467 = vld [vmem:[%s1 + $0xdc] sm:$0xf]
        %v468 = vld [vmem:[%s1 + $0xe0] sm:$0xf]
        %v469 = vld [vmem:[%s1 + $0xe4] sm:$0xf]
        %v470 = vld [vmem:[%s1 + $0xe8] sm:$0xf]
        %v471 = vld [vmem:[%s1 + $0xec] sm:$0xf]
        %v472 = vld [vmem:[%s1 + $0xf0] sm:$0xf]
        %v473 = vld [vmem:[%s1 + $0xf4] sm:$0xf]
        %v474 = vld [vmem:[%s1 + $0xf8] sm:$0xf]
        %v475 = vld [vmem:[%s1 + $0xfc] sm:$0xf]
        %v476 = vld [vmem:[%s2] sm:$0x1]
        %v478 = vlaneseq
        %v479 = vshrl.u32 %v478, 7
        %v480 = vsub.s32 0, %v479
        %v481 = vrot.slane %v476, %v480
        %v611 = vunpack.c.l.b16 %v284
        %v612 = vunpack.c.h.b16 %v284
        %v613 = vunpack.c.l.b16 %v285
        %v614 = vunpack.c.h.b16 %v285
        %v615 = vunpack.c.l.b16 %v286
        %v616 = vunpack.c.h.b16 %v286
        %v617 = vunpack.c.l.b16 %v287
        %v618 = vunpack.c.h.b16 %v287
        %v619 = vunpack.c.l.b16 %v288
        %v620 = vunpack.c.h.b16 %v288
        %v621 = vunpack.c.l.b16 %v289
        %v622 = vunpack.c.h.b16 %v289
        %v623 = vunpack.c.l.b16 %v290
        %v624 = vunpack.c.h.b16 %v290
        %v625 = vunpack.c.l.b16 %v291
        %v626 = vunpack.c.h.b16 %v291
        %v627 = vunpack.c.l.b16 %v292
        %v628 = vunpack.c.h.b16 %v292
        %v629 = vunpack.c.l.b16 %v293
        %v630 = vunpack.c.h.b16 %v293
        %v631 = vunpack.c.l.b16 %v294
        %v632 = vunpack.c.h.b16 %v294
        %v633 = vunpack.c.l.b16 %v295
        %v634 = vunpack.c.h.b16 %v295
        %v635 = vunpack.c.l.b16 %v296
        %v636 = vunpack.c.h.b16 %v296
        %v637 = vunpack.c.l.b16 %v297
        %v638 = vunpack.c.h.b16 %v297
        %v639 = vunpack.c.l.b16 %v298
        %v640 = vunpack.c.h.b16 %v298
        %v641 = vunpack.c.l.b16 %v299
        %v642 = vunpack.c.h.b16 %v299
        %v643 = vunpack.c.l.b16 %v300
        %v644 = vunpack.c.h.b16 %v300
        %v645 = vunpack.c.l.b16 %v301
        %v646 = vunpack.c.h.b16 %v301
        %v647 = vunpack.c.l.b16 %v302
        %v648 = vunpack.c.h.b16 %v302
        %v649 = vunpack.c.l.b16 %v303
        %v650 = vunpack.c.h.b16 %v303
        %v651 = vunpack.c.l.b16 %v304
        %v652 = vunpack.c.h.b16 %v304
        %v653 = vunpack.c.l.b16 %v305
        %v654 = vunpack.c.h.b16 %v305
        %v655 = vunpack.c.l.b16 %v306
        %v656 = vunpack.c.h.b16 %v306
        %v657 = vunpack.c.l.b16 %v307
        %v658 = vunpack.c.h.b16 %v307
        %v659 = vunpack.c.l.b16 %v308
        %v660 = vunpack.c.h.b16 %v308
        %v661 = vunpack.c.l.b16 %v309
        %v662 = vunpack.c.h.b16 %v309
        %v663 = vunpack.c.l.b16 %v310
        %v664 = vunpack.c.h.b16 %v310
        %v665 = vunpack.c.l.b16 %v311
        %v666 = vunpack.c.h.b16 %v311
        %v667 = vunpack.c.l.b16 %v312
        %v668 = vunpack.c.h.b16 %v312
        %v669 = vunpack.c.l.b16 %v313
        %v670 = vunpack.c.h.b16 %v313
        %v671 = vunpack.c.l.b16 %v314
        %v672 = vunpack.c.h.b16 %v314
        %v673 = vunpack.c.l.b16 %v315
        %v674 = vunpack.c.h.b16 %v315
        %v675 = vunpack.c.l.b16 %v316
        %v676 = vunpack.c.h.b16 %v316
        %v677 = vunpack.c.l.b16 %v317
        %v678 = vunpack.c.h.b16 %v317
        %v679 = vunpack.c.l.b16 %v318
        %v680 = vunpack.c.h.b16 %v318
        %v681 = vunpack.c.l.b16 %v319
        %v682 = vunpack.c.h.b16 %v319
        %v683 = vunpack.c.l.b16 %v320
        %v684 = vunpack.c.h.b16 %v320
        %v685 = vunpack.c.l.b16 %v321
        %v686 = vunpack.c.h.b16 %v321
        %v687 = vunpack.c.l.b16 %v322
        %v688 = vunpack.c.h.b16 %v322
        %v689 = vunpack.c.l.b16 %v323
        %v690 = vunpack.c.h.b16 %v323
        %v691 = vunpack.c.l.b16 %v324
        %v692 = vunpack.c.h.b16 %v324
        %v693 = vunpack.c.l.b16 %v325
        %v694 = vunpack.c.h.b16 %v325
        %v695 = vunpack.c.l.b16 %v326
        %v696 = vunpack.c.h.b16 %v326
        %v697 = vunpack.c.l.b16 %v327
        %v698 = vunpack.c.h.b16 %v327
        %v699 = vunpack.c.l.b16 %v328
        %v700 = vunpack.c.h.b16 %v328
        %v701 = vunpack.c.l.b16 %v329
        %v702 = vunpack.c.h.b16 %v329
        %v703 = vunpack.c.l.b16 %v330
        %v704 = vunpack.c.h.b16 %v330
        %v705 = vunpack.c.l.b16 %v331
        %v706 = vunpack.c.h.b16 %v331
        %v707 = vunpack.c.l.b16 %v332
        %v708 = vunpack.c.h.b16 %v332
        %v709 = vunpack.c.l.b16 %v333
        %v710 = vunpack.c.h.b16 %v333
        %v711 = vunpack.c.l.b16 %v334
        %v712 = vunpack.c.h.b16 %v334
        %v713 = vunpack.c.l.b16 %v335
        %v714 = vunpack.c.h.b16 %v335
        %v715 = vunpack.c.l.b16 %v336
        %v716 = vunpack.c.h.b16 %v336
        %v717 = vunpack.c.l.b16 %v337
        %v718 = vunpack.c.h.b16 %v337
        %v719 = vunpack.c.l.b16 %v338
        %v720 = vunpack.c.h.b16 %v338
        %v721 = vunpack.c.l.b16 %v339
        %v722 = vunpack.c.h.b16 %v339
        %v723 = vunpack.c.l.b16 %v340
        %v724 = vunpack.c.h.b16 %v340
        %v725 = vunpack.c.l.b16 %v341
        %v726 = vunpack.c.h.b16 %v341
        %v727 = vunpack.c.l.b16 %v342
        %v728 = vunpack.c.h.b16 %v342
        %v729 = vunpack.c.l.b16 %v343
        %v730 = vunpack.c.h.b16 %v343
        %v731 = vunpack.c.l.b16 %v344
        %v732 = vunpack.c.h.b16 %v344
        %v733 = vunpack.c.l.b16 %v345
        %v734 = vunpack.c.h.b16 %v345
        %v735 = vunpack.c.l.b16 %v346
        %v736 = vunpack.c.h.b16 %v346
        %v737 = vunpack.c.l.b16 %v347
        %v738 = vunpack.c.h.b16 %v347
        %v739 = vunpack.c.l.b16 %v348
        %v740 = vunpack.c.h.b16 %v348
        %v741 = vunpack.c.l.b16 %v349
        %v742 = vunpack.c.h.b16 %v349
        %v743 = vunpack.c.l.b16 %v350
        %v744 = vunpack.c.h.b16 %v350
        %v745 = vunpack.c.l.b16 %v351
        %v746 = vunpack.c.h.b16 %v351
        %v747 = vunpack.c.l.b16 %v352
        %v748 = vunpack.c.h.b16 %v352
        %v749 = vunpack.c.l.b16 %v353
        %v750 = vunpack.c.h.b16 %v353
        %v751 = vunpack.c.l.b16 %v354
        %v752 = vunpack.c.h.b16 %v354
        %v753 = vunpack.c.l.b16 %v355
        %v754 = vunpack.c.h.b16 %v355
        %v755 = vunpack.c.l.b16 %v356
        %v756 = vunpack.c.h.b16 %v356
        %v757 = vunpack.c.l.b16 %v357
        %v758 = vunpack.c.h.b16 %v357
        %v759 = vunpack.c.l.b16 %v358
        %v760 = vunpack.c.h.b16 %v358
        %v761 = vunpack.c.l.b16 %v359
        %v762 = vunpack.c.h.b16 %v359
        %v763 = vunpack.c.l.b16 %v360
        %v764 = vunpack.c.h.b16 %v360
        %v765 = vunpack.c.l.b16 %v361
        %v766 = vunpack.c.h.b16 %v361
        %v767 = vunpack.c.l.b16 %v362
        %v768 = vunpack.c.h.b16 %v362
        %v769 = vunpack.c.l.b16 %v363
        %v770 = vunpack.c.h.b16 %v363
        %v771 = vunpack.c.l.b16 %v364
        %v772 = vunpack.c.h.b16 %v364
        %v773 = vunpack.c.l.b16 %v365
        %v774 = vunpack.c.h.b16 %v365
        %v775 = vunpack.c.l.b16 %v366
        %v776 = vunpack.c.h.b16 %v366
        %v777 = vunpack.c.l.b16 %v367
        %v778 = vunpack.c.h.b16 %v367
        %v779 = vunpack.c.l.b16 %v368
        %v780 = vunpack.c.h.b16 %v368
        %v781 = vunpack.c.l.b16 %v369
        %v782 = vunpack.c.h.b16 %v369
        %v783 = vunpack.c.l.b16 %v370
        %v784 = vunpack.c.h.b16 %v370
        %v785 = vunpack.c.l.b16 %v371
        %v786 = vunpack.c.h.b16 %v371
        %v787 = vunpack.c.l.b16 %v372
        %v788 = vunpack.c.h.b16 %v372
        %v789 = vunpack.c.l.b16 %v373
        %v790 = vunpack.c.h.b16 %v373
        %v791 = vunpack.c.l.b16 %v374
        %v792 = vunpack.c.h.b16 %v374
        %v793 = vunpack.c.l.b16 %v375
        %v794 = vunpack.c.h.b16 %v375
        %v795 = vunpack.c.l.b16 %v376
        %v796 = vunpack.c.h.b16 %v376
        %v797 = vunpack.c.l.b16 %v377
        %v798 = vunpack.c.h.b16 %v377
        %v799 = vunpack.c.l.b16 %v378
        %v800 = vunpack.c.h.b16 %v378
        %v801 = vunpack.c.l.b16 %v379
        %v802 = vunpack.c.h.b16 %v379
        %v803 = vunpack.c.l.b16 %v380
        %v804 = vunpack.c.h.b16 %v380
        %v805 = vunpack.c.l.b16 %v381
        %v806 = vunpack.c.h.b16 %v381
        %v807 = vunpack.c.l.b16 %v382
        %v808 = vunpack.c.h.b16 %v382
        %v809 = vunpack.c.l.b16 %v383
        %v810 = vunpack.c.h.b16 %v383
        %v811 = vunpack.c.l.b16 %v384
        %v812 = vunpack.c.h.b16 %v384
        %v813 = vunpack.c.l.b16 %v385
        %v814 = vunpack.c.h.b16 %v385
        %v815 = vunpack.c.l.b16 %v386
        %v816 = vunpack.c.h.b16 %v386
        %v817 = vunpack.c.l.b16 %v387
        %v818 = vunpack.c.h.b16 %v387
        %v819 = vunpack.c.l.b16 %v388
        %v820 = vunpack.c.h.b16 %v388
        %v821 = vunpack.c.l.b16 %v389
        %v822 = vunpack.c.h.b16 %v389
        %v823 = vunpack.c.l.b16 %v390
        %v824 = vunpack.c.h.b16 %v390
        %v825 = vunpack.c.l.b16 %v391
        %v826 = vunpack.c.h.b16 %v391
        %v827 = vunpack.c.l.b16 %v392
        %v828 = vunpack.c.h.b16 %v392
        %v829 = vunpack.c.l.b16 %v393
        %v830 = vunpack.c.h.b16 %v393
        %v831 = vunpack.c.l.b16 %v394
        %v832 = vunpack.c.h.b16 %v394
        %v833 = vunpack.c.l.b16 %v395
        %v834 = vunpack.c.h.b16 %v395
        %v835 = vunpack.c.l.b16 %v396
        %v836 = vunpack.c.h.b16 %v396
        %v837 = vunpack.c.l.b16 %v397
        %v838 = vunpack.c.h.b16 %v397
        %v839 = vunpack.c.l.b16 %v398
        %v840 = vunpack.c.h.b16 %v398
        %v841 = vunpack.c.l.b16 %v399
        %v842 = vunpack.c.h.b16 %v399
        %v843 = vunpack.c.l.b16 %v400
        %v844 = vunpack.c.h.b16 %v400
        %v845 = vunpack.c.l.b16 %v401
        %v846 = vunpack.c.h.b16 %v401
        %v847 = vunpack.c.l.b16 %v402
        %v848 = vunpack.c.h.b16 %v402
        %v849 = vunpack.c.l.b16 %v403
        %v850 = vunpack.c.h.b16 %v403
        %v851 = vunpack.c.l.b16 %v404
        %v852 = vunpack.c.h.b16 %v404
        %v853 = vunpack.c.l.b16 %v405
        %v854 = vunpack.c.h.b16 %v405
        %v855 = vunpack.c.l.b16 %v406
        %v856 = vunpack.c.h.b16 %v406
        %v857 = vunpack.c.l.b16 %v407
        %v858 = vunpack.c.h.b16 %v407
        %v859 = vunpack.c.l.b16 %v408
        %v860 = vunpack.c.h.b16 %v408
        %v861 = vunpack.c.l.b16 %v409
        %v862 = vunpack.c.h.b16 %v409
        %v863 = vunpack.c.l.b16 %v410
        %v864 = vunpack.c.h.b16 %v410
        %v865 = vunpack.c.l.b16 %v411
        %v866 = vunpack.c.h.b16 %v411
        %v867 = vpack.c.b16 %v615, %v611
        %v868 = vpack.c.b16 %v616, %v612
        %v869 = vpack.c.b16 %v617, %v613
        %v870 = vpack.c.b16 %v618, %v614
        %v871 = vpack.c.b16 %v623, %v619
        %v872 = vpack.c.b16 %v624, %v620
        %v873 = vpack.c.b16 %v625, %v621
        %v874 = vpack.c.b16 %v626, %v622
        %v875 = vpack.c.b16 %v631, %v627
        %v876 = vpack.c.b16 %v632, %v628
        %v877 = vpack.c.b16 %v633, %v629
        %v878 = vpack.c.b16 %v634, %v630
        %v879 = vpack.c.b16 %v639, %v635
        %v880 = vpack.c.b16 %v640, %v636
        %v881 = vpack.c.b16 %v641, %v637
        %v882 = vpack.c.b16 %v642, %v638
        %v883 = vpack.c.b16 %v647, %v643
        %v884 = vpack.c.b16 %v648, %v644
        %v885 = vpack.c.b16 %v649, %v645
        %v886 = vpack.c.b16 %v650, %v646
        %v887 = vpack.c.b16 %v655, %v651
        %v888 = vpack.c.b16 %v656, %v652
        %v889 = vpack.c.b16 %v657, %v653
        %v890 = vpack.c.b16 %v658, %v654
        %v891 = vpack.c.b16 %v663, %v659
        %v892 = vpack.c.b16 %v664, %v660
        %v893 = vpack.c.b16 %v665, %v661
        %v894 = vpack.c.b16 %v666, %v662
        %v895 = vpack.c.b16 %v671, %v667
        %v896 = vpack.c.b16 %v672, %v668
        %v897 = vpack.c.b16 %v673, %v669
        %v898 = vpack.c.b16 %v674, %v670
        %v899 = vpack.c.b16 %v679, %v675
        %v900 = vpack.c.b16 %v680, %v676
        %v901 = vpack.c.b16 %v681, %v677
        %v902 = vpack.c.b16 %v682, %v678
        %v903 = vpack.c.b16 %v687, %v683
        %v904 = vpack.c.b16 %v688, %v684
        %v905 = vpack.c.b16 %v689, %v685
        %v906 = vpack.c.b16 %v690, %v686
        %v907 = vpack.c.b16 %v695, %v691
        %v908 = vpack.c.b16 %v696, %v692
        %v909 = vpack.c.b16 %v697, %v693
        %v910 = vpack.c.b16 %v698, %v694
        %v911 = vpack.c.b16 %v703, %v699
        %v912 = vpack.c.b16 %v704, %v700
        %v913 = vpack.c.b16 %v705, %v701
        %v914 = vpack.c.b16 %v706, %v702
        %v915 = vpack.c.b16 %v711, %v707
        %v916 = vpack.c.b16 %v712, %v708
        %v917 = vpack.c.b16 %v713, %v709
        %v918 = vpack.c.b16 %v714, %v710
        %v919 = vpack.c.b16 %v719, %v715
        %v920 = vpack.c.b16 %v720, %v716
        %v921 = vpack.c.b16 %v721, %v717
        %v922 = vpack.c.b16 %v722, %v718
        %v923 = vpack.c.b16 %v727, %v723
        %v924 = vpack.c.b16 %v728, %v724
        %v925 = vpack.c.b16 %v729, %v725
        %v926 = vpack.c.b16 %v730, %v726
        %v927 = vpack.c.b16 %v735, %v731
        %v928 = vpack.c.b16 %v736, %v732
        %v929 = vpack.c.b16 %v737, %v733
        %v930 = vpack.c.b16 %v738, %v734
        %v931 = vpack.c.b16 %v743, %v739
        %v932 = vpack.c.b16 %v744, %v740
        %v933 = vpack.c.b16 %v745, %v741
        %v934 = vpack.c.b16 %v746, %v742
        %v935 = vpack.c.b16 %v751, %v747
        %v936 = vpack.c.b16 %v752, %v748
        %v937 = vpack.c.b16 %v753, %v749
        %v938 = vpack.c.b16 %v754, %v750
        %v939 = vpack.c.b16 %v759, %v755
        %v940 = vpack.c.b16 %v760, %v756
        %v941 = vpack.c.b16 %v761, %v757
        %v942 = vpack.c.b16 %v762, %v758
        %v943 = vpack.c.b16 %v767, %v763
        %v944 = vpack.c.b16 %v768, %v764
        %v945 = vpack.c.b16 %v769, %v765
        %v946 = vpack.c.b16 %v770, %v766
        %v947 = vpack.c.b16 %v775, %v771
        %v948 = vpack.c.b16 %v776, %v772
        %v949 = vpack.c.b16 %v777, %v773
        %v950 = vpack.c.b16 %v778, %v774
        %v951 = vpack.c.b16 %v783, %v779
        %v952 = vpack.c.b16 %v784, %v780
        %v953 = vpack.c.b16 %v785, %v781
        %v954 = vpack.c.b16 %v786, %v782
        %v955 = vpack.c.b16 %v791, %v787
        %v956 = vpack.c.b16 %v792, %v788
        %v957 = vpack.c.b16 %v793, %v789
        %v958 = vpack.c.b16 %v794, %v790
        %v959 = vpack.c.b16 %v799, %v795
        %v960 = vpack.c.b16 %v800, %v796
        %v961 = vpack.c.b16 %v801, %v797
        %v962 = vpack.c.b16 %v802, %v798
        %v963 = vpack.c.b16 %v807, %v803
        %v964 = vpack.c.b16 %v808, %v804
        %v965 = vpack.c.b16 %v809, %v805
        %v966 = vpack.c.b16 %v810, %v806
        %v967 = vpack.c.b16 %v815, %v811
        %v968 = vpack.c.b16 %v816, %v812
        %v969 = vpack.c.b16 %v817, %v813
        %v970 = vpack.c.b16 %v818, %v814
        %v971 = vpack.c.b16 %v823, %v819
        %v972 = vpack.c.b16 %v824, %v820
        %v973 = vpack.c.b16 %v825, %v821
        %v974 = vpack.c.b16 %v826, %v822
        %v975 = vpack.c.b16 %v831, %v827
        %v976 = vpack.c.b16 %v832, %v828
        %v977 = vpack.c.b16 %v833, %v829
        %v978 = vpack.c.b16 %v834, %v830
        %v979 = vpack.c.b16 %v839, %v835
        %v980 = vpack.c.b16 %v840, %v836
        %v981 = vpack.c.b16 %v841, %v837
        %v982 = vpack.c.b16 %v842, %v838
        %v983 = vpack.c.b16 %v847, %v843
        %v984 = vpack.c.b16 %v848, %v844
        %v985 = vpack.c.b16 %v849, %v845
        %v986 = vpack.c.b16 %v850, %v846
        %v987 = vpack.c.b16 %v855, %v851
        %v988 = vpack.c.b16 %v856, %v852
        %v989 = vpack.c.b16 %v857, %v853
        %v990 = vpack.c.b16 %v858, %v854
        %v991 = vpack.c.b16 %v863, %v859
        %v992 = vpack.c.b16 %v864, %v860
        %v993 = vpack.c.b16 %v865, %v861
        %v994 = vpack.c.b16 %v866, %v862
        %v1187 = vunpack.c.l.b16 %v412
        %v1188 = vunpack.c.l.b16 %v413
        %v1189 = vunpack.c.l.b16 %v414
        %v1190 = vunpack.c.l.b16 %v415
        %v1191 = vunpack.c.l.b16 %v416
        %v1192 = vunpack.c.l.b16 %v417
        %v1193 = vunpack.c.l.b16 %v418
        %v1194 = vunpack.c.l.b16 %v419
        %v1195 = vunpack.c.l.b16 %v420
        %v1196 = vunpack.c.l.b16 %v421
        %v1197 = vunpack.c.l.b16 %v422
        %v1198 = vunpack.c.l.b16 %v423
        %v1199 = vunpack.c.l.b16 %v424
        %v1200 = vunpack.c.l.b16 %v425
        %v1201 = vunpack.c.l.b16 %v426
        %v1202 = vunpack.c.l.b16 %v427
        %v1203 = vunpack.c.l.b16 %v428
        %v1204 = vunpack.c.l.b16 %v429
        %v1205 = vunpack.c.l.b16 %v430
        %v1206 = vunpack.c.l.b16 %v431
        %v1207 = vunpack.c.l.b16 %v432
        %v1208 = vunpack.c.l.b16 %v433
        %v1209 = vunpack.c.l.b16 %v434
        %v1210 = vunpack.c.l.b16 %v435
        %v1211 = vunpack.c.l.b16 %v436
        %v1212 = vunpack.c.l.b16 %v437
        %v1213 = vunpack.c.l.b16 %v438
        %v1214 = vunpack.c.l.b16 %v439
        %v1215 = vunpack.c.l.b16 %v440
        %v1216 = vunpack.c.l.b16 %v441
        %v1217 = vunpack.c.l.b16 %v442
        %v1218 = vunpack.c.l.b16 %v443
        %v1219 = vunpack.c.l.b16 %v444
        %v1220 = vunpack.c.l.b16 %v445
        %v1221 = vunpack.c.l.b16 %v446
        %v1222 = vunpack.c.l.b16 %v447
        %v1223 = vunpack.c.l.b16 %v448
        %v1224 = vunpack.c.l.b16 %v449
        %v1225 = vunpack.c.l.b16 %v450
        %v1226 = vunpack.c.l.b16 %v451
        %v1227 = vunpack.c.l.b16 %v452
        %v1228 = vunpack.c.l.b16 %v453
        %v1229 = vunpack.c.l.b16 %v454
        %v1230 = vunpack.c.l.b16 %v455
        %v1231 = vunpack.c.l.b16 %v456
        %v1232 = vunpack.c.l.b16 %v457
        %v1233 = vunpack.c.l.b16 %v458
        %v1234 = vunpack.c.l.b16 %v459
        %v1235 = vunpack.c.l.b16 %v460
        %v1236 = vunpack.c.l.b16 %v461
        %v1237 = vunpack.c.l.b16 %v462
        %v1238 = vunpack.c.l.b16 %v463
        %v1239 = vunpack.c.l.b16 %v464
        %v1240 = vunpack.c.l.b16 %v465
        %v1241 = vunpack.c.l.b16 %v466
        %v1242 = vunpack.c.l.b16 %v467
        %v1243 = vunpack.c.l.b16 %v468
        %v1244 = vunpack.c.l.b16 %v469
        %v1245 = vunpack.c.l.b16 %v470
        %v1246 = vunpack.c.l.b16 %v471
        %v1247 = vunpack.c.l.b16 %v472
        %v1248 = vunpack.c.l.b16 %v473
        %v1249 = vunpack.c.l.b16 %v474
        %v1250 = vunpack.c.l.b16 %v475
        %v1251 = vpack.c.b16 %v1188, %v1187
        %v1252 = vpack.c.b16 %v1190, %v1189
        %v1253 = vpack.c.b16 %v1192, %v1191
        %v1254 = vpack.c.b16 %v1194, %v1193
        %v1255 = vpack.c.b16 %v1196, %v1195
        %v1256 = vpack.c.b16 %v1198, %v1197
        %v1257 = vpack.c.b16 %v1200, %v1199
        %v1258 = vpack.c.b16 %v1202, %v1201
        %v1259 = vpack.c.b16 %v1204, %v1203
        %v1260 = vpack.c.b16 %v1206, %v1205
        %v1261 = vpack.c.b16 %v1208, %v1207
        %v1262 = vpack.c.b16 %v1210, %v1209
        %v1263 = vpack.c.b16 %v1212, %v1211
        %v1264 = vpack.c.b16 %v1214, %v1213
        %v1265 = vpack.c.b16 %v1216, %v1215
        %v1266 = vpack.c.b16 %v1218, %v1217
        %v1267 = vpack.c.b16 %v1220, %v1219
        %v1268 = vpack.c.b16 %v1222, %v1221
        %v1269 = vpack.c.b16 %v1224, %v1223
        %v1270 = vpack.c.b16 %v1226, %v1225
        %v1271 = vpack.c.b16 %v1228, %v1227
        %v1272 = vpack.c.b16 %v1230, %v1229
        %v1273 = vpack.c.b16 %v1232, %v1231
        %v1274 = vpack.c.b16 %v1234, %v1233
        %v1275 = vpack.c.b16 %v1236, %v1235
        %v1276 = vpack.c.b16 %v1238, %v1237
        %v1277 = vpack.c.b16 %v1240, %v1239
        %v1278 = vpack.c.b16 %v1242, %v1241
        %v1279 = vpack.c.b16 %v1244, %v1243
        %v1280 = vpack.c.b16 %v1246, %v1245
        %v1281 = vpack.c.b16 %v1248, %v1247
        %v1282 = vpack.c.b16 %v1250, %v1249
        %1315 = vmatprep.subr.bf16.mxu0 0
        %1316 = vmatpush1.bf16.msra.mxu0 %v1251
        %1317 = vmatprep.subr.bf16.mxu0 0
        %1318 = vmatpush1.bf16.msra.mxu0 %v1252
        %1319 = vmatprep.subr.bf16.mxu0 0
        %1320 = vmatpush1.bf16.msra.mxu0 %v1253
        %1321 = vmatprep.subr.bf16.mxu0 0
        %1322 = vmatpush1.bf16.msra.mxu0 %v1254
        %1323 = vmatprep.subr.bf16.mxu0 0
        %1324 = vmatpush1.bf16.msra.mxu0 %v1255
        %1325 = vmatprep.subr.bf16.mxu0 0
        %1326 = vmatpush1.bf16.msra.mxu0 %v1256
        %1327 = vmatprep.subr.bf16.mxu0 0
        %1328 = vmatpush1.bf16.msra.mxu0 %v1257
        %1329 = vmatprep.subr.bf16.mxu0 0
        %1330 = vmatpush1.bf16.msra.mxu0 %v1258
        %1331 = vmatprep.subr.bf16.mxu0 0
        %1332 = vmatpush1.bf16.msra.mxu0 %v1259
        %1333 = vmatprep.subr.bf16.mxu0 0
        %1334 = vmatpush1.bf16.msra.mxu0 %v1260
        %1335 = vmatprep.subr.bf16.mxu0 0
        %1336 = vmatpush1.bf16.msra.mxu0 %v1261
        %1337 = vmatprep.subr.bf16.mxu0 0
        %1338 = vmatpush1.bf16.msra.mxu0 %v1262
        %1339 = vmatprep.subr.bf16.mxu0 0
        %1340 = vmatpush1.bf16.msra.mxu0 %v1263
        %1341 = vmatprep.subr.bf16.mxu0 0
        %1342 = vmatpush1.bf16.msra.mxu0 %v1264
        %1343 = vmatprep.subr.bf16.mxu0 0
        %1344 = vmatpush1.bf16.msra.mxu0 %v1265
        %1345 = vmatprep.subr.bf16.mxu0 0
        %1346 = vmatpush1.bf16.msra.mxu0 %v1266
        %1347 = vmatprep.mubr.bf16.mxu0 %v868
        %1348 = vmatmul.mubr.bf16.gmra.mrb[0].mxu0 %v867
        %v1349 = vpop.f32.mrb[0].mxu0
        %v1350 = vadd.f32 %v481, %v1349
        %v1351 = vpop.f32.mrb[0].mxu0
        %v1352 = vpop.f32.mrb[0].mxu0
        %v1353 = vadd.f32 %v481, %v1352
        %v1354 = vpop.f32.mrb[0].mxu0
        %1355 = vmatprep.mubr.bf16.mxu0 %v872
        %1356 = vmatmul.mubr.bf16.gmra.mrb[0].mxu0 %v871
        %v1357 = vpop.f32.mrb[0].mxu0
        %v1358 = vadd.f32 %v481, %v1357
        %v1359 = vpop.f32.mrb[0].mxu0
        %v1360 = vpop.f32.mrb[0].mxu0
        %v1361 = vadd.f32 %v481, %v1360
        %v1362 = vpop.f32.mrb[0].mxu0
        %1363 = vmatprep.mubr.bf16.mxu0 %v876
        %1364 = vmatmul.mubr.bf16.gmra.mrb[0].mxu0 %v875
        %v1365 = vpop.f32.mrb[0].mxu0
        %v1366 = vadd.f32 %v481, %v1365
        %v1367 = vpop.f32.mrb[0].mxu0
        %v1368 = vpop.f32.mrb[0].mxu0
        %v1369 = vadd.f32 %v481, %v1368
        %v1370 = vpop.f32.mrb[0].mxu0
        %1371 = vmatprep.mubr.bf16.mxu0 %v880
        %1372 = vmatmul.mubr.bf16.gmra.mrb[0].mxu0 %v879
        %v1373 = vpop.f32.mrb[0].mxu0
        %v1374 = vadd.f32 %v481, %v1373
        %v1375 = vpop.f32.mrb[0].mxu0
        %v1376 = vpop.f32.mrb[0].mxu0
        %v1377 = vadd.f32 %v481, %v1376
        %v1378 = vpop.f32.mrb[0].mxu0
        %1379 = vmatprep.mubr.bf16.mxu0 %v884
        %1380 = vmatmul.mubr.bf16.gmra.mrb[0].mxu0 %v883
        %v1381 = vpop.f32.mrb[0].mxu0
        %v1382 = vadd.f32 %v481, %v1381
        %v1383 = vpop.f32.mrb[0].mxu0
        %v1384 = vpop.f32.mrb[0].mxu0
        %v1385 = vadd.f32 %v481, %v1384
        %v1386 = vpop.f32.mrb[0].mxu0
        %1387 = vmatprep.mubr.bf16.mxu0 %v888
        %1388 = vmatmul.mubr.bf16.gmra.mrb[0].mxu0 %v887
        %v1389 = vpop.f32.mrb[0].mxu0
        %v1390 = vadd.f32 %v481, %v1389
        %v1391 = vpop.f32.mrb[0].mxu0
        %v1392 = vpop.f32.mrb[0].mxu0
        %v1393 = vadd.f32 %v481, %v1392
        %v1394 = vpop.f32.mrb[0].mxu0
        %1395 = vmatprep.mubr.bf16.mxu0 %v892
        %1396 = vmatmul.mubr.bf16.gmra.mrb[0].mxu0 %v891
        %v1397 = vpop.f32.mrb[0].mxu0
        %v1398 = vadd.f32 %v481, %v1397
        %v1399 = vpop.f32.mrb[0].mxu0
        %v1400 = vpop.f32.mrb[0].mxu0
        %v1401 = vadd.f32 %v481, %v1400
        %v1402 = vpop.f32.mrb[0].mxu0
        %1403 = vmatprep.mubr.bf16.mxu0 %v896
        %1404 = vmatmul.mubr.bf16.gmra.mrb[0].mxu0 %v895
        %v1405 = vpop.f32.mrb[0].mxu0
        %v1406 = vadd.f32 %v481, %v1405
        %v1407 = vpop.f32.mrb[0].mxu0
        %v1408 = vpop.f32.mrb[0].mxu0
        %v1409 = vadd.f32 %v481, %v1408
        %v1410 = vpop.f32.mrb[0].mxu0
        %1411 = vmatprep.mubr.bf16.mxu0 %v900
        %1412 = vmatmul.mubr.bf16.gmra.mrb[0].mxu0 %v899
        %v1413 = vpop.f32.mrb[0].mxu0
        %v1414 = vadd.f32 %v481, %v1413
        %v1415 = vpop.f32.mrb[0].mxu0
        %v1416 = vpop.f32.mrb[0].mxu0
        %v1417 = vadd.f32 %v481, %v1416
        %v1418 = vpop.f32.mrb[0].mxu0
        %1419 = vmatprep.mubr.bf16.mxu0 %v904
        %1420 = vmatmul.mubr.bf16.gmra.mrb[0].mxu0 %v903
        %v1421 = vpop.f32.mrb[0].mxu0
        %v1422 = vadd.f32 %v481, %v1421
        %v1423 = vpop.f32.mrb[0].mxu0
        %v1424 = vpop.f32.mrb[0].mxu0
        %v1425 = vadd.f32 %v481, %v1424
        %v1426 = vpop.f32.mrb[0].mxu0
        %1427 = vmatprep.mubr.bf16.mxu0 %v908
        %1428 = vmatmul.mubr.bf16.gmra.mrb[0].mxu0 %v907
        %v1429 = vpop.f32.mrb[0].mxu0
        %v1430 = vadd.f32 %v481, %v1429
        %v1431 = vpop.f32.mrb[0].mxu0
        %v1432 = vpop.f32.mrb[0].mxu0
        %v1433 = vadd.f32 %v481, %v1432
        %v1434 = vpop.f32.mrb[0].mxu0
        %1435 = vmatprep.mubr.bf16.mxu0 %v912
        %1436 = vmatmul.mubr.bf16.gmra.mrb[0].mxu0 %v911
        %v1437 = vpop.f32.mrb[0].mxu0
        %v1438 = vadd.f32 %v481, %v1437
        %v1439 = vpop.f32.mrb[0].mxu0
        %v1440 = vpop.f32.mrb[0].mxu0
        %v1441 = vadd.f32 %v481, %v1440
        %v1442 = vpop.f32.mrb[0].mxu0
        %1443 = vmatprep.mubr.bf16.mxu0 %v916
        %1444 = vmatmul.mubr.bf16.gmra.mrb[0].mxu0 %v915
        %v1445 = vpop.f32.mrb[0].mxu0
        %v1446 = vadd.f32 %v481, %v1445
        %v1447 = vpop.f32.mrb[0].mxu0
        %v1448 = vpop.f32.mrb[0].mxu0
        %v1449 = vadd.f32 %v481, %v1448
        %v1450 = vpop.f32.mrb[0].mxu0
        %1451 = vmatprep.mubr.bf16.mxu0 %v920
        %1452 = vmatmul.mubr.bf16.gmra.mrb[0].mxu0 %v919
        %v1453 = vpop.f32.mrb[0].mxu0
        %v1454 = vadd.f32 %v481, %v1453
        %v1455 = vpop.f32.mrb[0].mxu0
        %v1456 = vpop.f32.mrb[0].mxu0
        %v1457 = vadd.f32 %v481, %v1456
        %v1458 = vpop.f32.mrb[0].mxu0
        %1459 = vmatprep.mubr.bf16.mxu0 %v924
        %1460 = vmatmul.mubr.bf16.gmra.mrb[0].mxu0 %v923
        %v1461 = vpop.f32.mrb[0].mxu0
        %v1462 = vadd.f32 %v481, %v1461
        %v1463 = vpop.f32.mrb[0].mxu0
        %v1464 = vpop.f32.mrb[0].mxu0
        %v1465 = vadd.f32 %v481, %v1464
        %v1466 = vpop.f32.mrb[0].mxu0
        %1467 = vmatprep.mubr.bf16.mxu0 %v928
        %1468 = vmatmul.mubr.bf16.gmra.mrb[0].mxu0 %v927
        %v1469 = vpop.f32.mrb[0].mxu0
        %v1470 = vadd.f32 %v481, %v1469
        %v1471 = vpop.f32.mrb[0].mxu0
        %v1472 = vpop.f32.mrb[0].mxu0
        %v1473 = vadd.f32 %v481, %v1472
        %v1474 = vpop.f32.mrb[0].mxu0
        %1475 = vmatprep.mubr.bf16.mxu0 %v932
        %1476 = vmatmul.mubr.bf16.gmra.mrb[0].mxu0 %v931
        %v1477 = vpop.f32.mrb[0].mxu0
        %v1478 = vadd.f32 %v481, %v1477
        %v1479 = vpop.f32.mrb[0].mxu0
        %v1480 = vpop.f32.mrb[0].mxu0
        %v1481 = vadd.f32 %v481, %v1480
        %v1482 = vpop.f32.mrb[0].mxu0
        %1483 = vmatprep.mubr.bf16.mxu0 %v936
        %1484 = vmatmul.mubr.bf16.gmra.mrb[0].mxu0 %v935
        %v1485 = vpop.f32.mrb[0].mxu0
        %v1486 = vadd.f32 %v481, %v1485
        %v1487 = vpop.f32.mrb[0].mxu0
        %v1488 = vpop.f32.mrb[0].mxu0
        %v1489 = vadd.f32 %v481, %v1488
        %v1490 = vpop.f32.mrb[0].mxu0
        %1491 = vmatprep.mubr.bf16.mxu0 %v940
        %1492 = vmatmul.mubr.bf16.gmra.mrb[0].mxu0 %v939
        %v1493 = vpop.f32.mrb[0].mxu0
        %v1494 = vadd.f32 %v481, %v1493
        %v1495 = vpop.f32.mrb[0].mxu0
        %v1496 = vpop.f32.mrb[0].mxu0
        %v1497 = vadd.f32 %v481, %v1496
        %v1498 = vpop.f32.mrb[0].mxu0
        %1499 = vmatprep.mubr.bf16.mxu0 %v944
        %1500 = vmatmul.mubr.bf16.gmra.mrb[0].mxu0 %v943
        %v1501 = vpop.f32.mrb[0].mxu0
        %v1502 = vadd.f32 %v481, %v1501
        %v1503 = vpop.f32.mrb[0].mxu0
        %v1504 = vpop.f32.mrb[0].mxu0
        %v1505 = vadd.f32 %v481, %v1504
        %v1506 = vpop.f32.mrb[0].mxu0
        %1507 = vmatprep.mubr.bf16.mxu0 %v948
        %1508 = vmatmul.mubr.bf16.gmra.mrb[0].mxu0 %v947
        %v1509 = vpop.f32.mrb[0].mxu0
        %v1510 = vadd.f32 %v481, %v1509
        %v1511 = vpop.f32.mrb[0].mxu0
        %v1512 = vpop.f32.mrb[0].mxu0
        %v1513 = vadd.f32 %v481, %v1512
        %v1514 = vpop.f32.mrb[0].mxu0
        %1515 = vmatprep.mubr.bf16.mxu0 %v952
        %1516 = vmatmul.mubr.bf16.gmra.mrb[0].mxu0 %v951
        %v1517 = vpop.f32.mrb[0].mxu0
        %v1518 = vadd.f32 %v481, %v1517
        %v1519 = vpop.f32.mrb[0].mxu0
        %v1520 = vpop.f32.mrb[0].mxu0
        %v1521 = vadd.f32 %v481, %v1520
        %v1522 = vpop.f32.mrb[0].mxu0
        %1523 = vmatprep.mubr.bf16.mxu0 %v956
        %1524 = vmatmul.mubr.bf16.gmra.mrb[0].mxu0 %v955
        %v1525 = vpop.f32.mrb[0].mxu0
        %v1526 = vadd.f32 %v481, %v1525
        %v1527 = vpop.f32.mrb[0].mxu0
        %v1528 = vpop.f32.mrb[0].mxu0
        %v1529 = vadd.f32 %v481, %v1528
        %v1530 = vpop.f32.mrb[0].mxu0
        %1531 = vmatprep.mubr.bf16.mxu0 %v960
        %1532 = vmatmul.mubr.bf16.gmra.mrb[0].mxu0 %v959
        %v1533 = vpop.f32.mrb[0].mxu0
        %v1534 = vadd.f32 %v481, %v1533
        %v1535 = vpop.f32.mrb[0].mxu0
        %v1536 = vpop.f32.mrb[0].mxu0
        %v1537 = vadd.f32 %v481, %v1536
        %v1538 = vpop.f32.mrb[0].mxu0
        %1539 = vmatprep.mubr.bf16.mxu0 %v964
        %1540 = vmatmul.mubr.bf16.gmra.mrb[0].mxu0 %v963
        %v1541 = vpop.f32.mrb[0].mxu0
        %v1542 = vadd.f32 %v481, %v1541
        %v1543 = vpop.f32.mrb[0].mxu0
        %v1544 = vpop.f32.mrb[0].mxu0
        %v1545 = vadd.f32 %v481, %v1544
        %v1546 = vpop.f32.mrb[0].mxu0
        %1547 = vmatprep.mubr.bf16.mxu0 %v968
        %1548 = vmatmul.mubr.bf16.gmra.mrb[0].mxu0 %v967
        %v1549 = vpop.f32.mrb[0].mxu0
        %v1550 = vadd.f32 %v481, %v1549
        %v1551 = vpop.f32.mrb[0].mxu0
        %v1552 = vpop.f32.mrb[0].mxu0
        %v1553 = vadd.f32 %v481, %v1552
        %v1554 = vpop.f32.mrb[0].mxu0
        %1555 = vmatprep.mubr.bf16.mxu0 %v972
        %1556 = vmatmul.mubr.bf16.gmra.mrb[0].mxu0 %v971
        %v1557 = vpop.f32.mrb[0].mxu0
        %v1558 = vadd.f32 %v481, %v1557
        %v1559 = vpop.f32.mrb[0].mxu0
        %v1560 = vpop.f32.mrb[0].mxu0
        %v1561 = vadd.f32 %v481, %v1560
        %v1562 = vpop.f32.mrb[0].mxu0
        %1563 = vmatprep.mubr.bf16.mxu0 %v976
        %1564 = vmatmul.mubr.bf16.gmra.mrb[0].mxu0 %v975
        %v1565 = vpop.f32.mrb[0].mxu0
        %v1566 = vadd.f32 %v481, %v1565
        %v1567 = vpop.f32.mrb[0].mxu0
        %v1568 = vpop.f32.mrb[0].mxu0
        %v1569 = vadd.f32 %v481, %v1568
        %v1570 = vpop.f32.mrb[0].mxu0
        %1571 = vmatprep.mubr.bf16.mxu0 %v980
        %1572 = vmatmul.mubr.bf16.gmra.mrb[0].mxu0 %v979
        %v1573 = vpop.f32.mrb[0].mxu0
        %v1574 = vadd.f32 %v481, %v1573
        %v1575 = vpop.f32.mrb[0].mxu0
        %v1576 = vpop.f32.mrb[0].mxu0
        %v1577 = vadd.f32 %v481, %v1576
        %v1578 = vpop.f32.mrb[0].mxu0
        %1579 = vmatprep.mubr.bf16.mxu0 %v984
        %1580 = vmatmul.mubr.bf16.gmra.mrb[0].mxu0 %v983
        %v1581 = vpop.f32.mrb[0].mxu0
        %v1582 = vadd.f32 %v481, %v1581
        %v1583 = vpop.f32.mrb[0].mxu0
        %v1584 = vpop.f32.mrb[0].mxu0
        %v1585 = vadd.f32 %v481, %v1584
        %v1586 = vpop.f32.mrb[0].mxu0
        %1587 = vmatprep.mubr.bf16.mxu0 %v988
        %1588 = vmatmul.mubr.bf16.gmra.mrb[0].mxu0 %v987
        %v1589 = vpop.f32.mrb[0].mxu0
        %v1590 = vadd.f32 %v481, %v1589
        %v1591 = vpop.f32.mrb[0].mxu0
        %v1592 = vpop.f32.mrb[0].mxu0
        %v1593 = vadd.f32 %v481, %v1592
        %v1594 = vpop.f32.mrb[0].mxu0
        %1595 = vmatprep.mubr.bf16.mxu0 %v992
        %1596 = vmatmul.mubr.bf16.gmra.mrb[0].mxu0 %v991
        %v1597 = vpop.f32.mrb[0].mxu0
        %v1598 = vadd.f32 %v481, %v1597
        %v1599 = vpop.f32.mrb[0].mxu0
        %v1600 = vpop.f32.mrb[0].mxu0
        %v1601 = vadd.f32 %v481, %v1600
        %v1602 = vpop.f32.mrb[0].mxu0
        %1603 = vdwg.mxu0
        %1604 = vmatprep.subr.bf16.mxu0 0
        %1605 = vmatpush1.bf16.msra.mxu0 %v1267
        %1606 = vmatprep.subr.bf16.mxu0 0
        %1607 = vmatpush1.bf16.msra.mxu0 %v1268
        %1608 = vmatprep.subr.bf16.mxu0 0
        %1609 = vmatpush1.bf16.msra.mxu0 %v1269
        %1610 = vmatprep.subr.bf16.mxu0 0
        %1611 = vmatpush1.bf16.msra.mxu0 %v1270
        %1612 = vmatprep.subr.bf16.mxu0 0
        %1613 = vmatpush1.bf16.msra.mxu0 %v1271
        %1614 = vmatprep.subr.bf16.mxu0 0
        %1615 = vmatpush1.bf16.msra.mxu0 %v1272
        %1616 = vmatprep.subr.bf16.mxu0 0
        %1617 = vmatpush1.bf16.msra.mxu0 %v1273
        %1618 = vmatprep.subr.bf16.mxu0 0
        %1619 = vmatpush1.bf16.msra.mxu0 %v1274
        %1620 = vmatprep.subr.bf16.mxu0 0
        %1621 = vmatpush1.bf16.msra.mxu0 %v1275
        %1622 = vmatprep.subr.bf16.mxu0 0
        %1623 = vmatpush1.bf16.msra.mxu0 %v1276
        %1624 = vmatprep.subr.bf16.mxu0 0
        %1625 = vmatpush1.bf16.msra.mxu0 %v1277
        %1626 = vmatprep.subr.bf16.mxu0 0
        %1627 = vmatpush1.bf16.msra.mxu0 %v1278
        %1628 = vmatprep.subr.bf16.mxu0 0
        %1629 = vmatpush1.bf16.msra.mxu0 %v1279
        %1630 = vmatprep.subr.bf16.mxu0 0
        %1631 = vmatpush1.bf16.msra.mxu0 %v1280
        %1632 = vmatprep.subr.bf16.mxu0 0
        %1633 = vmatpush1.bf16.msra.mxu0 %v1281
        %1634 = vmatprep.subr.bf16.mxu0 0
        %1635 = vmatpush1.bf16.msra.mxu0 %v1282
        %1636 = vmatprep.mubr.bf16.mxu0 %v870
        %1637 = vmatmul.mubr.bf16.gmra.mrb[0].mxu0 %v869
        %v1638 = vpop.f32.mrb[0].mxu0
        %v1639 = vadd.f32 %v1350, %v1638
        %v1640 = vpop.f32.mrb[0].mxu0
        %v1641 = vpop.f32.mrb[0].mxu0
        %v1642 = vadd.f32 %v1353, %v1641
        %v1643 = vpop.f32.mrb[0].mxu0
        %1644 = vmatprep.mubr.bf16.mxu0 %v874
        %1645 = vmatmul.mubr.bf16.gmra.mrb[0].mxu0 %v873
        %v1646 = vpop.f32.mrb[0].mxu0
        %v1647 = vadd.f32 %v1358, %v1646
        %v1648 = vpop.f32.mrb[0].mxu0
        %v1649 = vpop.f32.mrb[0].mxu0
        %v1650 = vadd.f32 %v1361, %v1649
        %v1651 = vpop.f32.mrb[0].mxu0
        %1652 = vmatprep.mubr.bf16.mxu0 %v878
        %1653 = vmatmul.mubr.bf16.gmra.mrb[0].mxu0 %v877
        %v1654 = vpop.f32.mrb[0].mxu0
        %v1655 = vadd.f32 %v1366, %v1654
        %v1656 = vpop.f32.mrb[0].mxu0
        %v1657 = vpop.f32.mrb[0].mxu0
        %v1658 = vadd.f32 %v1369, %v1657
        %v1659 = vpop.f32.mrb[0].mxu0
        %1660 = vmatprep.mubr.bf16.mxu0 %v882
        %1661 = vmatmul.mubr.bf16.gmra.mrb[0].mxu0 %v881
        %v1662 = vpop.f32.mrb[0].mxu0
        %v1663 = vadd.f32 %v1374, %v1662
        %v1664 = vpop.f32.mrb[0].mxu0
        %v1665 = vpop.f32.mrb[0].mxu0
        %v1666 = vadd.f32 %v1377, %v1665
        %v1667 = vpop.f32.mrb[0].mxu0
        %1668 = vmatprep.mubr.bf16.mxu0 %v886
        %1669 = vmatmul.mubr.bf16.gmra.mrb[0].mxu0 %v885
        %v1670 = vpop.f32.mrb[0].mxu0
        %v1671 = vadd.f32 %v1382, %v1670
        %v1672 = vpop.f32.mrb[0].mxu0
        %v1673 = vpop.f32.mrb[0].mxu0
        %v1674 = vadd.f32 %v1385, %v1673
        %v1675 = vpop.f32.mrb[0].mxu0
        %1676 = vmatprep.mubr.bf16.mxu0 %v890
        %1677 = vmatmul.mubr.bf16.gmra.mrb[0].mxu0 %v889
        %v1678 = vpop.f32.mrb[0].mxu0
        %v1679 = vadd.f32 %v1390, %v1678
        %v1680 = vpop.f32.mrb[0].mxu0
        %v1681 = vpop.f32.mrb[0].mxu0
        %v1682 = vadd.f32 %v1393, %v1681
        %v1683 = vpop.f32.mrb[0].mxu0
        %1684 = vmatprep.mubr.bf16.mxu0 %v894
        %1685 = vmatmul.mubr.bf16.gmra.mrb[0].mxu0 %v893
        %v1686 = vpop.f32.mrb[0].mxu0
        %v1687 = vadd.f32 %v1398, %v1686
        %v1688 = vpop.f32.mrb[0].mxu0
        %v1689 = vpop.f32.mrb[0].mxu0
        %v1690 = vadd.f32 %v1401, %v1689
        %v1691 = vpop.f32.mrb[0].mxu0
        %1692 = vmatprep.mubr.bf16.mxu0 %v898
        %1693 = vmatmul.mubr.bf16.gmra.mrb[0].mxu0 %v897
        %v1694 = vpop.f32.mrb[0].mxu0
        %v1695 = vadd.f32 %v1406, %v1694
        %v1696 = vpop.f32.mrb[0].mxu0
        %v1697 = vpop.f32.mrb[0].mxu0
        %v1698 = vadd.f32 %v1409, %v1697
        %v1699 = vpop.f32.mrb[0].mxu0
        %1700 = vmatprep.mubr.bf16.mxu0 %v902
        %1701 = vmatmul.mubr.bf16.gmra.mrb[0].mxu0 %v901
        %v1702 = vpop.f32.mrb[0].mxu0
        %v1703 = vadd.f32 %v1414, %v1702
        %v1704 = vpop.f32.mrb[0].mxu0
        %v1705 = vpop.f32.mrb[0].mxu0
        %v1706 = vadd.f32 %v1417, %v1705
        %v1707 = vpop.f32.mrb[0].mxu0
        %1708 = vmatprep.mubr.bf16.mxu0 %v906
        %1709 = vmatmul.mubr.bf16.gmra.mrb[0].mxu0 %v905
        %v1710 = vpop.f32.mrb[0].mxu0
        %v1711 = vadd.f32 %v1422, %v1710
        %v1712 = vpop.f32.mrb[0].mxu0
        %v1713 = vpop.f32.mrb[0].mxu0
        %v1714 = vadd.f32 %v1425, %v1713
        %v1715 = vpop.f32.mrb[0].mxu0
        %1716 = vmatprep.mubr.bf16.mxu0 %v910
        %1717 = vmatmul.mubr.bf16.gmra.mrb[0].mxu0 %v909
        %v1718 = vpop.f32.mrb[0].mxu0
        %v1719 = vadd.f32 %v1430, %v1718
        %v1720 = vpop.f32.mrb[0].mxu0
        %v1721 = vpop.f32.mrb[0].mxu0
        %v1722 = vadd.f32 %v1433, %v1721
        %v1723 = vpop.f32.mrb[0].mxu0
        %1724 = vmatprep.mubr.bf16.mxu0 %v914
        %1725 = vmatmul.mubr.bf16.gmra.mrb[0].mxu0 %v913
        %v1726 = vpop.f32.mrb[0].mxu0
        %v1727 = vadd.f32 %v1438, %v1726
        %v1728 = vpop.f32.mrb[0].mxu0
        %v1729 = vpop.f32.mrb[0].mxu0
        %v1730 = vadd.f32 %v1441, %v1729
        %v1731 = vpop.f32.mrb[0].mxu0
        %1732 = vmatprep.mubr.bf16.mxu0 %v918
        %1733 = vmatmul.mubr.bf16.gmra.mrb[0].mxu0 %v917
        %v1734 = vpop.f32.mrb[0].mxu0
        %v1735 = vadd.f32 %v1446, %v1734
        %v1736 = vpop.f32.mrb[0].mxu0
        %v1737 = vpop.f32.mrb[0].mxu0
        %v1738 = vadd.f32 %v1449, %v1737
        %v1739 = vpop.f32.mrb[0].mxu0
        %1740 = vmatprep.mubr.bf16.mxu0 %v922
        %1741 = vmatmul.mubr.bf16.gmra.mrb[0].mxu0 %v921
        %v1742 = vpop.f32.mrb[0].mxu0
        %v1743 = vadd.f32 %v1454, %v1742
        %v1744 = vpop.f32.mrb[0].mxu0
        %v1745 = vpop.f32.mrb[0].mxu0
        %v1746 = vadd.f32 %v1457, %v1745
        %v1747 = vpop.f32.mrb[0].mxu0
        %1748 = vmatprep.mubr.bf16.mxu0 %v926
        %1749 = vmatmul.mubr.bf16.gmra.mrb[0].mxu0 %v925
        %v1750 = vpop.f32.mrb[0].mxu0
        %v1751 = vadd.f32 %v1462, %v1750
        %v1752 = vpop.f32.mrb[0].mxu0
        %v1753 = vpop.f32.mrb[0].mxu0
        %v1754 = vadd.f32 %v1465, %v1753
        %v1755 = vpop.f32.mrb[0].mxu0
        %1756 = vmatprep.mubr.bf16.mxu0 %v930
        %1757 = vmatmul.mubr.bf16.gmra.mrb[0].mxu0 %v929
        %v1758 = vpop.f32.mrb[0].mxu0
        %v1759 = vadd.f32 %v1470, %v1758
        %v1760 = vpop.f32.mrb[0].mxu0
        %v1761 = vpop.f32.mrb[0].mxu0
        %v1762 = vadd.f32 %v1473, %v1761
        %v1763 = vpop.f32.mrb[0].mxu0
        %1764 = vmatprep.mubr.bf16.mxu0 %v934
        %1765 = vmatmul.mubr.bf16.gmra.mrb[0].mxu0 %v933
        %v1766 = vpop.f32.mrb[0].mxu0
        %v1767 = vadd.f32 %v1478, %v1766
        %v1768 = vpop.f32.mrb[0].mxu0
        %v1769 = vpop.f32.mrb[0].mxu0
        %v1770 = vadd.f32 %v1481, %v1769
        %v1771 = vpop.f32.mrb[0].mxu0
        %1772 = vmatprep.mubr.bf16.mxu0 %v938
        %1773 = vmatmul.mubr.bf16.gmra.mrb[0].mxu0 %v937
        %v1774 = vpop.f32.mrb[0].mxu0
        %v1775 = vadd.f32 %v1486, %v1774
        %v1776 = vpop.f32.mrb[0].mxu0
        %v1777 = vpop.f32.mrb[0].mxu0
        %v1778 = vadd.f32 %v1489, %v1777
        %v1779 = vpop.f32.mrb[0].mxu0
        %1780 = vmatprep.mubr.bf16.mxu0 %v942
        %1781 = vmatmul.mubr.bf16.gmra.mrb[0].mxu0 %v941
        %v1782 = vpop.f32.mrb[0].mxu0
        %v1783 = vadd.f32 %v1494, %v1782
        %v1784 = vpop.f32.mrb[0].mxu0
        %v1785 = vpop.f32.mrb[0].mxu0
        %v1786 = vadd.f32 %v1497, %v1785
        %v1787 = vpop.f32.mrb[0].mxu0
        %1788 = vmatprep.mubr.bf16.mxu0 %v946
        %1789 = vmatmul.mubr.bf16.gmra.mrb[0].mxu0 %v945
        %v1790 = vpop.f32.mrb[0].mxu0
        %v1791 = vadd.f32 %v1502, %v1790
        %v1792 = vpop.f32.mrb[0].mxu0
        %v1793 = vpop.f32.mrb[0].mxu0
        %v1794 = vadd.f32 %v1505, %v1793
        %v1795 = vpop.f32.mrb[0].mxu0
        %1796 = vmatprep.mubr.bf16.mxu0 %v950
        %1797 = vmatmul.mubr.bf16.gmra.mrb[0].mxu0 %v949
        %v1798 = vpop.f32.mrb[0].mxu0
        %v1799 = vadd.f32 %v1510, %v1798
        %v1800 = vpop.f32.mrb[0].mxu0
        %v1801 = vpop.f32.mrb[0].mxu0
        %v1802 = vadd.f32 %v1513, %v1801
        %v1803 = vpop.f32.mrb[0].mxu0
        %1804 = vmatprep.mubr.bf16.mxu0 %v954
        %1805 = vmatmul.mubr.bf16.gmra.mrb[0].mxu0 %v953
        %v1806 = vpop.f32.mrb[0].mxu0
        %v1807 = vadd.f32 %v1518, %v1806
        %v1808 = vpop.f32.mrb[0].mxu0
        %v1809 = vpop.f32.mrb[0].mxu0
        %v1810 = vadd.f32 %v1521, %v1809
        %v1811 = vpop.f32.mrb[0].mxu0
        %1812 = vmatprep.mubr.bf16.mxu0 %v958
        %1813 = vmatmul.mubr.bf16.gmra.mrb[0].mxu0 %v957
        %v1814 = vpop.f32.mrb[0].mxu0
        %v1815 = vadd.f32 %v1526, %v1814
        %v1816 = vpop.f32.mrb[0].mxu0
        %v1817 = vpop.f32.mrb[0].mxu0
        %v1818 = vadd.f32 %v1529, %v1817
        %v1819 = vpop.f32.mrb[0].mxu0
        %1820 = vmatprep.mubr.bf16.mxu0 %v962
        %1821 = vmatmul.mubr.bf16.gmra.mrb[0].mxu0 %v961
        %v1822 = vpop.f32.mrb[0].mxu0
        %v1823 = vadd.f32 %v1534, %v1822
        %v1824 = vpop.f32.mrb[0].mxu0
        %v1825 = vpop.f32.mrb[0].mxu0
        %v1826 = vadd.f32 %v1537, %v1825
        %v1827 = vpop.f32.mrb[0].mxu0
        %1828 = vmatprep.mubr.bf16.mxu0 %v966
        %1829 = vmatmul.mubr.bf16.gmra.mrb[0].mxu0 %v965
        %v1830 = vpop.f32.mrb[0].mxu0
        %v1831 = vadd.f32 %v1542, %v1830
        %v1832 = vpop.f32.mrb[0].mxu0
        %v1833 = vpop.f32.mrb[0].mxu0
        %v1834 = vadd.f32 %v1545, %v1833
        %v1835 = vpop.f32.mrb[0].mxu0
        %1836 = vmatprep.mubr.bf16.mxu0 %v970
        %1837 = vmatmul.mubr.bf16.gmra.mrb[0].mxu0 %v969
        %v1838 = vpop.f32.mrb[0].mxu0
        %v1839 = vadd.f32 %v1550, %v1838
        %v1840 = vpop.f32.mrb[0].mxu0
        %v1841 = vpop.f32.mrb[0].mxu0
        %v1842 = vadd.f32 %v1553, %v1841
        %v1843 = vpop.f32.mrb[0].mxu0
        %1844 = vmatprep.mubr.bf16.mxu0 %v974
        %1845 = vmatmul.mubr.bf16.gmra.mrb[0].mxu0 %v973
        %v1846 = vpop.f32.mrb[0].mxu0
        %v1847 = vadd.f32 %v1558, %v1846
        %v1848 = vpop.f32.mrb[0].mxu0
        %v1849 = vpop.f32.mrb[0].mxu0
        %v1850 = vadd.f32 %v1561, %v1849
        %v1851 = vpop.f32.mrb[0].mxu0
        %1852 = vmatprep.mubr.bf16.mxu0 %v978
        %1853 = vmatmul.mubr.bf16.gmra.mrb[0].mxu0 %v977
        %v1854 = vpop.f32.mrb[0].mxu0
        %v1855 = vadd.f32 %v1566, %v1854
        %v1856 = vpop.f32.mrb[0].mxu0
        %v1857 = vpop.f32.mrb[0].mxu0
        %v1858 = vadd.f32 %v1569, %v1857
        %v1859 = vpop.f32.mrb[0].mxu0
        %1860 = vmatprep.mubr.bf16.mxu0 %v982
        %1861 = vmatmul.mubr.bf16.gmra.mrb[0].mxu0 %v981
        %v1862 = vpop.f32.mrb[0].mxu0
        %v1863 = vadd.f32 %v1574, %v1862
        %v1864 = vpop.f32.mrb[0].mxu0
        %v1865 = vpop.f32.mrb[0].mxu0
        %v1866 = vadd.f32 %v1577, %v1865
        %v1867 = vpop.f32.mrb[0].mxu0
        %1868 = vmatprep.mubr.bf16.mxu0 %v986
        %1869 = vmatmul.mubr.bf16.gmra.mrb[0].mxu0 %v985
        %v1870 = vpop.f32.mrb[0].mxu0
        %v1871 = vadd.f32 %v1582, %v1870
        %v1872 = vpop.f32.mrb[0].mxu0
        %v1873 = vpop.f32.mrb[0].mxu0
        %v1874 = vadd.f32 %v1585, %v1873
        %v1875 = vpop.f32.mrb[0].mxu0
        %1876 = vmatprep.mubr.bf16.mxu0 %v990
        %1877 = vmatmul.mubr.bf16.gmra.mrb[0].mxu0 %v989
        %v1878 = vpop.f32.mrb[0].mxu0
        %v1879 = vadd.f32 %v1590, %v1878
        %v1880 = vpop.f32.mrb[0].mxu0
        %v1881 = vpop.f32.mrb[0].mxu0
        %v1882 = vadd.f32 %v1593, %v1881
        %v1883 = vpop.f32.mrb[0].mxu0
        %1884 = vmatprep.mubr.bf16.mxu0 %v994
        %1885 = vmatmul.mubr.bf16.gmra.mrb[0].mxu0 %v993
        %v1886 = vpop.f32.mrb[0].mxu0
        %v1887 = vadd.f32 %v1598, %v1886
        %v1888 = vpop.f32.mrb[0].mxu0
        %v1889 = vpop.f32.mrb[0].mxu0
        %v1890 = vadd.f32 %v1601, %v1889
        %v1891 = vpop.f32.mrb[0].mxu0
        %1892 = vdwg.mxu0
        %v1893 = vmax.f32 %v1639, 0.0
        %v1894 = vmax.f32 %v1642, 0.0
        %v1895 = vmax.f32 %v1647, 0.0
        %v1896 = vmax.f32 %v1650, 0.0
        %v1897 = vmax.f32 %v1655, 0.0
        %v1898 = vmax.f32 %v1658, 0.0
        %v1899 = vmax.f32 %v1663, 0.0
        %v1900 = vmax.f32 %v1666, 0.0
        %v1901 = vmax.f32 %v1671, 0.0
        %v1902 = vmax.f32 %v1674, 0.0
        %v1903 = vmax.f32 %v1679, 0.0
        %v1904 = vmax.f32 %v1682, 0.0
        %v1905 = vmax.f32 %v1687, 0.0
        %v1906 = vmax.f32 %v1690, 0.0
        %v1907 = vmax.f32 %v1695, 0.0
        %v1908 = vmax.f32 %v1698, 0.0
        %v1909 = vmax.f32 %v1703, 0.0
        %v1910 = vmax.f32 %v1706, 0.0
        %v1911 = vmax.f32 %v1711, 0.0
        %v1912 = vmax.f32 %v1714, 0.0
        %v1913 = vmax.f32 %v1719, 0.0
        %v1914 = vmax.f32 %v1722, 0.0
        %v1915 = vmax.f32 %v1727, 0.0
        %v1916 = vmax.f32 %v1730, 0.0
        %v1917 = vmax.f32 %v1735, 0.0
        %v1918 = vmax.f32 %v1738, 0.0
        %v1919 = vmax.f32 %v1743, 0.0
        %v1920 = vmax.f32 %v1746, 0.0
        %v1921 = vmax.f32 %v1751, 0.0
        %v1922 = vmax.f32 %v1754, 0.0
        %v1923 = vmax.f32 %v1759, 0.0
        %v1924 = vmax.f32 %v1762, 0.0
        %v1925 = vmax.f32 %v1767, 0.0
        %v1926 = vmax.f32 %v1770, 0.0
        %v1927 = vmax.f32 %v1775, 0.0
        %v1928 = vmax.f32 %v1778, 0.0
        %v1929 = vmax.f32 %v1783, 0.0
        %v1930 = vmax.f32 %v1786, 0.0
        %v1931 = vmax.f32 %v1791, 0.0
        %v1932 = vmax.f32 %v1794, 0.0
        %v1933 = vmax.f32 %v1799, 0.0
        %v1934 = vmax.f32 %v1802, 0.0
        %v1935 = vmax.f32 %v1807, 0.0
        %v1936 = vmax.f32 %v1810, 0.0
        %v1937 = vmax.f32 %v1815, 0.0
        %v1938 = vmax.f32 %v1818, 0.0
        %v1939 = vmax.f32 %v1823, 0.0
        %v1940 = vmax.f32 %v1826, 0.0
        %v1941 = vmax.f32 %v1831, 0.0
        %v1942 = vmax.f32 %v1834, 0.0
        %v1943 = vmax.f32 %v1839, 0.0
        %v1944 = vmax.f32 %v1842, 0.0
        %v1945 = vmax.f32 %v1847, 0.0
        %v1946 = vmax.f32 %v1850, 0.0
        %v1947 = vmax.f32 %v1855, 0.0
        %v1948 = vmax.f32 %v1858, 0.0
        %v1949 = vmax.f32 %v1863, 0.0
        %v1950 = vmax.f32 %v1866, 0.0
        %v1951 = vmax.f32 %v1871, 0.0
        %v1952 = vmax.f32 %v1874, 0.0
        %v1953 = vmax.f32 %v1879, 0.0
        %v1954 = vmax.f32 %v1882, 0.0
        %v1955 = vmax.f32 %v1887, 0.0
        %v1956 = vmax.f32 %v1890, 0.0
        %v1957 = vrot.slane %v1893, 7
        %v1958 = vrot.slane %v1895, 7
        %v1959 = vrot.slane %v1897, 7
        %v1960 = vrot.slane %v1899, 7
        %v1961 = vrot.slane %v1901, 7
        %v1962 = vrot.slane %v1903, 7
        %v1963 = vrot.slane %v1905, 7
        %v1964 = vrot.slane %v1907, 7
        %v1965 = vrot.slane %v1909, 7
        %v1966 = vrot.slane %v1911, 7
        %v1967 = vrot.slane %v1913, 7
        %v1968 = vrot.slane %v1915, 7
        %v1969 = vrot.slane %v1917, 7
        %v1970 = vrot.slane %v1919, 7
        %v1971 = vrot.slane %v1921, 7
        %v1972 = vrot.slane %v1923, 7
        %v1973 = vrot.slane %v1925, 7
        %v1974 = vrot.slane %v1927, 7
        %v1975 = vrot.slane %v1929, 7
        %v1976 = vrot.slane %v1931, 7
        %v1977 = vrot.slane %v1933, 7
        %v1978 = vrot.slane %v1935, 7
        %v1979 = vrot.slane %v1937, 7
        %v1980 = vrot.slane %v1939, 7
        %v1981 = vrot.slane %v1941, 7
        %v1982 = vrot.slane %v1943, 7
        %v1983 = vrot.slane %v1945, 7
        %v1984 = vrot.slane %v1947, 7
        %v1985 = vrot.slane %v1949, 7
        %v1986 = vrot.slane %v1951, 7
        %v1987 = vrot.slane %v1953, 7
        %v1988 = vrot.slane %v1955, 7
        %v1989 = vrot.slane %v1894, 7
        %v1990 = vrot.slane %v1896, 7
        %v1991 = vrot.slane %v1898, 7
        %v1992 = vrot.slane %v1900, 7
        %v1993 = vrot.slane %v1902, 7
        %v1994 = vrot.slane %v1904, 7
        %v1995 = vrot.slane %v1906, 7
        %v1996 = vrot.slane %v1908, 7
        %v1997 = vrot.slane %v1910, 7
        %v1998 = vrot.slane %v1912, 7
        %v1999 = vrot.slane %v1914, 7
        %v2000 = vrot.slane %v1916, 7
        %v2001 = vrot.slane %v1918, 7
        %v2002 = vrot.slane %v1920, 7
        %v2003 = vrot.slane %v1922, 7
        %v2004 = vrot.slane %v1924, 7
        %v2005 = vrot.slane %v1926, 7
        %v2006 = vrot.slane %v1928, 7
        %v2007 = vrot.slane %v1930, 7
        %v2008 = vrot.slane %v1932, 7
        %v2009 = vrot.slane %v1934, 7
        %v2010 = vrot.slane %v1936, 7
        %v2011 = vrot.slane %v1938, 7
        %v2012 = vrot.slane %v1940, 7
        %v2013 = vrot.slane %v1942, 7
        %v2014 = vrot.slane %v1944, 7
        %v2015 = vrot.slane %v1946, 7
        %v2016 = vrot.slane %v1948, 7
        %v2017 = vrot.slane %v1950, 7
        %v2018 = vrot.slane %v1952, 7
        %v2019 = vrot.slane %v1954, 7
        %v2020 = vrot.slane %v1956, 7
        %v2021 = vlaneseq
        %v2022 = vshrl.u32 %v2021, 7
        %vm2023 = vcmp.lt.s32.totalorder %v2022, 1
        %v2024 = vsel %vm2023, %v1957, %v1989
        %v2025 = vsel %vm2023, %v1958, %v1990
        %v2026 = vsel %vm2023, %v1959, %v1991
        %v2027 = vsel %vm2023, %v1960, %v1992
        %v2028 = vsel %vm2023, %v1961, %v1993
        %v2029 = vsel %vm2023, %v1962, %v1994
        %v2030 = vsel %vm2023, %v1963, %v1995
        %v2031 = vsel %vm2023, %v1964, %v1996
        %v2032 = vsel %vm2023, %v1965, %v1997
        %v2033 = vsel %vm2023, %v1966, %v1998
        %v2034 = vsel %vm2023, %v1967, %v1999
        %v2035 = vsel %vm2023, %v1968, %v2000
        %v2036 = vsel %vm2023, %v1969, %v2001
        %v2037 = vsel %vm2023, %v1970, %v2002
        %v2038 = vsel %vm2023, %v1971, %v2003
        %v2039 = vsel %vm2023, %v1972, %v2004
        %v2040 = vsel %vm2023, %v1973, %v2005
        %v2041 = vsel %vm2023, %v1974, %v2006
        %v2042 = vsel %vm2023, %v1975, %v2007
        %v2043 = vsel %vm2023, %v1976, %v2008
        %v2044 = vsel %vm2023, %v1977, %v2009
        %v2045 = vsel %vm2023, %v1978, %v2010
        %v2046 = vsel %vm2023, %v1979, %v2011
        %v2047 = vsel %vm2023, %v1980, %v2012
        %v2048 = vsel %vm2023, %v1981, %v2013
        %v2049 = vsel %vm2023, %v1982, %v2014
        %v2050 = vsel %vm2023, %v1983, %v2015
        %v2051 = vsel %vm2023, %v1984, %v2016
        %v2052 = vsel %vm2023, %v1985, %v2017
        %v2053 = vsel %vm2023, %v1986, %v2018
        %v2054 = vsel %vm2023, %v1987, %v2019
        %v2055 = vsel %vm2023, %v1988, %v2020
        %v2056 = vsel %vm2023, %v1989, %v1957
        %v2057 = vsel %vm2023, %v1990, %v1958
        %v2058 = vsel %vm2023, %v1991, %v1959
        %v2059 = vsel %vm2023, %v1992, %v1960
        %v2060 = vsel %vm2023, %v1993, %v1961
        %v2061 = vsel %vm2023, %v1994, %v1962
        %v2062 = vsel %vm2023, %v1995, %v1963
        %v2063 = vsel %vm2023, %v1996, %v1964
        %v2064 = vsel %vm2023, %v1997, %v1965
        %v2065 = vsel %vm2023, %v1998, %v1966
        %v2066 = vsel %vm2023, %v1999, %v1967
        %v2067 = vsel %vm2023, %v2000, %v1968
        %v2068 = vsel %vm2023, %v2001, %v1969
        %v2069 = vsel %vm2023, %v2002, %v1970
        %v2070 = vsel %vm2023, %v2003, %v1971
        %v2071 = vsel %vm2023, %v2004, %v1972
        %v2072 = vsel %vm2023, %v2005, %v1973
        %v2073 = vsel %vm2023, %v2006, %v1974
        %v2074 = vsel %vm2023, %v2007, %v1975
        %v2075 = vsel %vm2023, %v2008, %v1976
        %v2076 = vsel %vm2023, %v2009, %v1977
        %v2077 = vsel %vm2023, %v2010, %v1978
        %v2078 = vsel %vm2023, %v2011, %v1979
        %v2079 = vsel %vm2023, %v2012, %v1980
        %v2080 = vsel %vm2023, %v2013, %v1981
        %v2081 = vsel %vm2023, %v2014, %v1982
        %v2082 = vsel %vm2023, %v2015, %v1983
        %v2083 = vsel %vm2023, %v2016, %v1984
        %v2084 = vsel %vm2023, %v2017, %v1985
        %v2085 = vsel %vm2023, %v2018, %v1986
        %v2086 = vsel %vm2023, %v2019, %v1987
        %v2087 = vsel %vm2023, %v2020, %v1988
        %v2088 = vrot.slane %v1893, 1
        %v2089 = vrot.slane %v1895, 1
        %v2090 = vrot.slane %v1897, 1
        %v2091 = vrot.slane %v1899, 1
        %v2092 = vrot.slane %v1901, 1
        %v2093 = vrot.slane %v1903, 1
        %v2094 = vrot.slane %v1905, 1
        %v2095 = vrot.slane %v1907, 1
        %v2096 = vrot.slane %v1909, 1
        %v2097 = vrot.slane %v1911, 1
        %v2098 = vrot.slane %v1913, 1
        %v2099 = vrot.slane %v1915, 1
        %v2100 = vrot.slane %v1917, 1
        %v2101 = vrot.slane %v1919, 1
        %v2102 = vrot.slane %v1921, 1
        %v2103 = vrot.slane %v1923, 1
        %v2104 = vrot.slane %v1925, 1
        %v2105 = vrot.slane %v1927, 1
        %v2106 = vrot.slane %v1929, 1
        %v2107 = vrot.slane %v1931, 1
        %v2108 = vrot.slane %v1933, 1
        %v2109 = vrot.slane %v1935, 1
        %v2110 = vrot.slane %v1937, 1
        %v2111 = vrot.slane %v1939, 1
        %v2112 = vrot.slane %v1941, 1
        %v2113 = vrot.slane %v1943, 1
        %v2114 = vrot.slane %v1945, 1
        %v2115 = vrot.slane %v1947, 1
        %v2116 = vrot.slane %v1949, 1
        %v2117 = vrot.slane %v1951, 1
        %v2118 = vrot.slane %v1953, 1
        %v2119 = vrot.slane %v1955, 1
        %v2120 = vrot.slane %v1894, 1
        %v2121 = vrot.slane %v1896, 1
        %v2122 = vrot.slane %v1898, 1
        %v2123 = vrot.slane %v1900, 1
        %v2124 = vrot.slane %v1902, 1
        %v2125 = vrot.slane %v1904, 1
        %v2126 = vrot.slane %v1906, 1
        %v2127 = vrot.slane %v1908, 1
        %v2128 = vrot.slane %v1910, 1
        %v2129 = vrot.slane %v1912, 1
        %v2130 = vrot.slane %v1914, 1
        %v2131 = vrot.slane %v1916, 1
        %v2132 = vrot.slane %v1918, 1
        %v2133 = vrot.slane %v1920, 1
        %v2134 = vrot.slane %v1922, 1
        %v2135 = vrot.slane %v1924, 1
        %v2136 = vrot.slane %v1926, 1
        %v2137 = vrot.slane %v1928, 1
        %v2138 = vrot.slane %v1930, 1
        %v2139 = vrot.slane %v1932, 1
        %v2140 = vrot.slane %v1934, 1
        %v2141 = vrot.slane %v1936, 1
        %v2142 = vrot.slane %v1938, 1
        %v2143 = vrot.slane %v1940, 1
        %v2144 = vrot.slane %v1942, 1
        %v2145 = vrot.slane %v1944, 1
        %v2146 = vrot.slane %v1946, 1
        %v2147 = vrot.slane %v1948, 1
        %v2148 = vrot.slane %v1950, 1
        %v2149 = vrot.slane %v1952, 1
        %v2150 = vrot.slane %v1954, 1
        %v2151 = vrot.slane %v1956, 1
        %vm2152 = vcmp.lt.s32.totalorder %v2022, 7
        %v2153 = vsel %vm2152, %v2088, %v2120
        %v2154 = vsel %vm2152, %v2089, %v2121
        %v2155 = vsel %vm2152, %v2090, %v2122
        %v2156 = vsel %vm2152, %v2091, %v2123
        %v2157 = vsel %vm2152, %v2092, %v2124
        %v2158 = vsel %vm2152, %v2093, %v2125
        %v2159 = vsel %vm2152, %v2094, %v2126
        %v2160 = vsel %vm2152, %v2095, %v2127
        %v2161 = vsel %vm2152, %v2096, %v2128
        %v2162 = vsel %vm2152, %v2097, %v2129
        %v2163 = vsel %vm2152, %v2098, %v2130
        %v2164 = vsel %vm2152, %v2099, %v2131
        %v2165 = vsel %vm2152, %v2100, %v2132
        %v2166 = vsel %vm2152, %v2101, %v2133
        %v2167 = vsel %vm2152, %v2102, %v2134
        %v2168 = vsel %vm2152, %v2103, %v2135
        %v2169 = vsel %vm2152, %v2104, %v2136
        %v2170 = vsel %vm2152, %v2105, %v2137
        %v2171 = vsel %vm2152, %v2106, %v2138
        %v2172 = vsel %vm2152, %v2107, %v2139
        %v2173 = vsel %vm2152, %v2108, %v2140
        %v2174 = vsel %vm2152, %v2109, %v2141
        %v2175 = vsel %vm2152, %v2110, %v2142
        %v2176 = vsel %vm2152, %v2111, %v2143
        %v2177 = vsel %vm2152, %v2112, %v2144
        %v2178 = vsel %vm2152, %v2113, %v2145
        %v2179 = vsel %vm2152, %v2114, %v2146
        %v2180 = vsel %vm2152, %v2115, %v2147
        %v2181 = vsel %vm2152, %v2116, %v2148
        %v2182 = vsel %vm2152, %v2117, %v2149
        %v2183 = vsel %vm2152, %v2118, %v2150
        %v2184 = vsel %vm2152, %v2119, %v2151
        %v2185 = vsel %vm2152, %v2120, %v2088
        %v2186 = vsel %vm2152, %v2121, %v2089
        %v2187 = vsel %vm2152, %v2122, %v2090
        %v2188 = vsel %vm2152, %v2123, %v2091
        %v2189 = vsel %vm2152, %v2124, %v2092
        %v2190 = vsel %vm2152, %v2125, %v2093
        %v2191 = vsel %vm2152, %v2126, %v2094
        %v2192 = vsel %vm2152, %v2127, %v2095
        %v2193 = vsel %vm2152, %v2128, %v2096
        %v2194 = vsel %vm2152, %v2129, %v2097
        %v2195 = vsel %vm2152, %v2130, %v2098
        %v2196 = vsel %vm2152, %v2131, %v2099
        %v2197 = vsel %vm2152, %v2132, %v2100
        %v2198 = vsel %vm2152, %v2133, %v2101
        %v2199 = vsel %vm2152, %v2134, %v2102
        %v2200 = vsel %vm2152, %v2135, %v2103
        %v2201 = vsel %vm2152, %v2136, %v2104
        %v2202 = vsel %vm2152, %v2137, %v2105
        %v2203 = vsel %vm2152, %v2138, %v2106
        %v2204 = vsel %vm2152, %v2139, %v2107
        %v2205 = vsel %vm2152, %v2140, %v2108
        %v2206 = vsel %vm2152, %v2141, %v2109
        %v2207 = vsel %vm2152, %v2142, %v2110
        %v2208 = vsel %vm2152, %v2143, %v2111
        %v2209 = vsel %vm2152, %v2144, %v2112
        %v2210 = vsel %vm2152, %v2145, %v2113
        %v2211 = vsel %vm2152, %v2146, %v2114
        %v2212 = vsel %vm2152, %v2147, %v2115
        %v2213 = vsel %vm2152, %v2148, %v2116
        %v2214 = vsel %vm2152, %v2149, %v2117
        %v2215 = vsel %vm2152, %v2150, %v2118
        %v2216 = vsel %vm2152, %v2151, %v2119
        %v2217 = vadd.s32 %v2022, 8
        %vm2218 = vcmp.eq.s32.totalorder %v2022, 0
        %vm2219 = vcmp.eq.s32.totalorder %v2217, 0
        %v2220 = vsel %vm2218, 1, 0
        %v2221 = vsel %vm2219, 1, 0
        %vm2222 = vcmp.eq.s32.totalorder %v2220, 1
        %vm2223 = vcmp.eq.s32.totalorder %v2221, 1
        %v2224 = vsel %vm2222, 0.0, 0.0
        %v2225 = vsel %vm2223, 0.0, 0.0
        %v2226 = vsel %vm2222, 0.0, %v2056
        %v2227 = vsel %vm2223, 0.0, %v2024
        %v2228 = vsel %vm2222, 0.0, %v2057
        %v2229 = vsel %vm2223, 0.0, %v2025
        %v2230 = vsel %vm2222, 0.0, %v2058
        %v2231 = vsel %vm2223, 0.0, %v2026
        %v2232 = vsel %vm2222, 0.0, %v2059
        %v2233 = vsel %vm2223, 0.0, %v2027
        %v2234 = vsel %vm2222, 0.0, %v2060
        %v2235 = vsel %vm2223, 0.0, %v2028
        %v2236 = vsel %vm2222, 0.0, %v2061
        %v2237 = vsel %vm2223, 0.0, %v2029
        %v2238 = vsel %vm2222, 0.0, %v2062
        %v2239 = vsel %vm2223, 0.0, %v2030
        %v2240 = vsel %vm2222, 0.0, %v2063
        %v2241 = vsel %vm2223, 0.0, %v2031
        %v2242 = vsel %vm2222, 0.0, %v2064
        %v2243 = vsel %vm2223, 0.0, %v2032
        %v2244 = vsel %vm2222, 0.0, %v2065
        %v2245 = vsel %vm2223, 0.0, %v2033
        %v2246 = vsel %vm2222, 0.0, %v2066
        %v2247 = vsel %vm2223, 0.0, %v2034
        %v2248 = vsel %vm2222, 0.0, %v2067
        %v2249 = vsel %vm2223, 0.0, %v2035
        %v2250 = vsel %vm2222, 0.0, %v2068
        %v2251 = vsel %vm2223, 0.0, %v2036
        %v2252 = vsel %vm2222, 0.0, %v2069
        %v2253 = vsel %vm2223, 0.0, %v2037
        %v2254 = vsel %vm2222, 0.0, %v2070
        %v2255 = vsel %vm2223, 0.0, %v2038
        %v2256 = vsel %vm2222, 0.0, %v2071
        %v2257 = vsel %vm2223, 0.0, %v2039
        %v2258 = vsel %vm2222, 0.0, %v2072
        %v2259 = vsel %vm2223, 0.0, %v2040
        %v2260 = vsel %vm2222, 0.0, %v2073
        %v2261 = vsel %vm2223, 0.0, %v2041
        %v2262 = vsel %vm2222, 0.0, %v2074
        %v2263 = vsel %vm2223, 0.0, %v2042
        %v2264 = vsel %vm2222, 0.0, %v2075
        %v2265 = vsel %vm2223, 0.0, %v2043
        %v2266 = vsel %vm2222, 0.0, %v2076
        %v2267 = vsel %vm2223, 0.0, %v2044
        %v2268 = vsel %vm2222, 0.0, %v2077
        %v2269 = vsel %vm2223, 0.0, %v2045
        %v2270 = vsel %vm2222, 0.0, %v2078
        %v2271 = vsel %vm2223, 0.0, %v2046
        %v2272 = vsel %vm2222, 0.0, %v2079
        %v2273 = vsel %vm2223, 0.0, %v2047
        %v2274 = vsel %vm2222, 0.0, %v2080
        %v2275 = vsel %vm2223, 0.0, %v2048
        %v2276 = vsel %vm2222, 0.0, %v2081
        %v2277 = vsel %vm2223, 0.0, %v2049
        %v2278 = vsel %vm2222, 0.0, %v2082
        %v2279 = vsel %vm2223, 0.0, %v2050
        %v2280 = vsel %vm2222, 0.0, %v2083
        %v2281 = vsel %vm2223, 0.0, %v2051
        %v2282 = vsel %vm2222, 0.0, %v2084
        %v2283 = vsel %vm2223, 0.0, %v2052
        %v2284 = vsel %vm2222, 0.0, %v2085
        %v2285 = vsel %vm2223, 0.0, %v2053
        %v2286 = vsel %vm2222, 0.0, %v2086
        %v2287 = vsel %vm2223, 0.0, %v2054
        %v2288 = vsel %vm2222, 0.0, %v2087
        %v2289 = vsel %vm2223, 0.0, %v2055
        %vm2290 = vcmp.eq.s32.totalorder %v2022, 15
        %vm2291 = vcmp.eq.s32.totalorder %v2217, 15
        %v2292 = vsel %vm2290, 1, 0
        %v2293 = vsel %vm2291, 1, 0
        %vm2294 = vcmp.eq.s32.totalorder %v2292, 1
        %vm2295 = vcmp.eq.s32.totalorder %v2293, 1
        %v2296 = vsel %vm2294, 0.0, 0.0
        %v2297 = vsel %vm2295, 0.0, 0.0
        %v2298 = vsel %vm2294, 0.0, %v2153
        %v2299 = vsel %vm2295, 0.0, %v2185
        %v2300 = vsel %vm2294, 0.0, %v2154
        %v2301 = vsel %vm2295, 0.0, %v2186
        %v2302 = vsel %vm2294, 0.0, %v2155
        %v2303 = vsel %vm2295, 0.0, %v2187
        %v2304 = vsel %vm2294, 0.0, %v2156
        %v2305 = vsel %vm2295, 0.0, %v2188
        %v2306 = vsel %vm2294, 0.0, %v2157
        %v2307 = vsel %vm2295, 0.0, %v2189
        %v2308 = vsel %vm2294, 0.0, %v2158
        %v2309 = vsel %vm2295, 0.0, %v2190
        %v2310 = vsel %vm2294, 0.0, %v2159
        %v2311 = vsel %vm2295, 0.0, %v2191
        %v2312 = vsel %vm2294, 0.0, %v2160
        %v2313 = vsel %vm2295, 0.0, %v2192
        %v2314 = vsel %vm2294, 0.0, %v2161
        %v2315 = vsel %vm2295, 0.0, %v2193
        %v2316 = vsel %vm2294, 0.0, %v2162
        %v2317 = vsel %vm2295, 0.0, %v2194
        %v2318 = vsel %vm2294, 0.0, %v2163
        %v2319 = vsel %vm2295, 0.0, %v2195
        %v2320 = vsel %vm2294, 0.0, %v2164
        %v2321 = vsel %vm2295, 0.0, %v2196
        %v2322 = vsel %vm2294, 0.0, %v2165
        %v2323 = vsel %vm2295, 0.0, %v2197
        %v2324 = vsel %vm2294, 0.0, %v2166
        %v2325 = vsel %vm2295, 0.0, %v2198
        %v2326 = vsel %vm2294, 0.0, %v2167
        %v2327 = vsel %vm2295, 0.0, %v2199
        %v2328 = vsel %vm2294, 0.0, %v2168
        %v2329 = vsel %vm2295, 0.0, %v2200
        %v2330 = vsel %vm2294, 0.0, %v2169
        %v2331 = vsel %vm2295, 0.0, %v2201
        %v2332 = vsel %vm2294, 0.0, %v2170
        %v2333 = vsel %vm2295, 0.0, %v2202
        %v2334 = vsel %vm2294, 0.0, %v2171
        %v2335 = vsel %vm2295, 0.0, %v2203
        %v2336 = vsel %vm2294, 0.0, %v2172
        %v2337 = vsel %vm2295, 0.0, %v2204
        %v2338 = vsel %vm2294, 0.0, %v2173
        %v2339 = vsel %vm2295, 0.0, %v2205
        %v2340 = vsel %vm2294, 0.0, %v2174
        %v2341 = vsel %vm2295, 0.0, %v2206
        %v2342 = vsel %vm2294, 0.0, %v2175
        %v2343 = vsel %vm2295, 0.0, %v2207
        %v2344 = vsel %vm2294, 0.0, %v2176
        %v2345 = vsel %vm2295, 0.0, %v2208
        %v2346 = vsel %vm2294, 0.0, %v2177
        %v2347 = vsel %vm2295, 0.0, %v2209
        %v2348 = vsel %vm2294, 0.0, %v2178
        %v2349 = vsel %vm2295, 0.0, %v2210
        %v2350 = vsel %vm2294, 0.0, %v2179
        %v2351 = vsel %vm2295, 0.0, %v2211
        %v2352 = vsel %vm2294, 0.0, %v2180
        %v2353 = vsel %vm2295, 0.0, %v2212
        %v2354 = vsel %vm2294, 0.0, %v2181
        %v2355 = vsel %vm2295, 0.0, %v2213
        %v2356 = vsel %vm2294, 0.0, %v2182
        %v2357 = vsel %vm2295, 0.0, %v2214
        %v2358 = vsel %vm2294, 0.0, %v2183
        %v2359 = vsel %vm2295, 0.0, %v2215
        %v2360 = vsel %vm2294, 0.0, %v2184
        %v2361 = vsel %vm2295, 0.0, %v2216
        %v2362 = vpack.c.bf16 %v2225, %v2224
        %v2363 = vpack.c.bf16 %v2227, %v2226
        %v2364 = vpack.c.bf16 %v2229, %v2228
        %v2365 = vpack.c.bf16 %v2231, %v2230
        %v2366 = vpack.c.bf16 %v2233, %v2232
        %v2367 = vpack.c.bf16 %v2235, %v2234
        %v2368 = vpack.c.bf16 %v2237, %v2236
        %v2369 = vpack.c.bf16 %v2239, %v2238
        %v2370 = vpack.c.bf16 %v2241, %v2240
        %v2371 = vpack.c.bf16 %v2243, %v2242
        %v2372 = vpack.c.bf16 %v2245, %v2244
        %v2373 = vpack.c.bf16 %v2247, %v2246
        %v2374 = vpack.c.bf16 %v2249, %v2248
        %v2375 = vpack.c.bf16 %v2251, %v2250
        %v2376 = vpack.c.bf16 %v2253, %v2252
        %v2377 = vpack.c.bf16 %v2255, %v2254
        %v2378 = vpack.c.bf16 %v2257, %v2256
        %v2379 = vpack.c.bf16 %v2259, %v2258
        %v2380 = vpack.c.bf16 %v2261, %v2260
        %v2381 = vpack.c.bf16 %v2263, %v2262
        %v2382 = vpack.c.bf16 %v2265, %v2264
        %v2383 = vpack.c.bf16 %v2267, %v2266
        %v2384 = vpack.c.bf16 %v2269, %v2268
        %v2385 = vpack.c.bf16 %v2271, %v2270
        %v2386 = vpack.c.bf16 %v2273, %v2272
        %v2387 = vpack.c.bf16 %v2275, %v2274
        %v2388 = vpack.c.bf16 %v2277, %v2276
        %v2389 = vpack.c.bf16 %v2279, %v2278
        %v2390 = vpack.c.bf16 %v2281, %v2280
        %v2391 = vpack.c.bf16 %v2283, %v2282
        %v2392 = vpack.c.bf16 %v2285, %v2284
        %v2393 = vpack.c.bf16 %v2287, %v2286
        %v2394 = vpack.c.bf16 %v2289, %v2288
        %v2395 = vpack.c.bf16 0.0, 0.0
        %v2396 = vpack.c.bf16 %v1894, %v1893
        %v2397 = vpack.c.bf16 %v1896, %v1895
        %v2398 = vpack.c.bf16 %v1898, %v1897
        %v2399 = vpack.c.bf16 %v1900, %v1899
        %v2400 = vpack.c.bf16 %v1902, %v1901
        %v2401 = vpack.c.bf16 %v1904, %v1903
        %v2402 = vpack.c.bf16 %v1906, %v1905
        %v2403 = vpack.c.bf16 %v1908, %v1907
        %v2404 = vpack.c.bf16 %v1910, %v1909
        %v2405 = vpack.c.bf16 %v1912, %v1911
        %v2406 = vpack.c.bf16 %v1914, %v1913
        %v2407 = vpack.c.bf16 %v1916, %v1915
        %v2408 = vpack.c.bf16 %v1918, %v1917
        %v2409 = vpack.c.bf16 %v1920, %v1919
        %v2410 = vpack.c.bf16 %v1922, %v1921
        %v2411 = vpack.c.bf16 %v1924, %v1923
        %v2412 = vpack.c.bf16 %v1926, %v1925
        %v2413 = vpack.c.bf16 %v1928, %v1927
        %v2414 = vpack.c.bf16 %v1930, %v1929
        %v2415 = vpack.c.bf16 %v1932, %v1931
        %v2416 = vpack.c.bf16 %v1934, %v1933
        %v2417 = vpack.c.bf16 %v1936, %v1935
        %v2418 = vpack.c.bf16 %v1938, %v1937
        %v2419 = vpack.c.bf16 %v1940, %v1939
        %v2420 = vpack.c.bf16 %v1942, %v1941
        %v2421 = vpack.c.bf16 %v1944, %v1943
        %v2422 = vpack.c.bf16 %v1946, %v1945
        %v2423 = vpack.c.bf16 %v1948, %v1947
        %v2424 = vpack.c.bf16 %v1950, %v1949
        %v2425 = vpack.c.bf16 %v1952, %v1951
        %v2426 = vpack.c.bf16 %v1954, %v1953
        %v2427 = vpack.c.bf16 %v1956, %v1955
        %v2428 = vpack.c.bf16 %v2297, %v2296
        %v2429 = vpack.c.bf16 %v2299, %v2298
        %v2430 = vpack.c.bf16 %v2301, %v2300
        %v2431 = vpack.c.bf16 %v2303, %v2302
        %v2432 = vpack.c.bf16 %v2305, %v2304
        %v2433 = vpack.c.bf16 %v2307, %v2306
        %v2434 = vpack.c.bf16 %v2309, %v2308
        %v2435 = vpack.c.bf16 %v2311, %v2310
        %v2436 = vpack.c.bf16 %v2313, %v2312
        %v2437 = vpack.c.bf16 %v2315, %v2314
        %v2438 = vpack.c.bf16 %v2317, %v2316
        %v2439 = vpack.c.bf16 %v2319, %v2318
        %v2440 = vpack.c.bf16 %v2321, %v2320
        %v2441 = vpack.c.bf16 %v2323, %v2322
        %v2442 = vpack.c.bf16 %v2325, %v2324
        %v2443 = vpack.c.bf16 %v2327, %v2326
        %v2444 = vpack.c.bf16 %v2329, %v2328
        %v2445 = vpack.c.bf16 %v2331, %v2330
        %v2446 = vpack.c.bf16 %v2333, %v2332
        %v2447 = vpack.c.bf16 %v2335, %v2334
        %v2448 = vpack.c.bf16 %v2337, %v2336
        %v2449 = vpack.c.bf16 %v2339, %v2338
        %v2450 = vpack.c.bf16 %v2341, %v2340
        %v2451 = vpack.c.bf16 %v2343, %v2342
        %v2452 = vpack.c.bf16 %v2345, %v2344
        %v2453 = vpack.c.bf16 %v2347, %v2346
        %v2454 = vpack.c.bf16 %v2349, %v2348
        %v2455 = vpack.c.bf16 %v2351, %v2350
        %v2456 = vpack.c.bf16 %v2353, %v2352
        %v2457 = vpack.c.bf16 %v2355, %v2354
        %v2458 = vpack.c.bf16 %v2357, %v2356
        %v2459 = vpack.c.bf16 %v2359, %v2358
        %v2460 = vpack.c.bf16 %v2361, %v2360
        %v2461 = vld [vmem:[%s3] sm:$0xf]
        %v2462 = vld [vmem:[%s3 + $0x4] sm:$0xf]
        %v2463 = vld [vmem:[%s3 + $0x8] sm:$0xf]
        %v2464 = vld [vmem:[%s3 + $0xc] sm:$0xf]
        %v2465 = vld [vmem:[%s3 + $0x10] sm:$0xf]
        %v2466 = vld [vmem:[%s3 + $0x14] sm:$0xf]
        %v2467 = vld [vmem:[%s3 + $0x18] sm:$0xf]
        %v2468 = vld [vmem:[%s3 + $0x1c] sm:$0xf]
        %v2469 = vld [vmem:[%s3 + $0x20] sm:$0xf]
        %v2470 = vld [vmem:[%s3 + $0x24] sm:$0xf]
        %v2471 = vld [vmem:[%s3 + $0x28] sm:$0xf]
        %v2472 = vld [vmem:[%s3 + $0x2c] sm:$0xf]
        %v2473 = vld [vmem:[%s3 + $0x30] sm:$0xf]
        %v2474 = vld [vmem:[%s3 + $0x34] sm:$0xf]
        %v2475 = vld [vmem:[%s3 + $0x38] sm:$0xf]
        %v2476 = vld [vmem:[%s3 + $0x3c] sm:$0xf]
        %v2477 = vld [vmem:[%s3 + $0x40] sm:$0xf]
        %v2478 = vld [vmem:[%s3 + $0x44] sm:$0xf]
        %v2479 = vld [vmem:[%s3 + $0x48] sm:$0xf]
        %v2480 = vld [vmem:[%s3 + $0x4c] sm:$0xf]
        %v2481 = vld [vmem:[%s3 + $0x50] sm:$0xf]
        %v2482 = vld [vmem:[%s3 + $0x54] sm:$0xf]
        %v2483 = vld [vmem:[%s3 + $0x58] sm:$0xf]
        %v2484 = vld [vmem:[%s3 + $0x5c] sm:$0xf]
        %v2485 = vld [vmem:[%s3 + $0x60] sm:$0xf]
        %v2486 = vld [vmem:[%s3 + $0x64] sm:$0xf]
        %v2487 = vld [vmem:[%s3 + $0x68] sm:$0xf]
        %v2488 = vld [vmem:[%s3 + $0x6c] sm:$0xf]
        %v2489 = vld [vmem:[%s3 + $0x70] sm:$0xf]
        %v2490 = vld [vmem:[%s3 + $0x74] sm:$0xf]
        %v2491 = vld [vmem:[%s3 + $0x78] sm:$0xf]
        %v2492 = vld [vmem:[%s3 + $0x7c] sm:$0xf]
        %v2493 = vld [vmem:[%s3 + $0x80] sm:$0xf]
        %v2494 = vld [vmem:[%s3 + $0x84] sm:$0xf]
        %v2495 = vld [vmem:[%s3 + $0x88] sm:$0xf]
        %v2496 = vld [vmem:[%s3 + $0x8c] sm:$0xf]
        %v2497 = vld [vmem:[%s3 + $0x90] sm:$0xf]
        %v2498 = vld [vmem:[%s3 + $0x94] sm:$0xf]
        %v2499 = vld [vmem:[%s3 + $0x98] sm:$0xf]
        %v2500 = vld [vmem:[%s3 + $0x9c] sm:$0xf]
        %v2501 = vld [vmem:[%s3 + $0xa0] sm:$0xf]
        %v2502 = vld [vmem:[%s3 + $0xa4] sm:$0xf]
        %v2503 = vld [vmem:[%s3 + $0xa8] sm:$0xf]
        %v2504 = vld [vmem:[%s3 + $0xac] sm:$0xf]
        %v2505 = vld [vmem:[%s3 + $0xb0] sm:$0xf]
        %v2506 = vld [vmem:[%s3 + $0xb4] sm:$0xf]
        %v2507 = vld [vmem:[%s3 + $0xb8] sm:$0xf]
        %v2508 = vld [vmem:[%s3 + $0xbc] sm:$0xf]
        %s2509 = scalar_lea.vmem %s3, 192
        %v2510 = vld [vmem:[%s2509] sm:$0xf]
        %v2511 = vld [vmem:[%s2509 + $0x4] sm:$0xf]
        %v2512 = vld [vmem:[%s2509 + $0x8] sm:$0xf]
        %v2513 = vld [vmem:[%s2509 + $0xc] sm:$0xf]
        %v2514 = vld [vmem:[%s2509 + $0x10] sm:$0xf]
        %v2515 = vld [vmem:[%s2509 + $0x14] sm:$0xf]
        %v2516 = vld [vmem:[%s2509 + $0x18] sm:$0xf]
        %v2517 = vld [vmem:[%s2509 + $0x1c] sm:$0xf]
        %v2518 = vld [vmem:[%s2509 + $0x20] sm:$0xf]
        %v2519 = vld [vmem:[%s2509 + $0x24] sm:$0xf]
        %v2520 = vld [vmem:[%s2509 + $0x28] sm:$0xf]
        %v2521 = vld [vmem:[%s2509 + $0x2c] sm:$0xf]
        %v2522 = vld [vmem:[%s2509 + $0x30] sm:$0xf]
        %v2523 = vld [vmem:[%s2509 + $0x34] sm:$0xf]
        %v2524 = vld [vmem:[%s2509 + $0x38] sm:$0xf]
        %v2525 = vld [vmem:[%s2509 + $0x3c] sm:$0xf]
        %v2526 = vld [vmem:[%s2509 + $0x40] sm:$0xf]
        %v2527 = vld [vmem:[%s2509 + $0x44] sm:$0xf]
        %v2528 = vld [vmem:[%s2509 + $0x48] sm:$0xf]
        %v2529 = vld [vmem:[%s2509 + $0x4c] sm:$0xf]
        %v2530 = vld [vmem:[%s2509 + $0x50] sm:$0xf]
        %v2531 = vld [vmem:[%s2509 + $0x54] sm:$0xf]
        %v2532 = vld [vmem:[%s2509 + $0x58] sm:$0xf]
        %v2533 = vld [vmem:[%s2509 + $0x5c] sm:$0xf]
        %v2534 = vld [vmem:[%s2509 + $0x60] sm:$0xf]
        %v2535 = vld [vmem:[%s2509 + $0x64] sm:$0xf]
        %v2536 = vld [vmem:[%s2509 + $0x68] sm:$0xf]
        %v2537 = vld [vmem:[%s2509 + $0x6c] sm:$0xf]
        %v2538 = vld [vmem:[%s2509 + $0x70] sm:$0xf]
        %v2539 = vld [vmem:[%s2509 + $0x74] sm:$0xf]
        %v2540 = vld [vmem:[%s2509 + $0x78] sm:$0xf]
        %v2541 = vld [vmem:[%s2509 + $0x7c] sm:$0xf]
        %v2542 = vld [vmem:[%s2509 + $0x80] sm:$0xf]
        %v2543 = vld [vmem:[%s2509 + $0x84] sm:$0xf]
        %v2544 = vld [vmem:[%s2509 + $0x88] sm:$0xf]
        %v2545 = vld [vmem:[%s2509 + $0x8c] sm:$0xf]
        %v2546 = vld [vmem:[%s2509 + $0x90] sm:$0xf]
        %v2547 = vld [vmem:[%s2509 + $0x94] sm:$0xf]
        %v2548 = vld [vmem:[%s2509 + $0x98] sm:$0xf]
        %v2549 = vld [vmem:[%s2509 + $0x9c] sm:$0xf]
        %v2550 = vld [vmem:[%s2509 + $0xa0] sm:$0xf]
        %v2551 = vld [vmem:[%s2509 + $0xa4] sm:$0xf]
        %v2552 = vld [vmem:[%s2509 + $0xa8] sm:$0xf]
        %v2553 = vld [vmem:[%s2509 + $0xac] sm:$0xf]
        %v2554 = vld [vmem:[%s2509 + $0xb0] sm:$0xf]
        %v2555 = vld [vmem:[%s2509 + $0xb4] sm:$0xf]
        %v2556 = vld [vmem:[%s2509 + $0xb8] sm:$0xf]
        %v2557 = vld [vmem:[%s2509 + $0xbc] sm:$0xf]
        %v2606 = vunpack.c.l.b16 %v2510
        %v2607 = vunpack.c.l.b16 %v2511
        %v2608 = vunpack.c.l.b16 %v2512
        %v2609 = vunpack.c.l.b16 %v2513
        %v2610 = vunpack.c.l.b16 %v2514
        %v2611 = vunpack.c.l.b16 %v2515
        %v2612 = vunpack.c.l.b16 %v2516
        %v2613 = vunpack.c.l.b16 %v2517
        %v2614 = vunpack.c.l.b16 %v2518
        %v2615 = vunpack.c.l.b16 %v2519
        %v2616 = vunpack.c.l.b16 %v2520
        %v2617 = vunpack.c.l.b16 %v2521
        %v2618 = vunpack.c.l.b16 %v2522
        %v2619 = vunpack.c.l.b16 %v2523
        %v2620 = vunpack.c.l.b16 %v2524
        %v2621 = vunpack.c.l.b16 %v2525
        %v2622 = vunpack.c.l.b16 %v2526
        %v2623 = vunpack.c.l.b16 %v2527
        %v2624 = vunpack.c.l.b16 %v2528
        %v2625 = vunpack.c.l.b16 %v2529
        %v2626 = vunpack.c.l.b16 %v2530
        %v2627 = vunpack.c.l.b16 %v2531
        %v2628 = vunpack.c.l.b16 %v2532
        %v2629 = vunpack.c.l.b16 %v2533
        %v2630 = vunpack.c.l.b16 %v2534
        %v2631 = vunpack.c.l.b16 %v2535
        %v2632 = vunpack.c.l.b16 %v2536
        %v2633 = vunpack.c.l.b16 %v2537
        %v2634 = vunpack.c.l.b16 %v2538
        %v2635 = vunpack.c.l.b16 %v2539
        %v2636 = vunpack.c.l.b16 %v2540
        %v2637 = vunpack.c.l.b16 %v2541
        %v2638 = vunpack.c.l.b16 %v2542
        %v2639 = vunpack.c.l.b16 %v2543
        %v2640 = vunpack.c.l.b16 %v2544
        %v2641 = vunpack.c.l.b16 %v2545
        %v2642 = vunpack.c.l.b16 %v2546
        %v2643 = vunpack.c.l.b16 %v2547
        %v2644 = vunpack.c.l.b16 %v2548
        %v2645 = vunpack.c.l.b16 %v2549
        %v2646 = vunpack.c.l.b16 %v2550
        %v2647 = vunpack.c.l.b16 %v2551
        %v2648 = vunpack.c.l.b16 %v2552
        %v2649 = vunpack.c.l.b16 %v2553
        %v2650 = vunpack.c.l.b16 %v2554
        %v2651 = vunpack.c.l.b16 %v2555
        %v2652 = vunpack.c.l.b16 %v2556
        %v2653 = vunpack.c.l.b16 %v2557
        %v2654 = vpack.c.b16 %v2607, %v2606
        %v2655 = vpack.c.b16 %v2609, %v2608
        %v2656 = vpack.c.b16 %v2611, %v2610
        %v2657 = vpack.c.b16 %v2613, %v2612
        %v2658 = vpack.c.b16 %v2615, %v2614
        %v2659 = vpack.c.b16 %v2617, %v2616
        %v2660 = vpack.c.b16 %v2619, %v2618
        %v2661 = vpack.c.b16 %v2621, %v2620
        %v2662 = vpack.c.b16 %v2623, %v2622
        %v2663 = vpack.c.b16 %v2625, %v2624
        %v2664 = vpack.c.b16 %v2627, %v2626
        %v2665 = vpack.c.b16 %v2629, %v2628
        %v2666 = vpack.c.b16 %v2631, %v2630
        %v2667 = vpack.c.b16 %v2633, %v2632
        %v2668 = vpack.c.b16 %v2635, %v2634
        %v2669 = vpack.c.b16 %v2637, %v2636
        %v2670 = vpack.c.b16 %v2639, %v2638
        %v2671 = vpack.c.b16 %v2641, %v2640
        %v2672 = vpack.c.b16 %v2643, %v2642
        %v2673 = vpack.c.b16 %v2645, %v2644
        %v2674 = vpack.c.b16 %v2647, %v2646
        %v2675 = vpack.c.b16 %v2649, %v2648
        %v2676 = vpack.c.b16 %v2651, %v2650
        %v2677 = vpack.c.b16 %v2653, %v2652
        %2702 = vmatprep.subr.bf16.mxu0 0
        %2703 = vmatpush1.bf16.msra.mxu0 %v2654
        %2704 = vmatprep.subr.bf16.mxu0 0
        %2705 = vmatpush1.bf16.msra.mxu0 %v2655
        %2706 = vmatprep.subr.bf16.mxu0 0
        %2707 = vmatpush1.bf16.msra.mxu0 %v2656
        %2708 = vmatprep.subr.bf16.mxu0 0
        %2709 = vmatpush1.bf16.msra.mxu0 %v2657
        %2710 = vmatprep.subr.bf16.mxu0 0
        %2711 = vmatpush1.bf16.msra.mxu0 %v2658
        %2712 = vmatprep.subr.bf16.mxu0 0
        %2713 = vmatpush1.bf16.msra.mxu0 %v2659
        %2714 = vmatprep.subr.bf16.mxu0 0
        %2715 = vmatpush1.bf16.msra.mxu0 %v2660
        %2716 = vmatprep.subr.bf16.mxu0 0
        %2717 = vmatpush1.bf16.msra.mxu0 %v2661
        %2718 = vmatprep.subr.bf16.mxu0 0
        %2719 = vmatpush1.bf16.msra.mxu0 %v2662
        %2720 = vmatprep.subr.bf16.mxu0 0
        %2721 = vmatpush1.bf16.msra.mxu0 %v2663
        %2722 = vmatprep.subr.bf16.mxu0 0
        %2723 = vmatpush1.bf16.msra.mxu0 %v2664
        %2724 = vmatprep.subr.bf16.mxu0 0
        %2725 = vmatpush1.bf16.msra.mxu0 %v2665
        %2726 = vmatprep.subr.bf16.mxu0 0
        %2727 = vmatpush1.bf16.msra.mxu0 %v2666
        %2728 = vmatprep.subr.bf16.mxu0 0
        %2729 = vmatpush1.bf16.msra.mxu0 %v2667
        %2730 = vmatprep.subr.bf16.mxu0 0
        %2731 = vmatpush1.bf16.msra.mxu0 %v2668
        %2732 = vmatprep.subr.bf16.mxu0 0
        %2733 = vmatpush1.bf16.msra.mxu0 %v2669
        %2734 = vmatprep.mubr.bf16.mxu0 %v2396
        %2735 = vmatmul.mubr.bf16.gmra.mrb[0].mxu0 %v2363
        %v2736 = vpop.f32.mrb[0].mxu0
        %v2737 = vadd.f32 0.0, %v2736
        %v2738 = vpop.f32.mrb[0].mxu0
        %v2739 = vpop.f32.mrb[0].mxu0
        %v2740 = vadd.f32 0.0, %v2739
        %v2741 = vpop.f32.mrb[0].mxu0
        %2742 = vmatprep.mubr.bf16.mxu0 %v2397
        %2743 = vmatmul.mubr.bf16.gmra.mrb[0].mxu0 %v2364
        %v2744 = vpop.f32.mrb[0].mxu0
        %v2745 = vadd.f32 0.0, %v2744
        %v2746 = vpop.f32.mrb[0].mxu0
        %v2747 = vpop.f32.mrb[0].mxu0
        %v2748 = vadd.f32 0.0, %v2747
        %v2749 = vpop.f32.mrb[0].mxu0
        %2750 = vmatprep.mubr.bf16.mxu0 %v2398
        %2751 = vmatmul.mubr.bf16.gmra.mrb[0].mxu0 %v2365
        %v2752 = vpop.f32.mrb[0].mxu0
        %v2753 = vadd.f32 0.0, %v2752
        %v2754 = vpop.f32.mrb[0].mxu0
        %v2755 = vpop.f32.mrb[0].mxu0
        %v2756 = vadd.f32 0.0, %v2755
        %v2757 = vpop.f32.mrb[0].mxu0
        %2758 = vmatprep.mubr.bf16.mxu0 %v2399
        %2759 = vmatmul.mubr.bf16.gmra.mrb[0].mxu0 %v2366
        %v2760 = vpop.f32.mrb[0].mxu0
        %v2761 = vadd.f32 0.0, %v2760
        %v2762 = vpop.f32.mrb[0].mxu0
        %v2763 = vpop.f32.mrb[0].mxu0
        %v2764 = vadd.f32 0.0, %v2763
        %v2765 = vpop.f32.mrb[0].mxu0
        %2766 = vmatprep.mubr.bf16.mxu0 %v2400
        %2767 = vmatmul.mubr.bf16.gmra.mrb[0].mxu0 %v2367
        %v2768 = vpop.f32.mrb[0].mxu0
        %v2769 = vadd.f32 0.0, %v2768
        %v2770 = vpop.f32.mrb[0].mxu0
        %v2771 = vpop.f32.mrb[0].mxu0
        %v2772 = vadd.f32 0.0, %v2771
        %v2773 = vpop.f32.mrb[0].mxu0
        %2774 = vmatprep.mubr.bf16.mxu0 %v2401
        %2775 = vmatmul.mubr.bf16.gmra.mrb[0].mxu0 %v2368
        %v2776 = vpop.f32.mrb[0].mxu0
        %v2777 = vadd.f32 0.0, %v2776
        %v2778 = vpop.f32.mrb[0].mxu0
        %v2779 = vpop.f32.mrb[0].mxu0
        %v2780 = vadd.f32 0.0, %v2779
        %v2781 = vpop.f32.mrb[0].mxu0
        %2782 = vmatprep.mubr.bf16.mxu0 %v2402
        %2783 = vmatmul.mubr.bf16.gmra.mrb[0].mxu0 %v2369
        %v2784 = vpop.f32.mrb[0].mxu0
        %v2785 = vadd.f32 0.0, %v2784
        %v2786 = vpop.f32.mrb[0].mxu0
        %v2787 = vpop.f32.mrb[0].mxu0
        %v2788 = vadd.f32 0.0, %v2787
        %v2789 = vpop.f32.mrb[0].mxu0
        %2790 = vmatprep.mubr.bf16.mxu0 %v2403
        %2791 = vmatmul.mubr.bf16.gmra.mrb[0].mxu0 %v2370
        %v2792 = vpop.f32.mrb[0].mxu0
        %v2793 = vadd.f32 0.0, %v2792
        %v2794 = vpop.f32.mrb[0].mxu0
        %v2795 = vpop.f32.mrb[0].mxu0
        %v2796 = vadd.f32 0.0, %v2795
        %v2797 = vpop.f32.mrb[0].mxu0
        %2798 = vmatprep.mubr.bf16.mxu0 %v2404
        %2799 = vmatmul.mubr.bf16.gmra.mrb[0].mxu0 %v2371
        %v2800 = vpop.f32.mrb[0].mxu0
        %v2801 = vadd.f32 0.0, %v2800
        %v2802 = vpop.f32.mrb[0].mxu0
        %v2803 = vpop.f32.mrb[0].mxu0
        %v2804 = vadd.f32 0.0, %v2803
        %v2805 = vpop.f32.mrb[0].mxu0
        %2806 = vmatprep.mubr.bf16.mxu0 %v2405
        %2807 = vmatmul.mubr.bf16.gmra.mrb[0].mxu0 %v2372
        %v2808 = vpop.f32.mrb[0].mxu0
        %v2809 = vadd.f32 0.0, %v2808
        %v2810 = vpop.f32.mrb[0].mxu0
        %v2811 = vpop.f32.mrb[0].mxu0
        %v2812 = vadd.f32 0.0, %v2811
        %v2813 = vpop.f32.mrb[0].mxu0
        %2814 = vmatprep.mubr.bf16.mxu0 %v2406
        %2815 = vmatmul.mubr.bf16.gmra.mrb[0].mxu0 %v2373
        %v2816 = vpop.f32.mrb[0].mxu0
        %v2817 = vadd.f32 0.0, %v2816
        %v2818 = vpop.f32.mrb[0].mxu0
        %v2819 = vpop.f32.mrb[0].mxu0
        %v2820 = vadd.f32 0.0, %v2819
        %v2821 = vpop.f32.mrb[0].mxu0
        %2822 = vmatprep.mubr.bf16.mxu0 %v2407
        %2823 = vmatmul.mubr.bf16.gmra.mrb[0].mxu0 %v2374
        %v2824 = vpop.f32.mrb[0].mxu0
        %v2825 = vadd.f32 0.0, %v2824
        %v2826 = vpop.f32.mrb[0].mxu0
        %v2827 = vpop.f32.mrb[0].mxu0
        %v2828 = vadd.f32 0.0, %v2827
        %v2829 = vpop.f32.mrb[0].mxu0
        %2830 = vmatprep.mubr.bf16.mxu0 %v2408
        %2831 = vmatmul.mubr.bf16.gmra.mrb[0].mxu0 %v2375
        %v2832 = vpop.f32.mrb[0].mxu0
        %v2833 = vadd.f32 0.0, %v2832
        %v2834 = vpop.f32.mrb[0].mxu0
        %v2835 = vpop.f32.mrb[0].mxu0
        %v2836 = vadd.f32 0.0, %v2835
        %v2837 = vpop.f32.mrb[0].mxu0
        %2838 = vmatprep.mubr.bf16.mxu0 %v2409
        %2839 = vmatmul.mubr.bf16.gmra.mrb[0].mxu0 %v2376
        %v2840 = vpop.f32.mrb[0].mxu0
        %v2841 = vadd.f32 0.0, %v2840
        %v2842 = vpop.f32.mrb[0].mxu0
        %v2843 = vpop.f32.mrb[0].mxu0
        %v2844 = vadd.f32 0.0, %v2843
        %v2845 = vpop.f32.mrb[0].mxu0
        %2846 = vmatprep.mubr.bf16.mxu0 %v2410
        %2847 = vmatmul.mubr.bf16.gmra.mrb[0].mxu0 %v2377
        %v2848 = vpop.f32.mrb[0].mxu0
        %v2849 = vadd.f32 0.0, %v2848
        %v2850 = vpop.f32.mrb[0].mxu0
        %v2851 = vpop.f32.mrb[0].mxu0
        %v2852 = vadd.f32 0.0, %v2851
        %v2853 = vpop.f32.mrb[0].mxu0
        %2854 = vmatprep.mubr.bf16.mxu0 %v2411
        %2855 = vmatmul.mubr.bf16.gmra.mrb[0].mxu0 %v2378
        %v2856 = vpop.f32.mrb[0].mxu0
        %v2857 = vadd.f32 0.0, %v2856
        %v2858 = vpop.f32.mrb[0].mxu0
        %v2859 = vpop.f32.mrb[0].mxu0
        %v2860 = vadd.f32 0.0, %v2859
        %v2861 = vpop.f32.mrb[0].mxu0
        %2862 = vmatprep.mubr.bf16.mxu0 %v2412
        %2863 = vmatmul.mubr.bf16.gmra.mrb[0].mxu0 %v2379
        %v2864 = vpop.f32.mrb[0].mxu0
        %v2865 = vadd.f32 0.0, %v2864
        %v2866 = vpop.f32.mrb[0].mxu0
        %v2867 = vpop.f32.mrb[0].mxu0
        %v2868 = vadd.f32 0.0, %v2867
        %v2869 = vpop.f32.mrb[0].mxu0
        %2870 = vmatprep.mubr.bf16.mxu0 %v2413
        %2871 = vmatmul.mubr.bf16.gmra.mrb[0].mxu0 %v2380
        %v2872 = vpop.f32.mrb[0].mxu0
        %v2873 = vadd.f32 0.0, %v2872
        %v2874 = vpop.f32.mrb[0].mxu0
        %v2875 = vpop.f32.mrb[0].mxu0
        %v2876 = vadd.f32 0.0, %v2875
        %v2877 = vpop.f32.mrb[0].mxu0
        %2878 = vmatprep.mubr.bf16.mxu0 %v2414
        %2879 = vmatmul.mubr.bf16.gmra.mrb[0].mxu0 %v2381
        %v2880 = vpop.f32.mrb[0].mxu0
        %v2881 = vadd.f32 0.0, %v2880
        %v2882 = vpop.f32.mrb[0].mxu0
        %v2883 = vpop.f32.mrb[0].mxu0
        %v2884 = vadd.f32 0.0, %v2883
        %v2885 = vpop.f32.mrb[0].mxu0
        %2886 = vmatprep.mubr.bf16.mxu0 %v2415
        %2887 = vmatmul.mubr.bf16.gmra.mrb[0].mxu0 %v2382
        %v2888 = vpop.f32.mrb[0].mxu0
        %v2889 = vadd.f32 0.0, %v2888
        %v2890 = vpop.f32.mrb[0].mxu0
        %v2891 = vpop.f32.mrb[0].mxu0
        %v2892 = vadd.f32 0.0, %v2891
        %v2893 = vpop.f32.mrb[0].mxu0
        %2894 = vmatprep.mubr.bf16.mxu0 %v2416
        %2895 = vmatmul.mubr.bf16.gmra.mrb[0].mxu0 %v2383
        %v2896 = vpop.f32.mrb[0].mxu0
        %v2897 = vadd.f32 0.0, %v2896
        %v2898 = vpop.f32.mrb[0].mxu0
        %v2899 = vpop.f32.mrb[0].mxu0
        %v2900 = vadd.f32 0.0, %v2899
        %v2901 = vpop.f32.mrb[0].mxu0
        %2902 = vmatprep.mubr.bf16.mxu0 %v2417
        %2903 = vmatmul.mubr.bf16.gmra.mrb[0].mxu0 %v2384
        %v2904 = vpop.f32.mrb[0].mxu0
        %v2905 = vadd.f32 0.0, %v2904
        %v2906 = vpop.f32.mrb[0].mxu0
        %v2907 = vpop.f32.mrb[0].mxu0
        %v2908 = vadd.f32 0.0, %v2907
        %v2909 = vpop.f32.mrb[0].mxu0
        %2910 = vmatprep.mubr.bf16.mxu0 %v2418
        %2911 = vmatmul.mubr.bf16.gmra.mrb[0].mxu0 %v2385
        %v2912 = vpop.f32.mrb[0].mxu0
        %v2913 = vadd.f32 0.0, %v2912
        %v2914 = vpop.f32.mrb[0].mxu0
        %v2915 = vpop.f32.mrb[0].mxu0
        %v2916 = vadd.f32 0.0, %v2915
        %v2917 = vpop.f32.mrb[0].mxu0
        %2918 = vmatprep.mubr.bf16.mxu0 %v2419
        %2919 = vmatmul.mubr.bf16.gmra.mrb[0].mxu0 %v2386
        %v2920 = vpop.f32.mrb[0].mxu0
        %v2921 = vadd.f32 0.0, %v2920
        %v2922 = vpop.f32.mrb[0].mxu0
        %v2923 = vpop.f32.mrb[0].mxu0
        %v2924 = vadd.f32 0.0, %v2923
        %v2925 = vpop.f32.mrb[0].mxu0
        %2926 = vmatprep.mubr.bf16.mxu0 %v2420
        %2927 = vmatmul.mubr.bf16.gmra.mrb[0].mxu0 %v2387
        %v2928 = vpop.f32.mrb[0].mxu0
        %v2929 = vadd.f32 0.0, %v2928
        %v2930 = vpop.f32.mrb[0].mxu0
        %v2931 = vpop.f32.mrb[0].mxu0
        %v2932 = vadd.f32 0.0, %v2931
        %v2933 = vpop.f32.mrb[0].mxu0
        %2934 = vmatprep.mubr.bf16.mxu0 %v2421
        %2935 = vmatmul.mubr.bf16.gmra.mrb[0].mxu0 %v2388
        %v2936 = vpop.f32.mrb[0].mxu0
        %v2937 = vadd.f32 0.0, %v2936
        %v2938 = vpop.f32.mrb[0].mxu0
        %v2939 = vpop.f32.mrb[0].mxu0
        %v2940 = vadd.f32 0.0, %v2939
        %v2941 = vpop.f32.mrb[0].mxu0
        %2942 = vmatprep.mubr.bf16.mxu0 %v2422
        %2943 = vmatmul.mubr.bf16.gmra.mrb[0].mxu0 %v2389
        %v2944 = vpop.f32.mrb[0].mxu0
        %v2945 = vadd.f32 0.0, %v2944
        %v2946 = vpop.f32.mrb[0].mxu0
        %v2947 = vpop.f32.mrb[0].mxu0
        %v2948 = vadd.f32 0.0, %v2947
        %v2949 = vpop.f32.mrb[0].mxu0
        %2950 = vmatprep.mubr.bf16.mxu0 %v2423
        %2951 = vmatmul.mubr.bf16.gmra.mrb[0].mxu0 %v2390
        %v2952 = vpop.f32.mrb[0].mxu0
        %v2953 = vadd.f32 0.0, %v2952
        %v2954 = vpop.f32.mrb[0].mxu0
        %v2955 = vpop.f32.mrb[0].mxu0
        %v2956 = vadd.f32 0.0, %v2955
        %v2957 = vpop.f32.mrb[0].mxu0
        %2958 = vmatprep.mubr.bf16.mxu0 %v2424
        %2959 = vmatmul.mubr.bf16.gmra.mrb[0].mxu0 %v2391
        %v2960 = vpop.f32.mrb[0].mxu0
        %v2961 = vadd.f32 0.0, %v2960
        %v2962 = vpop.f32.mrb[0].mxu0
        %v2963 = vpop.f32.mrb[0].mxu0
        %v2964 = vadd.f32 0.0, %v2963
        %v2965 = vpop.f32.mrb[0].mxu0
        %2966 = vmatprep.mubr.bf16.mxu0 %v2425
        %2967 = vmatmul.mubr.bf16.gmra.mrb[0].mxu0 %v2392
        %v2968 = vpop.f32.mrb[0].mxu0
        %v2969 = vadd.f32 0.0, %v2968
        %v2970 = vpop.f32.mrb[0].mxu0
        %v2971 = vpop.f32.mrb[0].mxu0
        %v2972 = vadd.f32 0.0, %v2971
        %v2973 = vpop.f32.mrb[0].mxu0
        %2974 = vmatprep.mubr.bf16.mxu0 %v2426
        %2975 = vmatmul.mubr.bf16.gmra.mrb[0].mxu0 %v2393
        %v2976 = vpop.f32.mrb[0].mxu0
        %v2977 = vadd.f32 0.0, %v2976
        %v2978 = vpop.f32.mrb[0].mxu0
        %v2979 = vpop.f32.mrb[0].mxu0
        %v2980 = vadd.f32 0.0, %v2979
        %v2981 = vpop.f32.mrb[0].mxu0
        %2982 = vmatprep.mubr.bf16.mxu0 %v2427
        %2983 = vmatmul.mubr.bf16.gmra.mrb[0].mxu0 %v2394
        %v2984 = vpop.f32.mrb[0].mxu0
        %v2985 = vadd.f32 0.0, %v2984
        %v2986 = vpop.f32.mrb[0].mxu0
        %v2987 = vpop.f32.mrb[0].mxu0
        %v2988 = vadd.f32 0.0, %v2987
        %v2989 = vpop.f32.mrb[0].mxu0
        %2990 = vdwg.mxu0
        %2991 = vmatprep.subr.bf16.mxu0 0
        %2992 = vmatpush1.bf16.msra.mxu0 %v2670
        %2993 = vmatprep.subr.bf16.mxu0 0
        %2994 = vmatpush1.bf16.msra.mxu0 %v2671
        %2995 = vmatprep.subr.bf16.mxu0 0
        %2996 = vmatpush1.bf16.msra.mxu0 %v2672
        %2997 = vmatprep.subr.bf16.mxu0 0
        %2998 = vmatpush1.bf16.msra.mxu0 %v2673
        %2999 = vmatprep.subr.bf16.mxu0 0
        %3000 = vmatpush1.bf16.msra.mxu0 %v2674
        %3001 = vmatprep.subr.bf16.mxu0 0
        %3002 = vmatpush1.bf16.msra.mxu0 %v2675
        %3003 = vmatprep.subr.bf16.mxu0 0
        %3004 = vmatpush1.bf16.msra.mxu0 %v2676
        %3005 = vmatprep.subr.bf16.mxu0 0
        %3006 = vmatpush1.bf16.msra.mxu0 %v2677
        %3007 = vmatprep.subr.bf16.mxu0 0
        %3008 = vmatpush1.bf16.msra.mxu0 0
        %3009 = vmatprep.subr.bf16.mxu0 0
        %3010 = vmatpush1.bf16.msra.mxu0 0
        %3011 = vmatprep.subr.bf16.mxu0 0
        %3012 = vmatpush1.bf16.msra.mxu0 0
        %3013 = vmatprep.subr.bf16.mxu0 0
        %3014 = vmatpush1.bf16.msra.mxu0 0
        %3015 = vmatprep.subr.bf16.mxu0 0
        %3016 = vmatpush1.bf16.msra.mxu0 0
        %3017 = vmatprep.subr.bf16.mxu0 0
        %3018 = vmatpush1.bf16.msra.mxu0 0
        %3019 = vmatprep.subr.bf16.mxu0 0
        %3020 = vmatpush1.bf16.msra.mxu0 0
        %3021 = vmatprep.subr.bf16.mxu0 0
        %3022 = vmatpush1.bf16.msra.mxu0 0
        %3023 = vmatprep.mubr.bf16.mxu0 0
        %3024 = vmatmul.mubr.bf16.gmra.mrb[0].mxu0 %v2429
        %v3025 = vpop.f32.mrb[0].mxu0
        %v3026 = vadd.f32 %v2737, %v3025
        %v3027 = vpop.f32.mrb[0].mxu0
        %v3028 = vpop.f32.mrb[0].mxu0
        %v3029 = vadd.f32 %v2740, %v3028
        %v3030 = vpop.f32.mrb[0].mxu0
        %3031 = vmatprep.mubr.bf16.mxu0 0
        %3032 = vmatmul.mubr.bf16.gmra.mrb[0].mxu0 %v2430
        %v3033 = vpop.f32.mrb[0].mxu0
        %v3034 = vadd.f32 %v2745, %v3033
        %v3035 = vpop.f32.mrb[0].mxu0
        %v3036 = vpop.f32.mrb[0].mxu0
        %v3037 = vadd.f32 %v2748, %v3036
        %v3038 = vpop.f32.mrb[0].mxu0
        %3039 = vmatprep.mubr.bf16.mxu0 0
        %3040 = vmatmul.mubr.bf16.gmra.mrb[0].mxu0 %v2431
        %v3041 = vpop.f32.mrb[0].mxu0
        %v3042 = vadd.f32 %v2753, %v3041
        %v3043 = vpop.f32.mrb[0].mxu0
        %v3044 = vpop.f32.mrb[0].mxu0
        %v3045 = vadd.f32 %v2756, %v3044
        %v3046 = vpop.f32.mrb[0].mxu0
        %3047 = vmatprep.mubr.bf16.mxu0 0
        %3048 = vmatmul.mubr.bf16.gmra.mrb[0].mxu0 %v2432
        %v3049 = vpop.f32.mrb[0].mxu0
        %v3050 = vadd.f32 %v2761, %v3049
        %v3051 = vpop.f32.mrb[0].mxu0
        %v3052 = vpop.f32.mrb[0].mxu0
        %v3053 = vadd.f32 %v2764, %v3052
        %v3054 = vpop.f32.mrb[0].mxu0
        %3055 = vmatprep.mubr.bf16.mxu0 0
        %3056 = vmatmul.mubr.bf16.gmra.mrb[0].mxu0 %v2433
        %v3057 = vpop.f32.mrb[0].mxu0
        %v3058 = vadd.f32 %v2769, %v3057
        %v3059 = vpop.f32.mrb[0].mxu0
        %v3060 = vpop.f32.mrb[0].mxu0
        %v3061 = vadd.f32 %v2772, %v3060
        %v3062 = vpop.f32.mrb[0].mxu0
        %3063 = vmatprep.mubr.bf16.mxu0 0
        %3064 = vmatmul.mubr.bf16.gmra.mrb[0].mxu0 %v2434
        %v3065 = vpop.f32.mrb[0].mxu0
        %v3066 = vadd.f32 %v2777, %v3065
        %v3067 = vpop.f32.mrb[0].mxu0
        %v3068 = vpop.f32.mrb[0].mxu0
        %v3069 = vadd.f32 %v2780, %v3068
        %v3070 = vpop.f32.mrb[0].mxu0
        %3071 = vmatprep.mubr.bf16.mxu0 0
        %3072 = vmatmul.mubr.bf16.gmra.mrb[0].mxu0 %v2435
        %v3073 = vpop.f32.mrb[0].mxu0
        %v3074 = vadd.f32 %v2785, %v3073
        %v3075 = vpop.f32.mrb[0].mxu0
        %v3076 = vpop.f32.mrb[0].mxu0
        %v3077 = vadd.f32 %v2788, %v3076
        %v3078 = vpop.f32.mrb[0].mxu0
        %3079 = vmatprep.mubr.bf16.mxu0 0
        %3080 = vmatmul.mubr.bf16.gmra.mrb[0].mxu0 %v2436
        %v3081 = vpop.f32.mrb[0].mxu0
        %v3082 = vadd.f32 %v2793, %v3081
        %v3083 = vpop.f32.mrb[0].mxu0
        %v3084 = vpop.f32.mrb[0].mxu0
        %v3085 = vadd.f32 %v2796, %v3084
        %v3086 = vpop.f32.mrb[0].mxu0
        %3087 = vmatprep.mubr.bf16.mxu0 0
        %3088 = vmatmul.mubr.bf16.gmra.mrb[0].mxu0 %v2437
        %v3089 = vpop.f32.mrb[0].mxu0
        %v3090 = vadd.f32 %v2801, %v3089
        %v3091 = vpop.f32.mrb[0].mxu0
        %v3092 = vpop.f32.mrb[0].mxu0
        %v3093 = vadd.f32 %v2804, %v3092
        %v3094 = vpop.f32.mrb[0].mxu0
        %3095 = vmatprep.mubr.bf16.mxu0 0
        %3096 = vmatmul.mubr.bf16.gmra.mrb[0].mxu0 %v2438
        %v3097 = vpop.f32.mrb[0].mxu0
        %v3098 = vadd.f32 %v2809, %v3097
        %v3099 = vpop.f32.mrb[0].mxu0
        %v3100 = vpop.f32.mrb[0].mxu0
        %v3101 = vadd.f32 %v2812, %v3100
        %v3102 = vpop.f32.mrb[0].mxu0
        %3103 = vmatprep.mubr.bf16.mxu0 0
        %3104 = vmatmul.mubr.bf16.gmra.mrb[0].mxu0 %v2439
        %v3105 = vpop.f32.mrb[0].mxu0
        %v3106 = vadd.f32 %v2817, %v3105
        %v3107 = vpop.f32.mrb[0].mxu0
        %v3108 = vpop.f32.mrb[0].mxu0
        %v3109 = vadd.f32 %v2820, %v3108
        %v3110 = vpop.f32.mrb[0].mxu0
        %3111 = vmatprep.mubr.bf16.mxu0 0
        %3112 = vmatmul.mubr.bf16.gmra.mrb[0].mxu0 %v2440
        %v3113 = vpop.f32.mrb[0].mxu0
        %v3114 = vadd.f32 %v2825, %v3113
        %v3115 = vpop.f32.mrb[0].mxu0
        %v3116 = vpop.f32.mrb[0].mxu0
        %v3117 = vadd.f32 %v2828, %v3116
        %v3118 = vpop.f32.mrb[0].mxu0
        %3119 = vmatprep.mubr.bf16.mxu0 0
        %3120 = vmatmul.mubr.bf16.gmra.mrb[0].mxu0 %v2441
        %v3121 = vpop.f32.mrb[0].mxu0
        %v3122 = vadd.f32 %v2833, %v3121
        %v3123 = vpop.f32.mrb[0].mxu0
        %v3124 = vpop.f32.mrb[0].mxu0
        %v3125 = vadd.f32 %v2836, %v3124
        %v3126 = vpop.f32.mrb[0].mxu0
        %3127 = vmatprep.mubr.bf16.mxu0 0
        %3128 = vmatmul.mubr.bf16.gmra.mrb[0].mxu0 %v2442
        %v3129 = vpop.f32.mrb[0].mxu0
        %v3130 = vadd.f32 %v2841, %v3129
        %v3131 = vpop.f32.mrb[0].mxu0
        %v3132 = vpop.f32.mrb[0].mxu0
        %v3133 = vadd.f32 %v2844, %v3132
        %v3134 = vpop.f32.mrb[0].mxu0
        %3135 = vmatprep.mubr.bf16.mxu0 0
        %3136 = vmatmul.mubr.bf16.gmra.mrb[0].mxu0 %v2443
        %v3137 = vpop.f32.mrb[0].mxu0
        %v3138 = vadd.f32 %v2849, %v3137
        %v3139 = vpop.f32.mrb[0].mxu0
        %v3140 = vpop.f32.mrb[0].mxu0
        %v3141 = vadd.f32 %v2852, %v3140
        %v3142 = vpop.f32.mrb[0].mxu0
        %3143 = vmatprep.mubr.bf16.mxu0 0
        %3144 = vmatmul.mubr.bf16.gmra.mrb[0].mxu0 %v2444
        %v3145 = vpop.f32.mrb[0].mxu0
        %v3146 = vadd.f32 %v2857, %v3145
        %v3147 = vpop.f32.mrb[0].mxu0
        %v3148 = vpop.f32.mrb[0].mxu0
        %v3149 = vadd.f32 %v2860, %v3148
        %v3150 = vpop.f32.mrb[0].mxu0
        %3151 = vmatprep.mubr.bf16.mxu0 0
        %3152 = vmatmul.mubr.bf16.gmra.mrb[0].mxu0 %v2445
        %v3153 = vpop.f32.mrb[0].mxu0
        %v3154 = vadd.f32 %v2865, %v3153
        %v3155 = vpop.f32.mrb[0].mxu0
        %v3156 = vpop.f32.mrb[0].mxu0
        %v3157 = vadd.f32 %v2868, %v3156
        %v3158 = vpop.f32.mrb[0].mxu0
        %3159 = vmatprep.mubr.bf16.mxu0 0
        %3160 = vmatmul.mubr.bf16.gmra.mrb[0].mxu0 %v2446
        %v3161 = vpop.f32.mrb[0].mxu0
        %v3162 = vadd.f32 %v2873, %v3161
        %v3163 = vpop.f32.mrb[0].mxu0
        %v3164 = vpop.f32.mrb[0].mxu0
        %v3165 = vadd.f32 %v2876, %v3164
        %v3166 = vpop.f32.mrb[0].mxu0
        %3167 = vmatprep.mubr.bf16.mxu0 0
        %3168 = vmatmul.mubr.bf16.gmra.mrb[0].mxu0 %v2447
        %v3169 = vpop.f32.mrb[0].mxu0
        %v3170 = vadd.f32 %v2881, %v3169
        %v3171 = vpop.f32.mrb[0].mxu0
        %v3172 = vpop.f32.mrb[0].mxu0
        %v3173 = vadd.f32 %v2884, %v3172
        %v3174 = vpop.f32.mrb[0].mxu0
        %3175 = vmatprep.mubr.bf16.mxu0 0
        %3176 = vmatmul.mubr.bf16.gmra.mrb[0].mxu0 %v2448
        %v3177 = vpop.f32.mrb[0].mxu0
        %v3178 = vadd.f32 %v2889, %v3177
        %v3179 = vpop.f32.mrb[0].mxu0
        %v3180 = vpop.f32.mrb[0].mxu0
        %v3181 = vadd.f32 %v2892, %v3180
        %v3182 = vpop.f32.mrb[0].mxu0
        %3183 = vmatprep.mubr.bf16.mxu0 0
        %3184 = vmatmul.mubr.bf16.gmra.mrb[0].mxu0 %v2449
        %v3185 = vpop.f32.mrb[0].mxu0
        %v3186 = vadd.f32 %v2897, %v3185
        %v3187 = vpop.f32.mrb[0].mxu0
        %v3188 = vpop.f32.mrb[0].mxu0
        %v3189 = vadd.f32 %v2900, %v3188
        %v3190 = vpop.f32.mrb[0].mxu0
        %3191 = vmatprep.mubr.bf16.mxu0 0
        %3192 = vmatmul.mubr.bf16.gmra.mrb[0].mxu0 %v2450
        %v3193 = vpop.f32.mrb[0].mxu0
        %v3194 = vadd.f32 %v2905, %v3193
        %v3195 = vpop.f32.mrb[0].mxu0
        %v3196 = vpop.f32.mrb[0].mxu0
        %v3197 = vadd.f32 %v2908, %v3196
        %v3198 = vpop.f32.mrb[0].mxu0
        %3199 = vmatprep.mubr.bf16.mxu0 0
        %3200 = vmatmul.mubr.bf16.gmra.mrb[0].mxu0 %v2451
        %v3201 = vpop.f32.mrb[0].mxu0
        %v3202 = vadd.f32 %v2913, %v3201
        %v3203 = vpop.f32.mrb[0].mxu0
        %v3204 = vpop.f32.mrb[0].mxu0
        %v3205 = vadd.f32 %v2916, %v3204
        %v3206 = vpop.f32.mrb[0].mxu0
        %3207 = vmatprep.mubr.bf16.mxu0 0
        %3208 = vmatmul.mubr.bf16.gmra.mrb[0].mxu0 %v2452
        %v3209 = vpop.f32.mrb[0].mxu0
        %v3210 = vadd.f32 %v2921, %v3209
        %v3211 = vpop.f32.mrb[0].mxu0
        %v3212 = vpop.f32.mrb[0].mxu0
        %v3213 = vadd.f32 %v2924, %v3212
        %v3214 = vpop.f32.mrb[0].mxu0
        %3215 = vmatprep.mubr.bf16.mxu0 0
        %3216 = vmatmul.mubr.bf16.gmra.mrb[0].mxu0 %v2453
        %v3217 = vpop.f32.mrb[0].mxu0
        %v3218 = vadd.f32 %v2929, %v3217
        %v3219 = vpop.f32.mrb[0].mxu0
        %v3220 = vpop.f32.mrb[0].mxu0
        %v3221 = vadd.f32 %v2932, %v3220
        %v3222 = vpop.f32.mrb[0].mxu0
        %3223 = vmatprep.mubr.bf16.mxu0 0
        %3224 = vmatmul.mubr.bf16.gmra.mrb[0].mxu0 %v2454
        %v3225 = vpop.f32.mrb[0].mxu0
        %v3226 = vadd.f32 %v2937, %v3225
        %v3227 = vpop.f32.mrb[0].mxu0
        %v3228 = vpop.f32.mrb[0].mxu0
        %v3229 = vadd.f32 %v2940, %v3228
        %v3230 = vpop.f32.mrb[0].mxu0
        %3231 = vmatprep.mubr.bf16.mxu0 0
        %3232 = vmatmul.mubr.bf16.gmra.mrb[0].mxu0 %v2455
        %v3233 = vpop.f32.mrb[0].mxu0
        %v3234 = vadd.f32 %v2945, %v3233
        %v3235 = vpop.f32.mrb[0].mxu0
        %v3236 = vpop.f32.mrb[0].mxu0
        %v3237 = vadd.f32 %v2948, %v3236
        %v3238 = vpop.f32.mrb[0].mxu0
        %3239 = vmatprep.mubr.bf16.mxu0 0
        %3240 = vmatmul.mubr.bf16.gmra.mrb[0].mxu0 %v2456
        %v3241 = vpop.f32.mrb[0].mxu0
        %v3242 = vadd.f32 %v2953, %v3241
        %v3243 = vpop.f32.mrb[0].mxu0
        %v3244 = vpop.f32.mrb[0].mxu0
        %v3245 = vadd.f32 %v2956, %v3244
        %v3246 = vpop.f32.mrb[0].mxu0
        %3247 = vmatprep.mubr.bf16.mxu0 0
        %3248 = vmatmul.mubr.bf16.gmra.mrb[0].mxu0 %v2457
        %v3249 = vpop.f32.mrb[0].mxu0
        %v3250 = vadd.f32 %v2961, %v3249
        %v3251 = vpop.f32.mrb[0].mxu0
        %v3252 = vpop.f32.mrb[0].mxu0
        %v3253 = vadd.f32 %v2964, %v3252
        %v3254 = vpop.f32.mrb[0].mxu0
        %3255 = vmatprep.mubr.bf16.mxu0 0
        %3256 = vmatmul.mubr.bf16.gmra.mrb[0].mxu0 %v2458
        %v3257 = vpop.f32.mrb[0].mxu0
        %v3258 = vadd.f32 %v2969, %v3257
        %v3259 = vpop.f32.mrb[0].mxu0
        %v3260 = vpop.f32.mrb[0].mxu0
        %v3261 = vadd.f32 %v2972, %v3260
        %v3262 = vpop.f32.mrb[0].mxu0
        %3263 = vmatprep.mubr.bf16.mxu0 0
        %3264 = vmatmul.mubr.bf16.gmra.mrb[0].mxu0 %v2459
        %v3265 = vpop.f32.mrb[0].mxu0
        %v3266 = vadd.f32 %v2977, %v3265
        %v3267 = vpop.f32.mrb[0].mxu0
        %v3268 = vpop.f32.mrb[0].mxu0
        %v3269 = vadd.f32 %v2980, %v3268
        %v3270 = vpop.f32.mrb[0].mxu0
        %3271 = vmatprep.mubr.bf16.mxu0 0
        %3272 = vmatmul.mubr.bf16.gmra.mrb[0].mxu0 %v2460
        %v3273 = vpop.f32.mrb[0].mxu0
        %v3274 = vadd.f32 %v2985, %v3273
        %v3275 = vpop.f32.mrb[0].mxu0
        %v3276 = vpop.f32.mrb[0].mxu0
        %v3277 = vadd.f32 %v2988, %v3276
        %v3278 = vpop.f32.mrb[0].mxu0
        %3279 = vdwg.mxu0
        %v3328 = vunpack.c.l.b16 %v2461
        %v3329 = vunpack.c.l.b16 %v2462
        %v3330 = vunpack.c.l.b16 %v2463
        %v3331 = vunpack.c.l.b16 %v2464
        %v3332 = vunpack.c.l.b16 %v2465
        %v3333 = vunpack.c.l.b16 %v2466
        %v3334 = vunpack.c.l.b16 %v2467
        %v3335 = vunpack.c.l.b16 %v2468
        %v3336 = vunpack.c.l.b16 %v2469
        %v3337 = vunpack.c.l.b16 %v2470
        %v3338 = vunpack.c.l.b16 %v2471
        %v3339 = vunpack.c.l.b16 %v2472
        %v3340 = vunpack.c.l.b16 %v2473
        %v3341 = vunpack.c.l.b16 %v2474
        %v3342 = vunpack.c.l.b16 %v2475
        %v3343 = vunpack.c.l.b16 %v2476
        %v3344 = vunpack.c.l.b16 %v2477
        %v3345 = vunpack.c.l.b16 %v2478
        %v3346 = vunpack.c.l.b16 %v2479
        %v3347 = vunpack.c.l.b16 %v2480
        %v3348 = vunpack.c.l.b16 %v2481
        %v3349 = vunpack.c.l.b16 %v2482
        %v3350 = vunpack.c.l.b16 %v2483
        %v3351 = vunpack.c.l.b16 %v2484
        %v3352 = vunpack.c.l.b16 %v2485
        %v3353 = vunpack.c.l.b16 %v2486
        %v3354 = vunpack.c.l.b16 %v2487
        %v3355 = vunpack.c.l.b16 %v2488
        %v3356 = vunpack.c.l.b16 %v2489
        %v3357 = vunpack.c.l.b16 %v2490
        %v3358 = vunpack.c.l.b16 %v2491
        %v3359 = vunpack.c.l.b16 %v2492
        %v3360 = vunpack.c.l.b16 %v2493
        %v3361 = vunpack.c.l.b16 %v2494
        %v3362 = vunpack.c.l.b16 %v2495
        %v3363 = vunpack.c.l.b16 %v2496
        %v3364 = vunpack.c.l.b16 %v2497
        %v3365 = vunpack.c.l.b16 %v2498
        %v3366 = vunpack.c.l.b16 %v2499
        %v3367 = vunpack.c.l.b16 %v2500
        %v3368 = vunpack.c.l.b16 %v2501
        %v3369 = vunpack.c.l.b16 %v2502
        %v3370 = vunpack.c.l.b16 %v2503
        %v3371 = vunpack.c.l.b16 %v2504
        %v3372 = vunpack.c.l.b16 %v2505
        %v3373 = vunpack.c.l.b16 %v2506
        %v3374 = vunpack.c.l.b16 %v2507
        %v3375 = vunpack.c.l.b16 %v2508
        %v3376 = vpack.c.b16 %v3329, %v3328
        %v3377 = vpack.c.b16 %v3331, %v3330
        %v3378 = vpack.c.b16 %v3333, %v3332
        %v3379 = vpack.c.b16 %v3335, %v3334
        %v3380 = vpack.c.b16 %v3337, %v3336
        %v3381 = vpack.c.b16 %v3339, %v3338
        %v3382 = vpack.c.b16 %v3341, %v3340
        %v3383 = vpack.c.b16 %v3343, %v3342
        %v3384 = vpack.c.b16 %v3345, %v3344
        %v3385 = vpack.c.b16 %v3347, %v3346
        %v3386 = vpack.c.b16 %v3349, %v3348
        %v3387 = vpack.c.b16 %v3351, %v3350
        %v3388 = vpack.c.b16 %v3353, %v3352
        %v3389 = vpack.c.b16 %v3355, %v3354
        %v3390 = vpack.c.b16 %v3357, %v3356
        %v3391 = vpack.c.b16 %v3359, %v3358
        %v3392 = vpack.c.b16 %v3361, %v3360
        %v3393 = vpack.c.b16 %v3363, %v3362
        %v3394 = vpack.c.b16 %v3365, %v3364
        %v3395 = vpack.c.b16 %v3367, %v3366
        %v3396 = vpack.c.b16 %v3369, %v3368
        %v3397 = vpack.c.b16 %v3371, %v3370
        %v3398 = vpack.c.b16 %v3373, %v3372
        %v3399 = vpack.c.b16 %v3375, %v3374
        %3424 = vmatprep.subr.bf16.mxu0 0
        %3425 = vmatpush1.bf16.msra.mxu0 %v3376
        %3426 = vmatprep.subr.bf16.mxu0 0
        %3427 = vmatpush1.bf16.msra.mxu0 %v3377
        %3428 = vmatprep.subr.bf16.mxu0 0
        %3429 = vmatpush1.bf16.msra.mxu0 %v3378
        %3430 = vmatprep.subr.bf16.mxu0 0
        %3431 = vmatpush1.bf16.msra.mxu0 %v3379
        %3432 = vmatprep.subr.bf16.mxu0 0
        %3433 = vmatpush1.bf16.msra.mxu0 %v3380
        %3434 = vmatprep.subr.bf16.mxu0 0
        %3435 = vmatpush1.bf16.msra.mxu0 %v3381
        %3436 = vmatprep.subr.bf16.mxu0 0
        %3437 = vmatpush1.bf16.msra.mxu0 %v3382
        %3438 = vmatprep.subr.bf16.mxu0 0
        %3439 = vmatpush1.bf16.msra.mxu0 %v3383
        %3440 = vmatprep.subr.bf16.mxu0 0
        %3441 = vmatpush1.bf16.msra.mxu0 %v3384
        %3442 = vmatprep.subr.bf16.mxu0 0
        %3443 = vmatpush1.bf16.msra.mxu0 %v3385
        %3444 = vmatprep.subr.bf16.mxu0 0
        %3445 = vmatpush1.bf16.msra.mxu0 %v3386
        %3446 = vmatprep.subr.bf16.mxu0 0
        %3447 = vmatpush1.bf16.msra.mxu0 %v3387
        %3448 = vmatprep.subr.bf16.mxu0 0
        %3449 = vmatpush1.bf16.msra.mxu0 %v3388
        %3450 = vmatprep.subr.bf16.mxu0 0
        %3451 = vmatpush1.bf16.msra.mxu0 %v3389
        %3452 = vmatprep.subr.bf16.mxu0 0
        %3453 = vmatpush1.bf16.msra.mxu0 %v3390
        %3454 = vmatprep.subr.bf16.mxu0 0
        %3455 = vmatpush1.bf16.msra.mxu0 %v3391
        %3456 = vmatprep.mubr.bf16.mxu0 %v2395
        %3457 = vmatmul.mubr.bf16.gmra.mrb[0].mxu0 %v2362
        %v3458 = vpop.f32.mrb[0].mxu0
        %v3459 = vadd.f32 %v3026, %v3458
        %v3460 = vpop.f32.mrb[0].mxu0
        %v3461 = vpop.f32.mrb[0].mxu0
        %v3462 = vadd.f32 %v3029, %v3461
        %v3463 = vpop.f32.mrb[0].mxu0
        %3464 = vmatprep.mubr.bf16.mxu0 %v2396
        %3465 = vmatmul.mubr.bf16.gmra.mrb[0].mxu0 %v2363
        %v3466 = vpop.f32.mrb[0].mxu0
        %v3467 = vadd.f32 %v3034, %v3466
        %v3468 = vpop.f32.mrb[0].mxu0
        %v3469 = vpop.f32.mrb[0].mxu0
        %v3470 = vadd.f32 %v3037, %v3469
        %v3471 = vpop.f32.mrb[0].mxu0
        %3472 = vmatprep.mubr.bf16.mxu0 %v2397
        %3473 = vmatmul.mubr.bf16.gmra.mrb[0].mxu0 %v2364
        %v3474 = vpop.f32.mrb[0].mxu0
        %v3475 = vadd.f32 %v3042, %v3474
        %v3476 = vpop.f32.mrb[0].mxu0
        %v3477 = vpop.f32.mrb[0].mxu0
        %v3478 = vadd.f32 %v3045, %v3477
        %v3479 = vpop.f32.mrb[0].mxu0
        %3480 = vmatprep.mubr.bf16.mxu0 %v2398
        %3481 = vmatmul.mubr.bf16.gmra.mrb[0].mxu0 %v2365
        %v3482 = vpop.f32.mrb[0].mxu0
        %v3483 = vadd.f32 %v3050, %v3482
        %v3484 = vpop.f32.mrb[0].mxu0
        %v3485 = vpop.f32.mrb[0].mxu0
        %v3486 = vadd.f32 %v3053, %v3485
        %v3487 = vpop.f32.mrb[0].mxu0
        %3488 = vmatprep.mubr.bf16.mxu0 %v2399
        %3489 = vmatmul.mubr.bf16.gmra.mrb[0].mxu0 %v2366
        %v3490 = vpop.f32.mrb[0].mxu0
        %v3491 = vadd.f32 %v3058, %v3490
        %v3492 = vpop.f32.mrb[0].mxu0
        %v3493 = vpop.f32.mrb[0].mxu0
        %v3494 = vadd.f32 %v3061, %v3493
        %v3495 = vpop.f32.mrb[0].mxu0
        %3496 = vmatprep.mubr.bf16.mxu0 %v2400
        %3497 = vmatmul.mubr.bf16.gmra.mrb[0].mxu0 %v2367
        %v3498 = vpop.f32.mrb[0].mxu0
        %v3499 = vadd.f32 %v3066, %v3498
        %v3500 = vpop.f32.mrb[0].mxu0
        %v3501 = vpop.f32.mrb[0].mxu0
        %v3502 = vadd.f32 %v3069, %v3501
        %v3503 = vpop.f32.mrb[0].mxu0
        %3504 = vmatprep.mubr.bf16.mxu0 %v2401
        %3505 = vmatmul.mubr.bf16.gmra.mrb[0].mxu0 %v2368
        %v3506 = vpop.f32.mrb[0].mxu0
        %v3507 = vadd.f32 %v3074, %v3506
        %v3508 = vpop.f32.mrb[0].mxu0
        %v3509 = vpop.f32.mrb[0].mxu0
        %v3510 = vadd.f32 %v3077, %v3509
        %v3511 = vpop.f32.mrb[0].mxu0
        %3512 = vmatprep.mubr.bf16.mxu0 %v2402
        %3513 = vmatmul.mubr.bf16.gmra.mrb[0].mxu0 %v2369
        %v3514 = vpop.f32.mrb[0].mxu0
        %v3515 = vadd.f32 %v3082, %v3514
        %v3516 = vpop.f32.mrb[0].mxu0
        %v3517 = vpop.f32.mrb[0].mxu0
        %v3518 = vadd.f32 %v3085, %v3517
        %v3519 = vpop.f32.mrb[0].mxu0
        %3520 = vmatprep.mubr.bf16.mxu0 %v2403
        %3521 = vmatmul.mubr.bf16.gmra.mrb[0].mxu0 %v2370
        %v3522 = vpop.f32.mrb[0].mxu0
        %v3523 = vadd.f32 %v3090, %v3522
        %v3524 = vpop.f32.mrb[0].mxu0
        %v3525 = vpop.f32.mrb[0].mxu0
        %v3526 = vadd.f32 %v3093, %v3525
        %v3527 = vpop.f32.mrb[0].mxu0
        %3528 = vmatprep.mubr.bf16.mxu0 %v2404
        %3529 = vmatmul.mubr.bf16.gmra.mrb[0].mxu0 %v2371
        %v3530 = vpop.f32.mrb[0].mxu0
        %v3531 = vadd.f32 %v3098, %v3530
        %v3532 = vpop.f32.mrb[0].mxu0
        %v3533 = vpop.f32.mrb[0].mxu0
        %v3534 = vadd.f32 %v3101, %v3533
        %v3535 = vpop.f32.mrb[0].mxu0
        %3536 = vmatprep.mubr.bf16.mxu0 %v2405
        %3537 = vmatmul.mubr.bf16.gmra.mrb[0].mxu0 %v2372
        %v3538 = vpop.f32.mrb[0].mxu0
        %v3539 = vadd.f32 %v3106, %v3538
        %v3540 = vpop.f32.mrb[0].mxu0
        %v3541 = vpop.f32.mrb[0].mxu0
        %v3542 = vadd.f32 %v3109, %v3541
        %v3543 = vpop.f32.mrb[0].mxu0
        %3544 = vmatprep.mubr.bf16.mxu0 %v2406
        %3545 = vmatmul.mubr.bf16.gmra.mrb[0].mxu0 %v2373
        %v3546 = vpop.f32.mrb[0].mxu0
        %v3547 = vadd.f32 %v3114, %v3546
        %v3548 = vpop.f32.mrb[0].mxu0
        %v3549 = vpop.f32.mrb[0].mxu0
        %v3550 = vadd.f32 %v3117, %v3549
        %v3551 = vpop.f32.mrb[0].mxu0
        %3552 = vmatprep.mubr.bf16.mxu0 %v2407
        %3553 = vmatmul.mubr.bf16.gmra.mrb[0].mxu0 %v2374
        %v3554 = vpop.f32.mrb[0].mxu0
        %v3555 = vadd.f32 %v3122, %v3554
        %v3556 = vpop.f32.mrb[0].mxu0
        %v3557 = vpop.f32.mrb[0].mxu0
        %v3558 = vadd.f32 %v3125, %v3557
        %v3559 = vpop.f32.mrb[0].mxu0
        %3560 = vmatprep.mubr.bf16.mxu0 %v2408
        %3561 = vmatmul.mubr.bf16.gmra.mrb[0].mxu0 %v2375
        %v3562 = vpop.f32.mrb[0].mxu0
        %v3563 = vadd.f32 %v3130, %v3562
        %v3564 = vpop.f32.mrb[0].mxu0
        %v3565 = vpop.f32.mrb[0].mxu0
        %v3566 = vadd.f32 %v3133, %v3565
        %v3567 = vpop.f32.mrb[0].mxu0
        %3568 = vmatprep.mubr.bf16.mxu0 %v2409
        %3569 = vmatmul.mubr.bf16.gmra.mrb[0].mxu0 %v2376
        %v3570 = vpop.f32.mrb[0].mxu0
        %v3571 = vadd.f32 %v3138, %v3570
        %v3572 = vpop.f32.mrb[0].mxu0
        %v3573 = vpop.f32.mrb[0].mxu0
        %v3574 = vadd.f32 %v3141, %v3573
        %v3575 = vpop.f32.mrb[0].mxu0
        %3576 = vmatprep.mubr.bf16.mxu0 %v2410
        %3577 = vmatmul.mubr.bf16.gmra.mrb[0].mxu0 %v2377
        %v3578 = vpop.f32.mrb[0].mxu0
        %v3579 = vadd.f32 %v3146, %v3578
        %v3580 = vpop.f32.mrb[0].mxu0
        %v3581 = vpop.f32.mrb[0].mxu0
        %v3582 = vadd.f32 %v3149, %v3581
        %v3583 = vpop.f32.mrb[0].mxu0
        %3584 = vmatprep.mubr.bf16.mxu0 %v2395
        %3585 = vmatmul.mubr.bf16.gmra.mrb[0].mxu0 %v2362
        %v3586 = vpop.f32.mrb[0].mxu0
        %v3587 = vadd.f32 %v3154, %v3586
        %v3588 = vpop.f32.mrb[0].mxu0
        %v3589 = vpop.f32.mrb[0].mxu0
        %v3590 = vadd.f32 %v3157, %v3589
        %v3591 = vpop.f32.mrb[0].mxu0
        %3592 = vmatprep.mubr.bf16.mxu0 %v2412
        %3593 = vmatmul.mubr.bf16.gmra.mrb[0].mxu0 %v2379
        %v3594 = vpop.f32.mrb[0].mxu0
        %v3595 = vadd.f32 %v3162, %v3594
        %v3596 = vpop.f32.mrb[0].mxu0
        %v3597 = vpop.f32.mrb[0].mxu0
        %v3598 = vadd.f32 %v3165, %v3597
        %v3599 = vpop.f32.mrb[0].mxu0
        %3600 = vmatprep.mubr.bf16.mxu0 %v2413
        %3601 = vmatmul.mubr.bf16.gmra.mrb[0].mxu0 %v2380
        %v3602 = vpop.f32.mrb[0].mxu0
        %v3603 = vadd.f32 %v3170, %v3602
        %v3604 = vpop.f32.mrb[0].mxu0
        %v3605 = vpop.f32.mrb[0].mxu0
        %v3606 = vadd.f32 %v3173, %v3605
        %v3607 = vpop.f32.mrb[0].mxu0
        %3608 = vmatprep.mubr.bf16.mxu0 %v2414
        %3609 = vmatmul.mubr.bf16.gmra.mrb[0].mxu0 %v2381
        %v3610 = vpop.f32.mrb[0].mxu0
        %v3611 = vadd.f32 %v3178, %v3610
        %v3612 = vpop.f32.mrb[0].mxu0
        %v3613 = vpop.f32.mrb[0].mxu0
        %v3614 = vadd.f32 %v3181, %v3613
        %v3615 = vpop.f32.mrb[0].mxu0
        %3616 = vmatprep.mubr.bf16.mxu0 %v2415
        %3617 = vmatmul.mubr.bf16.gmra.mrb[0].mxu0 %v2382
        %v3618 = vpop.f32.mrb[0].mxu0
        %v3619 = vadd.f32 %v3186, %v3618
        %v3620 = vpop.f32.mrb[0].mxu0
        %v3621 = vpop.f32.mrb[0].mxu0
        %v3622 = vadd.f32 %v3189, %v3621
        %v3623 = vpop.f32.mrb[0].mxu0
        %3624 = vmatprep.mubr.bf16.mxu0 %v2416
        %3625 = vmatmul.mubr.bf16.gmra.mrb[0].mxu0 %v2383
        %v3626 = vpop.f32.mrb[0].mxu0
        %v3627 = vadd.f32 %v3194, %v3626
        %v3628 = vpop.f32.mrb[0].mxu0
        %v3629 = vpop.f32.mrb[0].mxu0
        %v3630 = vadd.f32 %v3197, %v3629
        %v3631 = vpop.f32.mrb[0].mxu0
        %3632 = vmatprep.mubr.bf16.mxu0 %v2417
        %3633 = vmatmul.mubr.bf16.gmra.mrb[0].mxu0 %v2384
        %v3634 = vpop.f32.mrb[0].mxu0
        %v3635 = vadd.f32 %v3202, %v3634
        %v3636 = vpop.f32.mrb[0].mxu0
        %v3637 = vpop.f32.mrb[0].mxu0
        %v3638 = vadd.f32 %v3205, %v3637
        %v3639 = vpop.f32.mrb[0].mxu0
        %3640 = vmatprep.mubr.bf16.mxu0 %v2418
        %3641 = vmatmul.mubr.bf16.gmra.mrb[0].mxu0 %v2385
        %v3642 = vpop.f32.mrb[0].mxu0
        %v3643 = vadd.f32 %v3210, %v3642
        %v3644 = vpop.f32.mrb[0].mxu0
        %v3645 = vpop.f32.mrb[0].mxu0
        %v3646 = vadd.f32 %v3213, %v3645
        %v3647 = vpop.f32.mrb[0].mxu0
        %3648 = vmatprep.mubr.bf16.mxu0 %v2419
        %3649 = vmatmul.mubr.bf16.gmra.mrb[0].mxu0 %v2386
        %v3650 = vpop.f32.mrb[0].mxu0
        %v3651 = vadd.f32 %v3218, %v3650
        %v3652 = vpop.f32.mrb[0].mxu0
        %v3653 = vpop.f32.mrb[0].mxu0
        %v3654 = vadd.f32 %v3221, %v3653
        %v3655 = vpop.f32.mrb[0].mxu0
        %3656 = vmatprep.mubr.bf16.mxu0 %v2420
        %3657 = vmatmul.mubr.bf16.gmra.mrb[0].mxu0 %v2387
        %v3658 = vpop.f32.mrb[0].mxu0
        %v3659 = vadd.f32 %v3226, %v3658
        %v3660 = vpop.f32.mrb[0].mxu0
        %v3661 = vpop.f32.mrb[0].mxu0
        %v3662 = vadd.f32 %v3229, %v3661
        %v3663 = vpop.f32.mrb[0].mxu0
        %3664 = vmatprep.mubr.bf16.mxu0 %v2421
        %3665 = vmatmul.mubr.bf16.gmra.mrb[0].mxu0 %v2388
        %v3666 = vpop.f32.mrb[0].mxu0
        %v3667 = vadd.f32 %v3234, %v3666
        %v3668 = vpop.f32.mrb[0].mxu0
        %v3669 = vpop.f32.mrb[0].mxu0
        %v3670 = vadd.f32 %v3237, %v3669
        %v3671 = vpop.f32.mrb[0].mxu0
        %3672 = vmatprep.mubr.bf16.mxu0 %v2422
        %3673 = vmatmul.mubr.bf16.gmra.mrb[0].mxu0 %v2389
        %v3674 = vpop.f32.mrb[0].mxu0
        %v3675 = vadd.f32 %v3242, %v3674
        %v3676 = vpop.f32.mrb[0].mxu0
        %v3677 = vpop.f32.mrb[0].mxu0
        %v3678 = vadd.f32 %v3245, %v3677
        %v3679 = vpop.f32.mrb[0].mxu0
        %3680 = vmatprep.mubr.bf16.mxu0 %v2423
        %3681 = vmatmul.mubr.bf16.gmra.mrb[0].mxu0 %v2390
        %v3682 = vpop.f32.mrb[0].mxu0
        %v3683 = vadd.f32 %v3250, %v3682
        %v3684 = vpop.f32.mrb[0].mxu0
        %v3685 = vpop.f32.mrb[0].mxu0
        %v3686 = vadd.f32 %v3253, %v3685
        %v3687 = vpop.f32.mrb[0].mxu0
        %3688 = vmatprep.mubr.bf16.mxu0 %v2424
        %3689 = vmatmul.mubr.bf16.gmra.mrb[0].mxu0 %v2391
        %v3690 = vpop.f32.mrb[0].mxu0
        %v3691 = vadd.f32 %v3258, %v3690
        %v3692 = vpop.f32.mrb[0].mxu0
        %v3693 = vpop.f32.mrb[0].mxu0
        %v3694 = vadd.f32 %v3261, %v3693
        %v3695 = vpop.f32.mrb[0].mxu0
        %3696 = vmatprep.mubr.bf16.mxu0 %v2425
        %3697 = vmatmul.mubr.bf16.gmra.mrb[0].mxu0 %v2392
        %v3698 = vpop.f32.mrb[0].mxu0
        %v3699 = vadd.f32 %v3266, %v3698
        %v3700 = vpop.f32.mrb[0].mxu0
        %v3701 = vpop.f32.mrb[0].mxu0
        %v3702 = vadd.f32 %v3269, %v3701
        %v3703 = vpop.f32.mrb[0].mxu0
        %3704 = vmatprep.mubr.bf16.mxu0 %v2426
        %3705 = vmatmul.mubr.bf16.gmra.mrb[0].mxu0 %v2393
        %v3706 = vpop.f32.mrb[0].mxu0
        %v3707 = vadd.f32 %v3274, %v3706
        %v3708 = vpop.f32.mrb[0].mxu0
        %v3709 = vpop.f32.mrb[0].mxu0
        %v3710 = vadd.f32 %v3277, %v3709
        %v3711 = vpop.f32.mrb[0].mxu0
        %3712 = vdwg.mxu0
        %3713 = vmatprep.subr.bf16.mxu0 0
        %3714 = vmatpush1.bf16.msra.mxu0 %v3392
        %3715 = vmatprep.subr.bf16.mxu0 0
        %3716 = vmatpush1.bf16.msra.mxu0 %v3393
        %3717 = vmatprep.subr.bf16.mxu0 0
        %3718 = vmatpush1.bf16.msra.mxu0 %v3394
        %3719 = vmatprep.subr.bf16.mxu0 0
        %3720 = vmatpush1.bf16.msra.mxu0 %v3395
        %3721 = vmatprep.subr.bf16.mxu0 0
        %3722 = vmatpush1.bf16.msra.mxu0 %v3396
        %3723 = vmatprep.subr.bf16.mxu0 0
        %3724 = vmatpush1.bf16.msra.mxu0 %v3397
        %3725 = vmatprep.subr.bf16.mxu0 0
        %3726 = vmatpush1.bf16.msra.mxu0 %v3398
        %3727 = vmatprep.subr.bf16.mxu0 0
        %3728 = vmatpush1.bf16.msra.mxu0 %v3399
        %3729 = vmatprep.subr.bf16.mxu0 0
        %3730 = vmatpush1.bf16.msra.mxu0 0
        %3731 = vmatprep.subr.bf16.mxu0 0
        %3732 = vmatpush1.bf16.msra.mxu0 0
        %3733 = vmatprep.subr.bf16.mxu0 0
        %3734 = vmatpush1.bf16.msra.mxu0 0
        %3735 = vmatprep.subr.bf16.mxu0 0
        %3736 = vmatpush1.bf16.msra.mxu0 0
        %3737 = vmatprep.subr.bf16.mxu0 0
        %3738 = vmatpush1.bf16.msra.mxu0 0
        %3739 = vmatprep.subr.bf16.mxu0 0
        %3740 = vmatpush1.bf16.msra.mxu0 0
        %3741 = vmatprep.subr.bf16.mxu0 0
        %3742 = vmatpush1.bf16.msra.mxu0 0
        %3743 = vmatprep.subr.bf16.mxu0 0
        %3744 = vmatpush1.bf16.msra.mxu0 0
        %3745 = vmatprep.mubr.bf16.mxu0 0
        %3746 = vmatmul.mubr.bf16.gmra.mrb[0].mxu0 %v2428
        %v3747 = vpop.f32.mrb[0].mxu0
        %v3748 = vadd.f32 %v3459, %v3747
        %v3749 = vpop.f32.mrb[0].mxu0
        %v3750 = vpop.f32.mrb[0].mxu0
        %v3751 = vadd.f32 %v3462, %v3750
        %v3752 = vpop.f32.mrb[0].mxu0
        %3753 = vmatprep.mubr.bf16.mxu0 0
        %3754 = vmatmul.mubr.bf16.gmra.mrb[0].mxu0 %v2429
        %v3755 = vpop.f32.mrb[0].mxu0
        %v3756 = vadd.f32 %v3467, %v3755
        %v3757 = vpop.f32.mrb[0].mxu0
        %v3758 = vpop.f32.mrb[0].mxu0
        %v3759 = vadd.f32 %v3470, %v3758
        %v3760 = vpop.f32.mrb[0].mxu0
        %3761 = vmatprep.mubr.bf16.mxu0 0
        %3762 = vmatmul.mubr.bf16.gmra.mrb[0].mxu0 %v2430
        %v3763 = vpop.f32.mrb[0].mxu0
        %v3764 = vadd.f32 %v3475, %v3763
        %v3765 = vpop.f32.mrb[0].mxu0
        %v3766 = vpop.f32.mrb[0].mxu0
        %v3767 = vadd.f32 %v3478, %v3766
        %v3768 = vpop.f32.mrb[0].mxu0
        %3769 = vmatprep.mubr.bf16.mxu0 0
        %3770 = vmatmul.mubr.bf16.gmra.mrb[0].mxu0 %v2431
        %v3771 = vpop.f32.mrb[0].mxu0
        %v3772 = vadd.f32 %v3483, %v3771
        %v3773 = vpop.f32.mrb[0].mxu0
        %v3774 = vpop.f32.mrb[0].mxu0
        %v3775 = vadd.f32 %v3486, %v3774
        %v3776 = vpop.f32.mrb[0].mxu0
        %3777 = vmatprep.mubr.bf16.mxu0 0
        %3778 = vmatmul.mubr.bf16.gmra.mrb[0].mxu0 %v2432
        %v3779 = vpop.f32.mrb[0].mxu0
        %v3780 = vadd.f32 %v3491, %v3779
        %v3781 = vpop.f32.mrb[0].mxu0
        %v3782 = vpop.f32.mrb[0].mxu0
        %v3783 = vadd.f32 %v3494, %v3782
        %v3784 = vpop.f32.mrb[0].mxu0
        %3785 = vmatprep.mubr.bf16.mxu0 0
        %3786 = vmatmul.mubr.bf16.gmra.mrb[0].mxu0 %v2433
        %v3787 = vpop.f32.mrb[0].mxu0
        %v3788 = vadd.f32 %v3499, %v3787
        %v3789 = vpop.f32.mrb[0].mxu0
        %v3790 = vpop.f32.mrb[0].mxu0
        %v3791 = vadd.f32 %v3502, %v3790
        %v3792 = vpop.f32.mrb[0].mxu0
        %3793 = vmatprep.mubr.bf16.mxu0 0
        %3794 = vmatmul.mubr.bf16.gmra.mrb[0].mxu0 %v2434
        %v3795 = vpop.f32.mrb[0].mxu0
        %v3796 = vadd.f32 %v3507, %v3795
        %v3797 = vpop.f32.mrb[0].mxu0
        %v3798 = vpop.f32.mrb[0].mxu0
        %v3799 = vadd.f32 %v3510, %v3798
        %v3800 = vpop.f32.mrb[0].mxu0
        %3801 = vmatprep.mubr.bf16.mxu0 0
        %3802 = vmatmul.mubr.bf16.gmra.mrb[0].mxu0 %v2435
        %v3803 = vpop.f32.mrb[0].mxu0
        %v3804 = vadd.f32 %v3515, %v3803
        %v3805 = vpop.f32.mrb[0].mxu0
        %v3806 = vpop.f32.mrb[0].mxu0
        %v3807 = vadd.f32 %v3518, %v3806
        %v3808 = vpop.f32.mrb[0].mxu0
        %3809 = vmatprep.mubr.bf16.mxu0 0
        %3810 = vmatmul.mubr.bf16.gmra.mrb[0].mxu0 %v2436
        %v3811 = vpop.f32.mrb[0].mxu0
        %v3812 = vadd.f32 %v3523, %v3811
        %v3813 = vpop.f32.mrb[0].mxu0
        %v3814 = vpop.f32.mrb[0].mxu0
        %v3815 = vadd.f32 %v3526, %v3814
        %v3816 = vpop.f32.mrb[0].mxu0
        %3817 = vmatprep.mubr.bf16.mxu0 0
        %3818 = vmatmul.mubr.bf16.gmra.mrb[0].mxu0 %v2437
        %v3819 = vpop.f32.mrb[0].mxu0
        %v3820 = vadd.f32 %v3531, %v3819
        %v3821 = vpop.f32.mrb[0].mxu0
        %v3822 = vpop.f32.mrb[0].mxu0
        %v3823 = vadd.f32 %v3534, %v3822
        %v3824 = vpop.f32.mrb[0].mxu0
        %3825 = vmatprep.mubr.bf16.mxu0 0
        %3826 = vmatmul.mubr.bf16.gmra.mrb[0].mxu0 %v2438
        %v3827 = vpop.f32.mrb[0].mxu0
        %v3828 = vadd.f32 %v3539, %v3827
        %v3829 = vpop.f32.mrb[0].mxu0
        %v3830 = vpop.f32.mrb[0].mxu0
        %v3831 = vadd.f32 %v3542, %v3830
        %v3832 = vpop.f32.mrb[0].mxu0
        %3833 = vmatprep.mubr.bf16.mxu0 0
        %3834 = vmatmul.mubr.bf16.gmra.mrb[0].mxu0 %v2439
        %v3835 = vpop.f32.mrb[0].mxu0
        %v3836 = vadd.f32 %v3547, %v3835
        %v3837 = vpop.f32.mrb[0].mxu0
        %v3838 = vpop.f32.mrb[0].mxu0
        %v3839 = vadd.f32 %v3550, %v3838
        %v3840 = vpop.f32.mrb[0].mxu0
        %3841 = vmatprep.mubr.bf16.mxu0 0
        %3842 = vmatmul.mubr.bf16.gmra.mrb[0].mxu0 %v2440
        %v3843 = vpop.f32.mrb[0].mxu0
        %v3844 = vadd.f32 %v3555, %v3843
        %v3845 = vpop.f32.mrb[0].mxu0
        %v3846 = vpop.f32.mrb[0].mxu0
        %v3847 = vadd.f32 %v3558, %v3846
        %v3848 = vpop.f32.mrb[0].mxu0
        %3849 = vmatprep.mubr.bf16.mxu0 0
        %3850 = vmatmul.mubr.bf16.gmra.mrb[0].mxu0 %v2441
        %v3851 = vpop.f32.mrb[0].mxu0
        %v3852 = vadd.f32 %v3563, %v3851
        %v3853 = vpop.f32.mrb[0].mxu0
        %v3854 = vpop.f32.mrb[0].mxu0
        %v3855 = vadd.f32 %v3566, %v3854
        %v3856 = vpop.f32.mrb[0].mxu0
        %3857 = vmatprep.mubr.bf16.mxu0 0
        %3858 = vmatmul.mubr.bf16.gmra.mrb[0].mxu0 %v2442
        %v3859 = vpop.f32.mrb[0].mxu0
        %v3860 = vadd.f32 %v3571, %v3859
        %v3861 = vpop.f32.mrb[0].mxu0
        %v3862 = vpop.f32.mrb[0].mxu0
        %v3863 = vadd.f32 %v3574, %v3862
        %v3864 = vpop.f32.mrb[0].mxu0
        %3865 = vmatprep.mubr.bf16.mxu0 0
        %3866 = vmatmul.mubr.bf16.gmra.mrb[0].mxu0 %v2443
        %v3867 = vpop.f32.mrb[0].mxu0
        %v3868 = vadd.f32 %v3579, %v3867
        %v3869 = vpop.f32.mrb[0].mxu0
        %v3870 = vpop.f32.mrb[0].mxu0
        %v3871 = vadd.f32 %v3582, %v3870
        %v3872 = vpop.f32.mrb[0].mxu0
        %3873 = vmatprep.mubr.bf16.mxu0 0
        %3874 = vmatmul.mubr.bf16.gmra.mrb[0].mxu0 %v2428
        %v3875 = vpop.f32.mrb[0].mxu0
        %v3876 = vadd.f32 %v3587, %v3875
        %v3877 = vpop.f32.mrb[0].mxu0
        %v3878 = vpop.f32.mrb[0].mxu0
        %v3879 = vadd.f32 %v3590, %v3878
        %v3880 = vpop.f32.mrb[0].mxu0
        %3881 = vmatprep.mubr.bf16.mxu0 0
        %3882 = vmatmul.mubr.bf16.gmra.mrb[0].mxu0 %v2445
        %v3883 = vpop.f32.mrb[0].mxu0
        %v3884 = vadd.f32 %v3595, %v3883
        %v3885 = vpop.f32.mrb[0].mxu0
        %v3886 = vpop.f32.mrb[0].mxu0
        %v3887 = vadd.f32 %v3598, %v3886
        %v3888 = vpop.f32.mrb[0].mxu0
        %3889 = vmatprep.mubr.bf16.mxu0 0
        %3890 = vmatmul.mubr.bf16.gmra.mrb[0].mxu0 %v2446
        %v3891 = vpop.f32.mrb[0].mxu0
        %v3892 = vadd.f32 %v3603, %v3891
        %v3893 = vpop.f32.mrb[0].mxu0
        %v3894 = vpop.f32.mrb[0].mxu0
        %v3895 = vadd.f32 %v3606, %v3894
        %v3896 = vpop.f32.mrb[0].mxu0
        %3897 = vmatprep.mubr.bf16.mxu0 0
        %3898 = vmatmul.mubr.bf16.gmra.mrb[0].mxu0 %v2447
        %v3899 = vpop.f32.mrb[0].mxu0
        %v3900 = vadd.f32 %v3611, %v3899
        %v3901 = vpop.f32.mrb[0].mxu0
        %v3902 = vpop.f32.mrb[0].mxu0
        %v3903 = vadd.f32 %v3614, %v3902
        %v3904 = vpop.f32.mrb[0].mxu0
        %3905 = vmatprep.mubr.bf16.mxu0 0
        %3906 = vmatmul.mubr.bf16.gmra.mrb[0].mxu0 %v2448
        %v3907 = vpop.f32.mrb[0].mxu0
        %v3908 = vadd.f32 %v3619, %v3907
        %v3909 = vpop.f32.mrb[0].mxu0
        %v3910 = vpop.f32.mrb[0].mxu0
        %v3911 = vadd.f32 %v3622, %v3910
        %v3912 = vpop.f32.mrb[0].mxu0
        %3913 = vmatprep.mubr.bf16.mxu0 0
        %3914 = vmatmul.mubr.bf16.gmra.mrb[0].mxu0 %v2449
        %v3915 = vpop.f32.mrb[0].mxu0
        %v3916 = vadd.f32 %v3627, %v3915
        %v3917 = vpop.f32.mrb[0].mxu0
        %v3918 = vpop.f32.mrb[0].mxu0
        %v3919 = vadd.f32 %v3630, %v3918
        %v3920 = vpop.f32.mrb[0].mxu0
        %3921 = vmatprep.mubr.bf16.mxu0 0
        %3922 = vmatmul.mubr.bf16.gmra.mrb[0].mxu0 %v2450
        %v3923 = vpop.f32.mrb[0].mxu0
        %v3924 = vadd.f32 %v3635, %v3923
        %v3925 = vpop.f32.mrb[0].mxu0
        %v3926 = vpop.f32.mrb[0].mxu0
        %v3927 = vadd.f32 %v3638, %v3926
        %v3928 = vpop.f32.mrb[0].mxu0
        %3929 = vmatprep.mubr.bf16.mxu0 0
        %3930 = vmatmul.mubr.bf16.gmra.mrb[0].mxu0 %v2451
        %v3931 = vpop.f32.mrb[0].mxu0
        %v3932 = vadd.f32 %v3643, %v3931
        %v3933 = vpop.f32.mrb[0].mxu0
        %v3934 = vpop.f32.mrb[0].mxu0
        %v3935 = vadd.f32 %v3646, %v3934
        %v3936 = vpop.f32.mrb[0].mxu0
        %3937 = vmatprep.mubr.bf16.mxu0 0
        %3938 = vmatmul.mubr.bf16.gmra.mrb[0].mxu0 %v2452
        %v3939 = vpop.f32.mrb[0].mxu0
        %v3940 = vadd.f32 %v3651, %v3939
        %v3941 = vpop.f32.mrb[0].mxu0
        %v3942 = vpop.f32.mrb[0].mxu0
        %v3943 = vadd.f32 %v3654, %v3942
        %v3944 = vpop.f32.mrb[0].mxu0
        %3945 = vmatprep.mubr.bf16.mxu0 0
        %3946 = vmatmul.mubr.bf16.gmra.mrb[0].mxu0 %v2453
        %v3947 = vpop.f32.mrb[0].mxu0
        %v3948 = vadd.f32 %v3659, %v3947
        %v3949 = vpop.f32.mrb[0].mxu0
        %v3950 = vpop.f32.mrb[0].mxu0
        %v3951 = vadd.f32 %v3662, %v3950
        %v3952 = vpop.f32.mrb[0].mxu0
        %3953 = vmatprep.mubr.bf16.mxu0 0
        %3954 = vmatmul.mubr.bf16.gmra.mrb[0].mxu0 %v2454
        %v3955 = vpop.f32.mrb[0].mxu0
        %v3956 = vadd.f32 %v3667, %v3955
        %v3957 = vpop.f32.mrb[0].mxu0
        %v3958 = vpop.f32.mrb[0].mxu0
        %v3959 = vadd.f32 %v3670, %v3958
        %v3960 = vpop.f32.mrb[0].mxu0
        %3961 = vmatprep.mubr.bf16.mxu0 0
        %3962 = vmatmul.mubr.bf16.gmra.mrb[0].mxu0 %v2455
        %v3963 = vpop.f32.mrb[0].mxu0
        %v3964 = vadd.f32 %v3675, %v3963
        %v3965 = vpop.f32.mrb[0].mxu0
        %v3966 = vpop.f32.mrb[0].mxu0
        %v3967 = vadd.f32 %v3678, %v3966
        %v3968 = vpop.f32.mrb[0].mxu0
        %3969 = vmatprep.mubr.bf16.mxu0 0
        %3970 = vmatmul.mubr.bf16.gmra.mrb[0].mxu0 %v2456
        %v3971 = vpop.f32.mrb[0].mxu0
        %v3972 = vadd.f32 %v3683, %v3971
        %v3973 = vpop.f32.mrb[0].mxu0
        %v3974 = vpop.f32.mrb[0].mxu0
        %v3975 = vadd.f32 %v3686, %v3974
        %v3976 = vpop.f32.mrb[0].mxu0
        %3977 = vmatprep.mubr.bf16.mxu0 0
        %3978 = vmatmul.mubr.bf16.gmra.mrb[0].mxu0 %v2457
        %v3979 = vpop.f32.mrb[0].mxu0
        %v3980 = vadd.f32 %v3691, %v3979
        %v3981 = vpop.f32.mrb[0].mxu0
        %v3982 = vpop.f32.mrb[0].mxu0
        %v3983 = vadd.f32 %v3694, %v3982
        %v3984 = vpop.f32.mrb[0].mxu0
        %3985 = vmatprep.mubr.bf16.mxu0 0
        %3986 = vmatmul.mubr.bf16.gmra.mrb[0].mxu0 %v2458
        %v3987 = vpop.f32.mrb[0].mxu0
        %v3988 = vadd.f32 %v3699, %v3987
        %v3989 = vpop.f32.mrb[0].mxu0
        %v3990 = vpop.f32.mrb[0].mxu0
        %v3991 = vadd.f32 %v3702, %v3990
        %v3992 = vpop.f32.mrb[0].mxu0
        %3993 = vmatprep.mubr.bf16.mxu0 0
        %3994 = vmatmul.mubr.bf16.gmra.mrb[0].mxu0 %v2459
        %v3995 = vpop.f32.mrb[0].mxu0
        %v3996 = vadd.f32 %v3707, %v3995
        %v3997 = vpop.f32.mrb[0].mxu0
        %v3998 = vpop.f32.mrb[0].mxu0
        %v3999 = vadd.f32 %v3710, %v3998
        %v4000 = vpop.f32.mrb[0].mxu0
        %4001 = vdwg.mxu0
        %s4002 = scalar_lea.vmem %s3, 384
        %v4003 = vld [vmem:[%s4002] sm:$0xf]
        %v4004 = vld [vmem:[%s4002 + $0x4] sm:$0xf]
        %v4005 = vld [vmem:[%s4002 + $0x8] sm:$0xf]
        %v4006 = vld [vmem:[%s4002 + $0xc] sm:$0xf]
        %v4007 = vld [vmem:[%s4002 + $0x10] sm:$0xf]
        %v4008 = vld [vmem:[%s4002 + $0x14] sm:$0xf]
        %v4009 = vld [vmem:[%s4002 + $0x18] sm:$0xf]
        %v4010 = vld [vmem:[%s4002 + $0x1c] sm:$0xf]
        %v4011 = vld [vmem:[%s4002 + $0x20] sm:$0xf]
        %v4012 = vld [vmem:[%s4002 + $0x24] sm:$0xf]
        %v4013 = vld [vmem:[%s4002 + $0x28] sm:$0xf]
        %v4014 = vld [vmem:[%s4002 + $0x2c] sm:$0xf]
        %v4015 = vld [vmem:[%s4002 + $0x30] sm:$0xf]
        %v4016 = vld [vmem:[%s4002 + $0x34] sm:$0xf]
        %v4017 = vld [vmem:[%s4002 + $0x38] sm:$0xf]
        %v4018 = vld [vmem:[%s4002 + $0x3c] sm:$0xf]
        %v4019 = vld [vmem:[%s4002 + $0x40] sm:$0xf]
        %v4020 = vld [vmem:[%s4002 + $0x44] sm:$0xf]
        %v4021 = vld [vmem:[%s4002 + $0x48] sm:$0xf]
        %v4022 = vld [vmem:[%s4002 + $0x4c] sm:$0xf]
        %v4023 = vld [vmem:[%s4002 + $0x50] sm:$0xf]
        %v4024 = vld [vmem:[%s4002 + $0x54] sm:$0xf]
        %v4025 = vld [vmem:[%s4002 + $0x58] sm:$0xf]
        %v4026 = vld [vmem:[%s4002 + $0x5c] sm:$0xf]
        %v4027 = vld [vmem:[%s4002 + $0x60] sm:$0xf]
        %v4028 = vld [vmem:[%s4002 + $0x64] sm:$0xf]
        %v4029 = vld [vmem:[%s4002 + $0x68] sm:$0xf]
        %v4030 = vld [vmem:[%s4002 + $0x6c] sm:$0xf]
        %v4031 = vld [vmem:[%s4002 + $0x70] sm:$0xf]
        %v4032 = vld [vmem:[%s4002 + $0x74] sm:$0xf]
        %v4033 = vld [vmem:[%s4002 + $0x78] sm:$0xf]
        %v4034 = vld [vmem:[%s4002 + $0x7c] sm:$0xf]
        %v4035 = vld [vmem:[%s4002 + $0x80] sm:$0xf]
        %v4036 = vld [vmem:[%s4002 + $0x84] sm:$0xf]
        %v4037 = vld [vmem:[%s4002 + $0x88] sm:$0xf]
        %v4038 = vld [vmem:[%s4002 + $0x8c] sm:$0xf]
        %v4039 = vld [vmem:[%s4002 + $0x90] sm:$0xf]
        %v4040 = vld [vmem:[%s4002 + $0x94] sm:$0xf]
        %v4041 = vld [vmem:[%s4002 + $0x98] sm:$0xf]
        %v4042 = vld [vmem:[%s4002 + $0x9c] sm:$0xf]
        %v4043 = vld [vmem:[%s4002 + $0xa0] sm:$0xf]
        %v4044 = vld [vmem:[%s4002 + $0xa4] sm:$0xf]
        %v4045 = vld [vmem:[%s4002 + $0xa8] sm:$0xf]
        %v4046 = vld [vmem:[%s4002 + $0xac] sm:$0xf]
        %v4047 = vld [vmem:[%s4002 + $0xb0] sm:$0xf]
        %v4048 = vld [vmem:[%s4002 + $0xb4] sm:$0xf]
        %v4049 = vld [vmem:[%s4002 + $0xb8] sm:$0xf]
        %v4050 = vld [vmem:[%s4002 + $0xbc] sm:$0xf]
        %v4099 = vunpack.c.l.b16 %v4003
        %v4100 = vunpack.c.l.b16 %v4004
        %v4101 = vunpack.c.l.b16 %v4005
        %v4102 = vunpack.c.l.b16 %v4006
        %v4103 = vunpack.c.l.b16 %v4007
        %v4104 = vunpack.c.l.b16 %v4008
        %v4105 = vunpack.c.l.b16 %v4009
        %v4106 = vunpack.c.l.b16 %v4010
        %v4107 = vunpack.c.l.b16 %v4011
        %v4108 = vunpack.c.l.b16 %v4012
        %v4109 = vunpack.c.l.b16 %v4013
        %v4110 = vunpack.c.l.b16 %v4014
        %v4111 = vunpack.c.l.b16 %v4015
        %v4112 = vunpack.c.l.b16 %v4016
        %v4113 = vunpack.c.l.b16 %v4017
        %v4114 = vunpack.c.l.b16 %v4018
        %v4115 = vunpack.c.l.b16 %v4019
        %v4116 = vunpack.c.l.b16 %v4020
        %v4117 = vunpack.c.l.b16 %v4021
        %v4118 = vunpack.c.l.b16 %v4022
        %v4119 = vunpack.c.l.b16 %v4023
        %v4120 = vunpack.c.l.b16 %v4024
        %v4121 = vunpack.c.l.b16 %v4025
        %v4122 = vunpack.c.l.b16 %v4026
        %v4123 = vunpack.c.l.b16 %v4027
        %v4124 = vunpack.c.l.b16 %v4028
        %v4125 = vunpack.c.l.b16 %v4029
        %v4126 = vunpack.c.l.b16 %v4030
        %v4127 = vunpack.c.l.b16 %v4031
        %v4128 = vunpack.c.l.b16 %v4032
        %v4129 = vunpack.c.l.b16 %v4033
        %v4130 = vunpack.c.l.b16 %v4034
        %v4131 = vunpack.c.l.b16 %v4035
        %v4132 = vunpack.c.l.b16 %v4036
        %v4133 = vunpack.c.l.b16 %v4037
        %v4134 = vunpack.c.l.b16 %v4038
        %v4135 = vunpack.c.l.b16 %v4039
        %v4136 = vunpack.c.l.b16 %v4040
        %v4137 = vunpack.c.l.b16 %v4041
        %v4138 = vunpack.c.l.b16 %v4042
        %v4139 = vunpack.c.l.b16 %v4043
        %v4140 = vunpack.c.l.b16 %v4044
        %v4141 = vunpack.c.l.b16 %v4045
        %v4142 = vunpack.c.l.b16 %v4046
        %v4143 = vunpack.c.l.b16 %v4047
        %v4144 = vunpack.c.l.b16 %v4048
        %v4145 = vunpack.c.l.b16 %v4049
        %v4146 = vunpack.c.l.b16 %v4050
        %v4147 = vpack.c.b16 %v4100, %v4099
        %v4148 = vpack.c.b16 %v4102, %v4101
        %v4149 = vpack.c.b16 %v4104, %v4103
        %v4150 = vpack.c.b16 %v4106, %v4105
        %v4151 = vpack.c.b16 %v4108, %v4107
        %v4152 = vpack.c.b16 %v4110, %v4109
        %v4153 = vpack.c.b16 %v4112, %v4111
        %v4154 = vpack.c.b16 %v4114, %v4113
        %v4155 = vpack.c.b16 %v4116, %v4115
        %v4156 = vpack.c.b16 %v4118, %v4117
        %v4157 = vpack.c.b16 %v4120, %v4119
        %v4158 = vpack.c.b16 %v4122, %v4121
        %v4159 = vpack.c.b16 %v4124, %v4123
        %v4160 = vpack.c.b16 %v4126, %v4125
        %v4161 = vpack.c.b16 %v4128, %v4127
        %v4162 = vpack.c.b16 %v4130, %v4129
        %v4163 = vpack.c.b16 %v4132, %v4131
        %v4164 = vpack.c.b16 %v4134, %v4133
        %v4165 = vpack.c.b16 %v4136, %v4135
        %v4166 = vpack.c.b16 %v4138, %v4137
        %v4167 = vpack.c.b16 %v4140, %v4139
        %v4168 = vpack.c.b16 %v4142, %v4141
        %v4169 = vpack.c.b16 %v4144, %v4143
        %v4170 = vpack.c.b16 %v4146, %v4145
        %4195 = vmatprep.subr.bf16.mxu0 0
        %4196 = vmatpush1.bf16.msra.mxu0 %v4147
        %4197 = vmatprep.subr.bf16.mxu0 0
        %4198 = vmatpush1.bf16.msra.mxu0 %v4148
        %4199 = vmatprep.subr.bf16.mxu0 0
        %4200 = vmatpush1.bf16.msra.mxu0 %v4149
        %4201 = vmatprep.subr.bf16.mxu0 0
        %4202 = vmatpush1.bf16.msra.mxu0 %v4150
        %4203 = vmatprep.subr.bf16.mxu0 0
        %4204 = vmatpush1.bf16.msra.mxu0 %v4151
        %4205 = vmatprep.subr.bf16.mxu0 0
        %4206 = vmatpush1.bf16.msra.mxu0 %v4152
        %4207 = vmatprep.subr.bf16.mxu0 0
        %4208 = vmatpush1.bf16.msra.mxu0 %v4153
        %4209 = vmatprep.subr.bf16.mxu0 0
        %4210 = vmatpush1.bf16.msra.mxu0 %v4154
        %4211 = vmatprep.subr.bf16.mxu0 0
        %4212 = vmatpush1.bf16.msra.mxu0 %v4155
        %4213 = vmatprep.subr.bf16.mxu0 0
        %4214 = vmatpush1.bf16.msra.mxu0 %v4156
        %4215 = vmatprep.subr.bf16.mxu0 0
        %4216 = vmatpush1.bf16.msra.mxu0 %v4157
        %4217 = vmatprep.subr.bf16.mxu0 0
        %4218 = vmatpush1.bf16.msra.mxu0 %v4158
        %4219 = vmatprep.subr.bf16.mxu0 0
        %4220 = vmatpush1.bf16.msra.mxu0 %v4159
        %4221 = vmatprep.subr.bf16.mxu0 0
        %4222 = vmatpush1.bf16.msra.mxu0 %v4160
        %4223 = vmatprep.subr.bf16.mxu0 0
        %4224 = vmatpush1.bf16.msra.mxu0 %v4161
        %4225 = vmatprep.subr.bf16.mxu0 0
        %4226 = vmatpush1.bf16.msra.mxu0 %v4162
        %4227 = vmatprep.mubr.bf16.mxu0 %v2397
        %4228 = vmatmul.mubr.bf16.gmra.mrb[0].mxu0 %v2364
        %v4229 = vpop.f32.mrb[0].mxu0
        %v4230 = vadd.f32 0.0, %v4229
        %v4231 = vpop.f32.mrb[0].mxu0
        %v4232 = vpop.f32.mrb[0].mxu0
        %v4233 = vadd.f32 0.0, %v4232
        %v4234 = vpop.f32.mrb[0].mxu0
        %4235 = vmatprep.mubr.bf16.mxu0 %v2398
        %4236 = vmatmul.mubr.bf16.gmra.mrb[0].mxu0 %v2365
        %v4237 = vpop.f32.mrb[0].mxu0
        %v4238 = vadd.f32 0.0, %v4237
        %v4239 = vpop.f32.mrb[0].mxu0
        %v4240 = vpop.f32.mrb[0].mxu0
        %v4241 = vadd.f32 0.0, %v4240
        %v4242 = vpop.f32.mrb[0].mxu0
        %4243 = vmatprep.mubr.bf16.mxu0 %v2399
        %4244 = vmatmul.mubr.bf16.gmra.mrb[0].mxu0 %v2366
        %v4245 = vpop.f32.mrb[0].mxu0
        %v4246 = vadd.f32 0.0, %v4245
        %v4247 = vpop.f32.mrb[0].mxu0
        %v4248 = vpop.f32.mrb[0].mxu0
        %v4249 = vadd.f32 0.0, %v4248
        %v4250 = vpop.f32.mrb[0].mxu0
        %4251 = vmatprep.mubr.bf16.mxu0 %v2400
        %4252 = vmatmul.mubr.bf16.gmra.mrb[0].mxu0 %v2367
        %v4253 = vpop.f32.mrb[0].mxu0
        %v4254 = vadd.f32 0.0, %v4253
        %v4255 = vpop.f32.mrb[0].mxu0
        %v4256 = vpop.f32.mrb[0].mxu0
        %v4257 = vadd.f32 0.0, %v4256
        %v4258 = vpop.f32.mrb[0].mxu0
        %4259 = vmatprep.mubr.bf16.mxu0 %v2401
        %4260 = vmatmul.mubr.bf16.gmra.mrb[0].mxu0 %v2368
        %v4261 = vpop.f32.mrb[0].mxu0
        %v4262 = vadd.f32 0.0, %v4261
        %v4263 = vpop.f32.mrb[0].mxu0
        %v4264 = vpop.f32.mrb[0].mxu0
        %v4265 = vadd.f32 0.0, %v4264
        %v4266 = vpop.f32.mrb[0].mxu0
        %4267 = vmatprep.mubr.bf16.mxu0 %v2402
        %4268 = vmatmul.mubr.bf16.gmra.mrb[0].mxu0 %v2369
        %v4269 = vpop.f32.mrb[0].mxu0
        %v4270 = vadd.f32 0.0, %v4269
        %v4271 = vpop.f32.mrb[0].mxu0
        %v4272 = vpop.f32.mrb[0].mxu0
        %v4273 = vadd.f32 0.0, %v4272
        %v4274 = vpop.f32.mrb[0].mxu0
        %4275 = vmatprep.mubr.bf16.mxu0 %v2403
        %4276 = vmatmul.mubr.bf16.gmra.mrb[0].mxu0 %v2370
        %v4277 = vpop.f32.mrb[0].mxu0
        %v4278 = vadd.f32 0.0, %v4277
        %v4279 = vpop.f32.mrb[0].mxu0
        %v4280 = vpop.f32.mrb[0].mxu0
        %v4281 = vadd.f32 0.0, %v4280
        %v4282 = vpop.f32.mrb[0].mxu0
        %4283 = vmatprep.mubr.bf16.mxu0 %v2404
        %4284 = vmatmul.mubr.bf16.gmra.mrb[0].mxu0 %v2371
        %v4285 = vpop.f32.mrb[0].mxu0
        %v4286 = vadd.f32 0.0, %v4285
        %v4287 = vpop.f32.mrb[0].mxu0
        %v4288 = vpop.f32.mrb[0].mxu0
        %v4289 = vadd.f32 0.0, %v4288
        %v4290 = vpop.f32.mrb[0].mxu0
        %4291 = vmatprep.mubr.bf16.mxu0 %v2405
        %4292 = vmatmul.mubr.bf16.gmra.mrb[0].mxu0 %v2372
        %v4293 = vpop.f32.mrb[0].mxu0
        %v4294 = vadd.f32 0.0, %v4293
        %v4295 = vpop.f32.mrb[0].mxu0
        %v4296 = vpop.f32.mrb[0].mxu0
        %v4297 = vadd.f32 0.0, %v4296
        %v4298 = vpop.f32.mrb[0].mxu0
        %4299 = vmatprep.mubr.bf16.mxu0 %v2406
        %4300 = vmatmul.mubr.bf16.gmra.mrb[0].mxu0 %v2373
        %v4301 = vpop.f32.mrb[0].mxu0
        %v4302 = vadd.f32 0.0, %v4301
        %v4303 = vpop.f32.mrb[0].mxu0
        %v4304 = vpop.f32.mrb[0].mxu0
        %v4305 = vadd.f32 0.0, %v4304
        %v4306 = vpop.f32.mrb[0].mxu0
        %4307 = vmatprep.mubr.bf16.mxu0 %v2407
        %4308 = vmatmul.mubr.bf16.gmra.mrb[0].mxu0 %v2374
        %v4309 = vpop.f32.mrb[0].mxu0
        %v4310 = vadd.f32 0.0, %v4309
        %v4311 = vpop.f32.mrb[0].mxu0
        %v4312 = vpop.f32.mrb[0].mxu0
        %v4313 = vadd.f32 0.0, %v4312
        %v4314 = vpop.f32.mrb[0].mxu0
        %4315 = vmatprep.mubr.bf16.mxu0 %v2408
        %4316 = vmatmul.mubr.bf16.gmra.mrb[0].mxu0 %v2375
        %v4317 = vpop.f32.mrb[0].mxu0
        %v4318 = vadd.f32 0.0, %v4317
        %v4319 = vpop.f32.mrb[0].mxu0
        %v4320 = vpop.f32.mrb[0].mxu0
        %v4321 = vadd.f32 0.0, %v4320
        %v4322 = vpop.f32.mrb[0].mxu0
        %4323 = vmatprep.mubr.bf16.mxu0 %v2409
        %4324 = vmatmul.mubr.bf16.gmra.mrb[0].mxu0 %v2376
        %v4325 = vpop.f32.mrb[0].mxu0
        %v4326 = vadd.f32 0.0, %v4325
        %v4327 = vpop.f32.mrb[0].mxu0
        %v4328 = vpop.f32.mrb[0].mxu0
        %v4329 = vadd.f32 0.0, %v4328
        %v4330 = vpop.f32.mrb[0].mxu0
        %4331 = vmatprep.mubr.bf16.mxu0 %v2410
        %4332 = vmatmul.mubr.bf16.gmra.mrb[0].mxu0 %v2377
        %v4333 = vpop.f32.mrb[0].mxu0
        %v4334 = vadd.f32 0.0, %v4333
        %v4335 = vpop.f32.mrb[0].mxu0
        %v4336 = vpop.f32.mrb[0].mxu0
        %v4337 = vadd.f32 0.0, %v4336
        %v4338 = vpop.f32.mrb[0].mxu0
        %4339 = vmatprep.mubr.bf16.mxu0 %v2411
        %4340 = vmatmul.mubr.bf16.gmra.mrb[0].mxu0 %v2378
        %v4341 = vpop.f32.mrb[0].mxu0
        %v4342 = vadd.f32 0.0, %v4341
        %v4343 = vpop.f32.mrb[0].mxu0
        %v4344 = vpop.f32.mrb[0].mxu0
        %v4345 = vadd.f32 0.0, %v4344
        %v4346 = vpop.f32.mrb[0].mxu0
        %4347 = vmatprep.mubr.bf16.mxu0 %v2395
        %4348 = vmatmul.mubr.bf16.gmra.mrb[0].mxu0 %v2362
        %v4349 = vpop.f32.mrb[0].mxu0
        %v4350 = vadd.f32 0.0, %v4349
        %v4351 = vpop.f32.mrb[0].mxu0
        %v4352 = vpop.f32.mrb[0].mxu0
        %v4353 = vadd.f32 0.0, %v4352
        %v4354 = vpop.f32.mrb[0].mxu0
        %4355 = vmatprep.mubr.bf16.mxu0 %v2413
        %4356 = vmatmul.mubr.bf16.gmra.mrb[0].mxu0 %v2380
        %v4357 = vpop.f32.mrb[0].mxu0
        %v4358 = vadd.f32 0.0, %v4357
        %v4359 = vpop.f32.mrb[0].mxu0
        %v4360 = vpop.f32.mrb[0].mxu0
        %v4361 = vadd.f32 0.0, %v4360
        %v4362 = vpop.f32.mrb[0].mxu0
        %4363 = vmatprep.mubr.bf16.mxu0 %v2414
        %4364 = vmatmul.mubr.bf16.gmra.mrb[0].mxu0 %v2381
        %v4365 = vpop.f32.mrb[0].mxu0
        %v4366 = vadd.f32 0.0, %v4365
        %v4367 = vpop.f32.mrb[0].mxu0
        %v4368 = vpop.f32.mrb[0].mxu0
        %v4369 = vadd.f32 0.0, %v4368
        %v4370 = vpop.f32.mrb[0].mxu0
        %4371 = vmatprep.mubr.bf16.mxu0 %v2415
        %4372 = vmatmul.mubr.bf16.gmra.mrb[0].mxu0 %v2382
        %v4373 = vpop.f32.mrb[0].mxu0
        %v4374 = vadd.f32 0.0, %v4373
        %v4375 = vpop.f32.mrb[0].mxu0
        %v4376 = vpop.f32.mrb[0].mxu0
        %v4377 = vadd.f32 0.0, %v4376
        %v4378 = vpop.f32.mrb[0].mxu0
        %4379 = vmatprep.mubr.bf16.mxu0 %v2416
        %4380 = vmatmul.mubr.bf16.gmra.mrb[0].mxu0 %v2383
        %v4381 = vpop.f32.mrb[0].mxu0
        %v4382 = vadd.f32 0.0, %v4381
        %v4383 = vpop.f32.mrb[0].mxu0
        %v4384 = vpop.f32.mrb[0].mxu0
        %v4385 = vadd.f32 0.0, %v4384
        %v4386 = vpop.f32.mrb[0].mxu0
        %4387 = vmatprep.mubr.bf16.mxu0 %v2417
        %4388 = vmatmul.mubr.bf16.gmra.mrb[0].mxu0 %v2384
        %v4389 = vpop.f32.mrb[0].mxu0
        %v4390 = vadd.f32 0.0, %v4389
        %v4391 = vpop.f32.mrb[0].mxu0
        %v4392 = vpop.f32.mrb[0].mxu0
        %v4393 = vadd.f32 0.0, %v4392
        %v4394 = vpop.f32.mrb[0].mxu0
        %4395 = vmatprep.mubr.bf16.mxu0 %v2418
        %4396 = vmatmul.mubr.bf16.gmra.mrb[0].mxu0 %v2385
        %v4397 = vpop.f32.mrb[0].mxu0
        %v4398 = vadd.f32 0.0, %v4397
        %v4399 = vpop.f32.mrb[0].mxu0
        %v4400 = vpop.f32.mrb[0].mxu0
        %v4401 = vadd.f32 0.0, %v4400
        %v4402 = vpop.f32.mrb[0].mxu0
        %4403 = vmatprep.mubr.bf16.mxu0 %v2419
        %4404 = vmatmul.mubr.bf16.gmra.mrb[0].mxu0 %v2386
        %v4405 = vpop.f32.mrb[0].mxu0
        %v4406 = vadd.f32 0.0, %v4405
        %v4407 = vpop.f32.mrb[0].mxu0
        %v4408 = vpop.f32.mrb[0].mxu0
        %v4409 = vadd.f32 0.0, %v4408
        %v4410 = vpop.f32.mrb[0].mxu0
        %4411 = vmatprep.mubr.bf16.mxu0 %v2420
        %4412 = vmatmul.mubr.bf16.gmra.mrb[0].mxu0 %v2387
        %v4413 = vpop.f32.mrb[0].mxu0
        %v4414 = vadd.f32 0.0, %v4413
        %v4415 = vpop.f32.mrb[0].mxu0
        %v4416 = vpop.f32.mrb[0].mxu0
        %v4417 = vadd.f32 0.0, %v4416
        %v4418 = vpop.f32.mrb[0].mxu0
        %4419 = vmatprep.mubr.bf16.mxu0 %v2421
        %4420 = vmatmul.mubr.bf16.gmra.mrb[0].mxu0 %v2388
        %v4421 = vpop.f32.mrb[0].mxu0
        %v4422 = vadd.f32 0.0, %v4421
        %v4423 = vpop.f32.mrb[0].mxu0
        %v4424 = vpop.f32.mrb[0].mxu0
        %v4425 = vadd.f32 0.0, %v4424
        %v4426 = vpop.f32.mrb[0].mxu0
        %4427 = vmatprep.mubr.bf16.mxu0 %v2422
        %4428 = vmatmul.mubr.bf16.gmra.mrb[0].mxu0 %v2389
        %v4429 = vpop.f32.mrb[0].mxu0
        %v4430 = vadd.f32 0.0, %v4429
        %v4431 = vpop.f32.mrb[0].mxu0
        %v4432 = vpop.f32.mrb[0].mxu0
        %v4433 = vadd.f32 0.0, %v4432
        %v4434 = vpop.f32.mrb[0].mxu0
        %4435 = vmatprep.mubr.bf16.mxu0 %v2423
        %4436 = vmatmul.mubr.bf16.gmra.mrb[0].mxu0 %v2390
        %v4437 = vpop.f32.mrb[0].mxu0
        %v4438 = vadd.f32 0.0, %v4437
        %v4439 = vpop.f32.mrb[0].mxu0
        %v4440 = vpop.f32.mrb[0].mxu0
        %v4441 = vadd.f32 0.0, %v4440
        %v4442 = vpop.f32.mrb[0].mxu0
        %4443 = vmatprep.mubr.bf16.mxu0 %v2424
        %4444 = vmatmul.mubr.bf16.gmra.mrb[0].mxu0 %v2391
        %v4445 = vpop.f32.mrb[0].mxu0
        %v4446 = vadd.f32 0.0, %v4445
        %v4447 = vpop.f32.mrb[0].mxu0
        %v4448 = vpop.f32.mrb[0].mxu0
        %v4449 = vadd.f32 0.0, %v4448
        %v4450 = vpop.f32.mrb[0].mxu0
        %4451 = vmatprep.mubr.bf16.mxu0 %v2425
        %4452 = vmatmul.mubr.bf16.gmra.mrb[0].mxu0 %v2392
        %v4453 = vpop.f32.mrb[0].mxu0
        %v4454 = vadd.f32 0.0, %v4453
        %v4455 = vpop.f32.mrb[0].mxu0
        %v4456 = vpop.f32.mrb[0].mxu0
        %v4457 = vadd.f32 0.0, %v4456
        %v4458 = vpop.f32.mrb[0].mxu0
        %4459 = vmatprep.mubr.bf16.mxu0 %v2426
        %4460 = vmatmul.mubr.bf16.gmra.mrb[0].mxu0 %v2393
        %v4461 = vpop.f32.mrb[0].mxu0
        %v4462 = vadd.f32 0.0, %v4461
        %v4463 = vpop.f32.mrb[0].mxu0
        %v4464 = vpop.f32.mrb[0].mxu0
        %v4465 = vadd.f32 0.0, %v4464
        %v4466 = vpop.f32.mrb[0].mxu0
        %4467 = vmatprep.mubr.bf16.mxu0 %v2427
        %4468 = vmatmul.mubr.bf16.gmra.mrb[0].mxu0 %v2394
        %v4469 = vpop.f32.mrb[0].mxu0
        %v4470 = vadd.f32 0.0, %v4469
        %v4471 = vpop.f32.mrb[0].mxu0
        %v4472 = vpop.f32.mrb[0].mxu0
        %v4473 = vadd.f32 0.0, %v4472
        %v4474 = vpop.f32.mrb[0].mxu0
        %4475 = vmatprep.mubr.bf16.mxu0 %v2395
        %4476 = vmatmul.mubr.bf16.gmra.mrb[0].mxu0 %v2362
        %v4477 = vpop.f32.mrb[0].mxu0
        %v4478 = vadd.f32 0.0, %v4477
        %v4479 = vpop.f32.mrb[0].mxu0
        %v4480 = vpop.f32.mrb[0].mxu0
        %v4481 = vadd.f32 0.0, %v4480
        %v4482 = vpop.f32.mrb[0].mxu0
        %4483 = vdwg.mxu0
        %4484 = vmatprep.subr.bf16.mxu0 0
        %4485 = vmatpush1.bf16.msra.mxu0 %v4163
        %4486 = vmatprep.subr.bf16.mxu0 0
        %4487 = vmatpush1.bf16.msra.mxu0 %v4164
        %4488 = vmatprep.subr.bf16.mxu0 0
        %4489 = vmatpush1.bf16.msra.mxu0 %v4165
        %4490 = vmatprep.subr.bf16.mxu0 0
        %4491 = vmatpush1.bf16.msra.mxu0 %v4166
        %4492 = vmatprep.subr.bf16.mxu0 0
        %4493 = vmatpush1.bf16.msra.mxu0 %v4167
        %4494 = vmatprep.subr.bf16.mxu0 0
        %4495 = vmatpush1.bf16.msra.mxu0 %v4168
        %4496 = vmatprep.subr.bf16.mxu0 0
        %4497 = vmatpush1.bf16.msra.mxu0 %v4169
        %4498 = vmatprep.subr.bf16.mxu0 0
        %4499 = vmatpush1.bf16.msra.mxu0 %v4170
        %4500 = vmatprep.subr.bf16.mxu0 0
        %4501 = vmatpush1.bf16.msra.mxu0 0
        %4502 = vmatprep.subr.bf16.mxu0 0
        %4503 = vmatpush1.bf16.msra.mxu0 0
        %4504 = vmatprep.subr.bf16.mxu0 0
        %4505 = vmatpush1.bf16.msra.mxu0 0
        %4506 = vmatprep.subr.bf16.mxu0 0
        %4507 = vmatpush1.bf16.msra.mxu0 0
        %4508 = vmatprep.subr.bf16.mxu0 0
        %4509 = vmatpush1.bf16.msra.mxu0 0
        %4510 = vmatprep.subr.bf16.mxu0 0
        %4511 = vmatpush1.bf16.msra.mxu0 0
        %4512 = vmatprep.subr.bf16.mxu0 0
        %4513 = vmatpush1.bf16.msra.mxu0 0
        %4514 = vmatprep.subr.bf16.mxu0 0
        %4515 = vmatpush1.bf16.msra.mxu0 0
        %4516 = vmatprep.mubr.bf16.mxu0 0
        %4517 = vmatmul.mubr.bf16.gmra.mrb[0].mxu0 %v2430
        %v4518 = vpop.f32.mrb[0].mxu0
        %v4519 = vadd.f32 %v4230, %v4518
        %v4520 = vpop.f32.mrb[0].mxu0
        %v4521 = vpop.f32.mrb[0].mxu0
        %v4522 = vadd.f32 %v4233, %v4521
        %v4523 = vpop.f32.mrb[0].mxu0
        %4524 = vmatprep.mubr.bf16.mxu0 0
        %4525 = vmatmul.mubr.bf16.gmra.mrb[0].mxu0 %v2431
        %v4526 = vpop.f32.mrb[0].mxu0
        %v4527 = vadd.f32 %v4238, %v4526
        %v4528 = vpop.f32.mrb[0].mxu0
        %v4529 = vpop.f32.mrb[0].mxu0
        %v4530 = vadd.f32 %v4241, %v4529
        %v4531 = vpop.f32.mrb[0].mxu0
        %4532 = vmatprep.mubr.bf16.mxu0 0
        %4533 = vmatmul.mubr.bf16.gmra.mrb[0].mxu0 %v2432
        %v4534 = vpop.f32.mrb[0].mxu0
        %v4535 = vadd.f32 %v4246, %v4534
        %v4536 = vpop.f32.mrb[0].mxu0
        %v4537 = vpop.f32.mrb[0].mxu0
        %v4538 = vadd.f32 %v4249, %v4537
        %v4539 = vpop.f32.mrb[0].mxu0
        %4540 = vmatprep.mubr.bf16.mxu0 0
        %4541 = vmatmul.mubr.bf16.gmra.mrb[0].mxu0 %v2433
        %v4542 = vpop.f32.mrb[0].mxu0
        %v4543 = vadd.f32 %v4254, %v4542
        %v4544 = vpop.f32.mrb[0].mxu0
        %v4545 = vpop.f32.mrb[0].mxu0
        %v4546 = vadd.f32 %v4257, %v4545
        %v4547 = vpop.f32.mrb[0].mxu0
        %4548 = vmatprep.mubr.bf16.mxu0 0
        %4549 = vmatmul.mubr.bf16.gmra.mrb[0].mxu0 %v2434
        %v4550 = vpop.f32.mrb[0].mxu0
        %v4551 = vadd.f32 %v4262, %v4550
        %v4552 = vpop.f32.mrb[0].mxu0
        %v4553 = vpop.f32.mrb[0].mxu0
        %v4554 = vadd.f32 %v4265, %v4553
        %v4555 = vpop.f32.mrb[0].mxu0
        %4556 = vmatprep.mubr.bf16.mxu0 0
        %4557 = vmatmul.mubr.bf16.gmra.mrb[0].mxu0 %v2435
        %v4558 = vpop.f32.mrb[0].mxu0
        %v4559 = vadd.f32 %v4270, %v4558
        %v4560 = vpop.f32.mrb[0].mxu0
        %v4561 = vpop.f32.mrb[0].mxu0
        %v4562 = vadd.f32 %v4273, %v4561
        %v4563 = vpop.f32.mrb[0].mxu0
        %4564 = vmatprep.mubr.bf16.mxu0 0
        %4565 = vmatmul.mubr.bf16.gmra.mrb[0].mxu0 %v2436
        %v4566 = vpop.f32.mrb[0].mxu0
        %v4567 = vadd.f32 %v4278, %v4566
        %v4568 = vpop.f32.mrb[0].mxu0
        %v4569 = vpop.f32.mrb[0].mxu0
        %v4570 = vadd.f32 %v4281, %v4569
        %v4571 = vpop.f32.mrb[0].mxu0
        %4572 = vmatprep.mubr.bf16.mxu0 0
        %4573 = vmatmul.mubr.bf16.gmra.mrb[0].mxu0 %v2437
        %v4574 = vpop.f32.mrb[0].mxu0
        %v4575 = vadd.f32 %v4286, %v4574
        %v4576 = vpop.f32.mrb[0].mxu0
        %v4577 = vpop.f32.mrb[0].mxu0
        %v4578 = vadd.f32 %v4289, %v4577
        %v4579 = vpop.f32.mrb[0].mxu0
        %4580 = vmatprep.mubr.bf16.mxu0 0
        %4581 = vmatmul.mubr.bf16.gmra.mrb[0].mxu0 %v2438
        %v4582 = vpop.f32.mrb[0].mxu0
        %v4583 = vadd.f32 %v4294, %v4582
        %v4584 = vpop.f32.mrb[0].mxu0
        %v4585 = vpop.f32.mrb[0].mxu0
        %v4586 = vadd.f32 %v4297, %v4585
        %v4587 = vpop.f32.mrb[0].mxu0
        %4588 = vmatprep.mubr.bf16.mxu0 0
        %4589 = vmatmul.mubr.bf16.gmra.mrb[0].mxu0 %v2439
        %v4590 = vpop.f32.mrb[0].mxu0
        %v4591 = vadd.f32 %v4302, %v4590
        %v4592 = vpop.f32.mrb[0].mxu0
        %v4593 = vpop.f32.mrb[0].mxu0
        %v4594 = vadd.f32 %v4305, %v4593
        %v4595 = vpop.f32.mrb[0].mxu0
        %4596 = vmatprep.mubr.bf16.mxu0 0
        %4597 = vmatmul.mubr.bf16.gmra.mrb[0].mxu0 %v2440
        %v4598 = vpop.f32.mrb[0].mxu0
        %v4599 = vadd.f32 %v4310, %v4598
        %v4600 = vpop.f32.mrb[0].mxu0
        %v4601 = vpop.f32.mrb[0].mxu0
        %v4602 = vadd.f32 %v4313, %v4601
        %v4603 = vpop.f32.mrb[0].mxu0
        %4604 = vmatprep.mubr.bf16.mxu0 0
        %4605 = vmatmul.mubr.bf16.gmra.mrb[0].mxu0 %v2441
        %v4606 = vpop.f32.mrb[0].mxu0
        %v4607 = vadd.f32 %v4318, %v4606
        %v4608 = vpop.f32.mrb[0].mxu0
        %v4609 = vpop.f32.mrb[0].mxu0
        %v4610 = vadd.f32 %v4321, %v4609
        %v4611 = vpop.f32.mrb[0].mxu0
        %4612 = vmatprep.mubr.bf16.mxu0 0
        %4613 = vmatmul.mubr.bf16.gmra.mrb[0].mxu0 %v2442
        %v4614 = vpop.f32.mrb[0].mxu0
        %v4615 = vadd.f32 %v4326, %v4614
        %v4616 = vpop.f32.mrb[0].mxu0
        %v4617 = vpop.f32.mrb[0].mxu0
        %v4618 = vadd.f32 %v4329, %v4617
        %v4619 = vpop.f32.mrb[0].mxu0
        %4620 = vmatprep.mubr.bf16.mxu0 0
        %4621 = vmatmul.mubr.bf16.gmra.mrb[0].mxu0 %v2443
        %v4622 = vpop.f32.mrb[0].mxu0
        %v4623 = vadd.f32 %v4334, %v4622
        %v4624 = vpop.f32.mrb[0].mxu0
        %v4625 = vpop.f32.mrb[0].mxu0
        %v4626 = vadd.f32 %v4337, %v4625
        %v4627 = vpop.f32.mrb[0].mxu0
        %4628 = vmatprep.mubr.bf16.mxu0 0
        %4629 = vmatmul.mubr.bf16.gmra.mrb[0].mxu0 %v2444
        %v4630 = vpop.f32.mrb[0].mxu0
        %v4631 = vadd.f32 %v4342, %v4630
        %v4632 = vpop.f32.mrb[0].mxu0
        %v4633 = vpop.f32.mrb[0].mxu0
        %v4634 = vadd.f32 %v4345, %v4633
        %v4635 = vpop.f32.mrb[0].mxu0
        %4636 = vmatprep.mubr.bf16.mxu0 0
        %4637 = vmatmul.mubr.bf16.gmra.mrb[0].mxu0 %v2428
        %v4638 = vpop.f32.mrb[0].mxu0
        %v4639 = vadd.f32 %v4350, %v4638
        %v4640 = vpop.f32.mrb[0].mxu0
        %v4641 = vpop.f32.mrb[0].mxu0
        %v4642 = vadd.f32 %v4353, %v4641
        %v4643 = vpop.f32.mrb[0].mxu0
        %4644 = vmatprep.mubr.bf16.mxu0 0
        %4645 = vmatmul.mubr.bf16.gmra.mrb[0].mxu0 %v2446
        %v4646 = vpop.f32.mrb[0].mxu0
        %v4647 = vadd.f32 %v4358, %v4646
        %v4648 = vpop.f32.mrb[0].mxu0
        %v4649 = vpop.f32.mrb[0].mxu0
        %v4650 = vadd.f32 %v4361, %v4649
        %v4651 = vpop.f32.mrb[0].mxu0
        %4652 = vmatprep.mubr.bf16.mxu0 0
        %4653 = vmatmul.mubr.bf16.gmra.mrb[0].mxu0 %v2447
        %v4654 = vpop.f32.mrb[0].mxu0
        %v4655 = vadd.f32 %v4366, %v4654
        %v4656 = vpop.f32.mrb[0].mxu0
        %v4657 = vpop.f32.mrb[0].mxu0
        %v4658 = vadd.f32 %v4369, %v4657
        %v4659 = vpop.f32.mrb[0].mxu0
        %4660 = vmatprep.mubr.bf16.mxu0 0
        %4661 = vmatmul.mubr.bf16.gmra.mrb[0].mxu0 %v2448
        %v4662 = vpop.f32.mrb[0].mxu0
        %v4663 = vadd.f32 %v4374, %v4662
        %v4664 = vpop.f32.mrb[0].mxu0
        %v4665 = vpop.f32.mrb[0].mxu0
        %v4666 = vadd.f32 %v4377, %v4665
        %v4667 = vpop.f32.mrb[0].mxu0
        %4668 = vmatprep.mubr.bf16.mxu0 0
        %4669 = vmatmul.mubr.bf16.gmra.mrb[0].mxu0 %v2449
        %v4670 = vpop.f32.mrb[0].mxu0
        %v4671 = vadd.f32 %v4382, %v4670
        %v4672 = vpop.f32.mrb[0].mxu0
        %v4673 = vpop.f32.mrb[0].mxu0
        %v4674 = vadd.f32 %v4385, %v4673
        %v4675 = vpop.f32.mrb[0].mxu0
        %4676 = vmatprep.mubr.bf16.mxu0 0
        %4677 = vmatmul.mubr.bf16.gmra.mrb[0].mxu0 %v2450
        %v4678 = vpop.f32.mrb[0].mxu0
        %v4679 = vadd.f32 %v4390, %v4678
        %v4680 = vpop.f32.mrb[0].mxu0
        %v4681 = vpop.f32.mrb[0].mxu0
        %v4682 = vadd.f32 %v4393, %v4681
        %v4683 = vpop.f32.mrb[0].mxu0
        %4684 = vmatprep.mubr.bf16.mxu0 0
        %4685 = vmatmul.mubr.bf16.gmra.mrb[0].mxu0 %v2451
        %v4686 = vpop.f32.mrb[0].mxu0
        %v4687 = vadd.f32 %v4398, %v4686
        %v4688 = vpop.f32.mrb[0].mxu0
        %v4689 = vpop.f32.mrb[0].mxu0
        %v4690 = vadd.f32 %v4401, %v4689
        %v4691 = vpop.f32.mrb[0].mxu0
        %4692 = vmatprep.mubr.bf16.mxu0 0
        %4693 = vmatmul.mubr.bf16.gmra.mrb[0].mxu0 %v2452
        %v4694 = vpop.f32.mrb[0].mxu0
        %v4695 = vadd.f32 %v4406, %v4694
        %v4696 = vpop.f32.mrb[0].mxu0
        %v4697 = vpop.f32.mrb[0].mxu0
        %v4698 = vadd.f32 %v4409, %v4697
        %v4699 = vpop.f32.mrb[0].mxu0
        %4700 = vmatprep.mubr.bf16.mxu0 0
        %4701 = vmatmul.mubr.bf16.gmra.mrb[0].mxu0 %v2453
        %v4702 = vpop.f32.mrb[0].mxu0
        %v4703 = vadd.f32 %v4414, %v4702
        %v4704 = vpop.f32.mrb[0].mxu0
        %v4705 = vpop.f32.mrb[0].mxu0
        %v4706 = vadd.f32 %v4417, %v4705
        %v4707 = vpop.f32.mrb[0].mxu0
        %4708 = vmatprep.mubr.bf16.mxu0 0
        %4709 = vmatmul.mubr.bf16.gmra.mrb[0].mxu0 %v2454
        %v4710 = vpop.f32.mrb[0].mxu0
        %v4711 = vadd.f32 %v4422, %v4710
        %v4712 = vpop.f32.mrb[0].mxu0
        %v4713 = vpop.f32.mrb[0].mxu0
        %v4714 = vadd.f32 %v4425, %v4713
        %v4715 = vpop.f32.mrb[0].mxu0
        %4716 = vmatprep.mubr.bf16.mxu0 0
        %4717 = vmatmul.mubr.bf16.gmra.mrb[0].mxu0 %v2455
        %v4718 = vpop.f32.mrb[0].mxu0
        %v4719 = vadd.f32 %v4430, %v4718
        %v4720 = vpop.f32.mrb[0].mxu0
        %v4721 = vpop.f32.mrb[0].mxu0
        %v4722 = vadd.f32 %v4433, %v4721
        %v4723 = vpop.f32.mrb[0].mxu0
        %4724 = vmatprep.mubr.bf16.mxu0 0
        %4725 = vmatmul.mubr.bf16.gmra.mrb[0].mxu0 %v2456
        %v4726 = vpop.f32.mrb[0].mxu0
        %v4727 = vadd.f32 %v4438, %v4726
        %v4728 = vpop.f32.mrb[0].mxu0
        %v4729 = vpop.f32.mrb[0].mxu0
        %v4730 = vadd.f32 %v4441, %v4729
        %v4731 = vpop.f32.mrb[0].mxu0
        %4732 = vmatprep.mubr.bf16.mxu0 0
        %4733 = vmatmul.mubr.bf16.gmra.mrb[0].mxu0 %v2457
        %v4734 = vpop.f32.mrb[0].mxu0
        %v4735 = vadd.f32 %v4446, %v4734
        %v4736 = vpop.f32.mrb[0].mxu0
        %v4737 = vpop.f32.mrb[0].mxu0
        %v4738 = vadd.f32 %v4449, %v4737
        %v4739 = vpop.f32.mrb[0].mxu0
        %4740 = vmatprep.mubr.bf16.mxu0 0
        %4741 = vmatmul.mubr.bf16.gmra.mrb[0].mxu0 %v2458
        %v4742 = vpop.f32.mrb[0].mxu0
        %v4743 = vadd.f32 %v4454, %v4742
        %v4744 = vpop.f32.mrb[0].mxu0
        %v4745 = vpop.f32.mrb[0].mxu0
        %v4746 = vadd.f32 %v4457, %v4745
        %v4747 = vpop.f32.mrb[0].mxu0
        %4748 = vmatprep.mubr.bf16.mxu0 0
        %4749 = vmatmul.mubr.bf16.gmra.mrb[0].mxu0 %v2459
        %v4750 = vpop.f32.mrb[0].mxu0
        %v4751 = vadd.f32 %v4462, %v4750
        %v4752 = vpop.f32.mrb[0].mxu0
        %v4753 = vpop.f32.mrb[0].mxu0
        %v4754 = vadd.f32 %v4465, %v4753
        %v4755 = vpop.f32.mrb[0].mxu0
        %4756 = vmatprep.mubr.bf16.mxu0 0
        %4757 = vmatmul.mubr.bf16.gmra.mrb[0].mxu0 %v2460
        %v4758 = vpop.f32.mrb[0].mxu0
        %v4759 = vadd.f32 %v4470, %v4758
        %v4760 = vpop.f32.mrb[0].mxu0
        %v4761 = vpop.f32.mrb[0].mxu0
        %v4762 = vadd.f32 %v4473, %v4761
        %v4763 = vpop.f32.mrb[0].mxu0
        %4764 = vmatprep.mubr.bf16.mxu0 0
        %4765 = vmatmul.mubr.bf16.gmra.mrb[0].mxu0 %v2428
        %v4766 = vpop.f32.mrb[0].mxu0
        %v4767 = vadd.f32 %v4478, %v4766
        %v4768 = vpop.f32.mrb[0].mxu0
        %v4769 = vpop.f32.mrb[0].mxu0
        %v4770 = vadd.f32 %v4481, %v4769
        %v4771 = vpop.f32.mrb[0].mxu0
        %4772 = vdwg.mxu0
        %v4773 = vadd.f32 %v3748, %v4519
        %v4774 = vadd.f32 %v3751, %v4522
        %v4775 = vadd.f32 %v3756, %v4527
        %v4776 = vadd.f32 %v3759, %v4530
        %v4777 = vadd.f32 %v3764, %v4535
        %v4778 = vadd.f32 %v3767, %v4538
        %v4779 = vadd.f32 %v3772, %v4543
        %v4780 = vadd.f32 %v3775, %v4546
        %v4781 = vadd.f32 %v3780, %v4551
        %v4782 = vadd.f32 %v3783, %v4554
        %v4783 = vadd.f32 %v3788, %v4559
        %v4784 = vadd.f32 %v3791, %v4562
        %v4785 = vadd.f32 %v3796, %v4567
        %v4786 = vadd.f32 %v3799, %v4570
        %v4787 = vadd.f32 %v3804, %v4575
        %v4788 = vadd.f32 %v3807, %v4578
        %v4789 = vadd.f32 %v3812, %v4583
        %v4790 = vadd.f32 %v3815, %v4586
        %v4791 = vadd.f32 %v3820, %v4591
        %v4792 = vadd.f32 %v3823, %v4594
        %v4793 = vadd.f32 %v3828, %v4599
        %v4794 = vadd.f32 %v3831, %v4602
        %v4795 = vadd.f32 %v3836, %v4607
        %v4796 = vadd.f32 %v3839, %v4610
        %v4797 = vadd.f32 %v3844, %v4615
        %v4798 = vadd.f32 %v3847, %v4618
        %v4799 = vadd.f32 %v3852, %v4623
        %v4800 = vadd.f32 %v3855, %v4626
        %v4801 = vadd.f32 %v3860, %v4631
        %v4802 = vadd.f32 %v3863, %v4634
        %v4803 = vadd.f32 %v3868, %v4639
        %v4804 = vadd.f32 %v3871, %v4642
        %v4805 = vadd.f32 %v3876, %v4647
        %v4806 = vadd.f32 %v3879, %v4650
        %v4807 = vadd.f32 %v3884, %v4655
        %v4808 = vadd.f32 %v3887, %v4658
        %v4809 = vadd.f32 %v3892, %v4663
        %v4810 = vadd.f32 %v3895, %v4666
        %v4811 = vadd.f32 %v3900, %v4671
        %v4812 = vadd.f32 %v3903, %v4674
        %v4813 = vadd.f32 %v3908, %v4679
        %v4814 = vadd.f32 %v3911, %v4682
        %v4815 = vadd.f32 %v3916, %v4687
        %v4816 = vadd.f32 %v3919, %v4690
        %v4817 = vadd.f32 %v3924, %v4695
        %v4818 = vadd.f32 %v3927, %v4698
        %v4819 = vadd.f32 %v3932, %v4703
        %v4820 = vadd.f32 %v3935, %v4706
        %v4821 = vadd.f32 %v3940, %v4711
        %v4822 = vadd.f32 %v3943, %v4714
        %v4823 = vadd.f32 %v3948, %v4719
        %v4824 = vadd.f32 %v3951, %v4722
        %v4825 = vadd.f32 %v3956, %v4727
        %v4826 = vadd.f32 %v3959, %v4730
        %v4827 = vadd.f32 %v3964, %v4735
        %v4828 = vadd.f32 %v3967, %v4738
        %v4829 = vadd.f32 %v3972, %v4743
        %v4830 = vadd.f32 %v3975, %v4746
        %v4831 = vadd.f32 %v3980, %v4751
        %v4832 = vadd.f32 %v3983, %v4754
        %v4833 = vadd.f32 %v3988, %v4759
        %v4834 = vadd.f32 %v3991, %v4762
        %v4835 = vadd.f32 %v3996, %v4767
        %v4836 = vadd.f32 %v3999, %v4770
        %v4837 = vld [vmem:[%s4] sm:$0x1]
        %v4839 = vlaneseq
        %v4840 = vshrl.u32 %v4839, 7
        %v4841 = vsub.s32 0, %v4840
        %v4842 = vrot.slane %v4837, %v4841
        %v4844 = vadd.f32 %v4773, %v4842
        %v4845 = vadd.f32 %v4774, %v4842
        %v4846 = vadd.f32 %v4775, %v4842
        %v4847 = vadd.f32 %v4776, %v4842
        %v4848 = vadd.f32 %v4777, %v4842
        %v4849 = vadd.f32 %v4778, %v4842
        %v4850 = vadd.f32 %v4779, %v4842
        %v4851 = vadd.f32 %v4780, %v4842
        %v4852 = vadd.f32 %v4781, %v4842
        %v4853 = vadd.f32 %v4782, %v4842
        %v4854 = vadd.f32 %v4783, %v4842
        %v4855 = vadd.f32 %v4784, %v4842
        %v4856 = vadd.f32 %v4785, %v4842
        %v4857 = vadd.f32 %v4786, %v4842
        %v4858 = vadd.f32 %v4787, %v4842
        %v4859 = vadd.f32 %v4788, %v4842
        %v4860 = vadd.f32 %v4789, %v4842
        %v4861 = vadd.f32 %v4790, %v4842
        %v4862 = vadd.f32 %v4791, %v4842
        %v4863 = vadd.f32 %v4792, %v4842
        %v4864 = vadd.f32 %v4793, %v4842
        %v4865 = vadd.f32 %v4794, %v4842
        %v4866 = vadd.f32 %v4795, %v4842
        %v4867 = vadd.f32 %v4796, %v4842
        %v4868 = vadd.f32 %v4797, %v4842
        %v4869 = vadd.f32 %v4798, %v4842
        %v4870 = vadd.f32 %v4799, %v4842
        %v4871 = vadd.f32 %v4800, %v4842
        %v4872 = vadd.f32 %v4801, %v4842
        %v4873 = vadd.f32 %v4802, %v4842
        %v4874 = vadd.f32 %v4803, %v4842
        %v4875 = vadd.f32 %v4804, %v4842
        %v4876 = vadd.f32 %v4805, %v4842
        %v4877 = vadd.f32 %v4806, %v4842
        %v4878 = vadd.f32 %v4807, %v4842
        %v4879 = vadd.f32 %v4808, %v4842
        %v4880 = vadd.f32 %v4809, %v4842
        %v4881 = vadd.f32 %v4810, %v4842
        %v4882 = vadd.f32 %v4811, %v4842
        %v4883 = vadd.f32 %v4812, %v4842
        %v4884 = vadd.f32 %v4813, %v4842
        %v4885 = vadd.f32 %v4814, %v4842
        %v4886 = vadd.f32 %v4815, %v4842
        %v4887 = vadd.f32 %v4816, %v4842
        %v4888 = vadd.f32 %v4817, %v4842
        %v4889 = vadd.f32 %v4818, %v4842
        %v4890 = vadd.f32 %v4819, %v4842
        %v4891 = vadd.f32 %v4820, %v4842
        %v4892 = vadd.f32 %v4821, %v4842
        %v4893 = vadd.f32 %v4822, %v4842
        %v4894 = vadd.f32 %v4823, %v4842
        %v4895 = vadd.f32 %v4824, %v4842
        %v4896 = vadd.f32 %v4825, %v4842
        %v4897 = vadd.f32 %v4826, %v4842
        %v4898 = vadd.f32 %v4827, %v4842
        %v4899 = vadd.f32 %v4828, %v4842
        %v4900 = vadd.f32 %v4829, %v4842
        %v4901 = vadd.f32 %v4830, %v4842
        %v4902 = vadd.f32 %v4831, %v4842
        %v4903 = vadd.f32 %v4832, %v4842
        %v4904 = vadd.f32 %v4833, %v4842
        %v4905 = vadd.f32 %v4834, %v4842
        %v4906 = vadd.f32 %v4835, %v4842
        %v4907 = vadd.f32 %v4836, %v4842
        %v4908 = vmax.f32 %v4844, 0.0
        %v4909 = vmax.f32 %v4845, 0.0
        %v4910 = vmax.f32 %v4846, 0.0
        %v4911 = vmax.f32 %v4847, 0.0
        %v4912 = vmax.f32 %v4848, 0.0
        %v4913 = vmax.f32 %v4849, 0.0
        %v4914 = vmax.f32 %v4850, 0.0
        %v4915 = vmax.f32 %v4851, 0.0
        %v4916 = vmax.f32 %v4852, 0.0
        %v4917 = vmax.f32 %v4853, 0.0
        %v4918 = vmax.f32 %v4854, 0.0
        %v4919 = vmax.f32 %v4855, 0.0
        %v4920 = vmax.f32 %v4856, 0.0
        %v4921 = vmax.f32 %v4857, 0.0
        %v4922 = vmax.f32 %v4858, 0.0
        %v4923 = vmax.f32 %v4859, 0.0
        %v4924 = vmax.f32 %v4860, 0.0
        %v4925 = vmax.f32 %v4861, 0.0
        %v4926 = vmax.f32 %v4862, 0.0
        %v4927 = vmax.f32 %v4863, 0.0
        %v4928 = vmax.f32 %v4864, 0.0
        %v4929 = vmax.f32 %v4865, 0.0
        %v4930 = vmax.f32 %v4866, 0.0
        %v4931 = vmax.f32 %v4867, 0.0
        %v4932 = vmax.f32 %v4868, 0.0
        %v4933 = vmax.f32 %v4869, 0.0
        %v4934 = vmax.f32 %v4870, 0.0
        %v4935 = vmax.f32 %v4871, 0.0
        %v4936 = vmax.f32 %v4872, 0.0
        %v4937 = vmax.f32 %v4873, 0.0
        %v4938 = vmax.f32 %v4874, 0.0
        %v4939 = vmax.f32 %v4875, 0.0
        %v4940 = vmax.f32 %v4876, 0.0
        %v4941 = vmax.f32 %v4877, 0.0
        %v4942 = vmax.f32 %v4878, 0.0
        %v4943 = vmax.f32 %v4879, 0.0
        %v4944 = vmax.f32 %v4880, 0.0
        %v4945 = vmax.f32 %v4881, 0.0
        %v4946 = vmax.f32 %v4882, 0.0
        %v4947 = vmax.f32 %v4883, 0.0
        %v4948 = vmax.f32 %v4884, 0.0
        %v4949 = vmax.f32 %v4885, 0.0
        %v4950 = vmax.f32 %v4886, 0.0
        %v4951 = vmax.f32 %v4887, 0.0
        %v4952 = vmax.f32 %v4888, 0.0
        %v4953 = vmax.f32 %v4889, 0.0
        %v4954 = vmax.f32 %v4890, 0.0
        %v4955 = vmax.f32 %v4891, 0.0
        %v4956 = vmax.f32 %v4892, 0.0
        %v4957 = vmax.f32 %v4893, 0.0
        %v4958 = vmax.f32 %v4894, 0.0
        %v4959 = vmax.f32 %v4895, 0.0
        %v4960 = vmax.f32 %v4896, 0.0
        %v4961 = vmax.f32 %v4897, 0.0
        %v4962 = vmax.f32 %v4898, 0.0
        %v4963 = vmax.f32 %v4899, 0.0
        %v4964 = vmax.f32 %v4900, 0.0
        %v4965 = vmax.f32 %v4901, 0.0
        %v4966 = vmax.f32 %v4902, 0.0
        %v4967 = vmax.f32 %v4903, 0.0
        %v4968 = vmax.f32 %v4904, 0.0
        %v4969 = vmax.f32 %v4905, 0.0
        %v4970 = vmax.f32 %v4906, 0.0
        %v4971 = vmax.f32 %v4907, 0.0
        %v4972 = vpack.c.bf16 %v4909, %v4908
        %v4973 = vpack.c.bf16 %v4911, %v4910
        %v4974 = vpack.c.bf16 %v4913, %v4912
        %v4975 = vpack.c.bf16 %v4915, %v4914
        %v4976 = vpack.c.bf16 %v4917, %v4916
        %v4977 = vpack.c.bf16 %v4919, %v4918
        %v4978 = vpack.c.bf16 %v4921, %v4920
        %v4979 = vpack.c.bf16 %v4923, %v4922
        %v4980 = vpack.c.bf16 %v4925, %v4924
        %v4981 = vpack.c.bf16 %v4927, %v4926
        %v4982 = vpack.c.bf16 %v4929, %v4928
        %v4983 = vpack.c.bf16 %v4931, %v4930
        %v4984 = vpack.c.bf16 %v4933, %v4932
        %v4985 = vpack.c.bf16 %v4935, %v4934
        %v4986 = vpack.c.bf16 %v4937, %v4936
        %v4987 = vpack.c.bf16 %v4939, %v4938
        %v4988 = vpack.c.bf16 %v4941, %v4940
        %v4989 = vpack.c.bf16 %v4943, %v4942
        %v4990 = vpack.c.bf16 %v4945, %v4944
        %v4991 = vpack.c.bf16 %v4947, %v4946
        %v4992 = vpack.c.bf16 %v4949, %v4948
        %v4993 = vpack.c.bf16 %v4951, %v4950
        %v4994 = vpack.c.bf16 %v4953, %v4952
        %v4995 = vpack.c.bf16 %v4955, %v4954
        %v4996 = vpack.c.bf16 %v4957, %v4956
        %v4997 = vpack.c.bf16 %v4959, %v4958
        %v4998 = vpack.c.bf16 %v4961, %v4960
        %v4999 = vpack.c.bf16 %v4963, %v4962
        %v5000 = vpack.c.bf16 %v4965, %v4964
        %v5001 = vpack.c.bf16 %v4967, %v4966
        %v5002 = vpack.c.bf16 %v4969, %v4968
        %v5003 = vpack.c.bf16 %v4971, %v4970
        %v5004 = vld [vmem:[%s5] sm:$0xff]
        %v5005 = vld [vmem:[%s5 + $0x8] sm:$0xff]
        %v5006 = vld [vmem:[%s5 + $0x10] sm:$0xff]
        %v5007 = vld [vmem:[%s5 + $0x18] sm:$0xff]
        %v5008 = vld [vmem:[%s5 + $0x20] sm:$0xff]
        %v5009 = vld [vmem:[%s5 + $0x28] sm:$0xff]
        %v5010 = vld [vmem:[%s5 + $0x30] sm:$0xff]
        %v5011 = vld [vmem:[%s5 + $0x38] sm:$0xff]
        %v5012 = vld [vmem:[%s5 + $0x40] sm:$0xff]
        %v5013 = vld [vmem:[%s5 + $0x48] sm:$0xff]
        %v5014 = vld [vmem:[%s5 + $0x50] sm:$0xff]
        %v5015 = vld [vmem:[%s5 + $0x58] sm:$0xff]
        %v5016 = vld [vmem:[%s5 + $0x60] sm:$0xff]
        %v5017 = vld [vmem:[%s5 + $0x68] sm:$0xff]
        %v5018 = vld [vmem:[%s5 + $0x70] sm:$0xff]
        %v5019 = vld [vmem:[%s5 + $0x78] sm:$0xff]
        %v5020 = vld [vmem:[%s5 + $0x80] sm:$0xff]
        %v5021 = vld [vmem:[%s5 + $0x88] sm:$0xff]
        %v5022 = vld [vmem:[%s5 + $0x90] sm:$0xff]
        %v5023 = vld [vmem:[%s5 + $0x98] sm:$0xff]
        %v5024 = vld [vmem:[%s5 + $0xa0] sm:$0xff]
        %v5025 = vld [vmem:[%s5 + $0xa8] sm:$0xff]
        %v5026 = vld [vmem:[%s5 + $0xb0] sm:$0xff]
        %v5027 = vld [vmem:[%s5 + $0xb8] sm:$0xff]
        %v5028 = vld [vmem:[%s5 + $0xc0] sm:$0xff]
        %v5029 = vld [vmem:[%s5 + $0xc8] sm:$0xff]
        %v5030 = vld [vmem:[%s5 + $0xd0] sm:$0xff]
        %v5031 = vld [vmem:[%s5 + $0xd8] sm:$0xff]
        %v5032 = vld [vmem:[%s5 + $0xe0] sm:$0xff]
        %v5033 = vld [vmem:[%s5 + $0xe8] sm:$0xff]
        %v5034 = vld [vmem:[%s5 + $0xf0] sm:$0xff]
        %v5035 = vld [vmem:[%s5 + $0xf8] sm:$0xff]
        %v5036 = vld [vmem:[%s6] sm:$0xf]
        %v5038 = vlaneseq
        %v5039 = vshrl.u32 %v5038, 7
        %v5040 = vsub.s32 0, %v5039
        %v5041 = vrot.slane %v5036, %v5040
        %v5042 = vlaneseq
        %v5043 = vshrl.u32 %v5042, 7
        %v5044 = vsub.s32 1, %v5043
        %v5045 = vrot.slane %v5036, %v5044
        %v5046 = vlaneseq
        %v5047 = vshrl.u32 %v5046, 7
        %v5048 = vsub.s32 2, %v5047
        %v5049 = vrot.slane %v5036, %v5048
        %v5050 = vlaneseq
        %v5051 = vshrl.u32 %v5050, 7
        %v5052 = vsub.s32 3, %v5051
        %v5053 = vrot.slane %v5036, %v5052
        %v5090 = vunpack.c.l.b16 %v5004
        %v5091 = vunpack.c.h.b16 %v5004
        %v5092 = vunpack.c.l.b16 %v5005
        %v5093 = vunpack.c.h.b16 %v5005
        %v5094 = vunpack.c.l.b16 %v5006
        %v5095 = vunpack.c.h.b16 %v5006
        %v5096 = vunpack.c.l.b16 %v5007
        %v5097 = vunpack.c.h.b16 %v5007
        %v5098 = vunpack.c.l.b16 %v5008
        %v5099 = vunpack.c.h.b16 %v5008
        %v5100 = vunpack.c.l.b16 %v5009
        %v5101 = vunpack.c.h.b16 %v5009
        %v5102 = vunpack.c.l.b16 %v5010
        %v5103 = vunpack.c.h.b16 %v5010
        %v5104 = vunpack.c.l.b16 %v5011
        %v5105 = vunpack.c.h.b16 %v5011
        %v5106 = vunpack.c.l.b16 %v5012
        %v5107 = vunpack.c.h.b16 %v5012
        %v5108 = vunpack.c.l.b16 %v5013
        %v5109 = vunpack.c.h.b16 %v5013
        %v5110 = vunpack.c.l.b16 %v5014
        %v5111 = vunpack.c.h.b16 %v5014
        %v5112 = vunpack.c.l.b16 %v5015
        %v5113 = vunpack.c.h.b16 %v5015
        %v5114 = vunpack.c.l.b16 %v5016
        %v5115 = vunpack.c.h.b16 %v5016
        %v5116 = vunpack.c.l.b16 %v5017
        %v5117 = vunpack.c.h.b16 %v5017
        %v5118 = vunpack.c.l.b16 %v5018
        %v5119 = vunpack.c.h.b16 %v5018
        %v5120 = vunpack.c.l.b16 %v5019
        %v5121 = vunpack.c.h.b16 %v5019
        %v5122 = vunpack.c.l.b16 %v5020
        %v5123 = vunpack.c.h.b16 %v5020
        %v5124 = vunpack.c.l.b16 %v5021
        %v5125 = vunpack.c.h.b16 %v5021
        %v5126 = vunpack.c.l.b16 %v5022
        %v5127 = vunpack.c.h.b16 %v5022
        %v5128 = vunpack.c.l.b16 %v5023
        %v5129 = vunpack.c.h.b16 %v5023
        %v5130 = vunpack.c.l.b16 %v5024
        %v5131 = vunpack.c.h.b16 %v5024
        %v5132 = vunpack.c.l.b16 %v5025
        %v5133 = vunpack.c.h.b16 %v5025
        %v5134 = vunpack.c.l.b16 %v5026
        %v5135 = vunpack.c.h.b16 %v5026
        %v5136 = vunpack.c.l.b16 %v5027
        %v5137 = vunpack.c.h.b16 %v5027
        %v5138 = vunpack.c.l.b16 %v5028
        %v5139 = vunpack.c.h.b16 %v5028
        %v5140 = vunpack.c.l.b16 %v5029
        %v5141 = vunpack.c.h.b16 %v5029
        %v5142 = vunpack.c.l.b16 %v5030
        %v5143 = vunpack.c.h.b16 %v5030
        %v5144 = vunpack.c.l.b16 %v5031
        %v5145 = vunpack.c.h.b16 %v5031
        %v5146 = vunpack.c.l.b16 %v5032
        %v5147 = vunpack.c.h.b16 %v5032
        %v5148 = vunpack.c.l.b16 %v5033
        %v5149 = vunpack.c.h.b16 %v5033
        %v5150 = vunpack.c.l.b16 %v5034
        %v5151 = vunpack.c.h.b16 %v5034
        %v5152 = vunpack.c.l.b16 %v5035
        %v5153 = vunpack.c.h.b16 %v5035
        %v5154 = vpack.c.b16 %v5094, %v5090
        %v5155 = vpack.c.b16 %v5095, %v5091
        %v5156 = vpack.c.b16 %v5096, %v5092
        %v5157 = vpack.c.b16 %v5097, %v5093
        %v5158 = vpack.c.b16 %v5102, %v5098
        %v5159 = vpack.c.b16 %v5103, %v5099
        %v5160 = vpack.c.b16 %v5104, %v5100
        %v5161 = vpack.c.b16 %v5105, %v5101
        %v5162 = vpack.c.b16 %v5110, %v5106
        %v5163 = vpack.c.b16 %v5111, %v5107
        %v5164 = vpack.c.b16 %v5112, %v5108
        %v5165 = vpack.c.b16 %v5113, %v5109
        %v5166 = vpack.c.b16 %v5118, %v5114
        %v5167 = vpack.c.b16 %v5119, %v5115
        %v5168 = vpack.c.b16 %v5120, %v5116
        %v5169 = vpack.c.b16 %v5121, %v5117
        %v5170 = vpack.c.b16 %v5126, %v5122
        %v5171 = vpack.c.b16 %v5127, %v5123
        %v5172 = vpack.c.b16 %v5128, %v5124
        %v5173 = vpack.c.b16 %v5129, %v5125
        %v5174 = vpack.c.b16 %v5134, %v5130
        %v5175 = vpack.c.b16 %v5135, %v5131
        %v5176 = vpack.c.b16 %v5136, %v5132
        %v5177 = vpack.c.b16 %v5137, %v5133
        %v5178 = vpack.c.b16 %v5142, %v5138
        %v5179 = vpack.c.b16 %v5143, %v5139
        %v5180 = vpack.c.b16 %v5144, %v5140
        %v5181 = vpack.c.b16 %v5145, %v5141
        %v5182 = vpack.c.b16 %v5150, %v5146
        %v5183 = vpack.c.b16 %v5151, %v5147
        %v5184 = vpack.c.b16 %v5152, %v5148
        %v5185 = vpack.c.b16 %v5153, %v5149
        %5218 = vmatprep.subr.bf16.mxu0 %v5155
        %5219 = vmatpush1.bf16.msra.mxu0 %v5154
        %5220 = vmatprep.subr.bf16.mxu0 %v5159
        %5221 = vmatpush1.bf16.msra.mxu0 %v5158
        %5222 = vmatprep.subr.bf16.mxu0 %v5163
        %5223 = vmatpush1.bf16.msra.mxu0 %v5162
        %5224 = vmatprep.subr.bf16.mxu0 %v5167
        %5225 = vmatpush1.bf16.msra.mxu0 %v5166
        %5226 = vmatprep.subr.bf16.mxu0 %v5171
        %5227 = vmatpush1.bf16.msra.mxu0 %v5170
        %5228 = vmatprep.subr.bf16.mxu0 %v5175
        %5229 = vmatpush1.bf16.msra.mxu0 %v5174
        %5230 = vmatprep.subr.bf16.mxu0 %v5179
        %5231 = vmatpush1.bf16.msra.mxu0 %v5178
        %5232 = vmatprep.subr.bf16.mxu0 %v5183
        %5233 = vmatpush1.bf16.msra.mxu0 %v5182
        %5234 = vmatprep.subr.bf16.mxu0 0
        %5235 = vmatpush1.bf16.msra.mxu0 0
        %5236 = vmatprep.subr.bf16.mxu0 0
        %5237 = vmatpush1.bf16.msra.mxu0 0
        %5238 = vmatprep.subr.bf16.mxu0 0
        %5239 = vmatpush1.bf16.msra.mxu0 0
        %5240 = vmatprep.subr.bf16.mxu0 0
        %5241 = vmatpush1.bf16.msra.mxu0 0
        %5242 = vmatprep.subr.bf16.mxu0 0
        %5243 = vmatpush1.bf16.msra.mxu0 0
        %5244 = vmatprep.subr.bf16.mxu0 0
        %5245 = vmatpush1.bf16.msra.mxu0 0
        %5246 = vmatprep.subr.bf16.mxu0 0
        %5247 = vmatpush1.bf16.msra.mxu0 0
        %5248 = vmatprep.subr.bf16.mxu0 0
        %5249 = vmatpush1.bf16.msra.mxu0 0
        %5250 = vmatprep.mubr.bf16.mxu0 0
        %5251 = vmatmul.mubr.bf16.gmra.mrb[0].mxu0 %v4972
        %v5252 = vpop.f32.mrb[0].mxu0
        %v5253 = vadd.f32 %v5041, %v5252
        %v5254 = vpop.f32.mrb[0].mxu0
        %v5255 = vadd.f32 %v5045, %v5254
        %v5256 = vpop.f32.mrb[0].mxu0
        %v5257 = vadd.f32 %v5041, %v5256
        %v5258 = vpop.f32.mrb[0].mxu0
        %v5259 = vadd.f32 %v5045, %v5258
        %5260 = vmatprep.mubr.bf16.mxu0 0
        %5261 = vmatmul.mubr.bf16.gmra.mrb[0].mxu0 %v4973
        %v5262 = vpop.f32.mrb[0].mxu0
        %v5263 = vadd.f32 %v5041, %v5262
        %v5264 = vpop.f32.mrb[0].mxu0
        %v5265 = vadd.f32 %v5045, %v5264
        %v5266 = vpop.f32.mrb[0].mxu0
        %v5267 = vadd.f32 %v5041, %v5266
        %v5268 = vpop.f32.mrb[0].mxu0
        %v5269 = vadd.f32 %v5045, %v5268
        %5270 = vmatprep.mubr.bf16.mxu0 0
        %5271 = vmatmul.mubr.bf16.gmra.mrb[0].mxu0 %v4974
        %v5272 = vpop.f32.mrb[0].mxu0
        %v5273 = vadd.f32 %v5041, %v5272
        %v5274 = vpop.f32.mrb[0].mxu0
        %v5275 = vadd.f32 %v5045, %v5274
        %v5276 = vpop.f32.mrb[0].mxu0
        %v5277 = vadd.f32 %v5041, %v5276
        %v5278 = vpop.f32.mrb[0].mxu0
        %v5279 = vadd.f32 %v5045, %v5278
        %5280 = vmatprep.mubr.bf16.mxu0 0
        %5281 = vmatmul.mubr.bf16.gmra.mrb[0].mxu0 %v4975
        %v5282 = vpop.f32.mrb[0].mxu0
        %v5283 = vadd.f32 %v5041, %v5282
        %v5284 = vpop.f32.mrb[0].mxu0
        %v5285 = vadd.f32 %v5045, %v5284
        %v5286 = vpop.f32.mrb[0].mxu0
        %v5287 = vadd.f32 %v5041, %v5286
        %v5288 = vpop.f32.mrb[0].mxu0
        %v5289 = vadd.f32 %v5045, %v5288
        %5290 = vmatprep.mubr.bf16.mxu0 0
        %5291 = vmatmul.mubr.bf16.gmra.mrb[0].mxu0 %v4976
        %v5292 = vpop.f32.mrb[0].mxu0
        %v5293 = vadd.f32 %v5041, %v5292
        %v5294 = vpop.f32.mrb[0].mxu0
        %v5295 = vadd.f32 %v5045, %v5294
        %v5296 = vpop.f32.mrb[0].mxu0
        %v5297 = vadd.f32 %v5041, %v5296
        %v5298 = vpop.f32.mrb[0].mxu0
        %v5299 = vadd.f32 %v5045, %v5298
        %5300 = vmatprep.mubr.bf16.mxu0 0
        %5301 = vmatmul.mubr.bf16.gmra.mrb[0].mxu0 %v4977
        %v5302 = vpop.f32.mrb[0].mxu0
        %v5303 = vadd.f32 %v5041, %v5302
        %v5304 = vpop.f32.mrb[0].mxu0
        %v5305 = vadd.f32 %v5045, %v5304
        %v5306 = vpop.f32.mrb[0].mxu0
        %v5307 = vadd.f32 %v5041, %v5306
        %v5308 = vpop.f32.mrb[0].mxu0
        %v5309 = vadd.f32 %v5045, %v5308
        %5310 = vmatprep.mubr.bf16.mxu0 0
        %5311 = vmatmul.mubr.bf16.gmra.mrb[0].mxu0 %v4978
        %v5312 = vpop.f32.mrb[0].mxu0
        %v5313 = vadd.f32 %v5041, %v5312
        %v5314 = vpop.f32.mrb[0].mxu0
        %v5315 = vadd.f32 %v5045, %v5314
        %v5316 = vpop.f32.mrb[0].mxu0
        %v5317 = vadd.f32 %v5041, %v5316
        %v5318 = vpop.f32.mrb[0].mxu0
        %v5319 = vadd.f32 %v5045, %v5318
        %5320 = vmatprep.mubr.bf16.mxu0 0
        %5321 = vmatmul.mubr.bf16.gmra.mrb[0].mxu0 %v4979
        %v5322 = vpop.f32.mrb[0].mxu0
        %v5323 = vadd.f32 %v5041, %v5322
        %v5324 = vpop.f32.mrb[0].mxu0
        %v5325 = vadd.f32 %v5045, %v5324
        %v5326 = vpop.f32.mrb[0].mxu0
        %v5327 = vadd.f32 %v5041, %v5326
        %v5328 = vpop.f32.mrb[0].mxu0
        %v5329 = vadd.f32 %v5045, %v5328
        %5330 = vmatprep.mubr.bf16.mxu0 0
        %5331 = vmatmul.mubr.bf16.gmra.mrb[0].mxu0 %v4980
        %v5332 = vpop.f32.mrb[0].mxu0
        %v5333 = vadd.f32 %v5041, %v5332
        %v5334 = vpop.f32.mrb[0].mxu0
        %v5335 = vadd.f32 %v5045, %v5334
        %v5336 = vpop.f32.mrb[0].mxu0
        %v5337 = vadd.f32 %v5041, %v5336
        %v5338 = vpop.f32.mrb[0].mxu0
        %v5339 = vadd.f32 %v5045, %v5338
        %5340 = vmatprep.mubr.bf16.mxu0 0
        %5341 = vmatmul.mubr.bf16.gmra.mrb[0].mxu0 %v4981
        %v5342 = vpop.f32.mrb[0].mxu0
        %v5343 = vadd.f32 %v5041, %v5342
        %v5344 = vpop.f32.mrb[0].mxu0
        %v5345 = vadd.f32 %v5045, %v5344
        %v5346 = vpop.f32.mrb[0].mxu0
        %v5347 = vadd.f32 %v5041, %v5346
        %v5348 = vpop.f32.mrb[0].mxu0
        %v5349 = vadd.f32 %v5045, %v5348
        %5350 = vmatprep.mubr.bf16.mxu0 0
        %5351 = vmatmul.mubr.bf16.gmra.mrb[0].mxu0 %v4982
        %v5352 = vpop.f32.mrb[0].mxu0
        %v5353 = vadd.f32 %v5041, %v5352
        %v5354 = vpop.f32.mrb[0].mxu0
        %v5355 = vadd.f32 %v5045, %v5354
        %v5356 = vpop.f32.mrb[0].mxu0
        %v5357 = vadd.f32 %v5041, %v5356
        %v5358 = vpop.f32.mrb[0].mxu0
        %v5359 = vadd.f32 %v5045, %v5358
        %5360 = vmatprep.mubr.bf16.mxu0 0
        %5361 = vmatmul.mubr.bf16.gmra.mrb[0].mxu0 %v4983
        %v5362 = vpop.f32.mrb[0].mxu0
        %v5363 = vadd.f32 %v5041, %v5362
        %v5364 = vpop.f32.mrb[0].mxu0
        %v5365 = vadd.f32 %v5045, %v5364
        %v5366 = vpop.f32.mrb[0].mxu0
        %v5367 = vadd.f32 %v5041, %v5366
        %v5368 = vpop.f32.mrb[0].mxu0
        %v5369 = vadd.f32 %v5045, %v5368
        %5370 = vmatprep.mubr.bf16.mxu0 0
        %5371 = vmatmul.mubr.bf16.gmra.mrb[0].mxu0 %v4984
        %v5372 = vpop.f32.mrb[0].mxu0
        %v5373 = vadd.f32 %v5041, %v5372
        %v5374 = vpop.f32.mrb[0].mxu0
        %v5375 = vadd.f32 %v5045, %v5374
        %v5376 = vpop.f32.mrb[0].mxu0
        %v5377 = vadd.f32 %v5041, %v5376
        %v5378 = vpop.f32.mrb[0].mxu0
        %v5379 = vadd.f32 %v5045, %v5378
        %5380 = vmatprep.mubr.bf16.mxu0 0
        %5381 = vmatmul.mubr.bf16.gmra.mrb[0].mxu0 %v4985
        %v5382 = vpop.f32.mrb[0].mxu0
        %v5383 = vadd.f32 %v5041, %v5382
        %v5384 = vpop.f32.mrb[0].mxu0
        %v5385 = vadd.f32 %v5045, %v5384
        %v5386 = vpop.f32.mrb[0].mxu0
        %v5387 = vadd.f32 %v5041, %v5386
        %v5388 = vpop.f32.mrb[0].mxu0
        %v5389 = vadd.f32 %v5045, %v5388
        %5390 = vmatprep.mubr.bf16.mxu0 0
        %5391 = vmatmul.mubr.bf16.gmra.mrb[0].mxu0 %v4986
        %v5392 = vpop.f32.mrb[0].mxu0
        %v5393 = vadd.f32 %v5041, %v5392
        %v5394 = vpop.f32.mrb[0].mxu0
        %v5395 = vadd.f32 %v5045, %v5394
        %v5396 = vpop.f32.mrb[0].mxu0
        %v5397 = vadd.f32 %v5041, %v5396
        %v5398 = vpop.f32.mrb[0].mxu0
        %v5399 = vadd.f32 %v5045, %v5398
        %5400 = vmatprep.mubr.bf16.mxu0 0
        %5401 = vmatmul.mubr.bf16.gmra.mrb[0].mxu0 %v4987
        %v5402 = vpop.f32.mrb[0].mxu0
        %v5403 = vadd.f32 %v5041, %v5402
        %v5404 = vpop.f32.mrb[0].mxu0
        %v5405 = vadd.f32 %v5045, %v5404
        %v5406 = vpop.f32.mrb[0].mxu0
        %v5407 = vadd.f32 %v5041, %v5406
        %v5408 = vpop.f32.mrb[0].mxu0
        %v5409 = vadd.f32 %v5045, %v5408
        %5410 = vmatprep.mubr.bf16.mxu0 0
        %5411 = vmatmul.mubr.bf16.gmra.mrb[0].mxu0 %v4988
        %v5412 = vpop.f32.mrb[0].mxu0
        %v5413 = vadd.f32 %v5041, %v5412
        %v5414 = vpop.f32.mrb[0].mxu0
        %v5415 = vadd.f32 %v5045, %v5414
        %v5416 = vpop.f32.mrb[0].mxu0
        %v5417 = vadd.f32 %v5041, %v5416
        %v5418 = vpop.f32.mrb[0].mxu0
        %v5419 = vadd.f32 %v5045, %v5418
        %5420 = vmatprep.mubr.bf16.mxu0 0
        %5421 = vmatmul.mubr.bf16.gmra.mrb[0].mxu0 %v4989
        %v5422 = vpop.f32.mrb[0].mxu0
        %v5423 = vadd.f32 %v5041, %v5422
        %v5424 = vpop.f32.mrb[0].mxu0
        %v5425 = vadd.f32 %v5045, %v5424
        %v5426 = vpop.f32.mrb[0].mxu0
        %v5427 = vadd.f32 %v5041, %v5426
        %v5428 = vpop.f32.mrb[0].mxu0
        %v5429 = vadd.f32 %v5045, %v5428
        %5430 = vmatprep.mubr.bf16.mxu0 0
        %5431 = vmatmul.mubr.bf16.gmra.mrb[0].mxu0 %v4990
        %v5432 = vpop.f32.mrb[0].mxu0
        %v5433 = vadd.f32 %v5041, %v5432
        %v5434 = vpop.f32.mrb[0].mxu0
        %v5435 = vadd.f32 %v5045, %v5434
        %v5436 = vpop.f32.mrb[0].mxu0
        %v5437 = vadd.f32 %v5041, %v5436
        %v5438 = vpop.f32.mrb[0].mxu0
        %v5439 = vadd.f32 %v5045, %v5438
        %5440 = vmatprep.mubr.bf16.mxu0 0
        %5441 = vmatmul.mubr.bf16.gmra.mrb[0].mxu0 %v4991
        %v5442 = vpop.f32.mrb[0].mxu0
        %v5443 = vadd.f32 %v5041, %v5442
        %v5444 = vpop.f32.mrb[0].mxu0
        %v5445 = vadd.f32 %v5045, %v5444
        %v5446 = vpop.f32.mrb[0].mxu0
        %v5447 = vadd.f32 %v5041, %v5446
        %v5448 = vpop.f32.mrb[0].mxu0
        %v5449 = vadd.f32 %v5045, %v5448
        %5450 = vmatprep.mubr.bf16.mxu0 0
        %5451 = vmatmul.mubr.bf16.gmra.mrb[0].mxu0 %v4992
        %v5452 = vpop.f32.mrb[0].mxu0
        %v5453 = vadd.f32 %v5041, %v5452
        %v5454 = vpop.f32.mrb[0].mxu0
        %v5455 = vadd.f32 %v5045, %v5454
        %v5456 = vpop.f32.mrb[0].mxu0
        %v5457 = vadd.f32 %v5041, %v5456
        %v5458 = vpop.f32.mrb[0].mxu0
        %v5459 = vadd.f32 %v5045, %v5458
        %5460 = vmatprep.mubr.bf16.mxu0 0
        %5461 = vmatmul.mubr.bf16.gmra.mrb[0].mxu0 %v4993
        %v5462 = vpop.f32.mrb[0].mxu0
        %v5463 = vadd.f32 %v5041, %v5462
        %v5464 = vpop.f32.mrb[0].mxu0
        %v5465 = vadd.f32 %v5045, %v5464
        %v5466 = vpop.f32.mrb[0].mxu0
        %v5467 = vadd.f32 %v5041, %v5466
        %v5468 = vpop.f32.mrb[0].mxu0
        %v5469 = vadd.f32 %v5045, %v5468
        %5470 = vmatprep.mubr.bf16.mxu0 0
        %5471 = vmatmul.mubr.bf16.gmra.mrb[0].mxu0 %v4994
        %v5472 = vpop.f32.mrb[0].mxu0
        %v5473 = vadd.f32 %v5041, %v5472
        %v5474 = vpop.f32.mrb[0].mxu0
        %v5475 = vadd.f32 %v5045, %v5474
        %v5476 = vpop.f32.mrb[0].mxu0
        %v5477 = vadd.f32 %v5041, %v5476
        %v5478 = vpop.f32.mrb[0].mxu0
        %v5479 = vadd.f32 %v5045, %v5478
        %5480 = vmatprep.mubr.bf16.mxu0 0
        %5481 = vmatmul.mubr.bf16.gmra.mrb[0].mxu0 %v4995
        %v5482 = vpop.f32.mrb[0].mxu0
        %v5483 = vadd.f32 %v5041, %v5482
        %v5484 = vpop.f32.mrb[0].mxu0
        %v5485 = vadd.f32 %v5045, %v5484
        %v5486 = vpop.f32.mrb[0].mxu0
        %v5487 = vadd.f32 %v5041, %v5486
        %v5488 = vpop.f32.mrb[0].mxu0
        %v5489 = vadd.f32 %v5045, %v5488
        %5490 = vmatprep.mubr.bf16.mxu0 0
        %5491 = vmatmul.mubr.bf16.gmra.mrb[0].mxu0 %v4996
        %v5492 = vpop.f32.mrb[0].mxu0
        %v5493 = vadd.f32 %v5041, %v5492
        %v5494 = vpop.f32.mrb[0].mxu0
        %v5495 = vadd.f32 %v5045, %v5494
        %v5496 = vpop.f32.mrb[0].mxu0
        %v5497 = vadd.f32 %v5041, %v5496
        %v5498 = vpop.f32.mrb[0].mxu0
        %v5499 = vadd.f32 %v5045, %v5498
        %5500 = vmatprep.mubr.bf16.mxu0 0
        %5501 = vmatmul.mubr.bf16.gmra.mrb[0].mxu0 %v4997
        %v5502 = vpop.f32.mrb[0].mxu0
        %v5503 = vadd.f32 %v5041, %v5502
        %v5504 = vpop.f32.mrb[0].mxu0
        %v5505 = vadd.f32 %v5045, %v5504
        %v5506 = vpop.f32.mrb[0].mxu0
        %v5507 = vadd.f32 %v5041, %v5506
        %v5508 = vpop.f32.mrb[0].mxu0
        %v5509 = vadd.f32 %v5045, %v5508
        %5510 = vmatprep.mubr.bf16.mxu0 0
        %5511 = vmatmul.mubr.bf16.gmra.mrb[0].mxu0 %v4998
        %v5512 = vpop.f32.mrb[0].mxu0
        %v5513 = vadd.f32 %v5041, %v5512
        %v5514 = vpop.f32.mrb[0].mxu0
        %v5515 = vadd.f32 %v5045, %v5514
        %v5516 = vpop.f32.mrb[0].mxu0
        %v5517 = vadd.f32 %v5041, %v5516
        %v5518 = vpop.f32.mrb[0].mxu0
        %v5519 = vadd.f32 %v5045, %v5518
        %5520 = vmatprep.mubr.bf16.mxu0 0
        %5521 = vmatmul.mubr.bf16.gmra.mrb[0].mxu0 %v4999
        %v5522 = vpop.f32.mrb[0].mxu0
        %v5523 = vadd.f32 %v5041, %v5522
        %v5524 = vpop.f32.mrb[0].mxu0
        %v5525 = vadd.f32 %v5045, %v5524
        %v5526 = vpop.f32.mrb[0].mxu0
        %v5527 = vadd.f32 %v5041, %v5526
        %v5528 = vpop.f32.mrb[0].mxu0
        %v5529 = vadd.f32 %v5045, %v5528
        %5530 = vmatprep.mubr.bf16.mxu0 0
        %5531 = vmatmul.mubr.bf16.gmra.mrb[0].mxu0 %v5000
        %v5532 = vpop.f32.mrb[0].mxu0
        %v5533 = vadd.f32 %v5041, %v5532
        %v5534 = vpop.f32.mrb[0].mxu0
        %v5535 = vadd.f32 %v5045, %v5534
        %v5536 = vpop.f32.mrb[0].mxu0
        %v5537 = vadd.f32 %v5041, %v5536
        %v5538 = vpop.f32.mrb[0].mxu0
        %v5539 = vadd.f32 %v5045, %v5538
        %5540 = vmatprep.mubr.bf16.mxu0 0
        %5541 = vmatmul.mubr.bf16.gmra.mrb[0].mxu0 %v5001
        %v5542 = vpop.f32.mrb[0].mxu0
        %v5543 = vadd.f32 %v5041, %v5542
        %v5544 = vpop.f32.mrb[0].mxu0
        %v5545 = vadd.f32 %v5045, %v5544
        %v5546 = vpop.f32.mrb[0].mxu0
        %v5547 = vadd.f32 %v5041, %v5546
        %v5548 = vpop.f32.mrb[0].mxu0
        %v5549 = vadd.f32 %v5045, %v5548
        %5550 = vmatprep.mubr.bf16.mxu0 0
        %5551 = vmatmul.mubr.bf16.gmra.mrb[0].mxu0 %v5002
        %v5552 = vpop.f32.mrb[0].mxu0
        %v5553 = vadd.f32 %v5041, %v5552
        %v5554 = vpop.f32.mrb[0].mxu0
        %v5555 = vadd.f32 %v5045, %v5554
        %v5556 = vpop.f32.mrb[0].mxu0
        %v5557 = vadd.f32 %v5041, %v5556
        %v5558 = vpop.f32.mrb[0].mxu0
        %v5559 = vadd.f32 %v5045, %v5558
        %5560 = vmatprep.mubr.bf16.mxu0 0
        %5561 = vmatmul.mubr.bf16.gmra.mrb[0].mxu0 %v5003
        %v5562 = vpop.f32.mrb[0].mxu0
        %v5563 = vadd.f32 %v5041, %v5562
        %v5564 = vpop.f32.mrb[0].mxu0
        %v5565 = vadd.f32 %v5045, %v5564
        %v5566 = vpop.f32.mrb[0].mxu0
        %v5567 = vadd.f32 %v5041, %v5566
        %v5568 = vpop.f32.mrb[0].mxu0
        %v5569 = vadd.f32 %v5045, %v5568
        %5570 = vdwg.mxu0
        %5571 = vmatprep.subr.bf16.mxu0 %v5157
        %5572 = vmatpush1.bf16.msra.mxu0 %v5156
        %5573 = vmatprep.subr.bf16.mxu0 %v5161
        %5574 = vmatpush1.bf16.msra.mxu0 %v5160
        %5575 = vmatprep.subr.bf16.mxu0 %v5165
        %5576 = vmatpush1.bf16.msra.mxu0 %v5164
        %5577 = vmatprep.subr.bf16.mxu0 %v5169
        %5578 = vmatpush1.bf16.msra.mxu0 %v5168
        %5579 = vmatprep.subr.bf16.mxu0 %v5173
        %5580 = vmatpush1.bf16.msra.mxu0 %v5172
        %5581 = vmatprep.subr.bf16.mxu0 %v5177
        %5582 = vmatpush1.bf16.msra.mxu0 %v5176
        %5583 = vmatprep.subr.bf16.mxu0 %v5181
        %5584 = vmatpush1.bf16.msra.mxu0 %v5180
        %5585 = vmatprep.subr.bf16.mxu0 %v5185
        %5586 = vmatpush1.bf16.msra.mxu0 %v5184
        %5587 = vmatprep.subr.bf16.mxu0 0
        %5588 = vmatpush1.bf16.msra.mxu0 0
        %5589 = vmatprep.subr.bf16.mxu0 0
        %5590 = vmatpush1.bf16.msra.mxu0 0
        %5591 = vmatprep.subr.bf16.mxu0 0
        %5592 = vmatpush1.bf16.msra.mxu0 0
        %5593 = vmatprep.subr.bf16.mxu0 0
        %5594 = vmatpush1.bf16.msra.mxu0 0
        %5595 = vmatprep.subr.bf16.mxu0 0
        %5596 = vmatpush1.bf16.msra.mxu0 0
        %5597 = vmatprep.subr.bf16.mxu0 0
        %5598 = vmatpush1.bf16.msra.mxu0 0
        %5599 = vmatprep.subr.bf16.mxu0 0
        %5600 = vmatpush1.bf16.msra.mxu0 0
        %5601 = vmatprep.subr.bf16.mxu0 0
        %5602 = vmatpush1.bf16.msra.mxu0 0
        %5603 = vmatprep.mubr.bf16.mxu0 0
        %5604 = vmatmul.mubr.bf16.gmra.mrb[0].mxu0 %v4972
        %v5605 = vpop.f32.mrb[0].mxu0
        %v5606 = vadd.f32 %v5049, %v5605
        %v5607 = vpop.f32.mrb[0].mxu0
        %v5608 = vadd.f32 %v5053, %v5607
        %v5609 = vpop.f32.mrb[0].mxu0
        %v5610 = vadd.f32 %v5049, %v5609
        %v5611 = vpop.f32.mrb[0].mxu0
        %v5612 = vadd.f32 %v5053, %v5611
        %5613 = vmatprep.mubr.bf16.mxu0 0
        %5614 = vmatmul.mubr.bf16.gmra.mrb[0].mxu0 %v4973
        %v5615 = vpop.f32.mrb[0].mxu0
        %v5616 = vadd.f32 %v5049, %v5615
        %v5617 = vpop.f32.mrb[0].mxu0
        %v5618 = vadd.f32 %v5053, %v5617
        %v5619 = vpop.f32.mrb[0].mxu0
        %v5620 = vadd.f32 %v5049, %v5619
        %v5621 = vpop.f32.mrb[0].mxu0
        %v5622 = vadd.f32 %v5053, %v5621
        %5623 = vmatprep.mubr.bf16.mxu0 0
        %5624 = vmatmul.mubr.bf16.gmra.mrb[0].mxu0 %v4974
        %v5625 = vpop.f32.mrb[0].mxu0
        %v5626 = vadd.f32 %v5049, %v5625
        %v5627 = vpop.f32.mrb[0].mxu0
        %v5628 = vadd.f32 %v5053, %v5627
        %v5629 = vpop.f32.mrb[0].mxu0
        %v5630 = vadd.f32 %v5049, %v5629
        %v5631 = vpop.f32.mrb[0].mxu0
        %v5632 = vadd.f32 %v5053, %v5631
        %5633 = vmatprep.mubr.bf16.mxu0 0
        %5634 = vmatmul.mubr.bf16.gmra.mrb[0].mxu0 %v4975
        %v5635 = vpop.f32.mrb[0].mxu0
        %v5636 = vadd.f32 %v5049, %v5635
        %v5637 = vpop.f32.mrb[0].mxu0
        %v5638 = vadd.f32 %v5053, %v5637
        %v5639 = vpop.f32.mrb[0].mxu0
        %v5640 = vadd.f32 %v5049, %v5639
        %v5641 = vpop.f32.mrb[0].mxu0
        %v5642 = vadd.f32 %v5053, %v5641
        %5643 = vmatprep.mubr.bf16.mxu0 0
        %5644 = vmatmul.mubr.bf16.gmra.mrb[0].mxu0 %v4976
        %v5645 = vpop.f32.mrb[0].mxu0
        %v5646 = vadd.f32 %v5049, %v5645
        %v5647 = vpop.f32.mrb[0].mxu0
        %v5648 = vadd.f32 %v5053, %v5647
        %v5649 = vpop.f32.mrb[0].mxu0
        %v5650 = vadd.f32 %v5049, %v5649
        %v5651 = vpop.f32.mrb[0].mxu0
        %v5652 = vadd.f32 %v5053, %v5651
        %5653 = vmatprep.mubr.bf16.mxu0 0
        %5654 = vmatmul.mubr.bf16.gmra.mrb[0].mxu0 %v4977
        %v5655 = vpop.f32.mrb[0].mxu0
        %v5656 = vadd.f32 %v5049, %v5655
        %v5657 = vpop.f32.mrb[0].mxu0
        %v5658 = vadd.f32 %v5053, %v5657
        %v5659 = vpop.f32.mrb[0].mxu0
        %v5660 = vadd.f32 %v5049, %v5659
        %v5661 = vpop.f32.mrb[0].mxu0
        %v5662 = vadd.f32 %v5053, %v5661
        %5663 = vmatprep.mubr.bf16.mxu0 0
        %5664 = vmatmul.mubr.bf16.gmra.mrb[0].mxu0 %v4978
        %v5665 = vpop.f32.mrb[0].mxu0
        %v5666 = vadd.f32 %v5049, %v5665
        %v5667 = vpop.f32.mrb[0].mxu0
        %v5668 = vadd.f32 %v5053, %v5667
        %v5669 = vpop.f32.mrb[0].mxu0
        %v5670 = vadd.f32 %v5049, %v5669
        %v5671 = vpop.f32.mrb[0].mxu0
        %v5672 = vadd.f32 %v5053, %v5671
        %5673 = vmatprep.mubr.bf16.mxu0 0
        %5674 = vmatmul.mubr.bf16.gmra.mrb[0].mxu0 %v4979
        %v5675 = vpop.f32.mrb[0].mxu0
        %v5676 = vadd.f32 %v5049, %v5675
        %v5677 = vpop.f32.mrb[0].mxu0
        %v5678 = vadd.f32 %v5053, %v5677
        %v5679 = vpop.f32.mrb[0].mxu0
        %v5680 = vadd.f32 %v5049, %v5679
        %v5681 = vpop.f32.mrb[0].mxu0
        %v5682 = vadd.f32 %v5053, %v5681
        %5683 = vmatprep.mubr.bf16.mxu0 0
        %5684 = vmatmul.mubr.bf16.gmra.mrb[0].mxu0 %v4980
        %v5685 = vpop.f32.mrb[0].mxu0
        %v5686 = vadd.f32 %v5049, %v5685
        %v5687 = vpop.f32.mrb[0].mxu0
        %v5688 = vadd.f32 %v5053, %v5687
        %v5689 = vpop.f32.mrb[0].mxu0
        %v5690 = vadd.f32 %v5049, %v5689
        %v5691 = vpop.f32.mrb[0].mxu0
        %v5692 = vadd.f32 %v5053, %v5691
        %5693 = vmatprep.mubr.bf16.mxu0 0
        %5694 = vmatmul.mubr.bf16.gmra.mrb[0].mxu0 %v4981
        %v5695 = vpop.f32.mrb[0].mxu0
        %v5696 = vadd.f32 %v5049, %v5695
        %v5697 = vpop.f32.mrb[0].mxu0
        %v5698 = vadd.f32 %v5053, %v5697
        %v5699 = vpop.f32.mrb[0].mxu0
        %v5700 = vadd.f32 %v5049, %v5699
        %v5701 = vpop.f32.mrb[0].mxu0
        %v5702 = vadd.f32 %v5053, %v5701
        %5703 = vmatprep.mubr.bf16.mxu0 0
        %5704 = vmatmul.mubr.bf16.gmra.mrb[0].mxu0 %v4982
        %v5705 = vpop.f32.mrb[0].mxu0
        %v5706 = vadd.f32 %v5049, %v5705
        %v5707 = vpop.f32.mrb[0].mxu0
        %v5708 = vadd.f32 %v5053, %v5707
        %v5709 = vpop.f32.mrb[0].mxu0
        %v5710 = vadd.f32 %v5049, %v5709
        %v5711 = vpop.f32.mrb[0].mxu0
        %v5712 = vadd.f32 %v5053, %v5711
        %5713 = vmatprep.mubr.bf16.mxu0 0
        %5714 = vmatmul.mubr.bf16.gmra.mrb[0].mxu0 %v4983
        %v5715 = vpop.f32.mrb[0].mxu0
        %v5716 = vadd.f32 %v5049, %v5715
        %v5717 = vpop.f32.mrb[0].mxu0
        %v5718 = vadd.f32 %v5053, %v5717
        %v5719 = vpop.f32.mrb[0].mxu0
        %v5720 = vadd.f32 %v5049, %v5719
        %v5721 = vpop.f32.mrb[0].mxu0
        %v5722 = vadd.f32 %v5053, %v5721
        %5723 = vmatprep.mubr.bf16.mxu0 0
        %5724 = vmatmul.mubr.bf16.gmra.mrb[0].mxu0 %v4984
        %v5725 = vpop.f32.mrb[0].mxu0
        %v5726 = vadd.f32 %v5049, %v5725
        %v5727 = vpop.f32.mrb[0].mxu0
        %v5728 = vadd.f32 %v5053, %v5727
        %v5729 = vpop.f32.mrb[0].mxu0
        %v5730 = vadd.f32 %v5049, %v5729
        %v5731 = vpop.f32.mrb[0].mxu0
        %v5732 = vadd.f32 %v5053, %v5731
        %5733 = vmatprep.mubr.bf16.mxu0 0
        %5734 = vmatmul.mubr.bf16.gmra.mrb[0].mxu0 %v4985
        %v5735 = vpop.f32.mrb[0].mxu0
        %v5736 = vadd.f32 %v5049, %v5735
        %v5737 = vpop.f32.mrb[0].mxu0
        %v5738 = vadd.f32 %v5053, %v5737
        %v5739 = vpop.f32.mrb[0].mxu0
        %v5740 = vadd.f32 %v5049, %v5739
        %v5741 = vpop.f32.mrb[0].mxu0
        %v5742 = vadd.f32 %v5053, %v5741
        %5743 = vmatprep.mubr.bf16.mxu0 0
        %5744 = vmatmul.mubr.bf16.gmra.mrb[0].mxu0 %v4986
        %v5745 = vpop.f32.mrb[0].mxu0
        %v5746 = vadd.f32 %v5049, %v5745
        %v5747 = vpop.f32.mrb[0].mxu0
        %v5748 = vadd.f32 %v5053, %v5747
        %v5749 = vpop.f32.mrb[0].mxu0
        %v5750 = vadd.f32 %v5049, %v5749
        %v5751 = vpop.f32.mrb[0].mxu0
        %v5752 = vadd.f32 %v5053, %v5751
        %5753 = vmatprep.mubr.bf16.mxu0 0
        %5754 = vmatmul.mubr.bf16.gmra.mrb[0].mxu0 %v4987
        %v5755 = vpop.f32.mrb[0].mxu0
        %v5756 = vadd.f32 %v5049, %v5755
        %v5757 = vpop.f32.mrb[0].mxu0
        %v5758 = vadd.f32 %v5053, %v5757
        %v5759 = vpop.f32.mrb[0].mxu0
        %v5760 = vadd.f32 %v5049, %v5759
        %v5761 = vpop.f32.mrb[0].mxu0
        %v5762 = vadd.f32 %v5053, %v5761
        %5763 = vmatprep.mubr.bf16.mxu0 0
        %5764 = vmatmul.mubr.bf16.gmra.mrb[0].mxu0 %v4988
        %v5765 = vpop.f32.mrb[0].mxu0
        %v5766 = vadd.f32 %v5049, %v5765
        %v5767 = vpop.f32.mrb[0].mxu0
        %v5768 = vadd.f32 %v5053, %v5767
        %v5769 = vpop.f32.mrb[0].mxu0
        %v5770 = vadd.f32 %v5049, %v5769
        %v5771 = vpop.f32.mrb[0].mxu0
        %v5772 = vadd.f32 %v5053, %v5771
        %5773 = vmatprep.mubr.bf16.mxu0 0
        %5774 = vmatmul.mubr.bf16.gmra.mrb[0].mxu0 %v4989
        %v5775 = vpop.f32.mrb[0].mxu0
        %v5776 = vadd.f32 %v5049, %v5775
        %v5777 = vpop.f32.mrb[0].mxu0
        %v5778 = vadd.f32 %v5053, %v5777
        %v5779 = vpop.f32.mrb[0].mxu0
        %v5780 = vadd.f32 %v5049, %v5779
        %v5781 = vpop.f32.mrb[0].mxu0
        %v5782 = vadd.f32 %v5053, %v5781
        %5783 = vmatprep.mubr.bf16.mxu0 0
        %5784 = vmatmul.mubr.bf16.gmra.mrb[0].mxu0 %v4990
        %v5785 = vpop.f32.mrb[0].mxu0
        %v5786 = vadd.f32 %v5049, %v5785
        %v5787 = vpop.f32.mrb[0].mxu0
        %v5788 = vadd.f32 %v5053, %v5787
        %v5789 = vpop.f32.mrb[0].mxu0
        %v5790 = vadd.f32 %v5049, %v5789
        %v5791 = vpop.f32.mrb[0].mxu0
        %v5792 = vadd.f32 %v5053, %v5791
        %5793 = vmatprep.mubr.bf16.mxu0 0
        %5794 = vmatmul.mubr.bf16.gmra.mrb[0].mxu0 %v4991
        %v5795 = vpop.f32.mrb[0].mxu0
        %v5796 = vadd.f32 %v5049, %v5795
        %v5797 = vpop.f32.mrb[0].mxu0
        %v5798 = vadd.f32 %v5053, %v5797
        %v5799 = vpop.f32.mrb[0].mxu0
        %v5800 = vadd.f32 %v5049, %v5799
        %v5801 = vpop.f32.mrb[0].mxu0
        %v5802 = vadd.f32 %v5053, %v5801
        %5803 = vmatprep.mubr.bf16.mxu0 0
        %5804 = vmatmul.mubr.bf16.gmra.mrb[0].mxu0 %v4992
        %v5805 = vpop.f32.mrb[0].mxu0
        %v5806 = vadd.f32 %v5049, %v5805
        %v5807 = vpop.f32.mrb[0].mxu0
        %v5808 = vadd.f32 %v5053, %v5807
        %v5809 = vpop.f32.mrb[0].mxu0
        %v5810 = vadd.f32 %v5049, %v5809
        %v5811 = vpop.f32.mrb[0].mxu0
        %v5812 = vadd.f32 %v5053, %v5811
        %5813 = vmatprep.mubr.bf16.mxu0 0
        %5814 = vmatmul.mubr.bf16.gmra.mrb[0].mxu0 %v4993
        %v5815 = vpop.f32.mrb[0].mxu0
        %v5816 = vadd.f32 %v5049, %v5815
        %v5817 = vpop.f32.mrb[0].mxu0
        %v5818 = vadd.f32 %v5053, %v5817
        %v5819 = vpop.f32.mrb[0].mxu0
        %v5820 = vadd.f32 %v5049, %v5819
        %v5821 = vpop.f32.mrb[0].mxu0
        %v5822 = vadd.f32 %v5053, %v5821
        %5823 = vmatprep.mubr.bf16.mxu0 0
        %5824 = vmatmul.mubr.bf16.gmra.mrb[0].mxu0 %v4994
        %v5825 = vpop.f32.mrb[0].mxu0
        %v5826 = vadd.f32 %v5049, %v5825
        %v5827 = vpop.f32.mrb[0].mxu0
        %v5828 = vadd.f32 %v5053, %v5827
        %v5829 = vpop.f32.mrb[0].mxu0
        %v5830 = vadd.f32 %v5049, %v5829
        %v5831 = vpop.f32.mrb[0].mxu0
        %v5832 = vadd.f32 %v5053, %v5831
        %5833 = vmatprep.mubr.bf16.mxu0 0
        %5834 = vmatmul.mubr.bf16.gmra.mrb[0].mxu0 %v4995
        %v5835 = vpop.f32.mrb[0].mxu0
        %v5836 = vadd.f32 %v5049, %v5835
        %v5837 = vpop.f32.mrb[0].mxu0
        %v5838 = vadd.f32 %v5053, %v5837
        %v5839 = vpop.f32.mrb[0].mxu0
        %v5840 = vadd.f32 %v5049, %v5839
        %v5841 = vpop.f32.mrb[0].mxu0
        %v5842 = vadd.f32 %v5053, %v5841
        %5843 = vmatprep.mubr.bf16.mxu0 0
        %5844 = vmatmul.mubr.bf16.gmra.mrb[0].mxu0 %v4996
        %v5845 = vpop.f32.mrb[0].mxu0
        %v5846 = vadd.f32 %v5049, %v5845
        %v5847 = vpop.f32.mrb[0].mxu0
        %v5848 = vadd.f32 %v5053, %v5847
        %v5849 = vpop.f32.mrb[0].mxu0
        %v5850 = vadd.f32 %v5049, %v5849
        %v5851 = vpop.f32.mrb[0].mxu0
        %v5852 = vadd.f32 %v5053, %v5851
        %5853 = vmatprep.mubr.bf16.mxu0 0
        %5854 = vmatmul.mubr.bf16.gmra.mrb[0].mxu0 %v4997
        %v5855 = vpop.f32.mrb[0].mxu0
        %v5856 = vadd.f32 %v5049, %v5855
        %v5857 = vpop.f32.mrb[0].mxu0
        %v5858 = vadd.f32 %v5053, %v5857
        %v5859 = vpop.f32.mrb[0].mxu0
        %v5860 = vadd.f32 %v5049, %v5859
        %v5861 = vpop.f32.mrb[0].mxu0
        %v5862 = vadd.f32 %v5053, %v5861
        %5863 = vmatprep.mubr.bf16.mxu0 0
        %5864 = vmatmul.mubr.bf16.gmra.mrb[0].mxu0 %v4998
        %v5865 = vpop.f32.mrb[0].mxu0
        %v5866 = vadd.f32 %v5049, %v5865
        %v5867 = vpop.f32.mrb[0].mxu0
        %v5868 = vadd.f32 %v5053, %v5867
        %v5869 = vpop.f32.mrb[0].mxu0
        %v5870 = vadd.f32 %v5049, %v5869
        %v5871 = vpop.f32.mrb[0].mxu0
        %v5872 = vadd.f32 %v5053, %v5871
        %5873 = vmatprep.mubr.bf16.mxu0 0
        %5874 = vmatmul.mubr.bf16.gmra.mrb[0].mxu0 %v4999
        %v5875 = vpop.f32.mrb[0].mxu0
        %v5876 = vadd.f32 %v5049, %v5875
        %v5877 = vpop.f32.mrb[0].mxu0
        %v5878 = vadd.f32 %v5053, %v5877
        %v5879 = vpop.f32.mrb[0].mxu0
        %v5880 = vadd.f32 %v5049, %v5879
        %v5881 = vpop.f32.mrb[0].mxu0
        %v5882 = vadd.f32 %v5053, %v5881
        %5883 = vmatprep.mubr.bf16.mxu0 0
        %5884 = vmatmul.mubr.bf16.gmra.mrb[0].mxu0 %v5000
        %v5885 = vpop.f32.mrb[0].mxu0
        %v5886 = vadd.f32 %v5049, %v5885
        %v5887 = vpop.f32.mrb[0].mxu0
        %v5888 = vadd.f32 %v5053, %v5887
        %v5889 = vpop.f32.mrb[0].mxu0
        %v5890 = vadd.f32 %v5049, %v5889
        %v5891 = vpop.f32.mrb[0].mxu0
        %v5892 = vadd.f32 %v5053, %v5891
        %5893 = vmatprep.mubr.bf16.mxu0 0
        %5894 = vmatmul.mubr.bf16.gmra.mrb[0].mxu0 %v5001
        %v5895 = vpop.f32.mrb[0].mxu0
        %v5896 = vadd.f32 %v5049, %v5895
        %v5897 = vpop.f32.mrb[0].mxu0
        %v5898 = vadd.f32 %v5053, %v5897
        %v5899 = vpop.f32.mrb[0].mxu0
        %v5900 = vadd.f32 %v5049, %v5899
        %v5901 = vpop.f32.mrb[0].mxu0
        %v5902 = vadd.f32 %v5053, %v5901
        %5903 = vmatprep.mubr.bf16.mxu0 0
        %5904 = vmatmul.mubr.bf16.gmra.mrb[0].mxu0 %v5002
        %v5905 = vpop.f32.mrb[0].mxu0
        %v5906 = vadd.f32 %v5049, %v5905
        %v5907 = vpop.f32.mrb[0].mxu0
        %v5908 = vadd.f32 %v5053, %v5907
        %v5909 = vpop.f32.mrb[0].mxu0
        %v5910 = vadd.f32 %v5049, %v5909
        %v5911 = vpop.f32.mrb[0].mxu0
        %v5912 = vadd.f32 %v5053, %v5911
        %5913 = vmatprep.mubr.bf16.mxu0 0
        %5914 = vmatmul.mubr.bf16.gmra.mrb[0].mxu0 %v5003
        %v5915 = vpop.f32.mrb[0].mxu0
        %v5916 = vadd.f32 %v5049, %v5915
        %v5917 = vpop.f32.mrb[0].mxu0
        %v5918 = vadd.f32 %v5053, %v5917
        %v5919 = vpop.f32.mrb[0].mxu0
        %v5920 = vadd.f32 %v5049, %v5919
        %v5921 = vpop.f32.mrb[0].mxu0
        %v5922 = vadd.f32 %v5053, %v5921
        %5923 = vdwg.mxu0
        %v5924 = vunpack.c.l.bf16 %v284
        %v5925 = vunpack.c.h.bf16 %v284
        %v5926 = vunpack.c.l.bf16 %v285
        %v5927 = vunpack.c.h.bf16 %v285
        %v5928 = vunpack.c.l.bf16 %v286
        %v5929 = vunpack.c.h.bf16 %v286
        %v5930 = vunpack.c.l.bf16 %v287
        %v5931 = vunpack.c.h.bf16 %v287
        %v5932 = vunpack.c.l.bf16 %v288
        %v5933 = vunpack.c.h.bf16 %v288
        %v5934 = vunpack.c.l.bf16 %v289
        %v5935 = vunpack.c.h.bf16 %v289
        %v5936 = vunpack.c.l.bf16 %v290
        %v5937 = vunpack.c.h.bf16 %v290
        %v5938 = vunpack.c.l.bf16 %v291
        %v5939 = vunpack.c.h.bf16 %v291
        %v5940 = vunpack.c.l.bf16 %v292
        %v5941 = vunpack.c.h.bf16 %v292
        %v5942 = vunpack.c.l.bf16 %v293
        %v5943 = vunpack.c.h.bf16 %v293
        %v5944 = vunpack.c.l.bf16 %v294
        %v5945 = vunpack.c.h.bf16 %v294
        %v5946 = vunpack.c.l.bf16 %v295
        %v5947 = vunpack.c.h.bf16 %v295
        %v5948 = vunpack.c.l.bf16 %v296
        %v5949 = vunpack.c.h.bf16 %v296
        %v5950 = vunpack.c.l.bf16 %v297
        %v5951 = vunpack.c.h.bf16 %v297
        %v5952 = vunpack.c.l.bf16 %v298
        %v5953 = vunpack.c.h.bf16 %v298
        %v5954 = vunpack.c.l.bf16 %v299
        %v5955 = vunpack.c.h.bf16 %v299
        %v5956 = vunpack.c.l.bf16 %v300
        %v5957 = vunpack.c.h.bf16 %v300
        %v5958 = vunpack.c.l.bf16 %v301
        %v5959 = vunpack.c.h.bf16 %v301
        %v5960 = vunpack.c.l.bf16 %v302
        %v5961 = vunpack.c.h.bf16 %v302
        %v5962 = vunpack.c.l.bf16 %v303
        %v5963 = vunpack.c.h.bf16 %v303
        %v5964 = vunpack.c.l.bf16 %v304
        %v5965 = vunpack.c.h.bf16 %v304
        %v5966 = vunpack.c.l.bf16 %v305
        %v5967 = vunpack.c.h.bf16 %v305
        %v5968 = vunpack.c.l.bf16 %v306
        %v5969 = vunpack.c.h.bf16 %v306
        %v5970 = vunpack.c.l.bf16 %v307
        %v5971 = vunpack.c.h.bf16 %v307
        %v5972 = vunpack.c.l.bf16 %v308
        %v5973 = vunpack.c.h.bf16 %v308
        %v5974 = vunpack.c.l.bf16 %v309
        %v5975 = vunpack.c.h.bf16 %v309
        %v5976 = vunpack.c.l.bf16 %v310
        %v5977 = vunpack.c.h.bf16 %v310
        %v5978 = vunpack.c.l.bf16 %v311
        %v5979 = vunpack.c.h.bf16 %v311
        %v5980 = vunpack.c.l.bf16 %v312
        %v5981 = vunpack.c.h.bf16 %v312
        %v5982 = vunpack.c.l.bf16 %v313
        %v5983 = vunpack.c.h.bf16 %v313
        %v5984 = vunpack.c.l.bf16 %v314
        %v5985 = vunpack.c.h.bf16 %v314
        %v5986 = vunpack.c.l.bf16 %v315
        %v5987 = vunpack.c.h.bf16 %v315
        %v5988 = vunpack.c.l.bf16 %v316
        %v5989 = vunpack.c.h.bf16 %v316
        %v5990 = vunpack.c.l.bf16 %v317
        %v5991 = vunpack.c.h.bf16 %v317
        %v5992 = vunpack.c.l.bf16 %v318
        %v5993 = vunpack.c.h.bf16 %v318
        %v5994 = vunpack.c.l.bf16 %v319
        %v5995 = vunpack.c.h.bf16 %v319
        %v5996 = vunpack.c.l.bf16 %v320
        %v5997 = vunpack.c.h.bf16 %v320
        %v5998 = vunpack.c.l.bf16 %v321
        %v5999 = vunpack.c.h.bf16 %v321
        %v6000 = vunpack.c.l.bf16 %v322
        %v6001 = vunpack.c.h.bf16 %v322
        %v6002 = vunpack.c.l.bf16 %v323
        %v6003 = vunpack.c.h.bf16 %v323
        %v6004 = vunpack.c.l.bf16 %v324
        %v6005 = vunpack.c.h.bf16 %v324
        %v6006 = vunpack.c.l.bf16 %v325
        %v6007 = vunpack.c.h.bf16 %v325
        %v6008 = vunpack.c.l.bf16 %v326
        %v6009 = vunpack.c.h.bf16 %v326
        %v6010 = vunpack.c.l.bf16 %v327
        %v6011 = vunpack.c.h.bf16 %v327
        %v6012 = vunpack.c.l.bf16 %v328
        %v6013 = vunpack.c.h.bf16 %v328
        %v6014 = vunpack.c.l.bf16 %v329
        %v6015 = vunpack.c.h.bf16 %v329
        %v6016 = vunpack.c.l.bf16 %v330
        %v6017 = vunpack.c.h.bf16 %v330
        %v6018 = vunpack.c.l.bf16 %v331
        %v6019 = vunpack.c.h.bf16 %v331
        %v6020 = vunpack.c.l.bf16 %v332
        %v6021 = vunpack.c.h.bf16 %v332
        %v6022 = vunpack.c.l.bf16 %v333
        %v6023 = vunpack.c.h.bf16 %v333
        %v6024 = vunpack.c.l.bf16 %v334
        %v6025 = vunpack.c.h.bf16 %v334
        %v6026 = vunpack.c.l.bf16 %v335
        %v6027 = vunpack.c.h.bf16 %v335
        %v6028 = vunpack.c.l.bf16 %v336
        %v6029 = vunpack.c.h.bf16 %v336
        %v6030 = vunpack.c.l.bf16 %v337
        %v6031 = vunpack.c.h.bf16 %v337
        %v6032 = vunpack.c.l.bf16 %v338
        %v6033 = vunpack.c.h.bf16 %v338
        %v6034 = vunpack.c.l.bf16 %v339
        %v6035 = vunpack.c.h.bf16 %v339
        %v6036 = vunpack.c.l.bf16 %v340
        %v6037 = vunpack.c.h.bf16 %v340
        %v6038 = vunpack.c.l.bf16 %v341
        %v6039 = vunpack.c.h.bf16 %v341
        %v6040 = vunpack.c.l.bf16 %v342
        %v6041 = vunpack.c.h.bf16 %v342
        %v6042 = vunpack.c.l.bf16 %v343
        %v6043 = vunpack.c.h.bf16 %v343
        %v6044 = vunpack.c.l.bf16 %v344
        %v6045 = vunpack.c.h.bf16 %v344
        %v6046 = vunpack.c.l.bf16 %v345
        %v6047 = vunpack.c.h.bf16 %v345
        %v6048 = vunpack.c.l.bf16 %v346
        %v6049 = vunpack.c.h.bf16 %v346
        %v6050 = vunpack.c.l.bf16 %v347
        %v6051 = vunpack.c.h.bf16 %v347
        %v6052 = vunpack.c.l.bf16 %v348
        %v6053 = vunpack.c.h.bf16 %v348
        %v6054 = vunpack.c.l.bf16 %v349
        %v6055 = vunpack.c.h.bf16 %v349
        %v6056 = vunpack.c.l.bf16 %v350
        %v6057 = vunpack.c.h.bf16 %v350
        %v6058 = vunpack.c.l.bf16 %v351
        %v6059 = vunpack.c.h.bf16 %v351
        %v6060 = vunpack.c.l.bf16 %v352
        %v6061 = vunpack.c.h.bf16 %v352
        %v6062 = vunpack.c.l.bf16 %v353
        %v6063 = vunpack.c.h.bf16 %v353
        %v6064 = vunpack.c.l.bf16 %v354
        %v6065 = vunpack.c.h.bf16 %v354
        %v6066 = vunpack.c.l.bf16 %v355
        %v6067 = vunpack.c.h.bf16 %v355
        %v6068 = vunpack.c.l.bf16 %v356
        %v6069 = vunpack.c.h.bf16 %v356
        %v6070 = vunpack.c.l.bf16 %v357
        %v6071 = vunpack.c.h.bf16 %v357
        %v6072 = vunpack.c.l.bf16 %v358
        %v6073 = vunpack.c.h.bf16 %v358
        %v6074 = vunpack.c.l.bf16 %v359
        %v6075 = vunpack.c.h.bf16 %v359
        %v6076 = vunpack.c.l.bf16 %v360
        %v6077 = vunpack.c.h.bf16 %v360
        %v6078 = vunpack.c.l.bf16 %v361
        %v6079 = vunpack.c.h.bf16 %v361
        %v6080 = vunpack.c.l.bf16 %v362
        %v6081 = vunpack.c.h.bf16 %v362
        %v6082 = vunpack.c.l.bf16 %v363
        %v6083 = vunpack.c.h.bf16 %v363
        %v6084 = vunpack.c.l.bf16 %v364
        %v6085 = vunpack.c.h.bf16 %v364
        %v6086 = vunpack.c.l.bf16 %v365
        %v6087 = vunpack.c.h.bf16 %v365
        %v6088 = vunpack.c.l.bf16 %v366
        %v6089 = vunpack.c.h.bf16 %v366
        %v6090 = vunpack.c.l.bf16 %v367
        %v6091 = vunpack.c.h.bf16 %v367
        %v6092 = vunpack.c.l.bf16 %v368
        %v6093 = vunpack.c.h.bf16 %v368
        %v6094 = vunpack.c.l.bf16 %v369
        %v6095 = vunpack.c.h.bf16 %v369
        %v6096 = vunpack.c.l.bf16 %v370
        %v6097 = vunpack.c.h.bf16 %v370
        %v6098 = vunpack.c.l.bf16 %v371
        %v6099 = vunpack.c.h.bf16 %v371
        %v6100 = vunpack.c.l.bf16 %v372
        %v6101 = vunpack.c.h.bf16 %v372
        %v6102 = vunpack.c.l.bf16 %v373
        %v6103 = vunpack.c.h.bf16 %v373
        %v6104 = vunpack.c.l.bf16 %v374
        %v6105 = vunpack.c.h.bf16 %v374
        %v6106 = vunpack.c.l.bf16 %v375
        %v6107 = vunpack.c.h.bf16 %v375
        %v6108 = vunpack.c.l.bf16 %v376
        %v6109 = vunpack.c.h.bf16 %v376
        %v6110 = vunpack.c.l.bf16 %v377
        %v6111 = vunpack.c.h.bf16 %v377
        %v6112 = vunpack.c.l.bf16 %v378
        %v6113 = vunpack.c.h.bf16 %v378
        %v6114 = vunpack.c.l.bf16 %v379
        %v6115 = vunpack.c.h.bf16 %v379
        %v6116 = vunpack.c.l.bf16 %v380
        %v6117 = vunpack.c.h.bf16 %v380
        %v6118 = vunpack.c.l.bf16 %v381
        %v6119 = vunpack.c.h.bf16 %v381
        %v6120 = vunpack.c.l.bf16 %v382
        %v6121 = vunpack.c.h.bf16 %v382
        %v6122 = vunpack.c.l.bf16 %v383
        %v6123 = vunpack.c.h.bf16 %v383
        %v6124 = vunpack.c.l.bf16 %v384
        %v6125 = vunpack.c.h.bf16 %v384
        %v6126 = vunpack.c.l.bf16 %v385
        %v6127 = vunpack.c.h.bf16 %v385
        %v6128 = vunpack.c.l.bf16 %v386
        %v6129 = vunpack.c.h.bf16 %v386
        %v6130 = vunpack.c.l.bf16 %v387
        %v6131 = vunpack.c.h.bf16 %v387
        %v6132 = vunpack.c.l.bf16 %v388
        %v6133 = vunpack.c.h.bf16 %v388
        %v6134 = vunpack.c.l.bf16 %v389
        %v6135 = vunpack.c.h.bf16 %v389
        %v6136 = vunpack.c.l.bf16 %v390
        %v6137 = vunpack.c.h.bf16 %v390
        %v6138 = vunpack.c.l.bf16 %v391
        %v6139 = vunpack.c.h.bf16 %v391
        %v6140 = vunpack.c.l.bf16 %v392
        %v6141 = vunpack.c.h.bf16 %v392
        %v6142 = vunpack.c.l.bf16 %v393
        %v6143 = vunpack.c.h.bf16 %v393
        %v6144 = vunpack.c.l.bf16 %v394
        %v6145 = vunpack.c.h.bf16 %v394
        %v6146 = vunpack.c.l.bf16 %v395
        %v6147 = vunpack.c.h.bf16 %v395
        %v6148 = vunpack.c.l.bf16 %v396
        %v6149 = vunpack.c.h.bf16 %v396
        %v6150 = vunpack.c.l.bf16 %v397
        %v6151 = vunpack.c.h.bf16 %v397
        %v6152 = vunpack.c.l.bf16 %v398
        %v6153 = vunpack.c.h.bf16 %v398
        %v6154 = vunpack.c.l.bf16 %v399
        %v6155 = vunpack.c.h.bf16 %v399
        %v6156 = vunpack.c.l.bf16 %v400
        %v6157 = vunpack.c.h.bf16 %v400
        %v6158 = vunpack.c.l.bf16 %v401
        %v6159 = vunpack.c.h.bf16 %v401
        %v6160 = vunpack.c.l.bf16 %v402
        %v6161 = vunpack.c.h.bf16 %v402
        %v6162 = vunpack.c.l.bf16 %v403
        %v6163 = vunpack.c.h.bf16 %v403
        %v6164 = vunpack.c.l.bf16 %v404
        %v6165 = vunpack.c.h.bf16 %v404
        %v6166 = vunpack.c.l.bf16 %v405
        %v6167 = vunpack.c.h.bf16 %v405
        %v6168 = vunpack.c.l.bf16 %v406
        %v6169 = vunpack.c.h.bf16 %v406
        %v6170 = vunpack.c.l.bf16 %v407
        %v6171 = vunpack.c.h.bf16 %v407
        %v6172 = vunpack.c.l.bf16 %v408
        %v6173 = vunpack.c.h.bf16 %v408
        %v6174 = vunpack.c.l.bf16 %v409
        %v6175 = vunpack.c.h.bf16 %v409
        %v6176 = vunpack.c.l.bf16 %v410
        %v6177 = vunpack.c.h.bf16 %v410
        %v6178 = vunpack.c.l.bf16 %v411
        %v6179 = vunpack.c.h.bf16 %v411
        %v6180 = vadd.f32 %v5253, %v5924
        %v6181 = vadd.f32 %v5255, %v5925
        %v6182 = vadd.f32 %v5606, %v5926
        %v6183 = vadd.f32 %v5608, %v5927
        %v6184 = vadd.f32 %v5257, %v5928
        %v6185 = vadd.f32 %v5259, %v5929
        %v6186 = vadd.f32 %v5610, %v5930
        %v6187 = vadd.f32 %v5612, %v5931
        %v6188 = vadd.f32 %v5263, %v5932
        %v6189 = vadd.f32 %v5265, %v5933
        %v6190 = vadd.f32 %v5616, %v5934
        %v6191 = vadd.f32 %v5618, %v5935
        %v6192 = vadd.f32 %v5267, %v5936
        %v6193 = vadd.f32 %v5269, %v5937
        %v6194 = vadd.f32 %v5620, %v5938
        %v6195 = vadd.f32 %v5622, %v5939
        %v6196 = vadd.f32 %v5273, %v5940
        %v6197 = vadd.f32 %v5275, %v5941
        %v6198 = vadd.f32 %v5626, %v5942
        %v6199 = vadd.f32 %v5628, %v5943
        %v6200 = vadd.f32 %v5277, %v5944
        %v6201 = vadd.f32 %v5279, %v5945
        %v6202 = vadd.f32 %v5630, %v5946
        %v6203 = vadd.f32 %v5632, %v5947
        %v6204 = vadd.f32 %v5283, %v5948
        %v6205 = vadd.f32 %v5285, %v5949
        %v6206 = vadd.f32 %v5636, %v5950
        %v6207 = vadd.f32 %v5638, %v5951
        %v6208 = vadd.f32 %v5287, %v5952
        %v6209 = vadd.f32 %v5289, %v5953
        %v6210 = vadd.f32 %v5640, %v5954
        %v6211 = vadd.f32 %v5642, %v5955
        %v6212 = vadd.f32 %v5293, %v5956
        %v6213 = vadd.f32 %v5295, %v5957
        %v6214 = vadd.f32 %v5646, %v5958
        %v6215 = vadd.f32 %v5648, %v5959
        %v6216 = vadd.f32 %v5297, %v5960
        %v6217 = vadd.f32 %v5299, %v5961
        %v6218 = vadd.f32 %v5650, %v5962
        %v6219 = vadd.f32 %v5652, %v5963
        %v6220 = vadd.f32 %v5303, %v5964
        %v6221 = vadd.f32 %v5305, %v5965
        %v6222 = vadd.f32 %v5656, %v5966
        %v6223 = vadd.f32 %v5658, %v5967
        %v6224 = vadd.f32 %v5307, %v5968
        %v6225 = vadd.f32 %v5309, %v5969
        %v6226 = vadd.f32 %v5660, %v5970
        %v6227 = vadd.f32 %v5662, %v5971
        %v6228 = vadd.f32 %v5313, %v5972
        %v6229 = vadd.f32 %v5315, %v5973
        %v6230 = vadd.f32 %v5666, %v5974
        %v6231 = vadd.f32 %v5668, %v5975
        %v6232 = vadd.f32 %v5317, %v5976
        %v6233 = vadd.f32 %v5319, %v5977
        %v6234 = vadd.f32 %v5670, %v5978
        %v6235 = vadd.f32 %v5672, %v5979
        %v6236 = vadd.f32 %v5323, %v5980
        %v6237 = vadd.f32 %v5325, %v5981
        %v6238 = vadd.f32 %v5676, %v5982
        %v6239 = vadd.f32 %v5678, %v5983
        %v6240 = vadd.f32 %v5327, %v5984
        %v6241 = vadd.f32 %v5329, %v5985
        %v6242 = vadd.f32 %v5680, %v5986
        %v6243 = vadd.f32 %v5682, %v5987
        %v6244 = vadd.f32 %v5333, %v5988
        %v6245 = vadd.f32 %v5335, %v5989
        %v6246 = vadd.f32 %v5686, %v5990
        %v6247 = vadd.f32 %v5688, %v5991
        %v6248 = vadd.f32 %v5337, %v5992
        %v6249 = vadd.f32 %v5339, %v5993
        %v6250 = vadd.f32 %v5690, %v5994
        %v6251 = vadd.f32 %v5692, %v5995
        %v6252 = vadd.f32 %v5343, %v5996
        %v6253 = vadd.f32 %v5345, %v5997
        %v6254 = vadd.f32 %v5696, %v5998
        %v6255 = vadd.f32 %v5698, %v5999
        %v6256 = vadd.f32 %v5347, %v6000
        %v6257 = vadd.f32 %v5349, %v6001
        %v6258 = vadd.f32 %v5700, %v6002
        %v6259 = vadd.f32 %v5702, %v6003
        %v6260 = vadd.f32 %v5353, %v6004
        %v6261 = vadd.f32 %v5355, %v6005
        %v6262 = vadd.f32 %v5706, %v6006
        %v6263 = vadd.f32 %v5708, %v6007
        %v6264 = vadd.f32 %v5357, %v6008
        %v6265 = vadd.f32 %v5359, %v6009
        %v6266 = vadd.f32 %v5710, %v6010
        %v6267 = vadd.f32 %v5712, %v6011
        %v6268 = vadd.f32 %v5363, %v6012
        %v6269 = vadd.f32 %v5365, %v6013
        %v6270 = vadd.f32 %v5716, %v6014
        %v6271 = vadd.f32 %v5718, %v6015
        %v6272 = vadd.f32 %v5367, %v6016
        %v6273 = vadd.f32 %v5369, %v6017
        %v6274 = vadd.f32 %v5720, %v6018
        %v6275 = vadd.f32 %v5722, %v6019
        %v6276 = vadd.f32 %v5373, %v6020
        %v6277 = vadd.f32 %v5375, %v6021
        %v6278 = vadd.f32 %v5726, %v6022
        %v6279 = vadd.f32 %v5728, %v6023
        %v6280 = vadd.f32 %v5377, %v6024
        %v6281 = vadd.f32 %v5379, %v6025
        %v6282 = vadd.f32 %v5730, %v6026
        %v6283 = vadd.f32 %v5732, %v6027
        %v6284 = vadd.f32 %v5383, %v6028
        %v6285 = vadd.f32 %v5385, %v6029
        %v6286 = vadd.f32 %v5736, %v6030
        %v6287 = vadd.f32 %v5738, %v6031
        %v6288 = vadd.f32 %v5387, %v6032
        %v6289 = vadd.f32 %v5389, %v6033
        %v6290 = vadd.f32 %v5740, %v6034
        %v6291 = vadd.f32 %v5742, %v6035
        %v6292 = vadd.f32 %v5393, %v6036
        %v6293 = vadd.f32 %v5395, %v6037
        %v6294 = vadd.f32 %v5746, %v6038
        %v6295 = vadd.f32 %v5748, %v6039
        %v6296 = vadd.f32 %v5397, %v6040
        %v6297 = vadd.f32 %v5399, %v6041
        %v6298 = vadd.f32 %v5750, %v6042
        %v6299 = vadd.f32 %v5752, %v6043
        %v6300 = vadd.f32 %v5403, %v6044
        %v6301 = vadd.f32 %v5405, %v6045
        %v6302 = vadd.f32 %v5756, %v6046
        %v6303 = vadd.f32 %v5758, %v6047
        %v6304 = vadd.f32 %v5407, %v6048
        %v6305 = vadd.f32 %v5409, %v6049
        %v6306 = vadd.f32 %v5760, %v6050
        %v6307 = vadd.f32 %v5762, %v6051
        %v6308 = vadd.f32 %v5413, %v6052
        %v6309 = vadd.f32 %v5415, %v6053
        %v6310 = vadd.f32 %v5766, %v6054
        %v6311 = vadd.f32 %v5768, %v6055
        %v6312 = vadd.f32 %v5417, %v6056
        %v6313 = vadd.f32 %v5419, %v6057
        %v6314 = vadd.f32 %v5770, %v6058
        %v6315 = vadd.f32 %v5772, %v6059
        %v6316 = vadd.f32 %v5423, %v6060
        %v6317 = vadd.f32 %v5425, %v6061
        %v6318 = vadd.f32 %v5776, %v6062
        %v6319 = vadd.f32 %v5778, %v6063
        %v6320 = vadd.f32 %v5427, %v6064
        %v6321 = vadd.f32 %v5429, %v6065
        %v6322 = vadd.f32 %v5780, %v6066
        %v6323 = vadd.f32 %v5782, %v6067
        %v6324 = vadd.f32 %v5433, %v6068
        %v6325 = vadd.f32 %v5435, %v6069
        %v6326 = vadd.f32 %v5786, %v6070
        %v6327 = vadd.f32 %v5788, %v6071
        %v6328 = vadd.f32 %v5437, %v6072
        %v6329 = vadd.f32 %v5439, %v6073
        %v6330 = vadd.f32 %v5790, %v6074
        %v6331 = vadd.f32 %v5792, %v6075
        %v6332 = vadd.f32 %v5443, %v6076
        %v6333 = vadd.f32 %v5445, %v6077
        %v6334 = vadd.f32 %v5796, %v6078
        %v6335 = vadd.f32 %v5798, %v6079
        %v6336 = vadd.f32 %v5447, %v6080
        %v6337 = vadd.f32 %v5449, %v6081
        %v6338 = vadd.f32 %v5800, %v6082
        %v6339 = vadd.f32 %v5802, %v6083
        %v6340 = vadd.f32 %v5453, %v6084
        %v6341 = vadd.f32 %v5455, %v6085
        %v6342 = vadd.f32 %v5806, %v6086
        %v6343 = vadd.f32 %v5808, %v6087
        %v6344 = vadd.f32 %v5457, %v6088
        %v6345 = vadd.f32 %v5459, %v6089
        %v6346 = vadd.f32 %v5810, %v6090
        %v6347 = vadd.f32 %v5812, %v6091
        %v6348 = vadd.f32 %v5463, %v6092
        %v6349 = vadd.f32 %v5465, %v6093
        %v6350 = vadd.f32 %v5816, %v6094
        %v6351 = vadd.f32 %v5818, %v6095
        %v6352 = vadd.f32 %v5467, %v6096
        %v6353 = vadd.f32 %v5469, %v6097
        %v6354 = vadd.f32 %v5820, %v6098
        %v6355 = vadd.f32 %v5822, %v6099
        %v6356 = vadd.f32 %v5473, %v6100
        %v6357 = vadd.f32 %v5475, %v6101
        %v6358 = vadd.f32 %v5826, %v6102
        %v6359 = vadd.f32 %v5828, %v6103
        %v6360 = vadd.f32 %v5477, %v6104
        %v6361 = vadd.f32 %v5479, %v6105
        %v6362 = vadd.f32 %v5830, %v6106
        %v6363 = vadd.f32 %v5832, %v6107
        %v6364 = vadd.f32 %v5483, %v6108
        %v6365 = vadd.f32 %v5485, %v6109
        %v6366 = vadd.f32 %v5836, %v6110
        %v6367 = vadd.f32 %v5838, %v6111
        %v6368 = vadd.f32 %v5487, %v6112
        %v6369 = vadd.f32 %v5489, %v6113
        %v6370 = vadd.f32 %v5840, %v6114
        %v6371 = vadd.f32 %v5842, %v6115
        %v6372 = vadd.f32 %v5493, %v6116
        %v6373 = vadd.f32 %v5495, %v6117
        %v6374 = vadd.f32 %v5846, %v6118
        %v6375 = vadd.f32 %v5848, %v6119
        %v6376 = vadd.f32 %v5497, %v6120
        %v6377 = vadd.f32 %v5499, %v6121
        %v6378 = vadd.f32 %v5850, %v6122
        %v6379 = vadd.f32 %v5852, %v6123
        %v6380 = vadd.f32 %v5503, %v6124
        %v6381 = vadd.f32 %v5505, %v6125
        %v6382 = vadd.f32 %v5856, %v6126
        %v6383 = vadd.f32 %v5858, %v6127
        %v6384 = vadd.f32 %v5507, %v6128
        %v6385 = vadd.f32 %v5509, %v6129
        %v6386 = vadd.f32 %v5860, %v6130
        %v6387 = vadd.f32 %v5862, %v6131
        %v6388 = vadd.f32 %v5513, %v6132
        %v6389 = vadd.f32 %v5515, %v6133
        %v6390 = vadd.f32 %v5866, %v6134
        %v6391 = vadd.f32 %v5868, %v6135
        %v6392 = vadd.f32 %v5517, %v6136
        %v6393 = vadd.f32 %v5519, %v6137
        %v6394 = vadd.f32 %v5870, %v6138
        %v6395 = vadd.f32 %v5872, %v6139
        %v6396 = vadd.f32 %v5523, %v6140
        %v6397 = vadd.f32 %v5525, %v6141
        %v6398 = vadd.f32 %v5876, %v6142
        %v6399 = vadd.f32 %v5878, %v6143
        %v6400 = vadd.f32 %v5527, %v6144
        %v6401 = vadd.f32 %v5529, %v6145
        %v6402 = vadd.f32 %v5880, %v6146
        %v6403 = vadd.f32 %v5882, %v6147
        %v6404 = vadd.f32 %v5533, %v6148
        %v6405 = vadd.f32 %v5535, %v6149
        %v6406 = vadd.f32 %v5886, %v6150
        %v6407 = vadd.f32 %v5888, %v6151
        %v6408 = vadd.f32 %v5537, %v6152
        %v6409 = vadd.f32 %v5539, %v6153
        %v6410 = vadd.f32 %v5890, %v6154
        %v6411 = vadd.f32 %v5892, %v6155
        %v6412 = vadd.f32 %v5543, %v6156
        %v6413 = vadd.f32 %v5545, %v6157
        %v6414 = vadd.f32 %v5896, %v6158
        %v6415 = vadd.f32 %v5898, %v6159
        %v6416 = vadd.f32 %v5547, %v6160
        %v6417 = vadd.f32 %v5549, %v6161
        %v6418 = vadd.f32 %v5900, %v6162
        %v6419 = vadd.f32 %v5902, %v6163
        %v6420 = vadd.f32 %v5553, %v6164
        %v6421 = vadd.f32 %v5555, %v6165
        %v6422 = vadd.f32 %v5906, %v6166
        %v6423 = vadd.f32 %v5908, %v6167
        %v6424 = vadd.f32 %v5557, %v6168
        %v6425 = vadd.f32 %v5559, %v6169
        %v6426 = vadd.f32 %v5910, %v6170
        %v6427 = vadd.f32 %v5912, %v6171
        %v6428 = vadd.f32 %v5563, %v6172
        %v6429 = vadd.f32 %v5565, %v6173
        %v6430 = vadd.f32 %v5916, %v6174
        %v6431 = vadd.f32 %v5918, %v6175
        %v6432 = vadd.f32 %v5567, %v6176
        %v6433 = vadd.f32 %v5569, %v6177
        %v6434 = vadd.f32 %v5920, %v6178
        %v6435 = vadd.f32 %v5922, %v6179
        %v6436 = vmax.f32 %v6180, 0.0
        %v6437 = vmax.f32 %v6181, 0.0
        %v6438 = vmax.f32 %v6182, 0.0
        %v6439 = vmax.f32 %v6183, 0.0
        %v6440 = vmax.f32 %v6184, 0.0
        %v6441 = vmax.f32 %v6185, 0.0
        %v6442 = vmax.f32 %v6186, 0.0
        %v6443 = vmax.f32 %v6187, 0.0
        %v6444 = vmax.f32 %v6188, 0.0
        %v6445 = vmax.f32 %v6189, 0.0
        %v6446 = vmax.f32 %v6190, 0.0
        %v6447 = vmax.f32 %v6191, 0.0
        %v6448 = vmax.f32 %v6192, 0.0
        %v6449 = vmax.f32 %v6193, 0.0
        %v6450 = vmax.f32 %v6194, 0.0
        %v6451 = vmax.f32 %v6195, 0.0
        %v6452 = vmax.f32 %v6196, 0.0
        %v6453 = vmax.f32 %v6197, 0.0
        %v6454 = vmax.f32 %v6198, 0.0
        %v6455 = vmax.f32 %v6199, 0.0
        %v6456 = vmax.f32 %v6200, 0.0
        %v6457 = vmax.f32 %v6201, 0.0
        %v6458 = vmax.f32 %v6202, 0.0
        %v6459 = vmax.f32 %v6203, 0.0
        %v6460 = vmax.f32 %v6204, 0.0
        %v6461 = vmax.f32 %v6205, 0.0
        %v6462 = vmax.f32 %v6206, 0.0
        %v6463 = vmax.f32 %v6207, 0.0
        %v6464 = vmax.f32 %v6208, 0.0
        %v6465 = vmax.f32 %v6209, 0.0
        %v6466 = vmax.f32 %v6210, 0.0
        %v6467 = vmax.f32 %v6211, 0.0
        %v6468 = vmax.f32 %v6212, 0.0
        %v6469 = vmax.f32 %v6213, 0.0
        %v6470 = vmax.f32 %v6214, 0.0
        %v6471 = vmax.f32 %v6215, 0.0
        %v6472 = vmax.f32 %v6216, 0.0
        %v6473 = vmax.f32 %v6217, 0.0
        %v6474 = vmax.f32 %v6218, 0.0
        %v6475 = vmax.f32 %v6219, 0.0
        %v6476 = vmax.f32 %v6220, 0.0
        %v6477 = vmax.f32 %v6221, 0.0
        %v6478 = vmax.f32 %v6222, 0.0
        %v6479 = vmax.f32 %v6223, 0.0
        %v6480 = vmax.f32 %v6224, 0.0
        %v6481 = vmax.f32 %v6225, 0.0
        %v6482 = vmax.f32 %v6226, 0.0
        %v6483 = vmax.f32 %v6227, 0.0
        %v6484 = vmax.f32 %v6228, 0.0
        %v6485 = vmax.f32 %v6229, 0.0
        %v6486 = vmax.f32 %v6230, 0.0
        %v6487 = vmax.f32 %v6231, 0.0
        %v6488 = vmax.f32 %v6232, 0.0
        %v6489 = vmax.f32 %v6233, 0.0
        %v6490 = vmax.f32 %v6234, 0.0
        %v6491 = vmax.f32 %v6235, 0.0
        %v6492 = vmax.f32 %v6236, 0.0
        %v6493 = vmax.f32 %v6237, 0.0
        %v6494 = vmax.f32 %v6238, 0.0
        %v6495 = vmax.f32 %v6239, 0.0
        %v6496 = vmax.f32 %v6240, 0.0
        %v6497 = vmax.f32 %v6241, 0.0
        %v6498 = vmax.f32 %v6242, 0.0
        %v6499 = vmax.f32 %v6243, 0.0
        %v6500 = vmax.f32 %v6244, 0.0
        %v6501 = vmax.f32 %v6245, 0.0
        %v6502 = vmax.f32 %v6246, 0.0
        %v6503 = vmax.f32 %v6247, 0.0
        %v6504 = vmax.f32 %v6248, 0.0
        %v6505 = vmax.f32 %v6249, 0.0
        %v6506 = vmax.f32 %v6250, 0.0
        %v6507 = vmax.f32 %v6251, 0.0
        %v6508 = vmax.f32 %v6252, 0.0
        %v6509 = vmax.f32 %v6253, 0.0
        %v6510 = vmax.f32 %v6254, 0.0
        %v6511 = vmax.f32 %v6255, 0.0
        %v6512 = vmax.f32 %v6256, 0.0
        %v6513 = vmax.f32 %v6257, 0.0
        %v6514 = vmax.f32 %v6258, 0.0
        %v6515 = vmax.f32 %v6259, 0.0
        %v6516 = vmax.f32 %v6260, 0.0
        %v6517 = vmax.f32 %v6261, 0.0
        %v6518 = vmax.f32 %v6262, 0.0
        %v6519 = vmax.f32 %v6263, 0.0
        %v6520 = vmax.f32 %v6264, 0.0
        %v6521 = vmax.f32 %v6265, 0.0
        %v6522 = vmax.f32 %v6266, 0.0
        %v6523 = vmax.f32 %v6267, 0.0
        %v6524 = vmax.f32 %v6268, 0.0
        %v6525 = vmax.f32 %v6269, 0.0
        %v6526 = vmax.f32 %v6270, 0.0
        %v6527 = vmax.f32 %v6271, 0.0
        %v6528 = vmax.f32 %v6272, 0.0
        %v6529 = vmax.f32 %v6273, 0.0
        %v6530 = vmax.f32 %v6274, 0.0
        %v6531 = vmax.f32 %v6275, 0.0
        %v6532 = vmax.f32 %v6276, 0.0
        %v6533 = vmax.f32 %v6277, 0.0
        %v6534 = vmax.f32 %v6278, 0.0
        %v6535 = vmax.f32 %v6279, 0.0
        %v6536 = vmax.f32 %v6280, 0.0
        %v6537 = vmax.f32 %v6281, 0.0
        %v6538 = vmax.f32 %v6282, 0.0
        %v6539 = vmax.f32 %v6283, 0.0
        %v6540 = vmax.f32 %v6284, 0.0
        %v6541 = vmax.f32 %v6285, 0.0
        %v6542 = vmax.f32 %v6286, 0.0
        %v6543 = vmax.f32 %v6287, 0.0
        %v6544 = vmax.f32 %v6288, 0.0
        %v6545 = vmax.f32 %v6289, 0.0
        %v6546 = vmax.f32 %v6290, 0.0
        %v6547 = vmax.f32 %v6291, 0.0
        %v6548 = vmax.f32 %v6292, 0.0
        %v6549 = vmax.f32 %v6293, 0.0
        %v6550 = vmax.f32 %v6294, 0.0
        %v6551 = vmax.f32 %v6295, 0.0
        %v6552 = vmax.f32 %v6296, 0.0
        %v6553 = vmax.f32 %v6297, 0.0
        %v6554 = vmax.f32 %v6298, 0.0
        %v6555 = vmax.f32 %v6299, 0.0
        %v6556 = vmax.f32 %v6300, 0.0
        %v6557 = vmax.f32 %v6301, 0.0
        %v6558 = vmax.f32 %v6302, 0.0
        %v6559 = vmax.f32 %v6303, 0.0
        %v6560 = vmax.f32 %v6304, 0.0
        %v6561 = vmax.f32 %v6305, 0.0
        %v6562 = vmax.f32 %v6306, 0.0
        %v6563 = vmax.f32 %v6307, 0.0
        %v6564 = vmax.f32 %v6308, 0.0
        %v6565 = vmax.f32 %v6309, 0.0
        %v6566 = vmax.f32 %v6310, 0.0
        %v6567 = vmax.f32 %v6311, 0.0
        %v6568 = vmax.f32 %v6312, 0.0
        %v6569 = vmax.f32 %v6313, 0.0
        %v6570 = vmax.f32 %v6314, 0.0
        %v6571 = vmax.f32 %v6315, 0.0
        %v6572 = vmax.f32 %v6316, 0.0
        %v6573 = vmax.f32 %v6317, 0.0
        %v6574 = vmax.f32 %v6318, 0.0
        %v6575 = vmax.f32 %v6319, 0.0
        %v6576 = vmax.f32 %v6320, 0.0
        %v6577 = vmax.f32 %v6321, 0.0
        %v6578 = vmax.f32 %v6322, 0.0
        %v6579 = vmax.f32 %v6323, 0.0
        %v6580 = vmax.f32 %v6324, 0.0
        %v6581 = vmax.f32 %v6325, 0.0
        %v6582 = vmax.f32 %v6326, 0.0
        %v6583 = vmax.f32 %v6327, 0.0
        %v6584 = vmax.f32 %v6328, 0.0
        %v6585 = vmax.f32 %v6329, 0.0
        %v6586 = vmax.f32 %v6330, 0.0
        %v6587 = vmax.f32 %v6331, 0.0
        %v6588 = vmax.f32 %v6332, 0.0
        %v6589 = vmax.f32 %v6333, 0.0
        %v6590 = vmax.f32 %v6334, 0.0
        %v6591 = vmax.f32 %v6335, 0.0
        %v6592 = vmax.f32 %v6336, 0.0
        %v6593 = vmax.f32 %v6337, 0.0
        %v6594 = vmax.f32 %v6338, 0.0
        %v6595 = vmax.f32 %v6339, 0.0
        %v6596 = vmax.f32 %v6340, 0.0
        %v6597 = vmax.f32 %v6341, 0.0
        %v6598 = vmax.f32 %v6342, 0.0
        %v6599 = vmax.f32 %v6343, 0.0
        %v6600 = vmax.f32 %v6344, 0.0
        %v6601 = vmax.f32 %v6345, 0.0
        %v6602 = vmax.f32 %v6346, 0.0
        %v6603 = vmax.f32 %v6347, 0.0
        %v6604 = vmax.f32 %v6348, 0.0
        %v6605 = vmax.f32 %v6349, 0.0
        %v6606 = vmax.f32 %v6350, 0.0
        %v6607 = vmax.f32 %v6351, 0.0
        %v6608 = vmax.f32 %v6352, 0.0
        %v6609 = vmax.f32 %v6353, 0.0
        %v6610 = vmax.f32 %v6354, 0.0
        %v6611 = vmax.f32 %v6355, 0.0
        %v6612 = vmax.f32 %v6356, 0.0
        %v6613 = vmax.f32 %v6357, 0.0
        %v6614 = vmax.f32 %v6358, 0.0
        %v6615 = vmax.f32 %v6359, 0.0
        %v6616 = vmax.f32 %v6360, 0.0
        %v6617 = vmax.f32 %v6361, 0.0
        %v6618 = vmax.f32 %v6362, 0.0
        %v6619 = vmax.f32 %v6363, 0.0
        %v6620 = vmax.f32 %v6364, 0.0
        %v6621 = vmax.f32 %v6365, 0.0
        %v6622 = vmax.f32 %v6366, 0.0
        %v6623 = vmax.f32 %v6367, 0.0
        %v6624 = vmax.f32 %v6368, 0.0
        %v6625 = vmax.f32 %v6369, 0.0
        %v6626 = vmax.f32 %v6370, 0.0
        %v6627 = vmax.f32 %v6371, 0.0
        %v6628 = vmax.f32 %v6372, 0.0
        %v6629 = vmax.f32 %v6373, 0.0
        %v6630 = vmax.f32 %v6374, 0.0
        %v6631 = vmax.f32 %v6375, 0.0
        %v6632 = vmax.f32 %v6376, 0.0
        %v6633 = vmax.f32 %v6377, 0.0
        %v6634 = vmax.f32 %v6378, 0.0
        %v6635 = vmax.f32 %v6379, 0.0
        %v6636 = vmax.f32 %v6380, 0.0
        %v6637 = vmax.f32 %v6381, 0.0
        %v6638 = vmax.f32 %v6382, 0.0
        %v6639 = vmax.f32 %v6383, 0.0
        %v6640 = vmax.f32 %v6384, 0.0
        %v6641 = vmax.f32 %v6385, 0.0
        %v6642 = vmax.f32 %v6386, 0.0
        %v6643 = vmax.f32 %v6387, 0.0
        %v6644 = vmax.f32 %v6388, 0.0
        %v6645 = vmax.f32 %v6389, 0.0
        %v6646 = vmax.f32 %v6390, 0.0
        %v6647 = vmax.f32 %v6391, 0.0
        %v6648 = vmax.f32 %v6392, 0.0
        %v6649 = vmax.f32 %v6393, 0.0
        %v6650 = vmax.f32 %v6394, 0.0
        %v6651 = vmax.f32 %v6395, 0.0
        %v6652 = vmax.f32 %v6396, 0.0
        %v6653 = vmax.f32 %v6397, 0.0
        %v6654 = vmax.f32 %v6398, 0.0
        %v6655 = vmax.f32 %v6399, 0.0
        %v6656 = vmax.f32 %v6400, 0.0
        %v6657 = vmax.f32 %v6401, 0.0
        %v6658 = vmax.f32 %v6402, 0.0
        %v6659 = vmax.f32 %v6403, 0.0
        %v6660 = vmax.f32 %v6404, 0.0
        %v6661 = vmax.f32 %v6405, 0.0
        %v6662 = vmax.f32 %v6406, 0.0
        %v6663 = vmax.f32 %v6407, 0.0
        %v6664 = vmax.f32 %v6408, 0.0
        %v6665 = vmax.f32 %v6409, 0.0
        %v6666 = vmax.f32 %v6410, 0.0
        %v6667 = vmax.f32 %v6411, 0.0
        %v6668 = vmax.f32 %v6412, 0.0
        %v6669 = vmax.f32 %v6413, 0.0
        %v6670 = vmax.f32 %v6414, 0.0
        %v6671 = vmax.f32 %v6415, 0.0
        %v6672 = vmax.f32 %v6416, 0.0
        %v6673 = vmax.f32 %v6417, 0.0
        %v6674 = vmax.f32 %v6418, 0.0
        %v6675 = vmax.f32 %v6419, 0.0
        %v6676 = vmax.f32 %v6420, 0.0
        %v6677 = vmax.f32 %v6421, 0.0
        %v6678 = vmax.f32 %v6422, 0.0
        %v6679 = vmax.f32 %v6423, 0.0
        %v6680 = vmax.f32 %v6424, 0.0
        %v6681 = vmax.f32 %v6425, 0.0
        %v6682 = vmax.f32 %v6426, 0.0
        %v6683 = vmax.f32 %v6427, 0.0
        %v6684 = vmax.f32 %v6428, 0.0
        %v6685 = vmax.f32 %v6429, 0.0
        %v6686 = vmax.f32 %v6430, 0.0
        %v6687 = vmax.f32 %v6431, 0.0
        %v6688 = vmax.f32 %v6432, 0.0
        %v6689 = vmax.f32 %v6433, 0.0
        %v6690 = vmax.f32 %v6434, 0.0
        %v6691 = vmax.f32 %v6435, 0.0
        %v6692 = vpack.c.bf16 %v6440, %v6436
        %v6693 = vpack.c.bf16 %v6441, %v6437
        %v6694 = vpack.c.bf16 %v6442, %v6438
        %v6695 = vpack.c.bf16 %v6443, %v6439
        %v6696 = vpack.c.bf16 %v6448, %v6444
        %v6697 = vpack.c.bf16 %v6449, %v6445
        %v6698 = vpack.c.bf16 %v6450, %v6446
        %v6699 = vpack.c.bf16 %v6451, %v6447
        %v6700 = vpack.c.bf16 %v6456, %v6452
        %v6701 = vpack.c.bf16 %v6457, %v6453
        %v6702 = vpack.c.bf16 %v6458, %v6454
        %v6703 = vpack.c.bf16 %v6459, %v6455
        %v6704 = vpack.c.bf16 %v6464, %v6460
        %v6705 = vpack.c.bf16 %v6465, %v6461
        %v6706 = vpack.c.bf16 %v6466, %v6462
        %v6707 = vpack.c.bf16 %v6467, %v6463
        %v6708 = vpack.c.bf16 %v6472, %v6468
        %v6709 = vpack.c.bf16 %v6473, %v6469
        %v6710 = vpack.c.bf16 %v6474, %v6470
        %v6711 = vpack.c.bf16 %v6475, %v6471
        %v6712 = vpack.c.bf16 %v6480, %v6476
        %v6713 = vpack.c.bf16 %v6481, %v6477
        %v6714 = vpack.c.bf16 %v6482, %v6478
        %v6715 = vpack.c.bf16 %v6483, %v6479
        %v6716 = vpack.c.bf16 %v6488, %v6484
        %v6717 = vpack.c.bf16 %v6489, %v6485
        %v6718 = vpack.c.bf16 %v6490, %v6486
        %v6719 = vpack.c.bf16 %v6491, %v6487
        %v6720 = vpack.c.bf16 %v6496, %v6492
        %v6721 = vpack.c.bf16 %v6497, %v6493
        %v6722 = vpack.c.bf16 %v6498, %v6494
        %v6723 = vpack.c.bf16 %v6499, %v6495
        %v6724 = vpack.c.bf16 %v6504, %v6500
        %v6725 = vpack.c.bf16 %v6505, %v6501
        %v6726 = vpack.c.bf16 %v6506, %v6502
        %v6727 = vpack.c.bf16 %v6507, %v6503
        %v6728 = vpack.c.bf16 %v6512, %v6508
        %v6729 = vpack.c.bf16 %v6513, %v6509
        %v6730 = vpack.c.bf16 %v6514, %v6510
        %v6731 = vpack.c.bf16 %v6515, %v6511
        %v6732 = vpack.c.bf16 %v6520, %v6516
        %v6733 = vpack.c.bf16 %v6521, %v6517
        %v6734 = vpack.c.bf16 %v6522, %v6518
        %v6735 = vpack.c.bf16 %v6523, %v6519
        %v6736 = vpack.c.bf16 %v6528, %v6524
        %v6737 = vpack.c.bf16 %v6529, %v6525
        %v6738 = vpack.c.bf16 %v6530, %v6526
        %v6739 = vpack.c.bf16 %v6531, %v6527
        %v6740 = vpack.c.bf16 %v6536, %v6532
        %v6741 = vpack.c.bf16 %v6537, %v6533
        %v6742 = vpack.c.bf16 %v6538, %v6534
        %v6743 = vpack.c.bf16 %v6539, %v6535
        %v6744 = vpack.c.bf16 %v6544, %v6540
        %v6745 = vpack.c.bf16 %v6545, %v6541
        %v6746 = vpack.c.bf16 %v6546, %v6542
        %v6747 = vpack.c.bf16 %v6547, %v6543
        %v6748 = vpack.c.bf16 %v6552, %v6548
        %v6749 = vpack.c.bf16 %v6553, %v6549
        %v6750 = vpack.c.bf16 %v6554, %v6550
        %v6751 = vpack.c.bf16 %v6555, %v6551
        %v6752 = vpack.c.bf16 %v6560, %v6556
        %v6753 = vpack.c.bf16 %v6561, %v6557
        %v6754 = vpack.c.bf16 %v6562, %v6558
        %v6755 = vpack.c.bf16 %v6563, %v6559
        %v6756 = vpack.c.bf16 %v6568, %v6564
        %v6757 = vpack.c.bf16 %v6569, %v6565
        %v6758 = vpack.c.bf16 %v6570, %v6566
        %v6759 = vpack.c.bf16 %v6571, %v6567
        %v6760 = vpack.c.bf16 %v6576, %v6572
        %v6761 = vpack.c.bf16 %v6577, %v6573
        %v6762 = vpack.c.bf16 %v6578, %v6574
        %v6763 = vpack.c.bf16 %v6579, %v6575
        %v6764 = vpack.c.bf16 %v6584, %v6580
        %v6765 = vpack.c.bf16 %v6585, %v6581
        %v6766 = vpack.c.bf16 %v6586, %v6582
        %v6767 = vpack.c.bf16 %v6587, %v6583
        %v6768 = vpack.c.bf16 %v6592, %v6588
        %v6769 = vpack.c.bf16 %v6593, %v6589
        %v6770 = vpack.c.bf16 %v6594, %v6590
        %v6771 = vpack.c.bf16 %v6595, %v6591
        %v6772 = vpack.c.bf16 %v6600, %v6596
        %v6773 = vpack.c.bf16 %v6601, %v6597
        %v6774 = vpack.c.bf16 %v6602, %v6598
        %v6775 = vpack.c.bf16 %v6603, %v6599
        %v6776 = vpack.c.bf16 %v6608, %v6604
        %v6777 = vpack.c.bf16 %v6609, %v6605
        %v6778 = vpack.c.bf16 %v6610, %v6606
        %v6779 = vpack.c.bf16 %v6611, %v6607
        %v6780 = vpack.c.bf16 %v6616, %v6612
        %v6781 = vpack.c.bf16 %v6617, %v6613
        %v6782 = vpack.c.bf16 %v6618, %v6614
        %v6783 = vpack.c.bf16 %v6619, %v6615
        %v6784 = vpack.c.bf16 %v6624, %v6620
        %v6785 = vpack.c.bf16 %v6625, %v6621
        %v6786 = vpack.c.bf16 %v6626, %v6622
        %v6787 = vpack.c.bf16 %v6627, %v6623
        %v6788 = vpack.c.bf16 %v6632, %v6628
        %v6789 = vpack.c.bf16 %v6633, %v6629
        %v6790 = vpack.c.bf16 %v6634, %v6630
        %v6791 = vpack.c.bf16 %v6635, %v6631
        %v6792 = vpack.c.bf16 %v6640, %v6636
        %v6793 = vpack.c.bf16 %v6641, %v6637
        %v6794 = vpack.c.bf16 %v6642, %v6638
        %v6795 = vpack.c.bf16 %v6643, %v6639
        %v6796 = vpack.c.bf16 %v6648, %v6644
        %v6797 = vpack.c.bf16 %v6649, %v6645
        %v6798 = vpack.c.bf16 %v6650, %v6646
        %v6799 = vpack.c.bf16 %v6651, %v6647
        %v6800 = vpack.c.bf16 %v6656, %v6652
        %v6801 = vpack.c.bf16 %v6657, %v6653
        %v6802 = vpack.c.bf16 %v6658, %v6654
        %v6803 = vpack.c.bf16 %v6659, %v6655
        %v6804 = vpack.c.bf16 %v6664, %v6660
        %v6805 = vpack.c.bf16 %v6665, %v6661
        %v6806 = vpack.c.bf16 %v6666, %v6662
        %v6807 = vpack.c.bf16 %v6667, %v6663
        %v6808 = vpack.c.bf16 %v6672, %v6668
        %v6809 = vpack.c.bf16 %v6673, %v6669
        %v6810 = vpack.c.bf16 %v6674, %v6670
        %v6811 = vpack.c.bf16 %v6675, %v6671
        %v6812 = vpack.c.bf16 %v6680, %v6676
        %v6813 = vpack.c.bf16 %v6681, %v6677
        %v6814 = vpack.c.bf16 %v6682, %v6678
        %v6815 = vpack.c.bf16 %v6683, %v6679
        %v6816 = vpack.c.bf16 %v6688, %v6684
        %v6817 = vpack.c.bf16 %v6689, %v6685
        %v6818 = vpack.c.bf16 %v6690, %v6686
        %v6819 = vpack.c.bf16 %v6691, %v6687
        %v6948 = vunpack.c.l.b16 %v6692
        %v6949 = vunpack.c.l.b16 %v6693
        %v6950 = vunpack.c.l.b16 %v6694
        %v6951 = vunpack.c.l.b16 %v6695
        %v6952 = vunpack.c.h.b16 %v6692
        %v6953 = vunpack.c.h.b16 %v6693
        %v6954 = vunpack.c.h.b16 %v6694
        %v6955 = vunpack.c.h.b16 %v6695
        %v6956 = vunpack.c.l.b16 %v6696
        %v6957 = vunpack.c.l.b16 %v6697
        %v6958 = vunpack.c.l.b16 %v6698
        %v6959 = vunpack.c.l.b16 %v6699
        %v6960 = vunpack.c.h.b16 %v6696
        %v6961 = vunpack.c.h.b16 %v6697
        %v6962 = vunpack.c.h.b16 %v6698
        %v6963 = vunpack.c.h.b16 %v6699
        %v6964 = vunpack.c.l.b16 %v6700
        %v6965 = vunpack.c.l.b16 %v6701
        %v6966 = vunpack.c.l.b16 %v6702
        %v6967 = vunpack.c.l.b16 %v6703
        %v6968 = vunpack.c.h.b16 %v6700
        %v6969 = vunpack.c.h.b16 %v6701
        %v6970 = vunpack.c.h.b16 %v6702
        %v6971 = vunpack.c.h.b16 %v6703
        %v6972 = vunpack.c.l.b16 %v6704
        %v6973 = vunpack.c.l.b16 %v6705
        %v6974 = vunpack.c.l.b16 %v6706
        %v6975 = vunpack.c.l.b16 %v6707
        %v6976 = vunpack.c.h.b16 %v6704
        %v6977 = vunpack.c.h.b16 %v6705
        %v6978 = vunpack.c.h.b16 %v6706
        %v6979 = vunpack.c.h.b16 %v6707
        %v6980 = vunpack.c.l.b16 %v6708
        %v6981 = vunpack.c.l.b16 %v6709
        %v6982 = vunpack.c.l.b16 %v6710
        %v6983 = vunpack.c.l.b16 %v6711
        %v6984 = vunpack.c.h.b16 %v6708
        %v6985 = vunpack.c.h.b16 %v6709
        %v6986 = vunpack.c.h.b16 %v6710
        %v6987 = vunpack.c.h.b16 %v6711
        %v6988 = vunpack.c.l.b16 %v6712
        %v6989 = vunpack.c.l.b16 %v6713
        %v6990 = vunpack.c.l.b16 %v6714
        %v6991 = vunpack.c.l.b16 %v6715
        %v6992 = vunpack.c.h.b16 %v6712
        %v6993 = vunpack.c.h.b16 %v6713
        %v6994 = vunpack.c.h.b16 %v6714
        %v6995 = vunpack.c.h.b16 %v6715
        %v6996 = vunpack.c.l.b16 %v6716
        %v6997 = vunpack.c.l.b16 %v6717
        %v6998 = vunpack.c.l.b16 %v6718
        %v6999 = vunpack.c.l.b16 %v6719
        %v7000 = vunpack.c.h.b16 %v6716
        %v7001 = vunpack.c.h.b16 %v6717
        %v7002 = vunpack.c.h.b16 %v6718
        %v7003 = vunpack.c.h.b16 %v6719
        %v7004 = vunpack.c.l.b16 %v6720
        %v7005 = vunpack.c.l.b16 %v6721
        %v7006 = vunpack.c.l.b16 %v6722
        %v7007 = vunpack.c.l.b16 %v6723
        %v7008 = vunpack.c.h.b16 %v6720
        %v7009 = vunpack.c.h.b16 %v6721
        %v7010 = vunpack.c.h.b16 %v6722
        %v7011 = vunpack.c.h.b16 %v6723
        %v7012 = vunpack.c.l.b16 %v6724
        %v7013 = vunpack.c.l.b16 %v6725
        %v7014 = vunpack.c.l.b16 %v6726
        %v7015 = vunpack.c.l.b16 %v6727
        %v7016 = vunpack.c.h.b16 %v6724
        %v7017 = vunpack.c.h.b16 %v6725
        %v7018 = vunpack.c.h.b16 %v6726
        %v7019 = vunpack.c.h.b16 %v6727
        %v7020 = vunpack.c.l.b16 %v6728
        %v7021 = vunpack.c.l.b16 %v6729
        %v7022 = vunpack.c.l.b16 %v6730
        %v7023 = vunpack.c.l.b16 %v6731
        %v7024 = vunpack.c.h.b16 %v6728
        %v7025 = vunpack.c.h.b16 %v6729
        %v7026 = vunpack.c.h.b16 %v6730
        %v7027 = vunpack.c.h.b16 %v6731
        %v7028 = vunpack.c.l.b16 %v6732
        %v7029 = vunpack.c.l.b16 %v6733
        %v7030 = vunpack.c.l.b16 %v6734
        %v7031 = vunpack.c.l.b16 %v6735
        %v7032 = vunpack.c.h.b16 %v6732
        %v7033 = vunpack.c.h.b16 %v6733
        %v7034 = vunpack.c.h.b16 %v6734
        %v7035 = vunpack.c.h.b16 %v6735
        %v7036 = vunpack.c.l.b16 %v6736
        %v7037 = vunpack.c.l.b16 %v6737
        %v7038 = vunpack.c.l.b16 %v6738
        %v7039 = vunpack.c.l.b16 %v6739
        %v7040 = vunpack.c.h.b16 %v6736
        %v7041 = vunpack.c.h.b16 %v6737
        %v7042 = vunpack.c.h.b16 %v6738
        %v7043 = vunpack.c.h.b16 %v6739
        %v7044 = vunpack.c.l.b16 %v6740
        %v7045 = vunpack.c.l.b16 %v6741
        %v7046 = vunpack.c.l.b16 %v6742
        %v7047 = vunpack.c.l.b16 %v6743
        %v7048 = vunpack.c.h.b16 %v6740
        %v7049 = vunpack.c.h.b16 %v6741
        %v7050 = vunpack.c.h.b16 %v6742
        %v7051 = vunpack.c.h.b16 %v6743
        %v7052 = vunpack.c.l.b16 %v6744
        %v7053 = vunpack.c.l.b16 %v6745
        %v7054 = vunpack.c.l.b16 %v6746
        %v7055 = vunpack.c.l.b16 %v6747
        %v7056 = vunpack.c.h.b16 %v6744
        %v7057 = vunpack.c.h.b16 %v6745
        %v7058 = vunpack.c.h.b16 %v6746
        %v7059 = vunpack.c.h.b16 %v6747
        %v7060 = vunpack.c.l.b16 %v6748
        %v7061 = vunpack.c.l.b16 %v6749
        %v7062 = vunpack.c.l.b16 %v6750
        %v7063 = vunpack.c.l.b16 %v6751
        %v7064 = vunpack.c.h.b16 %v6748
        %v7065 = vunpack.c.h.b16 %v6749
        %v7066 = vunpack.c.h.b16 %v6750
        %v7067 = vunpack.c.h.b16 %v6751
        %v7068 = vunpack.c.l.b16 %v6752
        %v7069 = vunpack.c.l.b16 %v6753
        %v7070 = vunpack.c.l.b16 %v6754
        %v7071 = vunpack.c.l.b16 %v6755
        %v7072 = vunpack.c.h.b16 %v6752
        %v7073 = vunpack.c.h.b16 %v6753
        %v7074 = vunpack.c.h.b16 %v6754
        %v7075 = vunpack.c.h.b16 %v6755
        %v7076 = vunpack.c.l.b16 %v6756
        %v7077 = vunpack.c.l.b16 %v6757
        %v7078 = vunpack.c.l.b16 %v6758
        %v7079 = vunpack.c.l.b16 %v6759
        %v7080 = vunpack.c.h.b16 %v6756
        %v7081 = vunpack.c.h.b16 %v6757
        %v7082 = vunpack.c.h.b16 %v6758
        %v7083 = vunpack.c.h.b16 %v6759
        %v7084 = vunpack.c.l.b16 %v6760
        %v7085 = vunpack.c.l.b16 %v6761
        %v7086 = vunpack.c.l.b16 %v6762
        %v7087 = vunpack.c.l.b16 %v6763
        %v7088 = vunpack.c.h.b16 %v6760
        %v7089 = vunpack.c.h.b16 %v6761
        %v7090 = vunpack.c.h.b16 %v6762
        %v7091 = vunpack.c.h.b16 %v6763
        %v7092 = vunpack.c.l.b16 %v6764
        %v7093 = vunpack.c.l.b16 %v6765
        %v7094 = vunpack.c.l.b16 %v6766
        %v7095 = vunpack.c.l.b16 %v6767
        %v7096 = vunpack.c.h.b16 %v6764
        %v7097 = vunpack.c.h.b16 %v6765
        %v7098 = vunpack.c.h.b16 %v6766
        %v7099 = vunpack.c.h.b16 %v6767
        %v7100 = vunpack.c.l.b16 %v6768
        %v7101 = vunpack.c.l.b16 %v6769
        %v7102 = vunpack.c.l.b16 %v6770
        %v7103 = vunpack.c.l.b16 %v6771
        %v7104 = vunpack.c.h.b16 %v6768
        %v7105 = vunpack.c.h.b16 %v6769
        %v7106 = vunpack.c.h.b16 %v6770
        %v7107 = vunpack.c.h.b16 %v6771
        %v7108 = vunpack.c.l.b16 %v6772
        %v7109 = vunpack.c.l.b16 %v6773
        %v7110 = vunpack.c.l.b16 %v6774
        %v7111 = vunpack.c.l.b16 %v6775
        %v7112 = vunpack.c.h.b16 %v6772
        %v7113 = vunpack.c.h.b16 %v6773
        %v7114 = vunpack.c.h.b16 %v6774
        %v7115 = vunpack.c.h.b16 %v6775
        %v7116 = vunpack.c.l.b16 %v6776
        %v7117 = vunpack.c.l.b16 %v6777
        %v7118 = vunpack.c.l.b16 %v6778
        %v7119 = vunpack.c.l.b16 %v6779
        %v7120 = vunpack.c.h.b16 %v6776
        %v7121 = vunpack.c.h.b16 %v6777
        %v7122 = vunpack.c.h.b16 %v6778
        %v7123 = vunpack.c.h.b16 %v6779
        %v7124 = vunpack.c.l.b16 %v6780
        %v7125 = vunpack.c.l.b16 %v6781
        %v7126 = vunpack.c.l.b16 %v6782
        %v7127 = vunpack.c.l.b16 %v6783
        %v7128 = vunpack.c.h.b16 %v6780
        %v7129 = vunpack.c.h.b16 %v6781
        %v7130 = vunpack.c.h.b16 %v6782
        %v7131 = vunpack.c.h.b16 %v6783
        %v7132 = vunpack.c.l.b16 %v6784
        %v7133 = vunpack.c.l.b16 %v6785
        %v7134 = vunpack.c.l.b16 %v6786
        %v7135 = vunpack.c.l.b16 %v6787
        %v7136 = vunpack.c.h.b16 %v6784
        %v7137 = vunpack.c.h.b16 %v6785
        %v7138 = vunpack.c.h.b16 %v6786
        %v7139 = vunpack.c.h.b16 %v6787
        %v7140 = vunpack.c.l.b16 %v6788
        %v7141 = vunpack.c.l.b16 %v6789
        %v7142 = vunpack.c.l.b16 %v6790
        %v7143 = vunpack.c.l.b16 %v6791
        %v7144 = vunpack.c.h.b16 %v6788
        %v7145 = vunpack.c.h.b16 %v6789
        %v7146 = vunpack.c.h.b16 %v6790
        %v7147 = vunpack.c.h.b16 %v6791
        %v7148 = vunpack.c.l.b16 %v6792
        %v7149 = vunpack.c.l.b16 %v6793
        %v7150 = vunpack.c.l.b16 %v6794
        %v7151 = vunpack.c.l.b16 %v6795
        %v7152 = vunpack.c.h.b16 %v6792
        %v7153 = vunpack.c.h.b16 %v6793
        %v7154 = vunpack.c.h.b16 %v6794
        %v7155 = vunpack.c.h.b16 %v6795
        %v7156 = vunpack.c.l.b16 %v6796
        %v7157 = vunpack.c.l.b16 %v6797
        %v7158 = vunpack.c.l.b16 %v6798
        %v7159 = vunpack.c.l.b16 %v6799
        %v7160 = vunpack.c.h.b16 %v6796
        %v7161 = vunpack.c.h.b16 %v6797
        %v7162 = vunpack.c.h.b16 %v6798
        %v7163 = vunpack.c.h.b16 %v6799
        %v7164 = vunpack.c.l.b16 %v6800
        %v7165 = vunpack.c.l.b16 %v6801
        %v7166 = vunpack.c.l.b16 %v6802
        %v7167 = vunpack.c.l.b16 %v6803
        %v7168 = vunpack.c.h.b16 %v6800
        %v7169 = vunpack.c.h.b16 %v6801
        %v7170 = vunpack.c.h.b16 %v6802
        %v7171 = vunpack.c.h.b16 %v6803
        %v7172 = vunpack.c.l.b16 %v6804
        %v7173 = vunpack.c.l.b16 %v6805
        %v7174 = vunpack.c.l.b16 %v6806
        %v7175 = vunpack.c.l.b16 %v6807
        %v7176 = vunpack.c.h.b16 %v6804
        %v7177 = vunpack.c.h.b16 %v6805
        %v7178 = vunpack.c.h.b16 %v6806
        %v7179 = vunpack.c.h.b16 %v6807
        %v7180 = vunpack.c.l.b16 %v6808
        %v7181 = vunpack.c.l.b16 %v6809
        %v7182 = vunpack.c.l.b16 %v6810
        %v7183 = vunpack.c.l.b16 %v6811
        %v7184 = vunpack.c.h.b16 %v6808
        %v7185 = vunpack.c.h.b16 %v6809
        %v7186 = vunpack.c.h.b16 %v6810
        %v7187 = vunpack.c.h.b16 %v6811
        %v7188 = vunpack.c.l.b16 %v6812
        %v7189 = vunpack.c.l.b16 %v6813
        %v7190 = vunpack.c.l.b16 %v6814
        %v7191 = vunpack.c.l.b16 %v6815
        %v7192 = vunpack.c.h.b16 %v6812
        %v7193 = vunpack.c.h.b16 %v6813
        %v7194 = vunpack.c.h.b16 %v6814
        %v7195 = vunpack.c.h.b16 %v6815
        %v7196 = vunpack.c.l.b16 %v6816
        %v7197 = vunpack.c.l.b16 %v6817
        %v7198 = vunpack.c.l.b16 %v6818
        %v7199 = vunpack.c.l.b16 %v6819
        %v7200 = vunpack.c.h.b16 %v6816
        %v7201 = vunpack.c.h.b16 %v6817
        %v7202 = vunpack.c.h.b16 %v6818
        %v7203 = vunpack.c.h.b16 %v6819
        %v7204 = vpack.c.b16 %v6949, %v6948
        %v7205 = vpack.c.b16 %v6951, %v6950
        %v7206 = vpack.c.b16 %v6953, %v6952
        %v7207 = vpack.c.b16 %v6955, %v6954
        %v7208 = vpack.c.b16 %v6957, %v6956
        %v7209 = vpack.c.b16 %v6959, %v6958
        %v7210 = vpack.c.b16 %v6961, %v6960
        %v7211 = vpack.c.b16 %v6963, %v6962
        %v7212 = vpack.c.b16 %v6965, %v6964
        %v7213 = vpack.c.b16 %v6967, %v6966
        %v7214 = vpack.c.b16 %v6969, %v6968
        %v7215 = vpack.c.b16 %v6971, %v6970
        %v7216 = vpack.c.b16 %v6973, %v6972
        %v7217 = vpack.c.b16 %v6975, %v6974
        %v7218 = vpack.c.b16 %v6977, %v6976
        %v7219 = vpack.c.b16 %v6979, %v6978
        %v7220 = vpack.c.b16 %v6981, %v6980
        %v7221 = vpack.c.b16 %v6983, %v6982
        %v7222 = vpack.c.b16 %v6985, %v6984
        %v7223 = vpack.c.b16 %v6987, %v6986
        %v7224 = vpack.c.b16 %v6989, %v6988
        %v7225 = vpack.c.b16 %v6991, %v6990
        %v7226 = vpack.c.b16 %v6993, %v6992
        %v7227 = vpack.c.b16 %v6995, %v6994
        %v7228 = vpack.c.b16 %v6997, %v6996
        %v7229 = vpack.c.b16 %v6999, %v6998
        %v7230 = vpack.c.b16 %v7001, %v7000
        %v7231 = vpack.c.b16 %v7003, %v7002
        %v7232 = vpack.c.b16 %v7005, %v7004
        %v7233 = vpack.c.b16 %v7007, %v7006
        %v7234 = vpack.c.b16 %v7009, %v7008
        %v7235 = vpack.c.b16 %v7011, %v7010
        %v7236 = vpack.c.b16 %v7013, %v7012
        %v7237 = vpack.c.b16 %v7015, %v7014
        %v7238 = vpack.c.b16 %v7017, %v7016
        %v7239 = vpack.c.b16 %v7019, %v7018
        %v7240 = vpack.c.b16 %v7021, %v7020
        %v7241 = vpack.c.b16 %v7023, %v7022
        %v7242 = vpack.c.b16 %v7025, %v7024
        %v7243 = vpack.c.b16 %v7027, %v7026
        %v7244 = vpack.c.b16 %v7029, %v7028
        %v7245 = vpack.c.b16 %v7031, %v7030
        %v7246 = vpack.c.b16 %v7033, %v7032
        %v7247 = vpack.c.b16 %v7035, %v7034
        %v7248 = vpack.c.b16 %v7037, %v7036
        %v7249 = vpack.c.b16 %v7039, %v7038
        %v7250 = vpack.c.b16 %v7041, %v7040
        %v7251 = vpack.c.b16 %v7043, %v7042
        %v7252 = vpack.c.b16 %v7045, %v7044
        %v7253 = vpack.c.b16 %v7047, %v7046
        %v7254 = vpack.c.b16 %v7049, %v7048
        %v7255 = vpack.c.b16 %v7051, %v7050
        %v7256 = vpack.c.b16 %v7053, %v7052
        %v7257 = vpack.c.b16 %v7055, %v7054
        %v7258 = vpack.c.b16 %v7057, %v7056
        %v7259 = vpack.c.b16 %v7059, %v7058
        %v7260 = vpack.c.b16 %v7061, %v7060
        %v7261 = vpack.c.b16 %v7063, %v7062
        %v7262 = vpack.c.b16 %v7065, %v7064
        %v7263 = vpack.c.b16 %v7067, %v7066
        %v7264 = vpack.c.b16 %v7069, %v7068
        %v7265 = vpack.c.b16 %v7071, %v7070
        %v7266 = vpack.c.b16 %v7073, %v7072
        %v7267 = vpack.c.b16 %v7075, %v7074
        %v7268 = vpack.c.b16 %v7077, %v7076
        %v7269 = vpack.c.b16 %v7079, %v7078
        %v7270 = vpack.c.b16 %v7081, %v7080
        %v7271 = vpack.c.b16 %v7083, %v7082
        %v7272 = vpack.c.b16 %v7085, %v7084
        %v7273 = vpack.c.b16 %v7087, %v7086
        %v7274 = vpack.c.b16 %v7089, %v7088
        %v7275 = vpack.c.b16 %v7091, %v7090
        %v7276 = vpack.c.b16 %v7093, %v7092
        %v7277 = vpack.c.b16 %v7095, %v7094
        %v7278 = vpack.c.b16 %v7097, %v7096
        %v7279 = vpack.c.b16 %v7099, %v7098
        %v7280 = vpack.c.b16 %v7101, %v7100
        %v7281 = vpack.c.b16 %v7103, %v7102
        %v7282 = vpack.c.b16 %v7105, %v7104
        %v7283 = vpack.c.b16 %v7107, %v7106
        %v7284 = vpack.c.b16 %v7109, %v7108
        %v7285 = vpack.c.b16 %v7111, %v7110
        %v7286 = vpack.c.b16 %v7113, %v7112
        %v7287 = vpack.c.b16 %v7115, %v7114
        %v7288 = vpack.c.b16 %v7117, %v7116
        %v7289 = vpack.c.b16 %v7119, %v7118
        %v7290 = vpack.c.b16 %v7121, %v7120
        %v7291 = vpack.c.b16 %v7123, %v7122
        %v7292 = vpack.c.b16 %v7125, %v7124
        %v7293 = vpack.c.b16 %v7127, %v7126
        %v7294 = vpack.c.b16 %v7129, %v7128
        %v7295 = vpack.c.b16 %v7131, %v7130
        %v7296 = vpack.c.b16 %v7133, %v7132
        %v7297 = vpack.c.b16 %v7135, %v7134
        %v7298 = vpack.c.b16 %v7137, %v7136
        %v7299 = vpack.c.b16 %v7139, %v7138
        %v7300 = vpack.c.b16 %v7141, %v7140
        %v7301 = vpack.c.b16 %v7143, %v7142
        %v7302 = vpack.c.b16 %v7145, %v7144
        %v7303 = vpack.c.b16 %v7147, %v7146
        %v7304 = vpack.c.b16 %v7149, %v7148
        %v7305 = vpack.c.b16 %v7151, %v7150
        %v7306 = vpack.c.b16 %v7153, %v7152
        %v7307 = vpack.c.b16 %v7155, %v7154
        %v7308 = vpack.c.b16 %v7157, %v7156
        %v7309 = vpack.c.b16 %v7159, %v7158
        %v7310 = vpack.c.b16 %v7161, %v7160
        %v7311 = vpack.c.b16 %v7163, %v7162
        %v7312 = vpack.c.b16 %v7165, %v7164
        %v7313 = vpack.c.b16 %v7167, %v7166
        %v7314 = vpack.c.b16 %v7169, %v7168
        %v7315 = vpack.c.b16 %v7171, %v7170
        %v7316 = vpack.c.b16 %v7173, %v7172
        %v7317 = vpack.c.b16 %v7175, %v7174
        %v7318 = vpack.c.b16 %v7177, %v7176
        %v7319 = vpack.c.b16 %v7179, %v7178
        %v7320 = vpack.c.b16 %v7181, %v7180
        %v7321 = vpack.c.b16 %v7183, %v7182
        %v7322 = vpack.c.b16 %v7185, %v7184
        %v7323 = vpack.c.b16 %v7187, %v7186
        %v7324 = vpack.c.b16 %v7189, %v7188
        %v7325 = vpack.c.b16 %v7191, %v7190
        %v7326 = vpack.c.b16 %v7193, %v7192
        %v7327 = vpack.c.b16 %v7195, %v7194
        %v7328 = vpack.c.b16 %v7197, %v7196
        %v7329 = vpack.c.b16 %v7199, %v7198
        %v7330 = vpack.c.b16 %v7201, %v7200
        %v7331 = vpack.c.b16 %v7203, %v7202
        %7460 = vst [vmem:[%s274] sm:$0xff] %v7204
        %7461 = vst [vmem:[%s274 + $0x8] sm:$0xff] %v7205
        %7462 = vst [vmem:[%s274 + $0x10] sm:$0xff] %v7206
        %7463 = vst [vmem:[%s274 + $0x18] sm:$0xff] %v7207
        %7464 = vst [vmem:[%s274 + $0x20] sm:$0xff] %v7208
        %7465 = vst [vmem:[%s274 + $0x28] sm:$0xff] %v7209
        %7466 = vst [vmem:[%s274 + $0x30] sm:$0xff] %v7210
        %7467 = vst [vmem:[%s274 + $0x38] sm:$0xff] %v7211
        %7468 = vst [vmem:[%s274 + $0x40] sm:$0xff] %v7212
        %7469 = vst [vmem:[%s274 + $0x48] sm:$0xff] %v7213
        %7470 = vst [vmem:[%s274 + $0x50] sm:$0xff] %v7214
        %7471 = vst [vmem:[%s274 + $0x58] sm:$0xff] %v7215
        %7472 = vst [vmem:[%s274 + $0x60] sm:$0xff] %v7216
        %7473 = vst [vmem:[%s274 + $0x68] sm:$0xff] %v7217
        %7474 = vst [vmem:[%s274 + $0x70] sm:$0xff] %v7218
        %7475 = vst [vmem:[%s274 + $0x78] sm:$0xff] %v7219
        %7476 = vst [vmem:[%s274 + $0x80] sm:$0xff] %v7220
        %7477 = vst [vmem:[%s274 + $0x88] sm:$0xff] %v7221
        %7478 = vst [vmem:[%s274 + $0x90] sm:$0xff] %v7222
        %7479 = vst [vmem:[%s274 + $0x98] sm:$0xff] %v7223
        %7480 = vst [vmem:[%s274 + $0xa0] sm:$0xff] %v7224
        %7481 = vst [vmem:[%s274 + $0xa8] sm:$0xff] %v7225
        %7482 = vst [vmem:[%s274 + $0xb0] sm:$0xff] %v7226
        %7483 = vst [vmem:[%s274 + $0xb8] sm:$0xff] %v7227
        %7484 = vst [vmem:[%s274 + $0xc0] sm:$0xff] %v7228
        %7485 = vst [vmem:[%s274 + $0xc8] sm:$0xff] %v7229
        %7486 = vst [vmem:[%s274 + $0xd0] sm:$0xff] %v7230
        %7487 = vst [vmem:[%s274 + $0xd8] sm:$0xff] %v7231
        %7488 = vst [vmem:[%s274 + $0xe0] sm:$0xff] %v7232
        %7489 = vst [vmem:[%s274 + $0xe8] sm:$0xff] %v7233
        %7490 = vst [vmem:[%s274 + $0xf0] sm:$0xff] %v7234
        %7491 = vst [vmem:[%s274 + $0xf8] sm:$0xff] %v7235
        %7492 = vst [vmem:[%s274 + $0x100] sm:$0xff] %v7236
        %7493 = vst [vmem:[%s274 + $0x108] sm:$0xff] %v7237
        %7494 = vst [vmem:[%s274 + $0x110] sm:$0xff] %v7238
        %7495 = vst [vmem:[%s274 + $0x118] sm:$0xff] %v7239
        %7496 = vst [vmem:[%s274 + $0x120] sm:$0xff] %v7240
        %7497 = vst [vmem:[%s274 + $0x128] sm:$0xff] %v7241
        %7498 = vst [vmem:[%s274 + $0x130] sm:$0xff] %v7242
        %7499 = vst [vmem:[%s274 + $0x138] sm:$0xff] %v7243
        %7500 = vst [vmem:[%s274 + $0x140] sm:$0xff] %v7244
        %7501 = vst [vmem:[%s274 + $0x148] sm:$0xff] %v7245
        %7502 = vst [vmem:[%s274 + $0x150] sm:$0xff] %v7246
        %7503 = vst [vmem:[%s274 + $0x158] sm:$0xff] %v7247
        %7504 = vst [vmem:[%s274 + $0x160] sm:$0xff] %v7248
        %7505 = vst [vmem:[%s274 + $0x168] sm:$0xff] %v7249
        %7506 = vst [vmem:[%s274 + $0x170] sm:$0xff] %v7250
        %7507 = vst [vmem:[%s274 + $0x178] sm:$0xff] %v7251
        %7508 = vst [vmem:[%s274 + $0x180] sm:$0xff] %v7252
        %7509 = vst [vmem:[%s274 + $0x188] sm:$0xff] %v7253
        %7510 = vst [vmem:[%s274 + $0x190] sm:$0xff] %v7254
        %7511 = vst [vmem:[%s274 + $0x198] sm:$0xff] %v7255
        %7512 = vst [vmem:[%s274 + $0x1a0] sm:$0xff] %v7256
        %7513 = vst [vmem:[%s274 + $0x1a8] sm:$0xff] %v7257
        %7514 = vst [vmem:[%s274 + $0x1b0] sm:$0xff] %v7258
        %7515 = vst [vmem:[%s274 + $0x1b8] sm:$0xff] %v7259
        %7516 = vst [vmem:[%s274 + $0x1c0] sm:$0xff] %v7260
        %7517 = vst [vmem:[%s274 + $0x1c8] sm:$0xff] %v7261
        %7518 = vst [vmem:[%s274 + $0x1d0] sm:$0xff] %v7262
        %7519 = vst [vmem:[%s274 + $0x1d8] sm:$0xff] %v7263
        %7520 = vst [vmem:[%s274 + $0x1e0] sm:$0xff] %v7264
        %7521 = vst [vmem:[%s274 + $0x1e8] sm:$0xff] %v7265
        %7522 = vst [vmem:[%s274 + $0x1f0] sm:$0xff] %v7266
        %7523 = vst [vmem:[%s274 + $0x1f8] sm:$0xff] %v7267
        %7524 = vst [vmem:[%s274 + $0x200] sm:$0xff] %v7268
        %7525 = vst [vmem:[%s274 + $0x208] sm:$0xff] %v7269
        %7526 = vst [vmem:[%s274 + $0x210] sm:$0xff] %v7270
        %7527 = vst [vmem:[%s274 + $0x218] sm:$0xff] %v7271
        %7528 = vst [vmem:[%s274 + $0x220] sm:$0xff] %v7272
        %7529 = vst [vmem:[%s274 + $0x228] sm:$0xff] %v7273
        %7530 = vst [vmem:[%s274 + $0x230] sm:$0xff] %v7274
        %7531 = vst [vmem:[%s274 + $0x238] sm:$0xff] %v7275
        %7532 = vst [vmem:[%s274 + $0x240] sm:$0xff] %v7276
        %7533 = vst [vmem:[%s274 + $0x248] sm:$0xff] %v7277
        %7534 = vst [vmem:[%s274 + $0x250] sm:$0xff] %v7278
        %7535 = vst [vmem:[%s274 + $0x258] sm:$0xff] %v7279
        %7536 = vst [vmem:[%s274 + $0x260] sm:$0xff] %v7280
        %7537 = vst [vmem:[%s274 + $0x268] sm:$0xff] %v7281
        %7538 = vst [vmem:[%s274 + $0x270] sm:$0xff] %v7282
        %7539 = vst [vmem:[%s274 + $0x278] sm:$0xff] %v7283
        %7540 = vst [vmem:[%s274 + $0x280] sm:$0xff] %v7284
        %7541 = vst [vmem:[%s274 + $0x288] sm:$0xff] %v7285
        %7542 = vst [vmem:[%s274 + $0x290] sm:$0xff] %v7286
        %7543 = vst [vmem:[%s274 + $0x298] sm:$0xff] %v7287
        %7544 = vst [vmem:[%s274 + $0x2a0] sm:$0xff] %v7288
        %7545 = vst [vmem:[%s274 + $0x2a8] sm:$0xff] %v7289
        %7546 = vst [vmem:[%s274 + $0x2b0] sm:$0xff] %v7290
        %7547 = vst [vmem:[%s274 + $0x2b8] sm:$0xff] %v7291
        %7548 = vst [vmem:[%s274 + $0x2c0] sm:$0xff] %v7292
        %7549 = vst [vmem:[%s274 + $0x2c8] sm:$0xff] %v7293
        %7550 = vst [vmem:[%s274 + $0x2d0] sm:$0xff] %v7294
        %7551 = vst [vmem:[%s274 + $0x2d8] sm:$0xff] %v7295
        %7552 = vst [vmem:[%s274 + $0x2e0] sm:$0xff] %v7296
        %7553 = vst [vmem:[%s274 + $0x2e8] sm:$0xff] %v7297
        %7554 = vst [vmem:[%s274 + $0x2f0] sm:$0xff] %v7298
        %7555 = vst [vmem:[%s274 + $0x2f8] sm:$0xff] %v7299
        %7556 = vst [vmem:[%s274 + $0x300] sm:$0xff] %v7300
        %7557 = vst [vmem:[%s274 + $0x308] sm:$0xff] %v7301
        %7558 = vst [vmem:[%s274 + $0x310] sm:$0xff] %v7302
        %7559 = vst [vmem:[%s274 + $0x318] sm:$0xff] %v7303
        %7560 = vst [vmem:[%s274 + $0x320] sm:$0xff] %v7304
        %7561 = vst [vmem:[%s274 + $0x328] sm:$0xff] %v7305
        %7562 = vst [vmem:[%s274 + $0x330] sm:$0xff] %v7306
        %7563 = vst [vmem:[%s274 + $0x338] sm:$0xff] %v7307
        %7564 = vst [vmem:[%s274 + $0x340] sm:$0xff] %v7308
        %7565 = vst [vmem:[%s274 + $0x348] sm:$0xff] %v7309
        %7566 = vst [vmem:[%s274 + $0x350] sm:$0xff] %v7310
        %7567 = vst [vmem:[%s274 + $0x358] sm:$0xff] %v7311
        %7568 = vst [vmem:[%s274 + $0x360] sm:$0xff] %v7312
        %7569 = vst [vmem:[%s274 + $0x368] sm:$0xff] %v7313
        %7570 = vst [vmem:[%s274 + $0x370] sm:$0xff] %v7314
        %7571 = vst [vmem:[%s274 + $0x378] sm:$0xff] %v7315
        %7572 = vst [vmem:[%s274 + $0x380] sm:$0xff] %v7316
        %7573 = vst [vmem:[%s274 + $0x388] sm:$0xff] %v7317
        %7574 = vst [vmem:[%s274 + $0x390] sm:$0xff] %v7318
        %7575 = vst [vmem:[%s274 + $0x398] sm:$0xff] %v7319
        %7576 = vst [vmem:[%s274 + $0x3a0] sm:$0xff] %v7320
        %7577 = vst [vmem:[%s274 + $0x3a8] sm:$0xff] %v7321
        %7578 = vst [vmem:[%s274 + $0x3b0] sm:$0xff] %v7322
        %7579 = vst [vmem:[%s274 + $0x3b8] sm:$0xff] %v7323
        %7580 = vst [vmem:[%s274 + $0x3c0] sm:$0xff] %v7324
        %7581 = vst [vmem:[%s274 + $0x3c8] sm:$0xff] %v7325
        %7582 = vst [vmem:[%s274 + $0x3d0] sm:$0xff] %v7326
        %7583 = vst [vmem:[%s274 + $0x3d8] sm:$0xff] %v7327
        %7584 = vst [vmem:[%s274 + $0x3e0] sm:$0xff] %v7328
        %7585 = vst [vmem:[%s274 + $0x3e8] sm:$0xff] %v7329
        %7586 = vst [vmem:[%s274 + $0x3f0] sm:$0xff] %v7330
        %7587 = vst [vmem:[%s274 + $0x3f8] sm:$0xff] %v7331
        %s7588 = sand.u32 %s181, 1
        %s7589 = scalar_lea.sflag [#allocation3], %s7588
        %s7590 = sand.u32 %s181, 1
        %s7591 = smul.addr %s7590, 1024
        %s7592 = scalar_lea.vmem [#allocation2], %s7591
        // Predicated region
        $region49: #{bottleneck_pallas_nhwc.1} parent=47 // pred_check
          %p7593 = pneg %p191
        $region50: #{bottleneck_pallas_nhwc.1} parent=47 // pred_check_branch
          %7595 = sbr.rel (%p7593) target = $region52
        $region51: #{bottleneck_pallas_nhwc.1} parent=47 // pred_region
          %s7596 = smul.u32 2, %s21
          %s7598 = ssub.s32 16384, 16384
          %7599 = vsyncadd %s7589, %s7598
          %s7600 = smul.addr %s7596, 128
          %s7601 = smul.addr %s7600, 64
          %s7602 = scalar_lea.hbm %s7, %s7601
          %s7603 = sshll.u32 %s7592, 4
          %s7604 = int_to_ptr.vmem [resolvable:$true] %s7603
          %7609 = dma.vmem_to_hbm [thread:$0]  %s7604, 16384, %s7602, %s7589, 256, 256, 16
        $region52: #{bottleneck_pallas_nhwc.1} parent=47 // pred_fallthru
          _
      $region48: #{bottleneck_pallas_nhwc.1} parent=5 // pred_fallthru
        _
      %p7610 = scmp.le.s32.totalorder 2, %s16
      // Predicated region
      $region53: #{bottleneck_pallas_nhwc.1} parent=5 // pred_check
        %p7611 = pneg %p7610
      $region54: #{bottleneck_pallas_nhwc.1} parent=5 // pred_check_branch
        %7613 = sbr.rel (%p7611) target = $region56
      $region55: #{bottleneck_pallas_nhwc.1} parent=5 // pred_region
        %s7614 = ssub.s32 %s16, 2
        // Predicated region
        $region57: #{bottleneck_pallas_nhwc.1} parent=55 // pred_check
          %p7615 = pneg %p197
        $region58: #{bottleneck_pallas_nhwc.1} parent=55 // pred_check_branch
          %7617 = sbr.rel (%p7615) target = $region60
        $region59: #{bottleneck_pallas_nhwc.1} parent=55 // pred_region
          %s7618 = sand.u32 %s182, 1
          %s7619 = scalar_lea.sflag [#allocation3], %s7618
          %s7620 = sand.u32 %s182, 1
          %s7621 = smul.addr %s7620, 1024
          %s7622 = scalar_lea.vmem [#allocation2], %s7621
          %7623 = dma.done %s7619, 16384
        $region60: #{bottleneck_pallas_nhwc.1} parent=55 // pred_fallthru
          _
      $region56: #{bottleneck_pallas_nhwc.1} parent=5 // pred_fallthru
        _
    $region6: #{bottleneck_pallas_nhwc.1} parent=1 // loop_footer
      %s20 = sadd.s32 1, %s16
    $region7: #{bottleneck_pallas_nhwc.1} parent=1 // loop_footer_branch
      %15 = sbr.rel target = $region3
    $region8: #{bottleneck_pallas_nhwc.1} parent=1 // loop_exit
      _
    %7624 = vsyncpa [#allocation3], 1
    %s7625 = scalar_lea.sflag [#allocation3], 1
    %7626 = vsyncpa %s7625, 1

</llo_original>
